<compile_context>
chip_gen: v7x
topology: tpu7x:2x2x1
jax: 0.10.0
libtpu: 0.0.40
codegen_flags: <defaults>
</compile_context>

<pallas_src>
import functools

import jax
import jax.numpy as jnp
import numpy as np
from jax import lax
from jax.experimental import pallas as pl
from jax.experimental.pallas import tpu as pltpu


# Set after the first Mosaic rejection of the lane-dense store path so we do
# not retry a failing compile on every call.
_FLATTEN_STORE_BROKEN = False


@functools.lru_cache(maxsize=1)
def _vmem_limit_bytes():
    """Per-generation VMEM budget: ~3/4 of physical capacity, capped at 96 MiB.

    v5e/v6e: 128 MiB physical -> 96 MiB (well above the 16/32 MiB scoped
    defaults).  v7x: 64 MiB per TC -> 48 MiB.  Falls back to 48 MiB if the
    capacity query is unavailable.
    """
    cap = None
    try:
        cap = getattr(pltpu.get_tpu_info(), "vmem_capacity_bytes", None)
    except Exception:
        cap = None
    if not cap:
        cap = 64 * 1024 * 1024
    return int(min(cap * 3 // 4, 96 * 1024 * 1024))


def _conv3x3_rowsum(xp, w_ref, Ho, Wo, stride):
    """3x3 conv over an already-padded input, grouped by kernel row.

    xp:    (stride*(Ho-1)+3, stride*(Wo-1)+3, C) padded activation (value).
    w_ref: (3, 3*C, O) Ref; row ky holds the (kx, ci)-flattened weights for
           kernel row ky (BN scale already folded in).
    Returns a float32 (Ho, Wo, O) accumulator.

    Three matmuls with K = 3*C each (~MXU depth at C = 64) instead of one
    K = 9*C matmul over a fully-materialized 9-tap lane concat.
    """
    acc = None
    for ky in range(3):
        if stride == 1:
            taps = [xp[ky:ky + Ho, kx:kx + Wo, :] for kx in range(3)]
        else:
            # TODO(synk): stride-2 sublane-strided slices lower to gathers; a
            # space-to-depth (polyphase) input layout in the wrapper would make
            # these unit-stride.  Correct as-is.
            taps = [xp[ky:ky + stride * (Ho - 1) + 1:stride,
                       kx:kx + stride * (Wo - 1) + 1:stride, :]
                    for kx in range(3)]
        slab = jnp.concatenate(taps, axis=-1)                # (Ho, Wo, 3*C)
        part = jnp.einsum("hwk,ko->hwo", slab, w_ref[ky],
                          preferred_element_type=jnp.float32)
        acc = part if acc is None else acc + part
    return acc


def _basic_block_kernel(*refs, Ho, Wo, stride, has_projection, flatten_out):
    if has_projection:
        (x_ref, w1_ref, b1_ref, w2_ref, b2_ref, ws_ref, bs_ref, out_ref) = refs
    else:
        (x_ref, w1_ref, b1_ref, w2_ref, b2_ref, out_ref) = refs

    x = x_ref[0]                           # (H+2, W+2, Cin), compute dtype
    cdt = x.dtype
    cout = b1_ref.shape[-1]

    # ---- conv1 (3x3, stride s, pad 1) + folded BN1 bias + ReLU ----
    y1 = _conv3x3_rowsum(x, w1_ref, Ho, Wo, stride) + b1_ref[0]
    y1 = jnp.maximum(y1, 0.0).astype(cdt)                    # (Ho, Wo, Cout)

    # ---- conv2 (3x3, stride 1, pad 1) + folded BN2 bias ----
    # Zero halo built in-register (concat): no VMEM staging round-trip, no
    # misaligned scratch reads, no border-zeroing stores.
    zc = jnp.zeros((Ho, 1, cout), cdt)
    zr = jnp.zeros((1, Wo + 2, cout), cdt)
    y1p = jnp.concatenate(
        [zr, jnp.concatenate([zc, y1, zc], axis=1), zr], axis=0)
    y2 = _conv3x3_rowsum(y1p, w2_ref, Ho, Wo, 1) + b2_ref[0]

    # ---- shortcut ----
    if stride == 1:
        xs = x[1:1 + Ho, 1:1 + Wo, :]
    else:
        xs = x[1:1 + stride * (Ho - 1) + 1:stride,
               1:1 + stride * (Wo - 1) + 1:stride, :]
    if has_projection:
        sc = jnp.einsum("hwi,io->hwo", xs, ws_ref[...],
                        preferred_element_type=jnp.float32) + bs_ref[0]
    else:
        sc = xs.astype(jnp.float32)        # identity: no matmul, no weight DMA

    # ---- residual add + final ReLU + store ----
    res = jnp.maximum(y2 + sc, 0.0).astype(out_ref.dtype)
    if flatten_out:
        # Lane-dense store: flattened (Ho, Wo*Cout) slab -> unmasked 128-lane
        # vst instead of masked stores at Cout (<128) lanes.
        out_ref[0] = res.reshape(Ho, Wo * cout)
    else:
        out_ref[0] = res


@functools.partial(
    jax.jit,
    static_argnames=("stride", "compute_dtype", "out_dtype", "flatten_out"))
def _basic_block_impl(x_nchw, params, *, stride, compute_dtype, out_dtype,
                      flatten_out):
    N, Cin, H, W = x_nchw.shape
    Cout = params["w1"].shape[0]
    Ho = (H + 2 - 3) // stride + 1
    Wo = (W + 2 - 3) // stride + 1
    Hp, Wp = H + 2, W + 2
    eps = 1e-5
    has_projection = (stride != 1) or (Cin != Cout)

    # TODO(synk): for a fused multi-block network keep activations NHWC (or the
    # lane-dense flattened form) end-to-end; the NCHW<->NHWC transposes and the
    # pad below are per-call HBM passes kept only for PyTorch interface parity.
    x = jnp.transpose(x_nchw, (0, 2, 3, 1)).astype(jnp.float32)
    x_pad = jnp.pad(x, ((0, 0), (1, 1), (1, 1), (0, 0))).astype(compute_dtype)

    def fold_bn(gamma, beta, mean, var):
        scale = (gamma / jnp.sqrt(var + eps)).astype(jnp.float32)
        bias = (beta - mean * scale).astype(jnp.float32)
        return scale, bias

    s1, b1 = fold_bn(params["bn1_gamma"], params["bn1_beta"],
                     params["bn1_mean"], params["bn1_var"])
    s2, b2 = fold_bn(params["bn2_gamma"], params["bn2_beta"],
                     params["bn2_mean"], params["bn2_var"])

    # Conv weights (O,I,3,3) -> HWIO, BN scale folded, grouped per kernel row
    # as (3, 3*C, O) so the kernel does 3 matmuls with K = 3*C each.
    w1 = jnp.transpose(params["w1"], (2, 3, 1, 0)).astype(jnp.float32)
    w1g = (w1 * s1).reshape(3, 3 * Cin, Cout).astype(compute_dtype)
    w2 = jnp.transpose(params["w2"], (2, 3, 1, 0)).astype(jnp.float32)
    w2g = (w2 * s2).reshape(3, 3 * Cout, Cout).astype(compute_dtype)
    b1 = b1.reshape(1, Cout)
    b2 = b2.reshape(1, Cout)

    inputs = [x_pad, w1g, b1, w2g, b2]
    in_specs = [
        # TODO(synk): a lane-dense (1, Hp, Wp*Cin) input block needs an
        # in-kernel split-reshape relayout that negates the benefit; the real
        # fix is a network-level channels-last / space-to-depth layout.
        pl.BlockSpec((1, Hp, Wp, Cin), lambda n: (n, 0, 0, 0)),
        pl.BlockSpec((3, 3 * Cin, Cout), lambda n: (0, 0, 0)),
        pl.BlockSpec((1, Cout), lambda n: (0, 0)),
        pl.BlockSpec((3, 3 * Cout, Cout), lambda n: (0, 0, 0)),
        pl.BlockSpec((1, Cout), lambda n: (0, 0)),
    ]
    if has_projection:
        ws = jnp.transpose(params["ws"][:, :, 0, 0], (1, 0)).astype(jnp.float32)
        ss, bs = fold_bn(params["bns_gamma"], params["bns_beta"],
                         params["bns_mean"], params["bns_var"])
        inputs += [(ws * ss).astype(compute_dtype), bs.reshape(1, Cout)]
        in_specs += [pl.BlockSpec((Cin, Cout), lambda n: (0, 0)),
                     pl.BlockSpec((1, Cout), lambda n: (0, 0))]

    if flatten_out:
        out_shape = jax.ShapeDtypeStruct((N, Ho, Wo * Cout), out_dtype)
        out_spec = pl.BlockSpec((1, Ho, Wo * Cout), lambda n: (n, 0, 0))
    else:
        out_shape = jax.ShapeDtypeStruct((N, Ho, Wo, Cout), out_dtype)
        out_spec = pl.BlockSpec((1, Ho, Wo, Cout), lambda n: (n, 0, 0, 0))

    kernel = functools.partial(
        _basic_block_kernel, Ho=Ho, Wo=Wo, stride=stride,
        has_projection=has_projection, flatten_out=flatten_out)

    # TODO(synk): for v7x (64 MiB/TC) and large-spatial stages add a row-tile
    # grid axis with a 2-row input halo (and multi-image blocks for 14x14/7x7
    # stages) instead of whole-image blocks.
    out = pl.pallas_call(
        kernel,
        out_shape=out_shape,
        grid_spec=pltpu.PrefetchScalarGridSpec(
            num_scalar_prefetch=0,
            grid=(N,),
            in_specs=in_specs,
            out_specs=out_spec,
        ),
        compiler_params=pltpu.CompilerParams(
            dimension_semantics=("parallel",),       # megacore / v7x 2-TC split
            vmem_limit_bytes=_vmem_limit_bytes()),
    )(*inputs)

    if flatten_out:
        out = out.reshape(N, Ho, Wo, Cout)
    return jnp.transpose(out, (0, 3, 1, 2))


def basic_block_pallas(x_nchw, params, stride=1,
                       compute_dtype=jnp.bfloat16, out_dtype=jnp.float32):
    """Fused BasicBlock forward.  x_nchw: (N, Cin, H, W) -> (N, Cout, Ho, Wo)."""
    global _FLATTEN_STORE_BROKEN
    _, _, _, W = x_nchw.shape
    Cout = params["w1"].shape[0]
    Wo = (W + 2 - 3) // stride + 1
    kwargs = dict(stride=stride, compute_dtype=compute_dtype,
                  out_dtype=out_dtype)
    flatten = (Cout < 128) and ((Wo * Cout) % 128 == 0)
    if flatten and not _FLATTEN_STORE_BROKEN:
        try:
            return _basic_block_impl(x_nchw, params, flatten_out=True, **kwargs)
        except Exception:
            # This Mosaic build rejected the in-kernel (Ho,Wo,C)->(Ho,Wo*C)
            # relayout reshape; fall back to the channel-minor store.
            _FLATTEN_STORE_BROKEN = True
    return _basic_block_impl(x_nchw, params, flatten_out=False, **kwargs)


# ----------------------------- plain-JAX reference ---------------------------

def basic_block_reference(x_nchw, params, stride=1):
    eps = 1e-5
    x = jnp.transpose(x_nchw, (0, 2, 3, 1)).astype(jnp.float32)  # NHWC
    Cin = x.shape[-1]
    Cout = params["w1"].shape[0]

    def conv(inp, w_oihw, s):
        w = jnp.transpose(w_oihw, (2, 3, 1, 0)).astype(jnp.float32)  # HWIO
        pad = (w.shape[0] - 1) // 2
        return lax.conv_general_dilated(
            inp, w, (s, s), ((pad, pad), (pad, pad)),
            dimension_numbers=("NHWC", "HWIO", "NHWC"))

    def bn(y, g, b, m, v):
        sc = g / jnp.sqrt(v + eps)
        return y * sc + (b - m * sc)

    y = conv(x, params["w1"], stride)
    y = bn(y, params["bn1_gamma"], params["bn1_beta"],
           params["bn1_mean"], params["bn1_var"])
    y = jnp.maximum(y, 0.0)
    y = conv(y, params["w2"], 1)
    y = bn(y, params["bn2_gamma"], params["bn2_beta"],
           params["bn2_mean"], params["bn2_var"])

    if stride != 1 or Cin != Cout:
        s = conv(x, params["ws"], stride)
        s = bn(s, params["bns_gamma"], params["bns_beta"],
               params["bns_mean"], params["bns_var"])
    else:
        s = x
    out = jnp.maximum(y + s, 0.0)
    return jnp.transpose(out, (0, 3, 1, 2))


# --------------------------------- main --------------------------------------

if __name__ == "__main__":
    root = jax.random.PRNGKey(0)

    def bn_params(k, c):
        k0, k1, k2, k3 = jax.random.split(k, 4)
        return (1.0 + 0.1 * jax.random.normal(k0, (c,), jnp.float32),  # gamma
                0.1 * jax.random.normal(k1, (c,), jnp.float32),        # beta
                0.1 * jax.random.normal(k2, (c,), jnp.float32),        # mean
                0.5 + jnp.abs(jax.random.normal(k3, (c,), jnp.float32)))  # var

    def make_params(key, cin, cout, projection):
        ks = jax.random.split(key, 8)
        g1, b1, m1, v1 = bn_params(ks[2], cout)
        g2, b2, m2, v2 = bn_params(ks[3], cout)
        p = {
            "w1": 0.1 * jax.random.normal(ks[0], (cout, cin, 3, 3), jnp.float32),
            "w2": 0.1 * jax.random.normal(ks[1], (cout, cout, 3, 3), jnp.float32),
            "bn1_gamma": g1, "bn1_beta": b1, "bn1_mean": m1, "bn1_var": v1,
            "bn2_gamma": g2, "bn2_beta": b2, "bn2_mean": m2, "bn2_var": v2,
        }
        if projection:
            gs, bs, ms, vs = bn_params(ks[4], cout)
            p["ws"] = 0.1 * jax.random.normal(ks[5], (cout, cin, 1, 1), jnp.float32)
            p["bns_gamma"] = gs
            p["bns_beta"] = bs
            p["bns_mean"] = ms
            p["bns_var"] = vs
        return p

    k_p1, k_p2, k_x1, k_x2 = jax.random.split(root, 4)

    # Case 1: projection shortcut (Cin != Cout), stride 1, f32 — strict check.
    N, Cin, H, W, Cout = 2, 4, 16, 16, 8
    params1 = make_params(k_p1, Cin, Cout, projection=True)
    x1 = jax.random.normal(k_x1, (N, Cin, H, W), jnp.float32)
    out1 = jax.block_until_ready(
        basic_block_pallas(x1, params1, stride=1, compute_dtype=jnp.float32))
    ref1 = jax.block_until_ready(basic_block_reference(x1, params1, stride=1))
    assert out1.shape == (N, Cout, H, W), out1.shape
    np.testing.assert_allclose(np.asarray(out1), np.asarray(ref1),
                               rtol=1e-4, atol=1e-4)

    # Case 2: identity shortcut (Cin == Cout, stride 1), f32 — strict check.
    params2 = make_params(k_p2, Cout, Cout, projection=False)
    x2 = jax.random.normal(k_x2, (N, Cout, H, W), jnp.float32)
    out2 = jax.block_until_ready(
        basic_block_pallas(x2, params2, stride=1, compute_dtype=jnp.float32))
    ref2 = jax.block_until_ready(basic_block_reference(x2, params2, stride=1))
    np.testing.assert_allclose(np.asarray(out2), np.asarray(ref2),
                               rtol=1e-4, atol=1e-4)

    # Case 3: default bf16 compute path (f32 accumulation) — loose tolerance.
    out_bf16 = jax.block_until_ready(basic_block_pallas(x1, params1, stride=1))
    np.testing.assert_allclose(np.asarray(out_bf16), np.asarray(ref1),
                               rtol=5e-2, atol=5e-2)

    print("KERNEL_OK")
</pallas_src>

<mosaic_0001>
module attributes {stable_mosaic.version = 11 : i64} {
  func.func @_basic_block_kernel(%arg0: i32, %arg1: memref<1x18x18x4xf32, #tpu.memory_space<vmem>>, %arg2: memref<3x12x8xf32, #tpu.memory_space<vmem>>, %arg3: memref<1x8xf32, #tpu.memory_space<vmem>>, %arg4: memref<3x24x8xf32, #tpu.memory_space<vmem>>, %arg5: memref<1x8xf32, #tpu.memory_space<vmem>>, %arg6: memref<4x8xf32, #tpu.memory_space<vmem>>, %arg7: memref<1x8xf32, #tpu.memory_space<vmem>>, %arg8: memref<1x16x128xf32, #tpu.memory_space<vmem>>) attributes {dimension_semantics = [#tpu.dimension_semantics<parallel>], iteration_bounds = array<i64: 2>, scalar_prefetch = 0 : i64, scratch_operands = 0 : i64, tpu.core_type = #tpu.core_type<tc>, window_params = [{transform_indices = @transform_0, window_bounds = array<i64: 1, 18, 18, 4>}, {pipeline_mode = #tpu.pipeline_mode<synchronous>, transform_indices = @transform_1, window_bounds = array<i64: 3, 12, 8>}, {pipeline_mode = #tpu.pipeline_mode<synchronous>, transform_indices = @transform_2, window_bounds = array<i64: 1, 8>}, {pipeline_mode = #tpu.pipeline_mode<synchronous>, transform_indices = @transform_3, window_bounds = array<i64: 3, 24, 8>}, {pipeline_mode = #tpu.pipeline_mode<synchronous>, transform_indices = @transform_4, window_bounds = array<i64: 1, 8>}, {pipeline_mode = #tpu.pipeline_mode<synchronous>, transform_indices = @transform_5, window_bounds = array<i64: 4, 8>}, {pipeline_mode = #tpu.pipeline_mode<synchronous>, transform_indices = @transform_6, window_bounds = array<i64: 1, 8>}, {transform_indices = @transform_7, window_bounds = array<i64: 1, 16, 128>}]} {
    %c0 = arith.constant 0 : index
    %c0_0 = arith.constant 0 : index
    %c0_1 = arith.constant 0 : index
    %c0_2 = arith.constant 0 : index
    %0 = vector.load %arg1[%c0, %c0_0, %c0_1, %c0_2] : memref<1x18x18x4xf32, #tpu.memory_space<vmem>>, vector<1x18x18x4xf32>
    %1 = vector.shape_cast %0 : vector<1x18x18x4xf32> to vector<18x18x4xf32>
    %2 = vector.extract_strided_slice %1 {offsets = [0, 0, 0], sizes = [16, 16, 4], strides = [1, 1, 1]} : vector<18x18x4xf32> to vector<16x16x4xf32>
    %3 = vector.extract_strided_slice %1 {offsets = [0, 1, 0], sizes = [16, 16, 4], strides = [1, 1, 1]} : vector<18x18x4xf32> to vector<16x16x4xf32>
    %4 = vector.extract_strided_slice %1 {offsets = [0, 2, 0], sizes = [16, 16, 4], strides = [1, 1, 1]} : vector<18x18x4xf32> to vector<16x16x4xf32>
    %5 = tpu.concatenate %2, %3, %4 in 2 : vector<16x16x4xf32>, vector<16x16x4xf32>, vector<16x16x4xf32> -> vector<16x16x12xf32>
    %c0_3 = arith.constant 0 : index
    %c0_4 = arith.constant 0 : index
    %c0_5 = arith.constant 0 : index
    %6 = vector.load %arg2[%c0_3, %c0_4, %c0_5] : memref<3x12x8xf32, #tpu.memory_space<vmem>>, vector<1x12x8xf32>
    %7 = vector.shape_cast %6 : vector<1x12x8xf32> to vector<12x8xf32>
    "tpu.trace_start"() <{level = 10 : i32, message = "hwk,ko->hwo"}> : () -> ()
    %cst = arith.constant dense<0.000000e+00> : vector<16x16x8xf32>
    %8 = tpu.matmul %5, %7, %cst {dimension_numbers = #tpu.dot_dimension_numbers<[2], [0], [0, 1], [1], [0, 0, 0, 1, 1, 1], [], []>} : vector<16x16x12xf32>, vector<12x8xf32>, vector<16x16x8xf32> -> vector<16x16x8xf32>
    "tpu.trace_stop"() : () -> ()
    %9 = vector.extract_strided_slice %1 {offsets = [1, 0, 0], sizes = [16, 16, 4], strides = [1, 1, 1]} : vector<18x18x4xf32> to vector<16x16x4xf32>
    %10 = vector.extract_strided_slice %1 {offsets = [1, 1, 0], sizes = [16, 16, 4], strides = [1, 1, 1]} : vector<18x18x4xf32> to vector<16x16x4xf32>
    %11 = vector.extract_strided_slice %1 {offsets = [1, 2, 0], sizes = [16, 16, 4], strides = [1, 1, 1]} : vector<18x18x4xf32> to vector<16x16x4xf32>
    %12 = tpu.concatenate %9, %10, %11 in 2 : vector<16x16x4xf32>, vector<16x16x4xf32>, vector<16x16x4xf32> -> vector<16x16x12xf32>
    %c1 = arith.constant 1 : index
    %c0_6 = arith.constant 0 : index
    %c0_7 = arith.constant 0 : index
    %13 = vector.load %arg2[%c1, %c0_6, %c0_7] : memref<3x12x8xf32, #tpu.memory_space<vmem>>, vector<1x12x8xf32>
    %14 = vector.shape_cast %13 : vector<1x12x8xf32> to vector<12x8xf32>
    "tpu.trace_start"() <{level = 10 : i32, message = "hwk,ko->hwo"}> : () -> ()
    %cst_8 = arith.constant dense<0.000000e+00> : vector<16x16x8xf32>
    %15 = tpu.matmul %12, %14, %cst_8 {dimension_numbers = #tpu.dot_dimension_numbers<[2], [0], [0, 1], [1], [0, 0, 0, 1, 1, 1], [], []>} : vector<16x16x12xf32>, vector<12x8xf32>, vector<16x16x8xf32> -> vector<16x16x8xf32>
    "tpu.trace_stop"() : () -> ()
    %16 = arith.addf %8, %15 : vector<16x16x8xf32>
    %17 = vector.extract_strided_slice %1 {offsets = [2, 0, 0], sizes = [16, 16, 4], strides = [1, 1, 1]} : vector<18x18x4xf32> to vector<16x16x4xf32>
    %18 = vector.extract_strided_slice %1 {offsets = [2, 1, 0], sizes = [16, 16, 4], strides = [1, 1, 1]} : vector<18x18x4xf32> to vector<16x16x4xf32>
    %19 = vector.extract_strided_slice %1 {offsets = [2, 2, 0], sizes = [16, 16, 4], strides = [1, 1, 1]} : vector<18x18x4xf32> to vector<16x16x4xf32>
    %20 = tpu.concatenate %17, %18, %19 in 2 : vector<16x16x4xf32>, vector<16x16x4xf32>, vector<16x16x4xf32> -> vector<16x16x12xf32>
    %c2 = arith.constant 2 : index
    %c0_9 = arith.constant 0 : index
    %c0_10 = arith.constant 0 : index
    %21 = vector.load %arg2[%c2, %c0_9, %c0_10] : memref<3x12x8xf32, #tpu.memory_space<vmem>>, vector<1x12x8xf32>
    %22 = vector.shape_cast %21 : vector<1x12x8xf32> to vector<12x8xf32>
    "tpu.trace_start"() <{level = 10 : i32, message = "hwk,ko->hwo"}> : () -> ()
    %cst_11 = arith.constant dense<0.000000e+00> : vector<16x16x8xf32>
    %23 = tpu.matmul %20, %22, %cst_11 {dimension_numbers = #tpu.dot_dimension_numbers<[2], [0], [0, 1], [1], [0, 0, 0, 1, 1, 1], [], []>} : vector<16x16x12xf32>, vector<12x8xf32>, vector<16x16x8xf32> -> vector<16x16x8xf32>
    "tpu.trace_stop"() : () -> ()
    %24 = arith.addf %16, %23 : vector<16x16x8xf32>
    %c0_12 = arith.constant 0 : index
    %c0_13 = arith.constant 0 : index
    %25 = vector.load %arg3[%c0_12, %c0_13] : memref<1x8xf32, #tpu.memory_space<vmem>>, vector<1x8xf32>
    %26 = vector.shape_cast %25 : vector<1x8xf32> to vector<8xf32>
    %27 = vector.shape_cast %26 : vector<8xf32> to vector<1x1x8xf32>
    %28 = vector.broadcast %27 : vector<1x1x8xf32> to vector<16x16x8xf32>
    %29 = arith.addf %24, %28 : vector<16x16x8xf32>
    %cst_14 = arith.constant 0.000000e+00 : f32
    %30 = vector.broadcast %cst_14 : f32 to vector<16x16x8xf32>
    %31 = arith.maximumf %29, %30 : vector<16x16x8xf32>
    %cst_15 = arith.constant 0.000000e+00 : f32
    %32 = vector.broadcast %cst_15 : f32 to vector<16x1x8xf32>
    %cst_16 = arith.constant 0.000000e+00 : f32
    %33 = vector.broadcast %cst_16 : f32 to vector<1x18x8xf32>
    %34 = tpu.concatenate %32, %31, %32 in 1 : vector<16x1x8xf32>, vector<16x16x8xf32>, vector<16x1x8xf32> -> vector<16x18x8xf32>
    %35 = tpu.concatenate %33, %34, %33 in 0 : vector<1x18x8xf32>, vector<16x18x8xf32>, vector<1x18x8xf32> -> vector<18x18x8xf32>
    %36 = vector.extract_strided_slice %35 {offsets = [0, 0, 0], sizes = [16, 16, 8], strides = [1, 1, 1]} : vector<18x18x8xf32> to vector<16x16x8xf32>
    %37 = vector.extract_strided_slice %35 {offsets = [0, 1, 0], sizes = [16, 16, 8], strides = [1, 1, 1]} : vector<18x18x8xf32> to vector<16x16x8xf32>
    %38 = vector.extract_strided_slice %35 {offsets = [0, 2, 0], sizes = [16, 16, 8], strides = [1, 1, 1]} : vector<18x18x8xf32> to vector<16x16x8xf32>
    %39 = tpu.concatenate %36, %37, %38 in 2 : vector<16x16x8xf32>, vector<16x16x8xf32>, vector<16x16x8xf32> -> vector<16x16x24xf32>
    %c0_17 = arith.constant 0 : index
    %c0_18 = arith.constant 0 : index
    %c0_19 = arith.constant 0 : index
    %40 = vector.load %arg4[%c0_17, %c0_18, %c0_19] : memref<3x24x8xf32, #tpu.memory_space<vmem>>, vector<1x24x8xf32>
    %41 = vector.shape_cast %40 : vector<1x24x8xf32> to vector<24x8xf32>
    "tpu.trace_start"() <{level = 10 : i32, message = "hwk,ko->hwo"}> : () -> ()
    %cst_20 = arith.constant dense<0.000000e+00> : vector<16x16x8xf32>
    %42 = tpu.matmul %39, %41, %cst_20 {dimension_numbers = #tpu.dot_dimension_numbers<[2], [0], [0, 1], [1], [0, 0, 0, 1, 1, 1], [], []>} : vector<16x16x24xf32>, vector<24x8xf32>, vector<16x16x8xf32> -> vector<16x16x8xf32>
    "tpu.trace_stop"() : () -> ()
    %43 = vector.extract_strided_slice %35 {offsets = [1, 0, 0], sizes = [16, 16, 8], strides = [1, 1, 1]} : vector<18x18x8xf32> to vector<16x16x8xf32>
    %44 = vector.extract_strided_slice %35 {offsets = [1, 1, 0], sizes = [16, 16, 8], strides = [1, 1, 1]} : vector<18x18x8xf32> to vector<16x16x8xf32>
    %45 = vector.extract_strided_slice %35 {offsets = [1, 2, 0], sizes = [16, 16, 8], strides = [1, 1, 1]} : vector<18x18x8xf32> to vector<16x16x8xf32>
    %46 = tpu.concatenate %43, %44, %45 in 2 : vector<16x16x8xf32>, vector<16x16x8xf32>, vector<16x16x8xf32> -> vector<16x16x24xf32>
    %c1_21 = arith.constant 1 : index
    %c0_22 = arith.constant 0 : index
    %c0_23 = arith.constant 0 : index
    %47 = vector.load %arg4[%c1_21, %c0_22, %c0_23] : memref<3x24x8xf32, #tpu.memory_space<vmem>>, vector<1x24x8xf32>
    %48 = vector.shape_cast %47 : vector<1x24x8xf32> to vector<24x8xf32>
    "tpu.trace_start"() <{level = 10 : i32, message = "hwk,ko->hwo"}> : () -> ()
    %cst_24 = arith.constant dense<0.000000e+00> : vector<16x16x8xf32>
    %49 = tpu.matmul %46, %48, %cst_24 {dimension_numbers = #tpu.dot_dimension_numbers<[2], [0], [0, 1], [1], [0, 0, 0, 1, 1, 1], [], []>} : vector<16x16x24xf32>, vector<24x8xf32>, vector<16x16x8xf32> -> vector<16x16x8xf32>
    "tpu.trace_stop"() : () -> ()
    %50 = arith.addf %42, %49 : vector<16x16x8xf32>
    %51 = vector.extract_strided_slice %35 {offsets = [2, 0, 0], sizes = [16, 16, 8], strides = [1, 1, 1]} : vector<18x18x8xf32> to vector<16x16x8xf32>
    %52 = vector.extract_strided_slice %35 {offsets = [2, 1, 0], sizes = [16, 16, 8], strides = [1, 1, 1]} : vector<18x18x8xf32> to vector<16x16x8xf32>
    %53 = vector.extract_strided_slice %35 {offsets = [2, 2, 0], sizes = [16, 16, 8], strides = [1, 1, 1]} : vector<18x18x8xf32> to vector<16x16x8xf32>
    %54 = tpu.concatenate %51, %52, %53 in 2 : vector<16x16x8xf32>, vector<16x16x8xf32>, vector<16x16x8xf32> -> vector<16x16x24xf32>
    %c2_25 = arith.constant 2 : index
    %c0_26 = arith.constant 0 : index
    %c0_27 = arith.constant 0 : index
    %55 = vector.load %arg4[%c2_25, %c0_26, %c0_27] : memref<3x24x8xf32, #tpu.memory_space<vmem>>, vector<1x24x8xf32>
    %56 = vector.shape_cast %55 : vector<1x24x8xf32> to vector<24x8xf32>
    "tpu.trace_start"() <{level = 10 : i32, message = "hwk,ko->hwo"}> : () -> ()
    %cst_28 = arith.constant dense<0.000000e+00> : vector<16x16x8xf32>
    %57 = tpu.matmul %54, %56, %cst_28 {dimension_numbers = #tpu.dot_dimension_numbers<[2], [0], [0, 1], [1], [0, 0, 0, 1, 1, 1], [], []>} : vector<16x16x24xf32>, vector<24x8xf32>, vector<16x16x8xf32> -> vector<16x16x8xf32>
    "tpu.trace_stop"() : () -> ()
    %58 = arith.addf %50, %57 : vector<16x16x8xf32>
    %c0_29 = arith.constant 0 : index
    %c0_30 = arith.constant 0 : index
    %59 = vector.load %arg5[%c0_29, %c0_30] : memref<1x8xf32, #tpu.memory_space<vmem>>, vector<1x8xf32>
    %60 = vector.shape_cast %59 : vector<1x8xf32> to vector<8xf32>
    %61 = vector.shape_cast %60 : vector<8xf32> to vector<1x1x8xf32>
    %62 = vector.broadcast %61 : vector<1x1x8xf32> to vector<16x16x8xf32>
    %63 = arith.addf %58, %62 : vector<16x16x8xf32>
    %64 = vector.extract_strided_slice %1 {offsets = [1, 1, 0], sizes = [16, 16, 4], strides = [1, 1, 1]} : vector<18x18x4xf32> to vector<16x16x4xf32>
    %c0_31 = arith.constant 0 : index
    %c0_32 = arith.constant 0 : index
    %65 = vector.load %arg6[%c0_31, %c0_32] : memref<4x8xf32, #tpu.memory_space<vmem>>, vector<4x8xf32>
    "tpu.trace_start"() <{level = 10 : i32, message = "hwi,io->hwo"}> : () -> ()
    %cst_33 = arith.constant dense<0.000000e+00> : vector<16x16x8xf32>
    %66 = tpu.matmul %64, %65, %cst_33 {dimension_numbers = #tpu.dot_dimension_numbers<[2], [0], [0, 1], [1], [0, 0, 0, 1, 1, 1], [], []>} : vector<16x16x4xf32>, vector<4x8xf32>, vector<16x16x8xf32> -> vector<16x16x8xf32>
    "tpu.trace_stop"() : () -> ()
    %c0_34 = arith.constant 0 : index
    %c0_35 = arith.constant 0 : index
    %67 = vector.load %arg7[%c0_34, %c0_35] : memref<1x8xf32, #tpu.memory_space<vmem>>, vector<1x8xf32>
    %68 = vector.shape_cast %67 : vector<1x8xf32> to vector<8xf32>
    %69 = vector.shape_cast %68 : vector<8xf32> to vector<1x1x8xf32>
    %70 = vector.broadcast %69 : vector<1x1x8xf32> to vector<16x16x8xf32>
    %71 = arith.addf %66, %70 : vector<16x16x8xf32>
    %72 = arith.addf %63, %71 : vector<16x16x8xf32>
    %cst_36 = arith.constant 0.000000e+00 : f32
    %73 = vector.broadcast %cst_36 : f32 to vector<16x16x8xf32>
    %74 = arith.maximumf %72, %73 : vector<16x16x8xf32>
    %75 = vector.shape_cast %74 : vector<16x16x8xf32> to vector<16x128xf32>
    %c0_37 = arith.constant 0 : index
    %c0_38 = arith.constant 0 : index
    %c0_39 = arith.constant 0 : index
    %76 = vector.load %arg8[%c0_37, %c0_38, %c0_39] : memref<1x16x128xf32, #tpu.memory_space<vmem>>, vector<1x16x128xf32>
    %77 = vector.shape_cast %76 : vector<1x16x128xf32> to vector<16x128xf32>
    %78 = vector.shape_cast %75 : vector<16x128xf32> to vector<1x16x128xf32>
    tpu.vector_store %arg8[%c0_37, %c0_38, %c0_39], %78 {strides = array<i32>} : memref<1x16x128xf32, #tpu.memory_space<vmem>>, vector<1x16x128xf32>,
    return
  }
  func.func @transform_0(%arg0: i32) -> (i32, i32, i32, i32) {
    %c0_i32 = arith.constant 0 : i32
    %c0_i32_0 = arith.constant 0 : i32
    %c0_i32_1 = arith.constant 0 : i32
    %c0_i32_2 = arith.constant 0 : i32
    return %arg0, %c0_i32, %c0_i32_0, %c0_i32_1 : i32, i32, i32, i32
  }
  func.func @transform_1(%arg0: i32) -> (i32, i32, i32) {
    %c0_i32 = arith.constant 0 : i32
    %c0_i32_0 = arith.constant 0 : i32
    %c0_i32_1 = arith.constant 0 : i32
    %c0_i32_2 = arith.constant 0 : i32
    return %c0_i32, %c0_i32_0, %c0_i32_1 : i32, i32, i32
  }
  func.func @transform_2(%arg0: i32) -> (i32, i32) {
    %c0_i32 = arith.constant 0 : i32
    %c0_i32_0 = arith.constant 0 : i32
    %c0_i32_1 = arith.constant 0 : i32
    return %c0_i32, %c0_i32_0 : i32, i32
  }
  func.func @transform_3(%arg0: i32) -> (i32, i32, i32) {
    %c0_i32 = arith.constant 0 : i32
    %c0_i32_0 = arith.constant 0 : i32
    %c0_i32_1 = arith.constant 0 : i32
    %c0_i32_2 = arith.constant 0 : i32
    return %c0_i32, %c0_i32_0, %c0_i32_1 : i32, i32, i32
  }
  func.func @transform_4(%arg0: i32) -> (i32, i32) {
    %c0_i32 = arith.constant 0 : i32
    %c0_i32_0 = arith.constant 0 : i32
    %c0_i32_1 = arith.constant 0 : i32
    return %c0_i32, %c0_i32_0 : i32, i32
  }
  func.func @transform_5(%arg0: i32) -> (i32, i32) {
    %c0_i32 = arith.constant 0 : i32
    %c0_i32_0 = arith.constant 0 : i32
    %c0_i32_1 = arith.constant 0 : i32
    return %c0_i32, %c0_i32_0 : i32, i32
  }
  func.func @transform_6(%arg0: i32) -> (i32, i32) {
    %c0_i32 = arith.constant 0 : i32
    %c0_i32_0 = arith.constant 0 : i32
    %c0_i32_1 = arith.constant 0 : i32
    return %c0_i32, %c0_i32_0 : i32, i32
  }
  func.func @transform_7(%arg0: i32) -> (i32, i32, i32) {
    %c0_i32 = arith.constant 0 : i32
    %c0_i32_0 = arith.constant 0 : i32
    %c0_i32_1 = arith.constant 0 : i32
    return %arg0, %c0_i32, %c0_i32_0 : i32, i32, i32
  }
}

module attributes {stable_mosaic.version = 11 : i64} {
  func.func @_basic_block_kernel(%arg0: i32, %arg1: memref<1x18x18x4xf32, #tpu.memory_space<vmem>>, %arg2: memref<3x12x8xf32, #tpu.memory_space<vmem>>, %arg3: memref<1x8xf32, #tpu.memory_space<vmem>>, %arg4: memref<3x24x8xf32, #tpu.memory_space<vmem>>, %arg5: memref<1x8xf32, #tpu.memory_space<vmem>>, %arg6: memref<4x8xf32, #tpu.memory_space<vmem>>, %arg7: memref<1x8xf32, #tpu.memory_space<vmem>>, %arg8: memref<1x16x16x8xf32, #tpu.memory_space<vmem>>) attributes {dimension_semantics = [#tpu.dimension_semantics<parallel>], iteration_bounds = array<i64: 2>, scalar_prefetch = 0 : i64, scratch_operands = 0 : i64, tpu.core_type = #tpu.core_type<tc>, window_params = [{transform_indices = @transform_0, window_bounds = array<i64: 1, 18, 18, 4>}, {pipeline_mode = #tpu.pipeline_mode<synchronous>, transform_indices = @transform_1, window_bounds = array<i64: 3, 12, 8>}, {pipeline_mode = #tpu.pipeline_mode<synchronous>, transform_indices = @transform_2, window_bounds = array<i64: 1, 8>}, {pipeline_mode = #tpu.pipeline_mode<synchronous>, transform_indices = @transform_3, window_bounds = array<i64: 3, 24, 8>}, {pipeline_mode = #tpu.pipeline_mode<synchronous>, transform_indices = @transform_4, window_bounds = array<i64: 1, 8>}, {pipeline_mode = #tpu.pipeline_mode<synchronous>, transform_indices = @transform_5, window_bounds = array<i64: 4, 8>}, {pipeline_mode = #tpu.pipeline_mode<synchronous>, transform_indices = @transform_6, window_bounds = array<i64: 1, 8>}, {transform_indices = @transform_7, window_bounds = array<i64: 1, 16, 16, 8>}]} {
    %c0 = arith.constant 0 : index
    %c0_0 = arith.constant 0 : index
    %c0_1 = arith.constant 0 : index
    %c0_2 = arith.constant 0 : index
    %0 = vector.load %arg1[%c0, %c0_0, %c0_1, %c0_2] : memref<1x18x18x4xf32, #tpu.memory_space<vmem>>, vector<1x18x18x4xf32>
    %1 = vector.shape_cast %0 : vector<1x18x18x4xf32> to vector<18x18x4xf32>
    %2 = vector.extract_strided_slice %1 {offsets = [0, 0, 0], sizes = [16, 16, 4], strides = [1, 1, 1]} : vector<18x18x4xf32> to vector<16x16x4xf32>
    %3 = vector.extract_strided_slice %1 {offsets = [0, 1, 0], sizes = [16, 16, 4], strides = [1, 1, 1]} : vector<18x18x4xf32> to vector<16x16x4xf32>
    %4 = vector.extract_strided_slice %1 {offsets = [0, 2, 0], sizes = [16, 16, 4], strides = [1, 1, 1]} : vector<18x18x4xf32> to vector<16x16x4xf32>
    %5 = tpu.concatenate %2, %3, %4 in 2 : vector<16x16x4xf32>, vector<16x16x4xf32>, vector<16x16x4xf32> -> vector<16x16x12xf32>
    %c0_3 = arith.constant 0 : index
    %c0_4 = arith.constant 0 : index
    %c0_5 = arith.constant 0 : index
    %6 = vector.load %arg2[%c0_3, %c0_4, %c0_5] : memref<3x12x8xf32, #tpu.memory_space<vmem>>, vector<1x12x8xf32>
    %7 = vector.shape_cast %6 : vector<1x12x8xf32> to vector<12x8xf32>
    "tpu.trace_start"() <{level = 10 : i32, message = "hwk,ko->hwo"}> : () -> ()
    %cst = arith.constant dense<0.000000e+00> : vector<16x16x8xf32>
    %8 = tpu.matmul %5, %7, %cst {dimension_numbers = #tpu.dot_dimension_numbers<[2], [0], [0, 1], [1], [0, 0, 0, 1, 1, 1], [], []>} : vector<16x16x12xf32>, vector<12x8xf32>, vector<16x16x8xf32> -> vector<16x16x8xf32>
    "tpu.trace_stop"() : () -> ()
    %9 = vector.extract_strided_slice %1 {offsets = [1, 0, 0], sizes = [16, 16, 4], strides = [1, 1, 1]} : vector<18x18x4xf32> to vector<16x16x4xf32>
    %10 = vector.extract_strided_slice %1 {offsets = [1, 1, 0], sizes = [16, 16, 4], strides = [1, 1, 1]} : vector<18x18x4xf32> to vector<16x16x4xf32>
    %11 = vector.extract_strided_slice %1 {offsets = [1, 2, 0], sizes = [16, 16, 4], strides = [1, 1, 1]} : vector<18x18x4xf32> to vector<16x16x4xf32>
    %12 = tpu.concatenate %9, %10, %11 in 2 : vector<16x16x4xf32>, vector<16x16x4xf32>, vector<16x16x4xf32> -> vector<16x16x12xf32>
    %c1 = arith.constant 1 : index
    %c0_6 = arith.constant 0 : index
    %c0_7 = arith.constant 0 : index
    %13 = vector.load %arg2[%c1, %c0_6, %c0_7] : memref<3x12x8xf32, #tpu.memory_space<vmem>>, vector<1x12x8xf32>
    %14 = vector.shape_cast %13 : vector<1x12x8xf32> to vector<12x8xf32>
    "tpu.trace_start"() <{level = 10 : i32, message = "hwk,ko->hwo"}> : () -> ()
    %cst_8 = arith.constant dense<0.000000e+00> : vector<16x16x8xf32>
    %15 = tpu.matmul %12, %14, %cst_8 {dimension_numbers = #tpu.dot_dimension_numbers<[2], [0], [0, 1], [1], [0, 0, 0, 1, 1, 1], [], []>} : vector<16x16x12xf32>, vector<12x8xf32>, vector<16x16x8xf32> -> vector<16x16x8xf32>
    "tpu.trace_stop"() : () -> ()
    %16 = arith.addf %8, %15 : vector<16x16x8xf32>
    %17 = vector.extract_strided_slice %1 {offsets = [2, 0, 0], sizes = [16, 16, 4], strides = [1, 1, 1]} : vector<18x18x4xf32> to vector<16x16x4xf32>
    %18 = vector.extract_strided_slice %1 {offsets = [2, 1, 0], sizes = [16, 16, 4], strides = [1, 1, 1]} : vector<18x18x4xf32> to vector<16x16x4xf32>
    %19 = vector.extract_strided_slice %1 {offsets = [2, 2, 0], sizes = [16, 16, 4], strides = [1, 1, 1]} : vector<18x18x4xf32> to vector<16x16x4xf32>
    %20 = tpu.concatenate %17, %18, %19 in 2 : vector<16x16x4xf32>, vector<16x16x4xf32>, vector<16x16x4xf32> -> vector<16x16x12xf32>
    %c2 = arith.constant 2 : index
    %c0_9 = arith.constant 0 : index
    %c0_10 = arith.constant 0 : index
    %21 = vector.load %arg2[%c2, %c0_9, %c0_10] : memref<3x12x8xf32, #tpu.memory_space<vmem>>, vector<1x12x8xf32>
    %22 = vector.shape_cast %21 : vector<1x12x8xf32> to vector<12x8xf32>
    "tpu.trace_start"() <{level = 10 : i32, message = "hwk,ko->hwo"}> : () -> ()
    %cst_11 = arith.constant dense<0.000000e+00> : vector<16x16x8xf32>
    %23 = tpu.matmul %20, %22, %cst_11 {dimension_numbers = #tpu.dot_dimension_numbers<[2], [0], [0, 1], [1], [0, 0, 0, 1, 1, 1], [], []>} : vector<16x16x12xf32>, vector<12x8xf32>, vector<16x16x8xf32> -> vector<16x16x8xf32>
    "tpu.trace_stop"() : () -> ()
    %24 = arith.addf %16, %23 : vector<16x16x8xf32>
    %c0_12 = arith.constant 0 : index
    %c0_13 = arith.constant 0 : index
    %25 = vector.load %arg3[%c0_12, %c0_13] : memref<1x8xf32, #tpu.memory_space<vmem>>, vector<1x8xf32>
    %26 = vector.shape_cast %25 : vector<1x8xf32> to vector<8xf32>
    %27 = vector.shape_cast %26 : vector<8xf32> to vector<1x1x8xf32>
    %28 = vector.broadcast %27 : vector<1x1x8xf32> to vector<16x16x8xf32>
    %29 = arith.addf %24, %28 : vector<16x16x8xf32>
    %cst_14 = arith.constant 0.000000e+00 : f32
    %30 = vector.broadcast %cst_14 : f32 to vector<16x16x8xf32>
    %31 = arith.maximumf %29, %30 : vector<16x16x8xf32>
    %cst_15 = arith.constant 0.000000e+00 : f32
    %32 = vector.broadcast %cst_15 : f32 to vector<16x1x8xf32>
    %cst_16 = arith.constant 0.000000e+00 : f32
    %33 = vector.broadcast %cst_16 : f32 to vector<1x18x8xf32>
    %34 = tpu.concatenate %32, %31, %32 in 1 : vector<16x1x8xf32>, vector<16x16x8xf32>, vector<16x1x8xf32> -> vector<16x18x8xf32>
    %35 = tpu.concatenate %33, %34, %33 in 0 : vector<1x18x8xf32>, vector<16x18x8xf32>, vector<1x18x8xf32> -> vector<18x18x8xf32>
    %36 = vector.extract_strided_slice %35 {offsets = [0, 0, 0], sizes = [16, 16, 8], strides = [1, 1, 1]} : vector<18x18x8xf32> to vector<16x16x8xf32>
    %37 = vector.extract_strided_slice %35 {offsets = [0, 1, 0], sizes = [16, 16, 8], strides = [1, 1, 1]} : vector<18x18x8xf32> to vector<16x16x8xf32>
    %38 = vector.extract_strided_slice %35 {offsets = [0, 2, 0], sizes = [16, 16, 8], strides = [1, 1, 1]} : vector<18x18x8xf32> to vector<16x16x8xf32>
    %39 = tpu.concatenate %36, %37, %38 in 2 : vector<16x16x8xf32>, vector<16x16x8xf32>, vector<16x16x8xf32> -> vector<16x16x24xf32>
    %c0_17 = arith.constant 0 : index
    %c0_18 = arith.constant 0 : index
    %c0_19 = arith.constant 0 : index
    %40 = vector.load %arg4[%c0_17, %c0_18, %c0_19] : memref<3x24x8xf32, #tpu.memory_space<vmem>>, vector<1x24x8xf32>
    %41 = vector.shape_cast %40 : vector<1x24x8xf32> to vector<24x8xf32>
    "tpu.trace_start"() <{level = 10 : i32, message = "hwk,ko->hwo"}> : () -> ()
    %cst_20 = arith.constant dense<0.000000e+00> : vector<16x16x8xf32>
    %42 = tpu.matmul %39, %41, %cst_20 {dimension_numbers = #tpu.dot_dimension_numbers<[2], [0], [0, 1], [1], [0, 0, 0, 1, 1, 1], [], []>} : vector<16x16x24xf32>, vector<24x8xf32>, vector<16x16x8xf32> -> vector<16x16x8xf32>
    "tpu.trace_stop"() : () -> ()
    %43 = vector.extract_strided_slice %35 {offsets = [1, 0, 0], sizes = [16, 16, 8], strides = [1, 1, 1]} : vector<18x18x8xf32> to vector<16x16x8xf32>
    %44 = vector.extract_strided_slice %35 {offsets = [1, 1, 0], sizes = [16, 16, 8], strides = [1, 1, 1]} : vector<18x18x8xf32> to vector<16x16x8xf32>
    %45 = vector.extract_strided_slice %35 {offsets = [1, 2, 0], sizes = [16, 16, 8], strides = [1, 1, 1]} : vector<18x18x8xf32> to vector<16x16x8xf32>
    %46 = tpu.concatenate %43, %44, %45 in 2 : vector<16x16x8xf32>, vector<16x16x8xf32>, vector<16x16x8xf32> -> vector<16x16x24xf32>
    %c1_21 = arith.constant 1 : index
    %c0_22 = arith.constant 0 : index
    %c0_23 = arith.constant 0 : index
    %47 = vector.load %arg4[%c1_21, %c0_22, %c0_23] : memref<3x24x8xf32, #tpu.memory_space<vmem>>, vector<1x24x8xf32>
    %48 = vector.shape_cast %47 : vector<1x24x8xf32> to vector<24x8xf32>
    "tpu.trace_start"() <{level = 10 : i32, message = "hwk,ko->hwo"}> : () -> ()
    %cst_24 = arith.constant dense<0.000000e+00> : vector<16x16x8xf32>
    %49 = tpu.matmul %46, %48, %cst_24 {dimension_numbers = #tpu.dot_dimension_numbers<[2], [0], [0, 1], [1], [0, 0, 0, 1, 1, 1], [], []>} : vector<16x16x24xf32>, vector<24x8xf32>, vector<16x16x8xf32> -> vector<16x16x8xf32>
    "tpu.trace_stop"() : () -> ()
    %50 = arith.addf %42, %49 : vector<16x16x8xf32>
    %51 = vector.extract_strided_slice %35 {offsets = [2, 0, 0], sizes = [16, 16, 8], strides = [1, 1, 1]} : vector<18x18x8xf32> to vector<16x16x8xf32>
    %52 = vector.extract_strided_slice %35 {offsets = [2, 1, 0], sizes = [16, 16, 8], strides = [1, 1, 1]} : vector<18x18x8xf32> to vector<16x16x8xf32>
    %53 = vector.extract_strided_slice %35 {offsets = [2, 2, 0], sizes = [16, 16, 8], strides = [1, 1, 1]} : vector<18x18x8xf32> to vector<16x16x8xf32>
    %54 = tpu.concatenate %51, %52, %53 in 2 : vector<16x16x8xf32>, vector<16x16x8xf32>, vector<16x16x8xf32> -> vector<16x16x24xf32>
    %c2_25 = arith.constant 2 : index
    %c0_26 = arith.constant 0 : index
    %c0_27 = arith.constant 0 : index
    %55 = vector.load %arg4[%c2_25, %c0_26, %c0_27] : memref<3x24x8xf32, #tpu.memory_space<vmem>>, vector<1x24x8xf32>
    %56 = vector.shape_cast %55 : vector<1x24x8xf32> to vector<24x8xf32>
    "tpu.trace_start"() <{level = 10 : i32, message = "hwk,ko->hwo"}> : () -> ()
    %cst_28 = arith.constant dense<0.000000e+00> : vector<16x16x8xf32>
    %57 = tpu.matmul %54, %56, %cst_28 {dimension_numbers = #tpu.dot_dimension_numbers<[2], [0], [0, 1], [1], [0, 0, 0, 1, 1, 1], [], []>} : vector<16x16x24xf32>, vector<24x8xf32>, vector<16x16x8xf32> -> vector<16x16x8xf32>
    "tpu.trace_stop"() : () -> ()
    %58 = arith.addf %50, %57 : vector<16x16x8xf32>
    %c0_29 = arith.constant 0 : index
    %c0_30 = arith.constant 0 : index
    %59 = vector.load %arg5[%c0_29, %c0_30] : memref<1x8xf32, #tpu.memory_space<vmem>>, vector<1x8xf32>
    %60 = vector.shape_cast %59 : vector<1x8xf32> to vector<8xf32>
    %61 = vector.shape_cast %60 : vector<8xf32> to vector<1x1x8xf32>
    %62 = vector.broadcast %61 : vector<1x1x8xf32> to vector<16x16x8xf32>
    %63 = arith.addf %58, %62 : vector<16x16x8xf32>
    %64 = vector.extract_strided_slice %1 {offsets = [1, 1, 0], sizes = [16, 16, 4], strides = [1, 1, 1]} : vector<18x18x4xf32> to vector<16x16x4xf32>
    %c0_31 = arith.constant 0 : index
    %c0_32 = arith.constant 0 : index
    %65 = vector.load %arg6[%c0_31, %c0_32] : memref<4x8xf32, #tpu.memory_space<vmem>>, vector<4x8xf32>
    "tpu.trace_start"() <{level = 10 : i32, message = "hwi,io->hwo"}> : () -> ()
    %cst_33 = arith.constant dense<0.000000e+00> : vector<16x16x8xf32>
    %66 = tpu.matmul %64, %65, %cst_33 {dimension_numbers = #tpu.dot_dimension_numbers<[2], [0], [0, 1], [1], [0, 0, 0, 1, 1, 1], [], []>} : vector<16x16x4xf32>, vector<4x8xf32>, vector<16x16x8xf32> -> vector<16x16x8xf32>
    "tpu.trace_stop"() : () -> ()
    %c0_34 = arith.constant 0 : index
    %c0_35 = arith.constant 0 : index
    %67 = vector.load %arg7[%c0_34, %c0_35] : memref<1x8xf32, #tpu.memory_space<vmem>>, vector<1x8xf32>
    %68 = vector.shape_cast %67 : vector<1x8xf32> to vector<8xf32>
    %69 = vector.shape_cast %68 : vector<8xf32> to vector<1x1x8xf32>
    %70 = vector.broadcast %69 : vector<1x1x8xf32> to vector<16x16x8xf32>
    %71 = arith.addf %66, %70 : vector<16x16x8xf32>
    %72 = arith.addf %63, %71 : vector<16x16x8xf32>
    %cst_36 = arith.constant 0.000000e+00 : f32
    %73 = vector.broadcast %cst_36 : f32 to vector<16x16x8xf32>
    %74 = arith.maximumf %72, %73 : vector<16x16x8xf32>
    %c0_37 = arith.constant 0 : index
    %c0_38 = arith.constant 0 : index
    %c0_39 = arith.constant 0 : index
    %c0_40 = arith.constant 0 : index
    %75 = vector.load %arg8[%c0_37, %c0_38, %c0_39, %c0_40] : memref<1x16x16x8xf32, #tpu.memory_space<vmem>>, vector<1x16x16x8xf32>
    %76 = vector.shape_cast %75 : vector<1x16x16x8xf32> to vector<16x16x8xf32>
    %77 = vector.shape_cast %74 : vector<16x16x8xf32> to vector<1x16x16x8xf32>
    tpu.vector_store %arg8[%c0_37, %c0_38, %c0_39, %c0_40], %77 {strides = array<i32>} : memref<1x16x16x8xf32, #tpu.memory_space<vmem>>, vector<1x16x16x8xf32>,
    return
  }
  func.func @transform_0(%arg0: i32) -> (i32, i32, i32, i32) {
    %c0_i32 = arith.constant 0 : i32
    %c0_i32_0 = arith.constant 0 : i32
    %c0_i32_1 = arith.constant 0 : i32
    %c0_i32_2 = arith.constant 0 : i32
    return %arg0, %c0_i32, %c0_i32_0, %c0_i32_1 : i32, i32, i32, i32
  }
  func.func @transform_1(%arg0: i32) -> (i32, i32, i32) {
    %c0_i32 = arith.constant 0 : i32
    %c0_i32_0 = arith.constant 0 : i32
    %c0_i32_1 = arith.constant 0 : i32
    %c0_i32_2 = arith.constant 0 : i32
    return %c0_i32, %c0_i32_0, %c0_i32_1 : i32, i32, i32
  }
  func.func @transform_2(%arg0: i32) -> (i32, i32) {
    %c0_i32 = arith.constant 0 : i32
    %c0_i32_0 = arith.constant 0 : i32
    %c0_i32_1 = arith.constant 0 : i32
    return %c0_i32, %c0_i32_0 : i32, i32
  }
  func.func @transform_3(%arg0: i32) -> (i32, i32, i32) {
    %c0_i32 = arith.constant 0 : i32
    %c0_i32_0 = arith.constant 0 : i32
    %c0_i32_1 = arith.constant 0 : i32
    %c0_i32_2 = arith.constant 0 : i32
    return %c0_i32, %c0_i32_0, %c0_i32_1 : i32, i32, i32
  }
  func.func @transform_4(%arg0: i32) -> (i32, i32) {
    %c0_i32 = arith.constant 0 : i32
    %c0_i32_0 = arith.constant 0 : i32
    %c0_i32_1 = arith.constant 0 : i32
    return %c0_i32, %c0_i32_0 : i32, i32
  }
  func.func @transform_5(%arg0: i32) -> (i32, i32) {
    %c0_i32 = arith.constant 0 : i32
    %c0_i32_0 = arith.constant 0 : i32
    %c0_i32_1 = arith.constant 0 : i32
    return %c0_i32, %c0_i32_0 : i32, i32
  }
  func.func @transform_6(%arg0: i32) -> (i32, i32) {
    %c0_i32 = arith.constant 0 : i32
    %c0_i32_0 = arith.constant 0 : i32
    %c0_i32_1 = arith.constant 0 : i32
    return %c0_i32, %c0_i32_0 : i32, i32
  }
  func.func @transform_7(%arg0: i32) -> (i32, i32, i32, i32) {
    %c0_i32 = arith.constant 0 : i32
    %c0_i32_0 = arith.constant 0 : i32
    %c0_i32_1 = arith.constant 0 : i32
    %c0_i32_2 = arith.constant 0 : i32
    return %arg0, %c0_i32, %c0_i32_0, %c0_i32_1 : i32, i32, i32, i32
  }
}

</mosaic_0001>

<llo_original>
// kernel: _basic_block_impl.1
$region0: #{_basic_block_impl.1}
  #allocation0 [shape = 'u32[]', space=smem, size = 0x4, offset = 0x4, fixed_abs, tag = 'smem constant byte address 0x4 - core index']
  #allocation1 [shape = 'u32[144,128]{1,0:T(1,128)}', space=vmem, size = 0x12000, scoped, tag = 'internal scratch']
  %s0 = inlined_call_operand.vmem [shape: f32[2,18,18,4], index: 0, kind: input, shape index: {}]
  %s1 = inlined_call_operand.vmem [shape: f32[3,12,8], index: 1, kind: input, shape index: {}]
  %s2 = inlined_call_operand.vmem [shape: f32[1,8], index: 2, kind: input, shape index: {}]
  %s3 = inlined_call_operand.vmem [shape: f32[3,24,8], index: 3, kind: input, shape index: {}]
  %s4 = inlined_call_operand.vmem [shape: f32[1,8], index: 4, kind: input, shape index: {}]
  %s5 = inlined_call_operand.vmem [shape: f32[4,8], index: 5, kind: input, shape index: {}]
  %s6 = inlined_call_operand.vmem [shape: f32[1,8], index: 6, kind: input, shape index: {}]
  %s7 = inlined_call_operand.vmem [shape: f32[2,16,128], index: 7, kind: output, shape index: {}]
  %s8 = sld [smem:[#allocation0]]
  $region61: #{_basic_block_impl.1} parent=0
    _
  %s10 = ssub.s32 1, %s8
  %s11 = scalar_select 0, %s10, %s8
  loop: start=0, step=1, limit=4
  $region2: #{_basic_block_impl.1} parent=0 // loop_pre_header
    _
  $region3: #{_basic_block_impl.1} parent=0 // loop_header
    %s13 = sphi 0, %s17
    %p14 = scmp.ge.s32.totalorder %s13, 4
    %s23 = sphi 0, %s25
    %s26 = sphi 0, %s23
    %s27 = sphi 0, %s26
    %s43 = sphi 0, %s27
    %s47 = sphi 0, %s47
    %s49 = sphi 0, %s47
    %s50 = sphi 0, %s49
    %s64 = sphi 0, %s50
    %s68 = sphi 0, %s68
    %s70 = sphi 0, %s68
    %s71 = sphi 0, %s70
    %s85 = sphi 0, %s71
    %s89 = sphi 0, %s89
    %s91 = sphi 0, %s89
    %s92 = sphi 0, %s91
    %s106 = sphi 0, %s92
    %s110 = sphi 0, %s110
    %s112 = sphi 0, %s110
    %s113 = sphi 0, %s112
    %s127 = sphi 0, %s113
    %s131 = sphi 0, %s131
    %s133 = sphi 0, %s131
    %s134 = sphi 0, %s133
    %s148 = sphi 0, %s134
    %s152 = sphi 0, %s152
    %s154 = sphi 0, %s152
    %s155 = sphi 0, %s154
    %s169 = sphi 0, %s155
    %s175 = sphi 0, %s177
    %s178 = sphi 0, %s175
    %s179 = sphi 0, %s178
    %s195 = sphi 0, %s179
  $region4: #{_basic_block_impl.1} parent=0 // loop_header_branch
    %16 = sbr.rel (%p14) target = $region8
  $region5: #{_basic_block_impl.1} parent=0 // loop_body
    %s18 = ssub.s32 %s13, 1
    %s19 = ssub.s32 %s13, 2
    %s20 = sadd.s32 %s13, 1
    %s21 = ssub.s32 %s13, %s20
    %p22 = scmp.eq.s32.totalorder %s21, 0
    %s24 = sadd.s32 %s23, 1
    %s25 = scalar_select %p22, %s23, %s24
    %p28 = pneg %p22
    %p29 = scmp.eq.s32.totalorder %s13, 1
    %p30 = por %p28, %p29
    %p31 = scmp.ne.s32.totalorder %s23, %s26
    %p32 = scmp.eq.s32.totalorder %s13, 0
    %p33 = por %p31, %p32
    %p34 = scmp.ne.s32.totalorder %s23, %s26
    %p35 = scmp.eq.s32.totalorder %s18, 1
    %p36 = por %p34, %p35
    %p37 = scmp.ne.s32.totalorder %s26, %s27
    %p38 = scmp.eq.s32.totalorder %s18, 0
    %p39 = por %p37, %p38
    %p40 = scmp.ne.s32.totalorder %s26, %s27
    %p41 = scmp.eq.s32.totalorder %s19, 1
    %p42 = por %p40, %p41
    %p44 = scmp.ne.s32.totalorder %s27, %s43
    %p45 = scmp.eq.s32.totalorder %s19, 0
    %p46 = por %p44, %p45
    %s48 = sadd.s32 %s47, 1
    %p51 = scmp.eq.s32.totalorder %s13, 1
    %p52 = scmp.ne.s32.totalorder %s47, %s49
    %p53 = scmp.eq.s32.totalorder %s13, 0
    %p54 = por %p52, %p53
    %p55 = scmp.ne.s32.totalorder %s47, %s49
    %p56 = scmp.eq.s32.totalorder %s18, 1
    %p57 = por %p55, %p56
    %p58 = scmp.ne.s32.totalorder %s49, %s50
    %p59 = scmp.eq.s32.totalorder %s18, 0
    %p60 = por %p58, %p59
    %p61 = scmp.ne.s32.totalorder %s49, %s50
    %p62 = scmp.eq.s32.totalorder %s19, 1
    %p63 = por %p61, %p62
    %p65 = scmp.ne.s32.totalorder %s50, %s64
    %p66 = scmp.eq.s32.totalorder %s19, 0
    %p67 = por %p65, %p66
    %s69 = sadd.s32 %s68, 1
    %p72 = scmp.eq.s32.totalorder %s13, 1
    %p73 = scmp.ne.s32.totalorder %s68, %s70
    %p74 = scmp.eq.s32.totalorder %s13, 0
    %p75 = por %p73, %p74
    %p76 = scmp.ne.s32.totalorder %s68, %s70
    %p77 = scmp.eq.s32.totalorder %s18, 1
    %p78 = por %p76, %p77
    %p79 = scmp.ne.s32.totalorder %s70, %s71
    %p80 = scmp.eq.s32.totalorder %s18, 0
    %p81 = por %p79, %p80
    %p82 = scmp.ne.s32.totalorder %s70, %s71
    %p83 = scmp.eq.s32.totalorder %s19, 1
    %p84 = por %p82, %p83
    %p86 = scmp.ne.s32.totalorder %s71, %s85
    %p87 = scmp.eq.s32.totalorder %s19, 0
    %p88 = por %p86, %p87
    %s90 = sadd.s32 %s89, 1
    %p93 = scmp.eq.s32.totalorder %s13, 1
    %p94 = scmp.ne.s32.totalorder %s89, %s91
    %p95 = scmp.eq.s32.totalorder %s13, 0
    %p96 = por %p94, %p95
    %p97 = scmp.ne.s32.totalorder %s89, %s91
    %p98 = scmp.eq.s32.totalorder %s18, 1
    %p99 = por %p97, %p98
    %p100 = scmp.ne.s32.totalorder %s91, %s92
    %p101 = scmp.eq.s32.totalorder %s18, 0
    %p102 = por %p100, %p101
    %p103 = scmp.ne.s32.totalorder %s91, %s92
    %p104 = scmp.eq.s32.totalorder %s19, 1
    %p105 = por %p103, %p104
    %p107 = scmp.ne.s32.totalorder %s92, %s106
    %p108 = scmp.eq.s32.totalorder %s19, 0
    %p109 = por %p107, %p108
    %s111 = sadd.s32 %s110, 1
    %p114 = scmp.eq.s32.totalorder %s13, 1
    %p115 = scmp.ne.s32.totalorder %s110, %s112
    %p116 = scmp.eq.s32.totalorder %s13, 0
    %p117 = por %p115, %p116
    %p118 = scmp.ne.s32.totalorder %s110, %s112
    %p119 = scmp.eq.s32.totalorder %s18, 1
    %p120 = por %p118, %p119
    %p121 = scmp.ne.s32.totalorder %s112, %s113
    %p122 = scmp.eq.s32.totalorder %s18, 0
    %p123 = por %p121, %p122
    %p124 = scmp.ne.s32.totalorder %s112, %s113
    %p125 = scmp.eq.s32.totalorder %s19, 1
    %p126 = por %p124, %p125
    %p128 = scmp.ne.s32.totalorder %s113, %s127
    %p129 = scmp.eq.s32.totalorder %s19, 0
    %p130 = por %p128, %p129
    %s132 = sadd.s32 %s131, 1
    %p135 = scmp.eq.s32.totalorder %s13, 1
    %p136 = scmp.ne.s32.totalorder %s131, %s133
    %p137 = scmp.eq.s32.totalorder %s13, 0
    %p138 = por %p136, %p137
    %p139 = scmp.ne.s32.totalorder %s131, %s133
    %p140 = scmp.eq.s32.totalorder %s18, 1
    %p141 = por %p139, %p140
    %p142 = scmp.ne.s32.totalorder %s133, %s134
    %p143 = scmp.eq.s32.totalorder %s18, 0
    %p144 = por %p142, %p143
    %p145 = scmp.ne.s32.totalorder %s133, %s134
    %p146 = scmp.eq.s32.totalorder %s19, 1
    %p147 = por %p145, %p146
    %p149 = scmp.ne.s32.totalorder %s134, %s148
    %p150 = scmp.eq.s32.totalorder %s19, 0
    %p151 = por %p149, %p150
    %s153 = sadd.s32 %s152, 1
    %p156 = scmp.eq.s32.totalorder %s13, 1
    %p157 = scmp.ne.s32.totalorder %s152, %s154
    %p158 = scmp.eq.s32.totalorder %s13, 0
    %p159 = por %p157, %p158
    %p160 = scmp.ne.s32.totalorder %s152, %s154
    %p161 = scmp.eq.s32.totalorder %s18, 1
    %p162 = por %p160, %p161
    %p163 = scmp.ne.s32.totalorder %s154, %s155
    %p164 = scmp.eq.s32.totalorder %s18, 0
    %p165 = por %p163, %p164
    %p166 = scmp.ne.s32.totalorder %s154, %s155
    %p167 = scmp.eq.s32.totalorder %s19, 1
    %p168 = por %p166, %p167
    %p170 = scmp.ne.s32.totalorder %s155, %s169
    %p171 = scmp.eq.s32.totalorder %s19, 0
    %p172 = por %p170, %p171
    %s173 = ssub.s32 %s13, %s20
    %p174 = scmp.eq.s32.totalorder %s173, 0
    %s176 = sadd.s32 %s175, 1
    %s177 = scalar_select %p174, %s175, %s176
    %p180 = pneg %p174
    %p181 = scmp.eq.s32.totalorder %s13, 1
    %p182 = por %p180, %p181
    %p183 = scmp.ne.s32.totalorder %s175, %s178
    %p184 = scmp.eq.s32.totalorder %s13, 0
    %p185 = por %p183, %p184
    %p186 = scmp.ne.s32.totalorder %s175, %s178
    %p187 = scmp.eq.s32.totalorder %s18, 1
    %p188 = por %p186, %p187
    %p189 = scmp.ne.s32.totalorder %s178, %s179
    %p190 = scmp.eq.s32.totalorder %s18, 0
    %p191 = por %p189, %p190
    %p192 = scmp.ne.s32.totalorder %s178, %s179
    %p193 = scmp.eq.s32.totalorder %s19, 1
    %p194 = por %p192, %p193
    %p196 = scmp.ne.s32.totalorder %s179, %s195
    %p197 = scmp.eq.s32.totalorder %s19, 0
    %p198 = por %p196, %p197
    %p199 = scmp.le.s32.totalorder 1, %s13
    %p200 = scmp.lt.s32.totalorder %s13, 3
    %p201 = pnand %p199, %p200
    %p202 = pneg %p201
    // Predicated region
    $region9: #{_basic_block_impl.1} parent=5 // pred_check
      _
    $region10: #{_basic_block_impl.1} parent=5 // pred_check_branch
      %204 = sbr.rel (%p201) target = $region12
    $region11: #{_basic_block_impl.1} parent=5 // pred_region
      %s205 = ssub.s32 %s13, 1
      // Predicated region
      $region13: #{_basic_block_impl.1} parent=11 // pred_check
        %p206 = pneg %p60
      $region14: #{_basic_block_impl.1} parent=11 // pred_check_branch
        %208 = sbr.rel (%p206) target = $region16
      $region15: #{_basic_block_impl.1} parent=11 // pred_region
        _
      $region16: #{_basic_block_impl.1} parent=11 // pred_fallthru
        _
      // Predicated region
      $region17: #{_basic_block_impl.1} parent=11 // pred_check
        %p209 = pneg %p81
      $region18: #{_basic_block_impl.1} parent=11 // pred_check_branch
        %211 = sbr.rel (%p209) target = $region20
      $region19: #{_basic_block_impl.1} parent=11 // pred_region
        _
      $region20: #{_basic_block_impl.1} parent=11 // pred_fallthru
        _
      // Predicated region
      $region21: #{_basic_block_impl.1} parent=11 // pred_check
        %p212 = pneg %p102
      $region22: #{_basic_block_impl.1} parent=11 // pred_check_branch
        %214 = sbr.rel (%p212) target = $region24
      $region23: #{_basic_block_impl.1} parent=11 // pred_region
        _
      $region24: #{_basic_block_impl.1} parent=11 // pred_fallthru
        _
      // Predicated region
      $region25: #{_basic_block_impl.1} parent=11 // pred_check
        %p215 = pneg %p123
      $region26: #{_basic_block_impl.1} parent=11 // pred_check_branch
        %217 = sbr.rel (%p215) target = $region28
      $region27: #{_basic_block_impl.1} parent=11 // pred_region
        _
      $region28: #{_basic_block_impl.1} parent=11 // pred_fallthru
        _
      // Predicated region
      $region29: #{_basic_block_impl.1} parent=11 // pred_check
        %p218 = pneg %p144
      $region30: #{_basic_block_impl.1} parent=11 // pred_check_branch
        %220 = sbr.rel (%p218) target = $region32
      $region31: #{_basic_block_impl.1} parent=11 // pred_region
        _
      $region32: #{_basic_block_impl.1} parent=11 // pred_fallthru
        _
      // Predicated region
      $region33: #{_basic_block_impl.1} parent=11 // pred_check
        %p221 = pneg %p165
      $region34: #{_basic_block_impl.1} parent=11 // pred_check_branch
        %223 = sbr.rel (%p221) target = $region36
      $region35: #{_basic_block_impl.1} parent=11 // pred_region
        _
      $region36: #{_basic_block_impl.1} parent=11 // pred_fallthru
        _
    $region12: #{_basic_block_impl.1} parent=5 // pred_fallthru
      _
    %p224 = scmp.lt.s32.totalorder %s13, 2
    // Predicated region
    $region37: #{_basic_block_impl.1} parent=5 // pred_check
      %p225 = pneg %p224
    $region38: #{_basic_block_impl.1} parent=5 // pred_check_branch
      %227 = sbr.rel (%p225) target = $region40
    $region39: #{_basic_block_impl.1} parent=5 // pred_region
      // Predicated region
      $region41: #{_basic_block_impl.1} parent=39 // pred_check
        %p228 = pneg %p33
      $region42: #{_basic_block_impl.1} parent=39 // pred_check_branch
        %230 = sbr.rel (%p228) target = $region44
      $region43: #{_basic_block_impl.1} parent=39 // pred_region
        %p231 = scmp.lt.s32.totalorder %s13, 1
        %s232 = scalar_select %p231, %s13, 1
        %s233 = smul.addr %s232, 54
        %s234 = smul.addr %s233, 8
        %s235 = scalar_lea.vmem %s0, %s234
      $region44: #{_basic_block_impl.1} parent=39 // pred_fallthru
        _
    $region40: #{_basic_block_impl.1} parent=5 // pred_fallthru
      _
    %p236 = scmp.le.s32.totalorder 1, %s13
    %p237 = scmp.lt.s32.totalorder %s13, 3
    %p238 = pnand %p236, %p237
    %p239 = pneg %p238
    // Predicated region
    $region45: #{_basic_block_impl.1} parent=5 // pred_check
      _
    $region46: #{_basic_block_impl.1} parent=5 // pred_check_branch
      %241 = sbr.rel (%p238) target = $region48
    $region47: #{_basic_block_impl.1} parent=5 // pred_region
      %s242 = ssub.s32 %s13, 1
      %p243 = scmp.lt.s32.totalorder %s18, 1
      %s244 = scalar_select %p243, %s18, 1
      %s245 = smul.addr %s244, 54
      %s246 = smul.addr %s245, 8
      %s247 = scalar_lea.vmem %s0, %s246
      %p248 = pneg %p39
      %p249 = pneg %p36
      %p250 = pneg %p60
      %p251 = pneg %p57
      %p252 = pneg %p81
      %p253 = pneg %p78
      %p254 = pneg %p102
      %p255 = pneg %p99
      %p256 = pneg %p123
      %p257 = pneg %p120
      %p258 = pneg %p144
      %p259 = pneg %p141
      %p260 = pneg %p165
      %p261 = pneg %p162
      %p262 = pneg %p191
      %p263 = pneg %p188
      %p264 = scmp.lt.s32.totalorder %s18, 1
      %s265 = scalar_select %p264, %s18, 1
      %s266 = smul.addr %s265, 2
      %s267 = smul.addr %s266, 8
      %s268 = scalar_lea.vmem %s7, %s267
      %p269 = scmp.lt.s32.totalorder %s18, 1
      %s270 = scalar_select %p269, %s18, 1
      %s271 = smul.addr %s270, 54
      %s272 = smul.addr %s271, 8
      %s273 = scalar_lea.vmem %s0, %s272
      %p274 = scmp.lt.s32.totalorder %s18, 1
      %s275 = scalar_select %p274, %s18, 1
      %s276 = smul.addr %s275, 2
      %s277 = smul.addr %s276, 8
      %s278 = scalar_lea.vmem %s7, %s277
      %v279 = vld [vmem:[%s273] sm:$0xff]
      %v280 = vld [vmem:[%s273 + $0x8] sm:$0xff]
      %v281 = vld [vmem:[%s273 + $0x10] sm:$0x3]
      %v282 = vld [vmem:[%s273 + $0x18] sm:$0xff]
      %v283 = vld [vmem:[%s273 + $0x20] sm:$0xff]
      %v284 = vld [vmem:[%s273 + $0x28] sm:$0x3]
      %v285 = vld [vmem:[%s273 + $0x30] sm:$0xff]
      %v286 = vld [vmem:[%s273 + $0x38] sm:$0xff]
      %v287 = vld [vmem:[%s273 + $0x40] sm:$0x3]
      %v288 = vld [vmem:[%s273 + $0x48] sm:$0xff]
      %v289 = vld [vmem:[%s273 + $0x50] sm:$0xff]
      %v290 = vld [vmem:[%s273 + $0x58] sm:$0x3]
      %v291 = vld [vmem:[%s273 + $0x60] sm:$0xff]
      %v292 = vld [vmem:[%s273 + $0x68] sm:$0xff]
      %v293 = vld [vmem:[%s273 + $0x70] sm:$0x3]
      %v294 = vld [vmem:[%s273 + $0x78] sm:$0xff]
      %v295 = vld [vmem:[%s273 + $0x80] sm:$0xff]
      %v296 = vld [vmem:[%s273 + $0x88] sm:$0x3]
      %v297 = vld [vmem:[%s273 + $0x90] sm:$0xff]
      %v298 = vld [vmem:[%s273 + $0x98] sm:$0xff]
      %v299 = vld [vmem:[%s273 + $0xa0] sm:$0x3]
      %v300 = vld [vmem:[%s273 + $0xa8] sm:$0xff]
      %v301 = vld [vmem:[%s273 + $0xb0] sm:$0xff]
      %v302 = vld [vmem:[%s273 + $0xb8] sm:$0x3]
      %v303 = vld [vmem:[%s273 + $0xc0] sm:$0xff]
      %v304 = vld [vmem:[%s273 + $0xc8] sm:$0xff]
      %v305 = vld [vmem:[%s273 + $0xd0] sm:$0x3]
      %v306 = vld [vmem:[%s273 + $0xd8] sm:$0xff]
      %v307 = vld [vmem:[%s273 + $0xe0] sm:$0xff]
      %v308 = vld [vmem:[%s273 + $0xe8] sm:$0x3]
      %v309 = vld [vmem:[%s273 + $0xf0] sm:$0xff]
      %v310 = vld [vmem:[%s273 + $0xf8] sm:$0xff]
      %v311 = vld [vmem:[%s273 + $0x100] sm:$0x3]
      %v312 = vld [vmem:[%s273 + $0x108] sm:$0xff]
      %v313 = vld [vmem:[%s273 + $0x110] sm:$0xff]
      %v314 = vld [vmem:[%s273 + $0x118] sm:$0x3]
      %v315 = vld [vmem:[%s273 + $0x120] sm:$0xff]
      %v316 = vld [vmem:[%s273 + $0x128] sm:$0xff]
      %v317 = vld [vmem:[%s273 + $0x130] sm:$0x3]
      %v318 = vld [vmem:[%s273 + $0x138] sm:$0xff]
      %v319 = vld [vmem:[%s273 + $0x140] sm:$0xff]
      %v320 = vld [vmem:[%s273 + $0x148] sm:$0x3]
      %v321 = vld [vmem:[%s273 + $0x150] sm:$0xff]
      %v322 = vld [vmem:[%s273 + $0x158] sm:$0xff]
      %v323 = vld [vmem:[%s273 + $0x160] sm:$0x3]
      %v324 = vld [vmem:[%s273 + $0x168] sm:$0xff]
      %v325 = vld [vmem:[%s273 + $0x170] sm:$0xff]
      %v326 = vld [vmem:[%s273 + $0x178] sm:$0x3]
      %v327 = vld [vmem:[%s273 + $0x180] sm:$0xff]
      %v328 = vld [vmem:[%s273 + $0x188] sm:$0xff]
      %v329 = vld [vmem:[%s273 + $0x190] sm:$0x3]
      %v330 = vld [vmem:[%s273 + $0x198] sm:$0xff]
      %v331 = vld [vmem:[%s273 + $0x1a0] sm:$0xff]
      %v332 = vld [vmem:[%s273 + $0x1a8] sm:$0x3]
      %vm381 = vcmask 1046528
      %v382 = vrot.slane %v279, 1
      %v383 = vrot.slane %v280, 1
      %v384 = vsel %vm381, %v382, %v383
      %v385 = vrot.slane %v281, 1
      %v386 = vsel %vm381, %v383, %v385
      %v387 = vrot.slane %v282, 1
      %v388 = vrot.slane %v283, 1
      %v389 = vsel %vm381, %v387, %v388
      %v390 = vrot.slane %v284, 1
      %v391 = vsel %vm381, %v388, %v390
      %v392 = vrot.slane %v285, 1
      %v393 = vrot.slane %v286, 1
      %v394 = vsel %vm381, %v392, %v393
      %v395 = vrot.slane %v287, 1
      %v396 = vsel %vm381, %v393, %v395
      %v397 = vrot.slane %v288, 1
      %v398 = vrot.slane %v289, 1
      %v399 = vsel %vm381, %v397, %v398
      %v400 = vrot.slane %v290, 1
      %v401 = vsel %vm381, %v398, %v400
      %v402 = vrot.slane %v291, 1
      %v403 = vrot.slane %v292, 1
      %v404 = vsel %vm381, %v402, %v403
      %v405 = vrot.slane %v293, 1
      %v406 = vsel %vm381, %v403, %v405
      %v407 = vrot.slane %v294, 1
      %v408 = vrot.slane %v295, 1
      %v409 = vsel %vm381, %v407, %v408
      %v410 = vrot.slane %v296, 1
      %v411 = vsel %vm381, %v408, %v410
      %v412 = vrot.slane %v297, 1
      %v413 = vrot.slane %v298, 1
      %v414 = vsel %vm381, %v412, %v413
      %v415 = vrot.slane %v299, 1
      %v416 = vsel %vm381, %v413, %v415
      %v417 = vrot.slane %v300, 1
      %v418 = vrot.slane %v301, 1
      %v419 = vsel %vm381, %v417, %v418
      %v420 = vrot.slane %v302, 1
      %v421 = vsel %vm381, %v418, %v420
      %v422 = vrot.slane %v303, 1
      %v423 = vrot.slane %v304, 1
      %v424 = vsel %vm381, %v422, %v423
      %v425 = vrot.slane %v305, 1
      %v426 = vsel %vm381, %v423, %v425
      %v427 = vrot.slane %v306, 1
      %v428 = vrot.slane %v307, 1
      %v429 = vsel %vm381, %v427, %v428
      %v430 = vrot.slane %v308, 1
      %v431 = vsel %vm381, %v428, %v430
      %v432 = vrot.slane %v309, 1
      %v433 = vrot.slane %v310, 1
      %v434 = vsel %vm381, %v432, %v433
      %v435 = vrot.slane %v311, 1
      %v436 = vsel %vm381, %v433, %v435
      %v437 = vrot.slane %v312, 1
      %v438 = vrot.slane %v313, 1
      %v439 = vsel %vm381, %v437, %v438
      %v440 = vrot.slane %v314, 1
      %v441 = vsel %vm381, %v438, %v440
      %v442 = vrot.slane %v315, 1
      %v443 = vrot.slane %v316, 1
      %v444 = vsel %vm381, %v442, %v443
      %v445 = vrot.slane %v317, 1
      %v446 = vsel %vm381, %v443, %v445
      %v447 = vrot.slane %v318, 1
      %v448 = vrot.slane %v319, 1
      %v449 = vsel %vm381, %v447, %v448
      %v450 = vrot.slane %v320, 1
      %v451 = vsel %vm381, %v448, %v450
      %v452 = vrot.slane %v321, 1
      %v453 = vrot.slane %v322, 1
      %v454 = vsel %vm381, %v452, %v453
      %v455 = vrot.slane %v323, 1
      %v456 = vsel %vm381, %v453, %v455
      %v457 = vrot.slane %v324, 1
      %v458 = vrot.slane %v325, 1
      %v459 = vsel %vm381, %v457, %v458
      %v460 = vrot.slane %v326, 1
      %v461 = vsel %vm381, %v458, %v460
      %462 = vrot.lane.b32.xlu0 %v384, 4
      %v463 = vpop.permute.xlu0 %462
      %464 = vrot.lane.b32.xlu0 %v386, 4
      %v465 = vpop.permute.xlu0 %464
      %466 = vrot.lane.b32.xlu0 %v389, 4
      %v467 = vpop.permute.xlu0 %466
      %468 = vrot.lane.b32.xlu0 %v391, 4
      %v469 = vpop.permute.xlu0 %468
      %470 = vrot.lane.b32.xlu0 %v394, 4
      %v471 = vpop.permute.xlu0 %470
      %472 = vrot.lane.b32.xlu0 %v396, 4
      %v473 = vpop.permute.xlu0 %472
      %474 = vrot.lane.b32.xlu0 %v399, 4
      %v475 = vpop.permute.xlu0 %474
      %476 = vrot.lane.b32.xlu0 %v401, 4
      %v477 = vpop.permute.xlu0 %476
      %478 = vrot.lane.b32.xlu0 %v404, 4
      %v479 = vpop.permute.xlu0 %478
      %480 = vrot.lane.b32.xlu0 %v406, 4
      %v481 = vpop.permute.xlu0 %480
      %482 = vrot.lane.b32.xlu0 %v409, 4
      %v483 = vpop.permute.xlu0 %482
      %484 = vrot.lane.b32.xlu0 %v411, 4
      %v485 = vpop.permute.xlu0 %484
      %486 = vrot.lane.b32.xlu0 %v414, 4
      %v487 = vpop.permute.xlu0 %486
      %488 = vrot.lane.b32.xlu0 %v416, 4
      %v489 = vpop.permute.xlu0 %488
      %490 = vrot.lane.b32.xlu0 %v419, 4
      %v491 = vpop.permute.xlu0 %490
      %492 = vrot.lane.b32.xlu0 %v421, 4
      %v493 = vpop.permute.xlu0 %492
      %494 = vrot.lane.b32.xlu0 %v424, 4
      %v495 = vpop.permute.xlu0 %494
      %496 = vrot.lane.b32.xlu0 %v426, 4
      %v497 = vpop.permute.xlu0 %496
      %498 = vrot.lane.b32.xlu0 %v429, 4
      %v499 = vpop.permute.xlu0 %498
      %500 = vrot.lane.b32.xlu0 %v431, 4
      %v501 = vpop.permute.xlu0 %500
      %502 = vrot.lane.b32.xlu0 %v434, 4
      %v503 = vpop.permute.xlu0 %502
      %504 = vrot.lane.b32.xlu0 %v436, 4
      %v505 = vpop.permute.xlu0 %504
      %506 = vrot.lane.b32.xlu0 %v439, 4
      %v507 = vpop.permute.xlu0 %506
      %508 = vrot.lane.b32.xlu0 %v441, 4
      %v509 = vpop.permute.xlu0 %508
      %510 = vrot.lane.b32.xlu0 %v444, 4
      %v511 = vpop.permute.xlu0 %510
      %512 = vrot.lane.b32.xlu0 %v446, 4
      %v513 = vpop.permute.xlu0 %512
      %514 = vrot.lane.b32.xlu0 %v449, 4
      %v515 = vpop.permute.xlu0 %514
      %516 = vrot.lane.b32.xlu0 %v451, 4
      %v517 = vpop.permute.xlu0 %516
      %518 = vrot.lane.b32.xlu0 %v454, 4
      %v519 = vpop.permute.xlu0 %518
      %520 = vrot.lane.b32.xlu0 %v456, 4
      %v521 = vpop.permute.xlu0 %520
      %522 = vrot.lane.b32.xlu0 %v459, 4
      %v523 = vpop.permute.xlu0 %522
      %524 = vrot.lane.b32.xlu0 %v461, 4
      %v525 = vpop.permute.xlu0 %524
      %vm558 = vcmask 1045504
      %v559 = vrot.slane %v279, 2
      %v560 = vrot.slane %v280, 2
      %v561 = vsel %vm558, %v559, %v560
      %v562 = vrot.slane %v281, 2
      %v563 = vsel %vm558, %v560, %v562
      %v564 = vrot.slane %v282, 2
      %v565 = vrot.slane %v283, 2
      %v566 = vsel %vm558, %v564, %v565
      %v567 = vrot.slane %v284, 2
      %v568 = vsel %vm558, %v565, %v567
      %v569 = vrot.slane %v285, 2
      %v570 = vrot.slane %v286, 2
      %v571 = vsel %vm558, %v569, %v570
      %v572 = vrot.slane %v287, 2
      %v573 = vsel %vm558, %v570, %v572
      %v574 = vrot.slane %v288, 2
      %v575 = vrot.slane %v289, 2
      %v576 = vsel %vm558, %v574, %v575
      %v577 = vrot.slane %v290, 2
      %v578 = vsel %vm558, %v575, %v577
      %v579 = vrot.slane %v291, 2
      %v580 = vrot.slane %v292, 2
      %v581 = vsel %vm558, %v579, %v580
      %v582 = vrot.slane %v293, 2
      %v583 = vsel %vm558, %v580, %v582
      %v584 = vrot.slane %v294, 2
      %v585 = vrot.slane %v295, 2
      %v586 = vsel %vm558, %v584, %v585
      %v587 = vrot.slane %v296, 2
      %v588 = vsel %vm558, %v585, %v587
      %v589 = vrot.slane %v297, 2
      %v590 = vrot.slane %v298, 2
      %v591 = vsel %vm558, %v589, %v590
      %v592 = vrot.slane %v299, 2
      %v593 = vsel %vm558, %v590, %v592
      %v594 = vrot.slane %v300, 2
      %v595 = vrot.slane %v301, 2
      %v596 = vsel %vm558, %v594, %v595
      %v597 = vrot.slane %v302, 2
      %v598 = vsel %vm558, %v595, %v597
      %v599 = vrot.slane %v303, 2
      %v600 = vrot.slane %v304, 2
      %v601 = vsel %vm558, %v599, %v600
      %v602 = vrot.slane %v305, 2
      %v603 = vsel %vm558, %v600, %v602
      %v604 = vrot.slane %v306, 2
      %v605 = vrot.slane %v307, 2
      %v606 = vsel %vm558, %v604, %v605
      %v607 = vrot.slane %v308, 2
      %v608 = vsel %vm558, %v605, %v607
      %v609 = vrot.slane %v309, 2
      %v610 = vrot.slane %v310, 2
      %v611 = vsel %vm558, %v609, %v610
      %v612 = vrot.slane %v311, 2
      %v613 = vsel %vm558, %v610, %v612
      %v614 = vrot.slane %v312, 2
      %v615 = vrot.slane %v313, 2
      %v616 = vsel %vm558, %v614, %v615
      %v617 = vrot.slane %v314, 2
      %v618 = vsel %vm558, %v615, %v617
      %v619 = vrot.slane %v315, 2
      %v620 = vrot.slane %v316, 2
      %v621 = vsel %vm558, %v619, %v620
      %v622 = vrot.slane %v317, 2
      %v623 = vsel %vm558, %v620, %v622
      %v624 = vrot.slane %v318, 2
      %v625 = vrot.slane %v319, 2
      %v626 = vsel %vm558, %v624, %v625
      %v627 = vrot.slane %v320, 2
      %v628 = vsel %vm558, %v625, %v627
      %v629 = vrot.slane %v321, 2
      %v630 = vrot.slane %v322, 2
      %v631 = vsel %vm558, %v629, %v630
      %v632 = vrot.slane %v323, 2
      %v633 = vsel %vm558, %v630, %v632
      %v634 = vrot.slane %v324, 2
      %v635 = vrot.slane %v325, 2
      %v636 = vsel %vm558, %v634, %v635
      %v637 = vrot.slane %v326, 2
      %v638 = vsel %vm558, %v635, %v637
      %639 = vrot.lane.b32.xlu0 %v561, 8
      %v640 = vpop.permute.xlu0 %639
      %641 = vrot.lane.b32.xlu0 %v563, 8
      %v642 = vpop.permute.xlu0 %641
      %643 = vrot.lane.b32.xlu0 %v566, 8
      %v644 = vpop.permute.xlu0 %643
      %645 = vrot.lane.b32.xlu0 %v568, 8
      %v646 = vpop.permute.xlu0 %645
      %647 = vrot.lane.b32.xlu0 %v571, 8
      %v648 = vpop.permute.xlu0 %647
      %649 = vrot.lane.b32.xlu0 %v573, 8
      %v650 = vpop.permute.xlu0 %649
      %651 = vrot.lane.b32.xlu0 %v576, 8
      %v652 = vpop.permute.xlu0 %651
      %653 = vrot.lane.b32.xlu0 %v578, 8
      %v654 = vpop.permute.xlu0 %653
      %655 = vrot.lane.b32.xlu0 %v581, 8
      %v656 = vpop.permute.xlu0 %655
      %657 = vrot.lane.b32.xlu0 %v583, 8
      %v658 = vpop.permute.xlu0 %657
      %659 = vrot.lane.b32.xlu0 %v586, 8
      %v660 = vpop.permute.xlu0 %659
      %661 = vrot.lane.b32.xlu0 %v588, 8
      %v662 = vpop.permute.xlu0 %661
      %663 = vrot.lane.b32.xlu0 %v591, 8
      %v664 = vpop.permute.xlu0 %663
      %665 = vrot.lane.b32.xlu0 %v593, 8
      %v666 = vpop.permute.xlu0 %665
      %667 = vrot.lane.b32.xlu0 %v596, 8
      %v668 = vpop.permute.xlu0 %667
      %669 = vrot.lane.b32.xlu0 %v598, 8
      %v670 = vpop.permute.xlu0 %669
      %671 = vrot.lane.b32.xlu0 %v601, 8
      %v672 = vpop.permute.xlu0 %671
      %673 = vrot.lane.b32.xlu0 %v603, 8
      %v674 = vpop.permute.xlu0 %673
      %675 = vrot.lane.b32.xlu0 %v606, 8
      %v676 = vpop.permute.xlu0 %675
      %677 = vrot.lane.b32.xlu0 %v608, 8
      %v678 = vpop.permute.xlu0 %677
      %679 = vrot.lane.b32.xlu0 %v611, 8
      %v680 = vpop.permute.xlu0 %679
      %681 = vrot.lane.b32.xlu0 %v613, 8
      %v682 = vpop.permute.xlu0 %681
      %683 = vrot.lane.b32.xlu0 %v616, 8
      %v684 = vpop.permute.xlu0 %683
      %685 = vrot.lane.b32.xlu0 %v618, 8
      %v686 = vpop.permute.xlu0 %685
      %687 = vrot.lane.b32.xlu0 %v621, 8
      %v688 = vpop.permute.xlu0 %687
      %689 = vrot.lane.b32.xlu0 %v623, 8
      %v690 = vpop.permute.xlu0 %689
      %691 = vrot.lane.b32.xlu0 %v626, 8
      %v692 = vpop.permute.xlu0 %691
      %693 = vrot.lane.b32.xlu0 %v628, 8
      %v694 = vpop.permute.xlu0 %693
      %695 = vrot.lane.b32.xlu0 %v631, 8
      %v696 = vpop.permute.xlu0 %695
      %697 = vrot.lane.b32.xlu0 %v633, 8
      %v698 = vpop.permute.xlu0 %697
      %699 = vrot.lane.b32.xlu0 %v636, 8
      %v700 = vpop.permute.xlu0 %699
      %701 = vrot.lane.b32.xlu0 %v638, 8
      %v702 = vpop.permute.xlu0 %701
      %vm735 = vcmask 31744
      %v736 = vsel %vm735, %v279, %v463
      %v737 = vsel %vm735, %v280, %v465
      %v738 = vsel %vm735, %v282, %v467
      %v739 = vsel %vm735, %v283, %v469
      %v740 = vsel %vm735, %v285, %v471
      %v741 = vsel %vm735, %v286, %v473
      %v742 = vsel %vm735, %v288, %v475
      %v743 = vsel %vm735, %v289, %v477
      %v744 = vsel %vm735, %v291, %v479
      %v745 = vsel %vm735, %v292, %v481
      %v746 = vsel %vm735, %v294, %v483
      %v747 = vsel %vm735, %v295, %v485
      %v748 = vsel %vm735, %v297, %v487
      %v749 = vsel %vm735, %v298, %v489
      %v750 = vsel %vm735, %v300, %v491
      %v751 = vsel %vm735, %v301, %v493
      %v752 = vsel %vm735, %v303, %v495
      %v753 = vsel %vm735, %v304, %v497
      %v754 = vsel %vm735, %v306, %v499
      %v755 = vsel %vm735, %v307, %v501
      %v756 = vsel %vm735, %v309, %v503
      %v757 = vsel %vm735, %v310, %v505
      %v758 = vsel %vm735, %v312, %v507
      %v759 = vsel %vm735, %v313, %v509
      %v760 = vsel %vm735, %v315, %v511
      %v761 = vsel %vm735, %v316, %v513
      %v762 = vsel %vm735, %v318, %v515
      %v763 = vsel %vm735, %v319, %v517
      %v764 = vsel %vm735, %v321, %v519
      %v765 = vsel %vm735, %v322, %v521
      %v766 = vsel %vm735, %v324, %v523
      %v767 = vsel %vm735, %v325, %v525
      %vm768 = vcmask 64512
      %v769 = vsel %vm768, %v736, %v640
      %v770 = vsel %vm768, %v737, %v642
      %v771 = vsel %vm768, %v738, %v644
      %v772 = vsel %vm768, %v739, %v646
      %v773 = vsel %vm768, %v740, %v648
      %v774 = vsel %vm768, %v741, %v650
      %v775 = vsel %vm768, %v742, %v652
      %v776 = vsel %vm768, %v743, %v654
      %v777 = vsel %vm768, %v744, %v656
      %v778 = vsel %vm768, %v745, %v658
      %v779 = vsel %vm768, %v746, %v660
      %v780 = vsel %vm768, %v747, %v662
      %v781 = vsel %vm768, %v748, %v664
      %v782 = vsel %vm768, %v749, %v666
      %v783 = vsel %vm768, %v750, %v668
      %v784 = vsel %vm768, %v751, %v670
      %v785 = vsel %vm768, %v752, %v672
      %v786 = vsel %vm768, %v753, %v674
      %v787 = vsel %vm768, %v754, %v676
      %v788 = vsel %vm768, %v755, %v678
      %v789 = vsel %vm768, %v756, %v680
      %v790 = vsel %vm768, %v757, %v682
      %v791 = vsel %vm768, %v758, %v684
      %v792 = vsel %vm768, %v759, %v686
      %v793 = vsel %vm768, %v760, %v688
      %v794 = vsel %vm768, %v761, %v690
      %v795 = vsel %vm768, %v762, %v692
      %v796 = vsel %vm768, %v763, %v694
      %v797 = vsel %vm768, %v764, %v696
      %v798 = vsel %vm768, %v765, %v698
      %v799 = vsel %vm768, %v766, %v700
      %v800 = vsel %vm768, %v767, %v702
      %v801 = vld [vmem:[%s1] sm:$0xff]
      %v802 = vld [vmem:[%s1 + $0x8] sm:$0xf]
      %v806 = vrot.slane %v327, 1
      %v807 = vrot.slane %v328, 1
      %v808 = vsel %vm381, %v806, %v807
      %v809 = vrot.slane %v329, 1
      %v810 = vsel %vm381, %v807, %v809
      %811 = vrot.lane.b32.xlu0 %v808, 4
      %v812 = vpop.permute.xlu0 %811
      %813 = vrot.lane.b32.xlu0 %v810, 4
      %v814 = vpop.permute.xlu0 %813
      %v817 = vrot.slane %v327, 2
      %v818 = vrot.slane %v328, 2
      %v819 = vsel %vm558, %v817, %v818
      %v820 = vrot.slane %v329, 2
      %v821 = vsel %vm558, %v818, %v820
      %822 = vrot.lane.b32.xlu0 %v819, 8
      %v823 = vpop.permute.xlu0 %822
      %824 = vrot.lane.b32.xlu0 %v821, 8
      %v825 = vpop.permute.xlu0 %824
      %v828 = vsel %vm735, %v327, %v812
      %v829 = vsel %vm735, %v328, %v814
      %v830 = vsel %vm768, %v828, %v823
      %v831 = vsel %vm768, %v829, %v825
      %s832 = scalar_lea.vmem %s1, 16
      %v833 = vld [vmem:[%s832] sm:$0xff]
      %v834 = vld [vmem:[%s832 + $0x8] sm:$0xf]
      %vm835 = vcmask 97280
      %v837 = vsel %vm835, %v771, 0
      %v840 = vsel %vm835, %v772, 0
      %v843 = vsel %vm835, %v773, 0
      %v846 = vsel %vm835, %v774, 0
      %v849 = vsel %vm835, %v775, 0
      %v852 = vsel %vm835, %v776, 0
      %v855 = vsel %vm835, %v777, 0
      %v858 = vsel %vm835, %v778, 0
      %v861 = vsel %vm835, %v779, 0
      %v864 = vsel %vm835, %v780, 0
      %v867 = vsel %vm835, %v781, 0
      %v870 = vsel %vm835, %v782, 0
      %v873 = vsel %vm835, %v783, 0
      %v876 = vsel %vm835, %v784, 0
      %v879 = vsel %vm835, %v785, 0
      %v882 = vsel %vm835, %v786, 0
      %v885 = vsel %vm835, %v787, 0
      %v888 = vsel %vm835, %v788, 0
      %v891 = vsel %vm835, %v789, 0
      %v894 = vsel %vm835, %v790, 0
      %v897 = vsel %vm835, %v791, 0
      %v900 = vsel %vm835, %v792, 0
      %v903 = vsel %vm835, %v793, 0
      %v906 = vsel %vm835, %v794, 0
      %v909 = vsel %vm835, %v795, 0
      %v912 = vsel %vm835, %v796, 0
      %v915 = vsel %vm835, %v797, 0
      %v918 = vsel %vm835, %v798, 0
      %v921 = vsel %vm835, %v799, 0
      %v924 = vsel %vm835, %v800, 0
      %v927 = vsel %vm835, %v830, 0
      %v930 = vsel %vm835, %v831, 0
      %vm932 = vcmask 1043456
      %v934 = vsel %vm932, %v834, 0
      %936 = vmatprep.subr.mxu0 0.0
      %937 = vmatpush1.msra.mxu0 %v833
      %938 = vmatprep.subr.mxu0 0.0
      %939 = vmatpush1.msra.mxu0 %v934
      %940 = vmatprep.subr.mxu0 0.0
      %941 = vmatpush1.msra.mxu0 0.0
      %942 = vmatprep.subr.mxu0 0.0
      %943 = vmatpush1.msra.mxu0 0.0
      %944 = vmatprep.subr.mxu0 0.0
      %945 = vmatpush1.msra.mxu0 0.0
      %946 = vmatprep.subr.mxu0 0.0
      %947 = vmatpush1.msra.mxu0 0.0
      %948 = vmatprep.subr.mxu0 0.0
      %949 = vmatpush1.msra.mxu0 0.0
      %950 = vmatprep.subr.mxu0 0.0
      %951 = vmatpush1.msra.mxu0 0.0
      %952 = vmatprep.subr.mxu0 0.0
      %953 = vmatpush1.msra.mxu0 0.0
      %954 = vmatprep.subr.mxu0 0.0
      %955 = vmatpush1.msra.mxu0 0.0
      %956 = vmatprep.subr.mxu0 0.0
      %957 = vmatpush1.msra.mxu0 0.0
      %958 = vmatprep.subr.mxu0 0.0
      %959 = vmatpush1.msra.mxu0 0.0
      %960 = vmatprep.subr.mxu0 0.0
      %961 = vmatpush1.msra.mxu0 0.0
      %962 = vmatprep.subr.mxu0 0.0
      %963 = vmatpush1.msra.mxu0 0.0
      %964 = vmatprep.subr.mxu0 0.0
      %965 = vmatpush1.msra.mxu0 0.0
      %966 = vmatprep.subr.mxu0 0.0
      %967 = vmatpush1.msra.mxu0 0.0
      %968 = vmatprep.subr.mxu0 0.0
      %969 = vmatpush1.msra.mxu0 0.0
      %970 = vmatprep.subr.mxu0 0.0
      %971 = vmatpush1.msra.mxu0 0.0
      %972 = vmatprep.subr.mxu0 0.0
      %973 = vmatpush1.msra.mxu0 0.0
      %974 = vmatprep.subr.mxu0 0.0
      %975 = vmatpush1.msra.mxu0 0.0
      %976 = vmatprep.subr.mxu0 0.0
      %977 = vmatpush1.msra.mxu0 0.0
      %978 = vmatprep.subr.mxu0 0.0
      %979 = vmatpush1.msra.mxu0 0.0
      %980 = vmatprep.subr.mxu0 0.0
      %981 = vmatpush1.msra.mxu0 0.0
      %982 = vmatprep.subr.mxu0 0.0
      %983 = vmatpush1.msra.mxu0 0.0
      %984 = vmatprep.subr.mxu0 0.0
      %985 = vmatpush1.msra.mxu0 0.0
      %986 = vmatprep.subr.mxu0 0.0
      %987 = vmatpush1.msra.mxu0 0.0
      %988 = vmatprep.subr.mxu0 0.0
      %989 = vmatpush1.msra.mxu0 0.0
      %990 = vmatprep.subr.mxu0 0.0
      %991 = vmatpush1.msra.mxu0 0.0
      %992 = vmatprep.subr.mxu0 0.0
      %993 = vmatpush1.msra.mxu0 0.0
      %994 = vmatprep.subr.mxu0 0.0
      %995 = vmatpush1.msra.mxu0 0.0
      %996 = vmatprep.subr.mxu0 0.0
      %997 = vmatpush1.msra.mxu0 0.0
      %998 = vmatprep.subr.mxu0 0.0
      %999 = vmatpush1.msra.mxu0 0.0
      %1000 = vmatprep.mubr.f32.mxu0 0.0
      %1001 = vmatmul.mubr.f32.gmra.mrb[0].mxu0 %v837
      %v1002 = vpop.f32.mrb[0].mxu0
      %v1003 = vadd.f32 0.0, %v1002
      %v1004 = vpop.f32.mrb[0].mxu0
      %1005 = vmatprep.mubr.f32.mxu0 0.0
      %1006 = vmatmul.mubr.f32.gmra.mrb[0].mxu0 %v840
      %v1007 = vpop.f32.mrb[0].mxu0
      %v1008 = vadd.f32 0.0, %v1007
      %v1009 = vpop.f32.mrb[0].mxu0
      %1010 = vmatprep.mubr.f32.mxu0 0.0
      %1011 = vmatmul.mubr.f32.gmra.mrb[0].mxu0 %v843
      %v1012 = vpop.f32.mrb[0].mxu0
      %v1013 = vadd.f32 0.0, %v1012
      %v1014 = vpop.f32.mrb[0].mxu0
      %1015 = vmatprep.mubr.f32.mxu0 0.0
      %1016 = vmatmul.mubr.f32.gmra.mrb[0].mxu0 %v846
      %v1017 = vpop.f32.mrb[0].mxu0
      %v1018 = vadd.f32 0.0, %v1017
      %v1019 = vpop.f32.mrb[0].mxu0
      %1020 = vmatprep.mubr.f32.mxu0 0.0
      %1021 = vmatmul.mubr.f32.gmra.mrb[0].mxu0 %v849
      %v1022 = vpop.f32.mrb[0].mxu0
      %v1023 = vadd.f32 0.0, %v1022
      %v1024 = vpop.f32.mrb[0].mxu0
      %1025 = vmatprep.mubr.f32.mxu0 0.0
      %1026 = vmatmul.mubr.f32.gmra.mrb[0].mxu0 %v852
      %v1027 = vpop.f32.mrb[0].mxu0
      %v1028 = vadd.f32 0.0, %v1027
      %v1029 = vpop.f32.mrb[0].mxu0
      %1030 = vmatprep.mubr.f32.mxu0 0.0
      %1031 = vmatmul.mubr.f32.gmra.mrb[0].mxu0 %v855
      %v1032 = vpop.f32.mrb[0].mxu0
      %v1033 = vadd.f32 0.0, %v1032
      %v1034 = vpop.f32.mrb[0].mxu0
      %1035 = vmatprep.mubr.f32.mxu0 0.0
      %1036 = vmatmul.mubr.f32.gmra.mrb[0].mxu0 %v858
      %v1037 = vpop.f32.mrb[0].mxu0
      %v1038 = vadd.f32 0.0, %v1037
      %v1039 = vpop.f32.mrb[0].mxu0
      %1040 = vmatprep.mubr.f32.mxu0 0.0
      %1041 = vmatmul.mubr.f32.gmra.mrb[0].mxu0 %v861
      %v1042 = vpop.f32.mrb[0].mxu0
      %v1043 = vadd.f32 0.0, %v1042
      %v1044 = vpop.f32.mrb[0].mxu0
      %1045 = vmatprep.mubr.f32.mxu0 0.0
      %1046 = vmatmul.mubr.f32.gmra.mrb[0].mxu0 %v864
      %v1047 = vpop.f32.mrb[0].mxu0
      %v1048 = vadd.f32 0.0, %v1047
      %v1049 = vpop.f32.mrb[0].mxu0
      %1050 = vmatprep.mubr.f32.mxu0 0.0
      %1051 = vmatmul.mubr.f32.gmra.mrb[0].mxu0 %v867
      %v1052 = vpop.f32.mrb[0].mxu0
      %v1053 = vadd.f32 0.0, %v1052
      %v1054 = vpop.f32.mrb[0].mxu0
      %1055 = vmatprep.mubr.f32.mxu0 0.0
      %1056 = vmatmul.mubr.f32.gmra.mrb[0].mxu0 %v870
      %v1057 = vpop.f32.mrb[0].mxu0
      %v1058 = vadd.f32 0.0, %v1057
      %v1059 = vpop.f32.mrb[0].mxu0
      %1060 = vmatprep.mubr.f32.mxu0 0.0
      %1061 = vmatmul.mubr.f32.gmra.mrb[0].mxu0 %v873
      %v1062 = vpop.f32.mrb[0].mxu0
      %v1063 = vadd.f32 0.0, %v1062
      %v1064 = vpop.f32.mrb[0].mxu0
      %1065 = vmatprep.mubr.f32.mxu0 0.0
      %1066 = vmatmul.mubr.f32.gmra.mrb[0].mxu0 %v876
      %v1067 = vpop.f32.mrb[0].mxu0
      %v1068 = vadd.f32 0.0, %v1067
      %v1069 = vpop.f32.mrb[0].mxu0
      %1070 = vmatprep.mubr.f32.mxu0 0.0
      %1071 = vmatmul.mubr.f32.gmra.mrb[0].mxu0 %v879
      %v1072 = vpop.f32.mrb[0].mxu0
      %v1073 = vadd.f32 0.0, %v1072
      %v1074 = vpop.f32.mrb[0].mxu0
      %1075 = vmatprep.mubr.f32.mxu0 0.0
      %1076 = vmatmul.mubr.f32.gmra.mrb[0].mxu0 %v882
      %v1077 = vpop.f32.mrb[0].mxu0
      %v1078 = vadd.f32 0.0, %v1077
      %v1079 = vpop.f32.mrb[0].mxu0
      %1080 = vmatprep.mubr.f32.mxu0 0.0
      %1081 = vmatmul.mubr.f32.gmra.mrb[0].mxu0 %v885
      %v1082 = vpop.f32.mrb[0].mxu0
      %v1083 = vadd.f32 0.0, %v1082
      %v1084 = vpop.f32.mrb[0].mxu0
      %1085 = vmatprep.mubr.f32.mxu0 0.0
      %1086 = vmatmul.mubr.f32.gmra.mrb[0].mxu0 %v888
      %v1087 = vpop.f32.mrb[0].mxu0
      %v1088 = vadd.f32 0.0, %v1087
      %v1089 = vpop.f32.mrb[0].mxu0
      %1090 = vmatprep.mubr.f32.mxu0 0.0
      %1091 = vmatmul.mubr.f32.gmra.mrb[0].mxu0 %v891
      %v1092 = vpop.f32.mrb[0].mxu0
      %v1093 = vadd.f32 0.0, %v1092
      %v1094 = vpop.f32.mrb[0].mxu0
      %1095 = vmatprep.mubr.f32.mxu0 0.0
      %1096 = vmatmul.mubr.f32.gmra.mrb[0].mxu0 %v894
      %v1097 = vpop.f32.mrb[0].mxu0
      %v1098 = vadd.f32 0.0, %v1097
      %v1099 = vpop.f32.mrb[0].mxu0
      %1100 = vmatprep.mubr.f32.mxu0 0.0
      %1101 = vmatmul.mubr.f32.gmra.mrb[0].mxu0 %v897
      %v1102 = vpop.f32.mrb[0].mxu0
      %v1103 = vadd.f32 0.0, %v1102
      %v1104 = vpop.f32.mrb[0].mxu0
      %1105 = vmatprep.mubr.f32.mxu0 0.0
      %1106 = vmatmul.mubr.f32.gmra.mrb[0].mxu0 %v900
      %v1107 = vpop.f32.mrb[0].mxu0
      %v1108 = vadd.f32 0.0, %v1107
      %v1109 = vpop.f32.mrb[0].mxu0
      %1110 = vmatprep.mubr.f32.mxu0 0.0
      %1111 = vmatmul.mubr.f32.gmra.mrb[0].mxu0 %v903
      %v1112 = vpop.f32.mrb[0].mxu0
      %v1113 = vadd.f32 0.0, %v1112
      %v1114 = vpop.f32.mrb[0].mxu0
      %1115 = vmatprep.mubr.f32.mxu0 0.0
      %1116 = vmatmul.mubr.f32.gmra.mrb[0].mxu0 %v906
      %v1117 = vpop.f32.mrb[0].mxu0
      %v1118 = vadd.f32 0.0, %v1117
      %v1119 = vpop.f32.mrb[0].mxu0
      %1120 = vmatprep.mubr.f32.mxu0 0.0
      %1121 = vmatmul.mubr.f32.gmra.mrb[0].mxu0 %v909
      %v1122 = vpop.f32.mrb[0].mxu0
      %v1123 = vadd.f32 0.0, %v1122
      %v1124 = vpop.f32.mrb[0].mxu0
      %1125 = vmatprep.mubr.f32.mxu0 0.0
      %1126 = vmatmul.mubr.f32.gmra.mrb[0].mxu0 %v912
      %v1127 = vpop.f32.mrb[0].mxu0
      %v1128 = vadd.f32 0.0, %v1127
      %v1129 = vpop.f32.mrb[0].mxu0
      %1130 = vmatprep.mubr.f32.mxu0 0.0
      %1131 = vmatmul.mubr.f32.gmra.mrb[0].mxu0 %v915
      %v1132 = vpop.f32.mrb[0].mxu0
      %v1133 = vadd.f32 0.0, %v1132
      %v1134 = vpop.f32.mrb[0].mxu0
      %1135 = vmatprep.mubr.f32.mxu0 0.0
      %1136 = vmatmul.mubr.f32.gmra.mrb[0].mxu0 %v918
      %v1137 = vpop.f32.mrb[0].mxu0
      %v1138 = vadd.f32 0.0, %v1137
      %v1139 = vpop.f32.mrb[0].mxu0
      %1140 = vmatprep.mubr.f32.mxu0 0.0
      %1141 = vmatmul.mubr.f32.gmra.mrb[0].mxu0 %v921
      %v1142 = vpop.f32.mrb[0].mxu0
      %v1143 = vadd.f32 0.0, %v1142
      %v1144 = vpop.f32.mrb[0].mxu0
      %1145 = vmatprep.mubr.f32.mxu0 0.0
      %1146 = vmatmul.mubr.f32.gmra.mrb[0].mxu0 %v924
      %v1147 = vpop.f32.mrb[0].mxu0
      %v1148 = vadd.f32 0.0, %v1147
      %v1149 = vpop.f32.mrb[0].mxu0
      %1150 = vmatprep.mubr.f32.mxu0 0.0
      %1151 = vmatmul.mubr.f32.gmra.mrb[0].mxu0 %v927
      %v1152 = vpop.f32.mrb[0].mxu0
      %v1153 = vadd.f32 0.0, %v1152
      %v1154 = vpop.f32.mrb[0].mxu0
      %1155 = vmatprep.mubr.f32.mxu0 0.0
      %1156 = vmatmul.mubr.f32.gmra.mrb[0].mxu0 %v930
      %v1157 = vpop.f32.mrb[0].mxu0
      %v1158 = vadd.f32 0.0, %v1157
      %v1159 = vpop.f32.mrb[0].mxu0
      %1160 = vdwg.mxu0
      %v1162 = vsel %vm835, %v769, 0
      %v1165 = vsel %vm835, %v770, 0
      %v1168 = vsel %vm932, %v802, 0
      %1170 = vmatprep.subr.mxu0 0.0
      %1171 = vmatpush1.msra.mxu0 %v801
      %1172 = vmatprep.subr.mxu0 0.0
      %1173 = vmatpush1.msra.mxu0 %v1168
      %1174 = vmatprep.subr.mxu0 0.0
      %1175 = vmatpush1.msra.mxu0 0.0
      %1176 = vmatprep.subr.mxu0 0.0
      %1177 = vmatpush1.msra.mxu0 0.0
      %1178 = vmatprep.subr.mxu0 0.0
      %1179 = vmatpush1.msra.mxu0 0.0
      %1180 = vmatprep.subr.mxu0 0.0
      %1181 = vmatpush1.msra.mxu0 0.0
      %1182 = vmatprep.subr.mxu0 0.0
      %1183 = vmatpush1.msra.mxu0 0.0
      %1184 = vmatprep.subr.mxu0 0.0
      %1185 = vmatpush1.msra.mxu0 0.0
      %1186 = vmatprep.subr.mxu0 0.0
      %1187 = vmatpush1.msra.mxu0 0.0
      %1188 = vmatprep.subr.mxu0 0.0
      %1189 = vmatpush1.msra.mxu0 0.0
      %1190 = vmatprep.subr.mxu0 0.0
      %1191 = vmatpush1.msra.mxu0 0.0
      %1192 = vmatprep.subr.mxu0 0.0
      %1193 = vmatpush1.msra.mxu0 0.0
      %1194 = vmatprep.subr.mxu0 0.0
      %1195 = vmatpush1.msra.mxu0 0.0
      %1196 = vmatprep.subr.mxu0 0.0
      %1197 = vmatpush1.msra.mxu0 0.0
      %1198 = vmatprep.subr.mxu0 0.0
      %1199 = vmatpush1.msra.mxu0 0.0
      %1200 = vmatprep.subr.mxu0 0.0
      %1201 = vmatpush1.msra.mxu0 0.0
      %1202 = vmatprep.subr.mxu0 0.0
      %1203 = vmatpush1.msra.mxu0 0.0
      %1204 = vmatprep.subr.mxu0 0.0
      %1205 = vmatpush1.msra.mxu0 0.0
      %1206 = vmatprep.subr.mxu0 0.0
      %1207 = vmatpush1.msra.mxu0 0.0
      %1208 = vmatprep.subr.mxu0 0.0
      %1209 = vmatpush1.msra.mxu0 0.0
      %1210 = vmatprep.subr.mxu0 0.0
      %1211 = vmatpush1.msra.mxu0 0.0
      %1212 = vmatprep.subr.mxu0 0.0
      %1213 = vmatpush1.msra.mxu0 0.0
      %1214 = vmatprep.subr.mxu0 0.0
      %1215 = vmatpush1.msra.mxu0 0.0
      %1216 = vmatprep.subr.mxu0 0.0
      %1217 = vmatpush1.msra.mxu0 0.0
      %1218 = vmatprep.subr.mxu0 0.0
      %1219 = vmatpush1.msra.mxu0 0.0
      %1220 = vmatprep.subr.mxu0 0.0
      %1221 = vmatpush1.msra.mxu0 0.0
      %1222 = vmatprep.subr.mxu0 0.0
      %1223 = vmatpush1.msra.mxu0 0.0
      %1224 = vmatprep.subr.mxu0 0.0
      %1225 = vmatpush1.msra.mxu0 0.0
      %1226 = vmatprep.subr.mxu0 0.0
      %1227 = vmatpush1.msra.mxu0 0.0
      %1228 = vmatprep.subr.mxu0 0.0
      %1229 = vmatpush1.msra.mxu0 0.0
      %1230 = vmatprep.subr.mxu0 0.0
      %1231 = vmatpush1.msra.mxu0 0.0
      %1232 = vmatprep.subr.mxu0 0.0
      %1233 = vmatpush1.msra.mxu0 0.0
      %1234 = vmatprep.mubr.f32.mxu0 0.0
      %1235 = vmatmul.mubr.f32.gmra.mrb[0].mxu0 %v1162
      %v1236 = vpop.f32.mrb[0].mxu0
      %v1237 = vadd.f32 %v1003, %v1236
      %v1238 = vpop.f32.mrb[0].mxu0
      %1239 = vmatprep.mubr.f32.mxu0 0.0
      %1240 = vmatmul.mubr.f32.gmra.mrb[0].mxu0 %v1165
      %v1241 = vpop.f32.mrb[0].mxu0
      %v1242 = vadd.f32 %v1008, %v1241
      %v1243 = vpop.f32.mrb[0].mxu0
      %1244 = vmatprep.mubr.f32.mxu0 0.0
      %1245 = vmatmul.mubr.f32.gmra.mrb[0].mxu0 %v837
      %v1246 = vpop.f32.mrb[0].mxu0
      %v1247 = vadd.f32 %v1013, %v1246
      %v1248 = vpop.f32.mrb[0].mxu0
      %1249 = vmatprep.mubr.f32.mxu0 0.0
      %1250 = vmatmul.mubr.f32.gmra.mrb[0].mxu0 %v840
      %v1251 = vpop.f32.mrb[0].mxu0
      %v1252 = vadd.f32 %v1018, %v1251
      %v1253 = vpop.f32.mrb[0].mxu0
      %1254 = vmatprep.mubr.f32.mxu0 0.0
      %1255 = vmatmul.mubr.f32.gmra.mrb[0].mxu0 %v843
      %v1256 = vpop.f32.mrb[0].mxu0
      %v1257 = vadd.f32 %v1023, %v1256
      %v1258 = vpop.f32.mrb[0].mxu0
      %1259 = vmatprep.mubr.f32.mxu0 0.0
      %1260 = vmatmul.mubr.f32.gmra.mrb[0].mxu0 %v846
      %v1261 = vpop.f32.mrb[0].mxu0
      %v1262 = vadd.f32 %v1028, %v1261
      %v1263 = vpop.f32.mrb[0].mxu0
      %1264 = vmatprep.mubr.f32.mxu0 0.0
      %1265 = vmatmul.mubr.f32.gmra.mrb[0].mxu0 %v849
      %v1266 = vpop.f32.mrb[0].mxu0
      %v1267 = vadd.f32 %v1033, %v1266
      %v1268 = vpop.f32.mrb[0].mxu0
      %1269 = vmatprep.mubr.f32.mxu0 0.0
      %1270 = vmatmul.mubr.f32.gmra.mrb[0].mxu0 %v852
      %v1271 = vpop.f32.mrb[0].mxu0
      %v1272 = vadd.f32 %v1038, %v1271
      %v1273 = vpop.f32.mrb[0].mxu0
      %1274 = vmatprep.mubr.f32.mxu0 0.0
      %1275 = vmatmul.mubr.f32.gmra.mrb[0].mxu0 %v855
      %v1276 = vpop.f32.mrb[0].mxu0
      %v1277 = vadd.f32 %v1043, %v1276
      %v1278 = vpop.f32.mrb[0].mxu0
      %1279 = vmatprep.mubr.f32.mxu0 0.0
      %1280 = vmatmul.mubr.f32.gmra.mrb[0].mxu0 %v858
      %v1281 = vpop.f32.mrb[0].mxu0
      %v1282 = vadd.f32 %v1048, %v1281
      %v1283 = vpop.f32.mrb[0].mxu0
      %1284 = vmatprep.mubr.f32.mxu0 0.0
      %1285 = vmatmul.mubr.f32.gmra.mrb[0].mxu0 %v861
      %v1286 = vpop.f32.mrb[0].mxu0
      %v1287 = vadd.f32 %v1053, %v1286
      %v1288 = vpop.f32.mrb[0].mxu0
      %1289 = vmatprep.mubr.f32.mxu0 0.0
      %1290 = vmatmul.mubr.f32.gmra.mrb[0].mxu0 %v864
      %v1291 = vpop.f32.mrb[0].mxu0
      %v1292 = vadd.f32 %v1058, %v1291
      %v1293 = vpop.f32.mrb[0].mxu0
      %1294 = vmatprep.mubr.f32.mxu0 0.0
      %1295 = vmatmul.mubr.f32.gmra.mrb[0].mxu0 %v867
      %v1296 = vpop.f32.mrb[0].mxu0
      %v1297 = vadd.f32 %v1063, %v1296
      %v1298 = vpop.f32.mrb[0].mxu0
      %1299 = vmatprep.mubr.f32.mxu0 0.0
      %1300 = vmatmul.mubr.f32.gmra.mrb[0].mxu0 %v870
      %v1301 = vpop.f32.mrb[0].mxu0
      %v1302 = vadd.f32 %v1068, %v1301
      %v1303 = vpop.f32.mrb[0].mxu0
      %1304 = vmatprep.mubr.f32.mxu0 0.0
      %1305 = vmatmul.mubr.f32.gmra.mrb[0].mxu0 %v873
      %v1306 = vpop.f32.mrb[0].mxu0
      %v1307 = vadd.f32 %v1073, %v1306
      %v1308 = vpop.f32.mrb[0].mxu0
      %1309 = vmatprep.mubr.f32.mxu0 0.0
      %1310 = vmatmul.mubr.f32.gmra.mrb[0].mxu0 %v876
      %v1311 = vpop.f32.mrb[0].mxu0
      %v1312 = vadd.f32 %v1078, %v1311
      %v1313 = vpop.f32.mrb[0].mxu0
      %1314 = vmatprep.mubr.f32.mxu0 0.0
      %1315 = vmatmul.mubr.f32.gmra.mrb[0].mxu0 %v879
      %v1316 = vpop.f32.mrb[0].mxu0
      %v1317 = vadd.f32 %v1083, %v1316
      %v1318 = vpop.f32.mrb[0].mxu0
      %1319 = vmatprep.mubr.f32.mxu0 0.0
      %1320 = vmatmul.mubr.f32.gmra.mrb[0].mxu0 %v882
      %v1321 = vpop.f32.mrb[0].mxu0
      %v1322 = vadd.f32 %v1088, %v1321
      %v1323 = vpop.f32.mrb[0].mxu0
      %1324 = vmatprep.mubr.f32.mxu0 0.0
      %1325 = vmatmul.mubr.f32.gmra.mrb[0].mxu0 %v885
      %v1326 = vpop.f32.mrb[0].mxu0
      %v1327 = vadd.f32 %v1093, %v1326
      %v1328 = vpop.f32.mrb[0].mxu0
      %1329 = vmatprep.mubr.f32.mxu0 0.0
      %1330 = vmatmul.mubr.f32.gmra.mrb[0].mxu0 %v888
      %v1331 = vpop.f32.mrb[0].mxu0
      %v1332 = vadd.f32 %v1098, %v1331
      %v1333 = vpop.f32.mrb[0].mxu0
      %1334 = vmatprep.mubr.f32.mxu0 0.0
      %1335 = vmatmul.mubr.f32.gmra.mrb[0].mxu0 %v891
      %v1336 = vpop.f32.mrb[0].mxu0
      %v1337 = vadd.f32 %v1103, %v1336
      %v1338 = vpop.f32.mrb[0].mxu0
      %1339 = vmatprep.mubr.f32.mxu0 0.0
      %1340 = vmatmul.mubr.f32.gmra.mrb[0].mxu0 %v894
      %v1341 = vpop.f32.mrb[0].mxu0
      %v1342 = vadd.f32 %v1108, %v1341
      %v1343 = vpop.f32.mrb[0].mxu0
      %1344 = vmatprep.mubr.f32.mxu0 0.0
      %1345 = vmatmul.mubr.f32.gmra.mrb[0].mxu0 %v897
      %v1346 = vpop.f32.mrb[0].mxu0
      %v1347 = vadd.f32 %v1113, %v1346
      %v1348 = vpop.f32.mrb[0].mxu0
      %1349 = vmatprep.mubr.f32.mxu0 0.0
      %1350 = vmatmul.mubr.f32.gmra.mrb[0].mxu0 %v900
      %v1351 = vpop.f32.mrb[0].mxu0
      %v1352 = vadd.f32 %v1118, %v1351
      %v1353 = vpop.f32.mrb[0].mxu0
      %1354 = vmatprep.mubr.f32.mxu0 0.0
      %1355 = vmatmul.mubr.f32.gmra.mrb[0].mxu0 %v903
      %v1356 = vpop.f32.mrb[0].mxu0
      %v1357 = vadd.f32 %v1123, %v1356
      %v1358 = vpop.f32.mrb[0].mxu0
      %1359 = vmatprep.mubr.f32.mxu0 0.0
      %1360 = vmatmul.mubr.f32.gmra.mrb[0].mxu0 %v906
      %v1361 = vpop.f32.mrb[0].mxu0
      %v1362 = vadd.f32 %v1128, %v1361
      %v1363 = vpop.f32.mrb[0].mxu0
      %1364 = vmatprep.mubr.f32.mxu0 0.0
      %1365 = vmatmul.mubr.f32.gmra.mrb[0].mxu0 %v909
      %v1366 = vpop.f32.mrb[0].mxu0
      %v1367 = vadd.f32 %v1133, %v1366
      %v1368 = vpop.f32.mrb[0].mxu0
      %1369 = vmatprep.mubr.f32.mxu0 0.0
      %1370 = vmatmul.mubr.f32.gmra.mrb[0].mxu0 %v912
      %v1371 = vpop.f32.mrb[0].mxu0
      %v1372 = vadd.f32 %v1138, %v1371
      %v1373 = vpop.f32.mrb[0].mxu0
      %1374 = vmatprep.mubr.f32.mxu0 0.0
      %1375 = vmatmul.mubr.f32.gmra.mrb[0].mxu0 %v915
      %v1376 = vpop.f32.mrb[0].mxu0
      %v1377 = vadd.f32 %v1143, %v1376
      %v1378 = vpop.f32.mrb[0].mxu0
      %1379 = vmatprep.mubr.f32.mxu0 0.0
      %1380 = vmatmul.mubr.f32.gmra.mrb[0].mxu0 %v918
      %v1381 = vpop.f32.mrb[0].mxu0
      %v1382 = vadd.f32 %v1148, %v1381
      %v1383 = vpop.f32.mrb[0].mxu0
      %1384 = vmatprep.mubr.f32.mxu0 0.0
      %1385 = vmatmul.mubr.f32.gmra.mrb[0].mxu0 %v921
      %v1386 = vpop.f32.mrb[0].mxu0
      %v1387 = vadd.f32 %v1153, %v1386
      %v1388 = vpop.f32.mrb[0].mxu0
      %1389 = vmatprep.mubr.f32.mxu0 0.0
      %1390 = vmatmul.mubr.f32.gmra.mrb[0].mxu0 %v924
      %v1391 = vpop.f32.mrb[0].mxu0
      %v1392 = vadd.f32 %v1158, %v1391
      %v1393 = vpop.f32.mrb[0].mxu0
      %1394 = vdwg.mxu0
      %v1398 = vrot.slane %v330, 1
      %v1399 = vrot.slane %v331, 1
      %v1400 = vsel %vm381, %v1398, %v1399
      %v1401 = vrot.slane %v332, 1
      %v1402 = vsel %vm381, %v1399, %v1401
      %1403 = vrot.lane.b32.xlu0 %v1400, 4
      %v1404 = vpop.permute.xlu0 %1403
      %1405 = vrot.lane.b32.xlu0 %v1402, 4
      %v1406 = vpop.permute.xlu0 %1405
      %v1409 = vrot.slane %v330, 2
      %v1410 = vrot.slane %v331, 2
      %v1411 = vsel %vm558, %v1409, %v1410
      %v1412 = vrot.slane %v332, 2
      %v1413 = vsel %vm558, %v1410, %v1412
      %1414 = vrot.lane.b32.xlu0 %v1411, 8
      %v1415 = vpop.permute.xlu0 %1414
      %1416 = vrot.lane.b32.xlu0 %v1413, 8
      %v1417 = vpop.permute.xlu0 %1416
      %v1420 = vsel %vm735, %v330, %v1404
      %v1421 = vsel %vm735, %v331, %v1406
      %v1422 = vsel %vm768, %v1420, %v1415
      %v1423 = vsel %vm768, %v1421, %v1417
      %s1424 = scalar_lea.vmem %s1, 32
      %v1425 = vld [vmem:[%s1424] sm:$0xff]
      %v1426 = vld [vmem:[%s1424 + $0x8] sm:$0xf]
      %v1428 = vsel %vm835, %v1422, 0
      %v1431 = vsel %vm835, %v1423, 0
      %v1434 = vsel %vm932, %v1426, 0
      %1436 = vmatprep.subr.mxu0 0.0
      %1437 = vmatpush1.msra.mxu0 %v1425
      %1438 = vmatprep.subr.mxu0 0.0
      %1439 = vmatpush1.msra.mxu0 %v1434
      %1440 = vmatprep.subr.mxu0 0.0
      %1441 = vmatpush1.msra.mxu0 0.0
      %1442 = vmatprep.subr.mxu0 0.0
      %1443 = vmatpush1.msra.mxu0 0.0
      %1444 = vmatprep.subr.mxu0 0.0
      %1445 = vmatpush1.msra.mxu0 0.0
      %1446 = vmatprep.subr.mxu0 0.0
      %1447 = vmatpush1.msra.mxu0 0.0
      %1448 = vmatprep.subr.mxu0 0.0
      %1449 = vmatpush1.msra.mxu0 0.0
      %1450 = vmatprep.subr.mxu0 0.0
      %1451 = vmatpush1.msra.mxu0 0.0
      %1452 = vmatprep.subr.mxu0 0.0
      %1453 = vmatpush1.msra.mxu0 0.0
      %1454 = vmatprep.subr.mxu0 0.0
      %1455 = vmatpush1.msra.mxu0 0.0
      %1456 = vmatprep.subr.mxu0 0.0
      %1457 = vmatpush1.msra.mxu0 0.0
      %1458 = vmatprep.subr.mxu0 0.0
      %1459 = vmatpush1.msra.mxu0 0.0
      %1460 = vmatprep.subr.mxu0 0.0
      %1461 = vmatpush1.msra.mxu0 0.0
      %1462 = vmatprep.subr.mxu0 0.0
      %1463 = vmatpush1.msra.mxu0 0.0
      %1464 = vmatprep.subr.mxu0 0.0
      %1465 = vmatpush1.msra.mxu0 0.0
      %1466 = vmatprep.subr.mxu0 0.0
      %1467 = vmatpush1.msra.mxu0 0.0
      %1468 = vmatprep.subr.mxu0 0.0
      %1469 = vmatpush1.msra.mxu0 0.0
      %1470 = vmatprep.subr.mxu0 0.0
      %1471 = vmatpush1.msra.mxu0 0.0
      %1472 = vmatprep.subr.mxu0 0.0
      %1473 = vmatpush1.msra.mxu0 0.0
      %1474 = vmatprep.subr.mxu0 0.0
      %1475 = vmatpush1.msra.mxu0 0.0
      %1476 = vmatprep.subr.mxu0 0.0
      %1477 = vmatpush1.msra.mxu0 0.0
      %1478 = vmatprep.subr.mxu0 0.0
      %1479 = vmatpush1.msra.mxu0 0.0
      %1480 = vmatprep.subr.mxu0 0.0
      %1481 = vmatpush1.msra.mxu0 0.0
      %1482 = vmatprep.subr.mxu0 0.0
      %1483 = vmatpush1.msra.mxu0 0.0
      %1484 = vmatprep.subr.mxu0 0.0
      %1485 = vmatpush1.msra.mxu0 0.0
      %1486 = vmatprep.subr.mxu0 0.0
      %1487 = vmatpush1.msra.mxu0 0.0
      %1488 = vmatprep.subr.mxu0 0.0
      %1489 = vmatpush1.msra.mxu0 0.0
      %1490 = vmatprep.subr.mxu0 0.0
      %1491 = vmatpush1.msra.mxu0 0.0
      %1492 = vmatprep.subr.mxu0 0.0
      %1493 = vmatpush1.msra.mxu0 0.0
      %1494 = vmatprep.subr.mxu0 0.0
      %1495 = vmatpush1.msra.mxu0 0.0
      %1496 = vmatprep.subr.mxu0 0.0
      %1497 = vmatpush1.msra.mxu0 0.0
      %1498 = vmatprep.subr.mxu0 0.0
      %1499 = vmatpush1.msra.mxu0 0.0
      %1500 = vmatprep.mubr.f32.mxu0 0.0
      %1501 = vmatmul.mubr.f32.gmra.mrb[0].mxu0 %v843
      %v1502 = vpop.f32.mrb[0].mxu0
      %v1503 = vadd.f32 0.0, %v1502
      %v1504 = vpop.f32.mrb[0].mxu0
      %1505 = vmatprep.mubr.f32.mxu0 0.0
      %1506 = vmatmul.mubr.f32.gmra.mrb[0].mxu0 %v846
      %v1507 = vpop.f32.mrb[0].mxu0
      %v1508 = vadd.f32 0.0, %v1507
      %v1509 = vpop.f32.mrb[0].mxu0
      %1510 = vmatprep.mubr.f32.mxu0 0.0
      %1511 = vmatmul.mubr.f32.gmra.mrb[0].mxu0 %v849
      %v1512 = vpop.f32.mrb[0].mxu0
      %v1513 = vadd.f32 0.0, %v1512
      %v1514 = vpop.f32.mrb[0].mxu0
      %1515 = vmatprep.mubr.f32.mxu0 0.0
      %1516 = vmatmul.mubr.f32.gmra.mrb[0].mxu0 %v852
      %v1517 = vpop.f32.mrb[0].mxu0
      %v1518 = vadd.f32 0.0, %v1517
      %v1519 = vpop.f32.mrb[0].mxu0
      %1520 = vmatprep.mubr.f32.mxu0 0.0
      %1521 = vmatmul.mubr.f32.gmra.mrb[0].mxu0 %v855
      %v1522 = vpop.f32.mrb[0].mxu0
      %v1523 = vadd.f32 0.0, %v1522
      %v1524 = vpop.f32.mrb[0].mxu0
      %1525 = vmatprep.mubr.f32.mxu0 0.0
      %1526 = vmatmul.mubr.f32.gmra.mrb[0].mxu0 %v858
      %v1527 = vpop.f32.mrb[0].mxu0
      %v1528 = vadd.f32 0.0, %v1527
      %v1529 = vpop.f32.mrb[0].mxu0
      %1530 = vmatprep.mubr.f32.mxu0 0.0
      %1531 = vmatmul.mubr.f32.gmra.mrb[0].mxu0 %v861
      %v1532 = vpop.f32.mrb[0].mxu0
      %v1533 = vadd.f32 0.0, %v1532
      %v1534 = vpop.f32.mrb[0].mxu0
      %1535 = vmatprep.mubr.f32.mxu0 0.0
      %1536 = vmatmul.mubr.f32.gmra.mrb[0].mxu0 %v864
      %v1537 = vpop.f32.mrb[0].mxu0
      %v1538 = vadd.f32 0.0, %v1537
      %v1539 = vpop.f32.mrb[0].mxu0
      %1540 = vmatprep.mubr.f32.mxu0 0.0
      %1541 = vmatmul.mubr.f32.gmra.mrb[0].mxu0 %v867
      %v1542 = vpop.f32.mrb[0].mxu0
      %v1543 = vadd.f32 0.0, %v1542
      %v1544 = vpop.f32.mrb[0].mxu0
      %1545 = vmatprep.mubr.f32.mxu0 0.0
      %1546 = vmatmul.mubr.f32.gmra.mrb[0].mxu0 %v870
      %v1547 = vpop.f32.mrb[0].mxu0
      %v1548 = vadd.f32 0.0, %v1547
      %v1549 = vpop.f32.mrb[0].mxu0
      %1550 = vmatprep.mubr.f32.mxu0 0.0
      %1551 = vmatmul.mubr.f32.gmra.mrb[0].mxu0 %v873
      %v1552 = vpop.f32.mrb[0].mxu0
      %v1553 = vadd.f32 0.0, %v1552
      %v1554 = vpop.f32.mrb[0].mxu0
      %1555 = vmatprep.mubr.f32.mxu0 0.0
      %1556 = vmatmul.mubr.f32.gmra.mrb[0].mxu0 %v876
      %v1557 = vpop.f32.mrb[0].mxu0
      %v1558 = vadd.f32 0.0, %v1557
      %v1559 = vpop.f32.mrb[0].mxu0
      %1560 = vmatprep.mubr.f32.mxu0 0.0
      %1561 = vmatmul.mubr.f32.gmra.mrb[0].mxu0 %v879
      %v1562 = vpop.f32.mrb[0].mxu0
      %v1563 = vadd.f32 0.0, %v1562
      %v1564 = vpop.f32.mrb[0].mxu0
      %1565 = vmatprep.mubr.f32.mxu0 0.0
      %1566 = vmatmul.mubr.f32.gmra.mrb[0].mxu0 %v882
      %v1567 = vpop.f32.mrb[0].mxu0
      %v1568 = vadd.f32 0.0, %v1567
      %v1569 = vpop.f32.mrb[0].mxu0
      %1570 = vmatprep.mubr.f32.mxu0 0.0
      %1571 = vmatmul.mubr.f32.gmra.mrb[0].mxu0 %v885
      %v1572 = vpop.f32.mrb[0].mxu0
      %v1573 = vadd.f32 0.0, %v1572
      %v1574 = vpop.f32.mrb[0].mxu0
      %1575 = vmatprep.mubr.f32.mxu0 0.0
      %1576 = vmatmul.mubr.f32.gmra.mrb[0].mxu0 %v888
      %v1577 = vpop.f32.mrb[0].mxu0
      %v1578 = vadd.f32 0.0, %v1577
      %v1579 = vpop.f32.mrb[0].mxu0
      %1580 = vmatprep.mubr.f32.mxu0 0.0
      %1581 = vmatmul.mubr.f32.gmra.mrb[0].mxu0 %v891
      %v1582 = vpop.f32.mrb[0].mxu0
      %v1583 = vadd.f32 0.0, %v1582
      %v1584 = vpop.f32.mrb[0].mxu0
      %1585 = vmatprep.mubr.f32.mxu0 0.0
      %1586 = vmatmul.mubr.f32.gmra.mrb[0].mxu0 %v894
      %v1587 = vpop.f32.mrb[0].mxu0
      %v1588 = vadd.f32 0.0, %v1587
      %v1589 = vpop.f32.mrb[0].mxu0
      %1590 = vmatprep.mubr.f32.mxu0 0.0
      %1591 = vmatmul.mubr.f32.gmra.mrb[0].mxu0 %v897
      %v1592 = vpop.f32.mrb[0].mxu0
      %v1593 = vadd.f32 0.0, %v1592
      %v1594 = vpop.f32.mrb[0].mxu0
      %1595 = vmatprep.mubr.f32.mxu0 0.0
      %1596 = vmatmul.mubr.f32.gmra.mrb[0].mxu0 %v900
      %v1597 = vpop.f32.mrb[0].mxu0
      %v1598 = vadd.f32 0.0, %v1597
      %v1599 = vpop.f32.mrb[0].mxu0
      %1600 = vmatprep.mubr.f32.mxu0 0.0
      %1601 = vmatmul.mubr.f32.gmra.mrb[0].mxu0 %v903
      %v1602 = vpop.f32.mrb[0].mxu0
      %v1603 = vadd.f32 0.0, %v1602
      %v1604 = vpop.f32.mrb[0].mxu0
      %1605 = vmatprep.mubr.f32.mxu0 0.0
      %1606 = vmatmul.mubr.f32.gmra.mrb[0].mxu0 %v906
      %v1607 = vpop.f32.mrb[0].mxu0
      %v1608 = vadd.f32 0.0, %v1607
      %v1609 = vpop.f32.mrb[0].mxu0
      %1610 = vmatprep.mubr.f32.mxu0 0.0
      %1611 = vmatmul.mubr.f32.gmra.mrb[0].mxu0 %v909
      %v1612 = vpop.f32.mrb[0].mxu0
      %v1613 = vadd.f32 0.0, %v1612
      %v1614 = vpop.f32.mrb[0].mxu0
      %1615 = vmatprep.mubr.f32.mxu0 0.0
      %1616 = vmatmul.mubr.f32.gmra.mrb[0].mxu0 %v912
      %v1617 = vpop.f32.mrb[0].mxu0
      %v1618 = vadd.f32 0.0, %v1617
      %v1619 = vpop.f32.mrb[0].mxu0
      %1620 = vmatprep.mubr.f32.mxu0 0.0
      %1621 = vmatmul.mubr.f32.gmra.mrb[0].mxu0 %v915
      %v1622 = vpop.f32.mrb[0].mxu0
      %v1623 = vadd.f32 0.0, %v1622
      %v1624 = vpop.f32.mrb[0].mxu0
      %1625 = vmatprep.mubr.f32.mxu0 0.0
      %1626 = vmatmul.mubr.f32.gmra.mrb[0].mxu0 %v918
      %v1627 = vpop.f32.mrb[0].mxu0
      %v1628 = vadd.f32 0.0, %v1627
      %v1629 = vpop.f32.mrb[0].mxu0
      %1630 = vmatprep.mubr.f32.mxu0 0.0
      %1631 = vmatmul.mubr.f32.gmra.mrb[0].mxu0 %v921
      %v1632 = vpop.f32.mrb[0].mxu0
      %v1633 = vadd.f32 0.0, %v1632
      %v1634 = vpop.f32.mrb[0].mxu0
      %1635 = vmatprep.mubr.f32.mxu0 0.0
      %1636 = vmatmul.mubr.f32.gmra.mrb[0].mxu0 %v924
      %v1637 = vpop.f32.mrb[0].mxu0
      %v1638 = vadd.f32 0.0, %v1637
      %v1639 = vpop.f32.mrb[0].mxu0
      %1640 = vmatprep.mubr.f32.mxu0 0.0
      %1641 = vmatmul.mubr.f32.gmra.mrb[0].mxu0 %v927
      %v1642 = vpop.f32.mrb[0].mxu0
      %v1643 = vadd.f32 0.0, %v1642
      %v1644 = vpop.f32.mrb[0].mxu0
      %1645 = vmatprep.mubr.f32.mxu0 0.0
      %1646 = vmatmul.mubr.f32.gmra.mrb[0].mxu0 %v930
      %v1647 = vpop.f32.mrb[0].mxu0
      %v1648 = vadd.f32 0.0, %v1647
      %v1649 = vpop.f32.mrb[0].mxu0
      %1650 = vmatprep.mubr.f32.mxu0 0.0
      %1651 = vmatmul.mubr.f32.gmra.mrb[0].mxu0 %v1428
      %v1652 = vpop.f32.mrb[0].mxu0
      %v1653 = vadd.f32 0.0, %v1652
      %v1654 = vpop.f32.mrb[0].mxu0
      %1655 = vmatprep.mubr.f32.mxu0 0.0
      %1656 = vmatmul.mubr.f32.gmra.mrb[0].mxu0 %v1431
      %v1657 = vpop.f32.mrb[0].mxu0
      %v1658 = vadd.f32 0.0, %v1657
      %v1659 = vpop.f32.mrb[0].mxu0
      %1660 = vdwg.mxu0
      %v1661 = vadd.f32 %v1237, %v1503
      %v1662 = vadd.f32 %v1242, %v1508
      %v1663 = vadd.f32 %v1247, %v1513
      %v1664 = vadd.f32 %v1252, %v1518
      %v1665 = vadd.f32 %v1257, %v1523
      %v1666 = vadd.f32 %v1262, %v1528
      %v1667 = vadd.f32 %v1267, %v1533
      %v1668 = vadd.f32 %v1272, %v1538
      %v1669 = vadd.f32 %v1277, %v1543
      %v1670 = vadd.f32 %v1282, %v1548
      %v1671 = vadd.f32 %v1287, %v1553
      %v1672 = vadd.f32 %v1292, %v1558
      %v1673 = vadd.f32 %v1297, %v1563
      %v1674 = vadd.f32 %v1302, %v1568
      %v1675 = vadd.f32 %v1307, %v1573
      %v1676 = vadd.f32 %v1312, %v1578
      %v1677 = vadd.f32 %v1317, %v1583
      %v1678 = vadd.f32 %v1322, %v1588
      %v1679 = vadd.f32 %v1327, %v1593
      %v1680 = vadd.f32 %v1332, %v1598
      %v1681 = vadd.f32 %v1337, %v1603
      %v1682 = vadd.f32 %v1342, %v1608
      %v1683 = vadd.f32 %v1347, %v1613
      %v1684 = vadd.f32 %v1352, %v1618
      %v1685 = vadd.f32 %v1357, %v1623
      %v1686 = vadd.f32 %v1362, %v1628
      %v1687 = vadd.f32 %v1367, %v1633
      %v1688 = vadd.f32 %v1372, %v1638
      %v1689 = vadd.f32 %v1377, %v1643
      %v1690 = vadd.f32 %v1382, %v1648
      %v1691 = vadd.f32 %v1387, %v1653
      %v1692 = vadd.f32 %v1392, %v1658
      %v1693 = vld [vmem:[%s2] sm:$0x1]
      %v1695 = vlaneseq
      %v1696 = vshrl.u32 %v1695, 7
      %v1697 = vsub.s32 0, %v1696
      %v1698 = vrot.slane %v1693, %v1697
      %v1700 = vadd.f32 %v1661, %v1698
      %v1701 = vadd.f32 %v1662, %v1698
      %v1702 = vadd.f32 %v1663, %v1698
      %v1703 = vadd.f32 %v1664, %v1698
      %v1704 = vadd.f32 %v1665, %v1698
      %v1705 = vadd.f32 %v1666, %v1698
      %v1706 = vadd.f32 %v1667, %v1698
      %v1707 = vadd.f32 %v1668, %v1698
      %v1708 = vadd.f32 %v1669, %v1698
      %v1709 = vadd.f32 %v1670, %v1698
      %v1710 = vadd.f32 %v1671, %v1698
      %v1711 = vadd.f32 %v1672, %v1698
      %v1712 = vadd.f32 %v1673, %v1698
      %v1713 = vadd.f32 %v1674, %v1698
      %v1714 = vadd.f32 %v1675, %v1698
      %v1715 = vadd.f32 %v1676, %v1698
      %v1716 = vadd.f32 %v1677, %v1698
      %v1717 = vadd.f32 %v1678, %v1698
      %v1718 = vadd.f32 %v1679, %v1698
      %v1719 = vadd.f32 %v1680, %v1698
      %v1720 = vadd.f32 %v1681, %v1698
      %v1721 = vadd.f32 %v1682, %v1698
      %v1722 = vadd.f32 %v1683, %v1698
      %v1723 = vadd.f32 %v1684, %v1698
      %v1724 = vadd.f32 %v1685, %v1698
      %v1725 = vadd.f32 %v1686, %v1698
      %v1726 = vadd.f32 %v1687, %v1698
      %v1727 = vadd.f32 %v1688, %v1698
      %v1728 = vadd.f32 %v1689, %v1698
      %v1729 = vadd.f32 %v1690, %v1698
      %v1730 = vadd.f32 %v1691, %v1698
      %v1731 = vadd.f32 %v1692, %v1698
      %v1732 = vmax.f32 %v1700, 0.0
      %v1733 = vmax.f32 %v1701, 0.0
      %v1734 = vmax.f32 %v1702, 0.0
      %v1735 = vmax.f32 %v1703, 0.0
      %v1736 = vmax.f32 %v1704, 0.0
      %v1737 = vmax.f32 %v1705, 0.0
      %v1738 = vmax.f32 %v1706, 0.0
      %v1739 = vmax.f32 %v1707, 0.0
      %v1740 = vmax.f32 %v1708, 0.0
      %v1741 = vmax.f32 %v1709, 0.0
      %v1742 = vmax.f32 %v1710, 0.0
      %v1743 = vmax.f32 %v1711, 0.0
      %v1744 = vmax.f32 %v1712, 0.0
      %v1745 = vmax.f32 %v1713, 0.0
      %v1746 = vmax.f32 %v1714, 0.0
      %v1747 = vmax.f32 %v1715, 0.0
      %v1748 = vmax.f32 %v1716, 0.0
      %v1749 = vmax.f32 %v1717, 0.0
      %v1750 = vmax.f32 %v1718, 0.0
      %v1751 = vmax.f32 %v1719, 0.0
      %v1752 = vmax.f32 %v1720, 0.0
      %v1753 = vmax.f32 %v1721, 0.0
      %v1754 = vmax.f32 %v1722, 0.0
      %v1755 = vmax.f32 %v1723, 0.0
      %v1756 = vmax.f32 %v1724, 0.0
      %v1757 = vmax.f32 %v1725, 0.0
      %v1758 = vmax.f32 %v1726, 0.0
      %v1759 = vmax.f32 %v1727, 0.0
      %v1760 = vmax.f32 %v1728, 0.0
      %v1761 = vmax.f32 %v1729, 0.0
      %v1762 = vmax.f32 %v1730, 0.0
      %v1763 = vmax.f32 %v1731, 0.0
      %vm1796 = vcmask 1040384
      %v1797 = vrot.slane %v1732, 7
      %v1798 = vrot.slane %v1733, 7
      %v1799 = vsel %vm1796, %v1797, %v1798
      %v1800 = vrot.slane %v1734, 7
      %v1801 = vrot.slane %v1735, 7
      %v1802 = vsel %vm1796, %v1800, %v1801
      %v1803 = vrot.slane %v1736, 7
      %v1804 = vrot.slane %v1737, 7
      %v1805 = vsel %vm1796, %v1803, %v1804
      %v1806 = vrot.slane %v1738, 7
      %v1807 = vrot.slane %v1739, 7
      %v1808 = vsel %vm1796, %v1806, %v1807
      %v1809 = vrot.slane %v1740, 7
      %v1810 = vrot.slane %v1741, 7
      %v1811 = vsel %vm1796, %v1809, %v1810
      %v1812 = vrot.slane %v1742, 7
      %v1813 = vrot.slane %v1743, 7
      %v1814 = vsel %vm1796, %v1812, %v1813
      %v1815 = vrot.slane %v1744, 7
      %v1816 = vrot.slane %v1745, 7
      %v1817 = vsel %vm1796, %v1815, %v1816
      %v1818 = vrot.slane %v1746, 7
      %v1819 = vrot.slane %v1747, 7
      %v1820 = vsel %vm1796, %v1818, %v1819
      %v1821 = vrot.slane %v1748, 7
      %v1822 = vrot.slane %v1749, 7
      %v1823 = vsel %vm1796, %v1821, %v1822
      %v1824 = vrot.slane %v1750, 7
      %v1825 = vrot.slane %v1751, 7
      %v1826 = vsel %vm1796, %v1824, %v1825
      %v1827 = vrot.slane %v1752, 7
      %v1828 = vrot.slane %v1753, 7
      %v1829 = vsel %vm1796, %v1827, %v1828
      %v1830 = vrot.slane %v1754, 7
      %v1831 = vrot.slane %v1755, 7
      %v1832 = vsel %vm1796, %v1830, %v1831
      %v1833 = vrot.slane %v1756, 7
      %v1834 = vrot.slane %v1757, 7
      %v1835 = vsel %vm1796, %v1833, %v1834
      %v1836 = vrot.slane %v1758, 7
      %v1837 = vrot.slane %v1759, 7
      %v1838 = vsel %vm1796, %v1836, %v1837
      %v1839 = vrot.slane %v1760, 7
      %v1840 = vrot.slane %v1761, 7
      %v1841 = vsel %vm1796, %v1839, %v1840
      %v1842 = vrot.slane %v1762, 7
      %v1843 = vrot.slane %v1763, 7
      %v1844 = vsel %vm1796, %v1842, %v1843
      %v1893 = vsel %vm1796, 0.0, %v1797
      %v1894 = vsel %vm1796, 0.0, %v1800
      %v1895 = vsel %vm1796, 0.0, %v1803
      %v1896 = vsel %vm1796, 0.0, %v1806
      %v1897 = vsel %vm1796, 0.0, %v1809
      %v1898 = vsel %vm1796, 0.0, %v1812
      %v1899 = vsel %vm1796, 0.0, %v1815
      %v1900 = vsel %vm1796, 0.0, %v1818
      %v1901 = vsel %vm1796, 0.0, %v1821
      %v1902 = vsel %vm1796, 0.0, %v1824
      %v1903 = vsel %vm1796, 0.0, %v1827
      %v1904 = vsel %vm1796, 0.0, %v1830
      %v1905 = vsel %vm1796, 0.0, %v1833
      %v1906 = vsel %vm1796, 0.0, %v1836
      %v1907 = vsel %vm1796, 0.0, %v1839
      %v1908 = vsel %vm1796, 0.0, %v1842
      %v1909 = vsel %vm1796, %v1798, 0.0
      %v1910 = vsel %vm1796, %v1801, 0.0
      %v1911 = vsel %vm1796, %v1804, 0.0
      %v1912 = vsel %vm1796, %v1807, 0.0
      %v1913 = vsel %vm1796, %v1810, 0.0
      %v1914 = vsel %vm1796, %v1813, 0.0
      %v1915 = vsel %vm1796, %v1816, 0.0
      %v1916 = vsel %vm1796, %v1819, 0.0
      %v1917 = vsel %vm1796, %v1822, 0.0
      %v1918 = vsel %vm1796, %v1825, 0.0
      %v1919 = vsel %vm1796, %v1828, 0.0
      %v1920 = vsel %vm1796, %v1831, 0.0
      %v1921 = vsel %vm1796, %v1834, 0.0
      %v1922 = vsel %vm1796, %v1837, 0.0
      %v1923 = vsel %vm1796, %v1840, 0.0
      %v1924 = vsel %vm1796, %v1843, 0.0
      %v1956 = vrot.slane 0.0, 1
      %v1957 = vsel %vm381, %v1956, %v1956
      %v1958 = vrot.slane %v1893, 1
      %v1959 = vrot.slane %v1799, 1
      %v1960 = vsel %vm381, %v1958, %v1959
      %v1961 = vrot.slane %v1909, 1
      %v1962 = vsel %vm381, %v1959, %v1961
      %v1963 = vrot.slane %v1894, 1
      %v1964 = vrot.slane %v1802, 1
      %v1965 = vsel %vm381, %v1963, %v1964
      %v1966 = vrot.slane %v1910, 1
      %v1967 = vsel %vm381, %v1964, %v1966
      %v1968 = vrot.slane %v1895, 1
      %v1969 = vrot.slane %v1805, 1
      %v1970 = vsel %vm381, %v1968, %v1969
      %v1971 = vrot.slane %v1911, 1
      %v1972 = vsel %vm381, %v1969, %v1971
      %v1973 = vrot.slane %v1896, 1
      %v1974 = vrot.slane %v1808, 1
      %v1975 = vsel %vm381, %v1973, %v1974
      %v1976 = vrot.slane %v1912, 1
      %v1977 = vsel %vm381, %v1974, %v1976
      %v1978 = vrot.slane %v1897, 1
      %v1979 = vrot.slane %v1811, 1
      %v1980 = vsel %vm381, %v1978, %v1979
      %v1981 = vrot.slane %v1913, 1
      %v1982 = vsel %vm381, %v1979, %v1981
      %v1983 = vrot.slane %v1898, 1
      %v1984 = vrot.slane %v1814, 1
      %v1985 = vsel %vm381, %v1983, %v1984
      %v1986 = vrot.slane %v1914, 1
      %v1987 = vsel %vm381, %v1984, %v1986
      %v1988 = vrot.slane %v1899, 1
      %v1989 = vrot.slane %v1817, 1
      %v1990 = vsel %vm381, %v1988, %v1989
      %v1991 = vrot.slane %v1915, 1
      %v1992 = vsel %vm381, %v1989, %v1991
      %v1993 = vrot.slane %v1900, 1
      %v1994 = vrot.slane %v1820, 1
      %v1995 = vsel %vm381, %v1993, %v1994
      %v1996 = vrot.slane %v1916, 1
      %v1997 = vsel %vm381, %v1994, %v1996
      %v1998 = vrot.slane %v1901, 1
      %v1999 = vrot.slane %v1823, 1
      %v2000 = vsel %vm381, %v1998, %v1999
      %v2001 = vrot.slane %v1917, 1
      %v2002 = vsel %vm381, %v1999, %v2001
      %v2003 = vrot.slane %v1902, 1
      %v2004 = vrot.slane %v1826, 1
      %v2005 = vsel %vm381, %v2003, %v2004
      %v2006 = vrot.slane %v1918, 1
      %v2007 = vsel %vm381, %v2004, %v2006
      %v2008 = vrot.slane %v1903, 1
      %v2009 = vrot.slane %v1829, 1
      %v2010 = vsel %vm381, %v2008, %v2009
      %v2011 = vrot.slane %v1919, 1
      %v2012 = vsel %vm381, %v2009, %v2011
      %v2013 = vrot.slane %v1904, 1
      %v2014 = vrot.slane %v1832, 1
      %v2015 = vsel %vm381, %v2013, %v2014
      %v2016 = vrot.slane %v1920, 1
      %v2017 = vsel %vm381, %v2014, %v2016
      %v2018 = vrot.slane %v1905, 1
      %v2019 = vrot.slane %v1835, 1
      %v2020 = vsel %vm381, %v2018, %v2019
      %v2021 = vrot.slane %v1921, 1
      %v2022 = vsel %vm381, %v2019, %v2021
      %v2023 = vrot.slane %v1906, 1
      %v2024 = vrot.slane %v1838, 1
      %v2025 = vsel %vm381, %v2023, %v2024
      %v2026 = vrot.slane %v1922, 1
      %v2027 = vsel %vm381, %v2024, %v2026
      %v2028 = vrot.slane %v1907, 1
      %v2029 = vrot.slane %v1841, 1
      %v2030 = vsel %vm381, %v2028, %v2029
      %v2031 = vrot.slane %v1923, 1
      %v2032 = vsel %vm381, %v2029, %v2031
      %2033 = vrot.lane.b32.xlu0 %v1957, 8
      %v2034 = vpop.permute.xlu0 %2033
      %2035 = vrot.lane.b32.xlu0 %v1960, 8
      %v2036 = vpop.permute.xlu0 %2035
      %2037 = vrot.lane.b32.xlu0 %v1962, 8
      %v2038 = vpop.permute.xlu0 %2037
      %2039 = vrot.lane.b32.xlu0 %v1965, 8
      %v2040 = vpop.permute.xlu0 %2039
      %2041 = vrot.lane.b32.xlu0 %v1967, 8
      %v2042 = vpop.permute.xlu0 %2041
      %2043 = vrot.lane.b32.xlu0 %v1970, 8
      %v2044 = vpop.permute.xlu0 %2043
      %2045 = vrot.lane.b32.xlu0 %v1972, 8
      %v2046 = vpop.permute.xlu0 %2045
      %2047 = vrot.lane.b32.xlu0 %v1975, 8
      %v2048 = vpop.permute.xlu0 %2047
      %2049 = vrot.lane.b32.xlu0 %v1977, 8
      %v2050 = vpop.permute.xlu0 %2049
      %2051 = vrot.lane.b32.xlu0 %v1980, 8
      %v2052 = vpop.permute.xlu0 %2051
      %2053 = vrot.lane.b32.xlu0 %v1982, 8
      %v2054 = vpop.permute.xlu0 %2053
      %2055 = vrot.lane.b32.xlu0 %v1985, 8
      %v2056 = vpop.permute.xlu0 %2055
      %2057 = vrot.lane.b32.xlu0 %v1987, 8
      %v2058 = vpop.permute.xlu0 %2057
      %2059 = vrot.lane.b32.xlu0 %v1990, 8
      %v2060 = vpop.permute.xlu0 %2059
      %2061 = vrot.lane.b32.xlu0 %v1992, 8
      %v2062 = vpop.permute.xlu0 %2061
      %2063 = vrot.lane.b32.xlu0 %v1995, 8
      %v2064 = vpop.permute.xlu0 %2063
      %2065 = vrot.lane.b32.xlu0 %v1997, 8
      %v2066 = vpop.permute.xlu0 %2065
      %2067 = vrot.lane.b32.xlu0 %v2000, 8
      %v2068 = vpop.permute.xlu0 %2067
      %2069 = vrot.lane.b32.xlu0 %v2002, 8
      %v2070 = vpop.permute.xlu0 %2069
      %2071 = vrot.lane.b32.xlu0 %v2005, 8
      %v2072 = vpop.permute.xlu0 %2071
      %2073 = vrot.lane.b32.xlu0 %v2007, 8
      %v2074 = vpop.permute.xlu0 %2073
      %2075 = vrot.lane.b32.xlu0 %v2010, 8
      %v2076 = vpop.permute.xlu0 %2075
      %2077 = vrot.lane.b32.xlu0 %v2012, 8
      %v2078 = vpop.permute.xlu0 %2077
      %2079 = vrot.lane.b32.xlu0 %v2015, 8
      %v2080 = vpop.permute.xlu0 %2079
      %2081 = vrot.lane.b32.xlu0 %v2017, 8
      %v2082 = vpop.permute.xlu0 %2081
      %2083 = vrot.lane.b32.xlu0 %v2020, 8
      %v2084 = vpop.permute.xlu0 %2083
      %2085 = vrot.lane.b32.xlu0 %v2022, 8
      %v2086 = vpop.permute.xlu0 %2085
      %2087 = vrot.lane.b32.xlu0 %v2025, 8
      %v2088 = vpop.permute.xlu0 %2087
      %2089 = vrot.lane.b32.xlu0 %v2027, 8
      %v2090 = vpop.permute.xlu0 %2089
      %2091 = vrot.lane.b32.xlu0 %v2030, 8
      %v2092 = vpop.permute.xlu0 %2091
      %2093 = vrot.lane.b32.xlu0 %v2032, 8
      %v2094 = vpop.permute.xlu0 %2093
      %v2126 = vrot.slane 0.0, 2
      %v2127 = vsel %vm558, %v2126, %v2126
      %v2128 = vrot.slane %v1893, 2
      %v2129 = vrot.slane %v1799, 2
      %v2130 = vsel %vm558, %v2128, %v2129
      %v2131 = vrot.slane %v1909, 2
      %v2132 = vsel %vm558, %v2129, %v2131
      %v2133 = vrot.slane %v1894, 2
      %v2134 = vrot.slane %v1802, 2
      %v2135 = vsel %vm558, %v2133, %v2134
      %v2136 = vrot.slane %v1910, 2
      %v2137 = vsel %vm558, %v2134, %v2136
      %v2138 = vrot.slane %v1895, 2
      %v2139 = vrot.slane %v1805, 2
      %v2140 = vsel %vm558, %v2138, %v2139
      %v2141 = vrot.slane %v1911, 2
      %v2142 = vsel %vm558, %v2139, %v2141
      %v2143 = vrot.slane %v1896, 2
      %v2144 = vrot.slane %v1808, 2
      %v2145 = vsel %vm558, %v2143, %v2144
      %v2146 = vrot.slane %v1912, 2
      %v2147 = vsel %vm558, %v2144, %v2146
      %v2148 = vrot.slane %v1897, 2
      %v2149 = vrot.slane %v1811, 2
      %v2150 = vsel %vm558, %v2148, %v2149
      %v2151 = vrot.slane %v1913, 2
      %v2152 = vsel %vm558, %v2149, %v2151
      %v2153 = vrot.slane %v1898, 2
      %v2154 = vrot.slane %v1814, 2
      %v2155 = vsel %vm558, %v2153, %v2154
      %v2156 = vrot.slane %v1914, 2
      %v2157 = vsel %vm558, %v2154, %v2156
      %v2158 = vrot.slane %v1899, 2
      %v2159 = vrot.slane %v1817, 2
      %v2160 = vsel %vm558, %v2158, %v2159
      %v2161 = vrot.slane %v1915, 2
      %v2162 = vsel %vm558, %v2159, %v2161
      %v2163 = vrot.slane %v1900, 2
      %v2164 = vrot.slane %v1820, 2
      %v2165 = vsel %vm558, %v2163, %v2164
      %v2166 = vrot.slane %v1916, 2
      %v2167 = vsel %vm558, %v2164, %v2166
      %v2168 = vrot.slane %v1901, 2
      %v2169 = vrot.slane %v1823, 2
      %v2170 = vsel %vm558, %v2168, %v2169
      %v2171 = vrot.slane %v1917, 2
      %v2172 = vsel %vm558, %v2169, %v2171
      %v2173 = vrot.slane %v1902, 2
      %v2174 = vrot.slane %v1826, 2
      %v2175 = vsel %vm558, %v2173, %v2174
      %v2176 = vrot.slane %v1918, 2
      %v2177 = vsel %vm558, %v2174, %v2176
      %v2178 = vrot.slane %v1903, 2
      %v2179 = vrot.slane %v1829, 2
      %v2180 = vsel %vm558, %v2178, %v2179
      %v2181 = vrot.slane %v1919, 2
      %v2182 = vsel %vm558, %v2179, %v2181
      %v2183 = vrot.slane %v1904, 2
      %v2184 = vrot.slane %v1832, 2
      %v2185 = vsel %vm558, %v2183, %v2184
      %v2186 = vrot.slane %v1920, 2
      %v2187 = vsel %vm558, %v2184, %v2186
      %v2188 = vrot.slane %v1905, 2
      %v2189 = vrot.slane %v1835, 2
      %v2190 = vsel %vm558, %v2188, %v2189
      %v2191 = vrot.slane %v1921, 2
      %v2192 = vsel %vm558, %v2189, %v2191
      %v2193 = vrot.slane %v1906, 2
      %v2194 = vrot.slane %v1838, 2
      %v2195 = vsel %vm558, %v2193, %v2194
      %v2196 = vrot.slane %v1922, 2
      %v2197 = vsel %vm558, %v2194, %v2196
      %v2198 = vrot.slane %v1907, 2
      %v2199 = vrot.slane %v1841, 2
      %v2200 = vsel %vm558, %v2198, %v2199
      %v2201 = vrot.slane %v1923, 2
      %v2202 = vsel %vm558, %v2199, %v2201
      %2203 = vrot.lane.b32.xlu0 %v2127, 16
      %v2204 = vpop.permute.xlu0 %2203
      %2205 = vrot.lane.b32.xlu0 %v2130, 16
      %v2206 = vpop.permute.xlu0 %2205
      %2207 = vrot.lane.b32.xlu0 %v2132, 16
      %v2208 = vpop.permute.xlu0 %2207
      %2209 = vrot.lane.b32.xlu0 %v2135, 16
      %v2210 = vpop.permute.xlu0 %2209
      %2211 = vrot.lane.b32.xlu0 %v2137, 16
      %v2212 = vpop.permute.xlu0 %2211
      %2213 = vrot.lane.b32.xlu0 %v2140, 16
      %v2214 = vpop.permute.xlu0 %2213
      %2215 = vrot.lane.b32.xlu0 %v2142, 16
      %v2216 = vpop.permute.xlu0 %2215
      %2217 = vrot.lane.b32.xlu0 %v2145, 16
      %v2218 = vpop.permute.xlu0 %2217
      %2219 = vrot.lane.b32.xlu0 %v2147, 16
      %v2220 = vpop.permute.xlu0 %2219
      %2221 = vrot.lane.b32.xlu0 %v2150, 16
      %v2222 = vpop.permute.xlu0 %2221
      %2223 = vrot.lane.b32.xlu0 %v2152, 16
      %v2224 = vpop.permute.xlu0 %2223
      %2225 = vrot.lane.b32.xlu0 %v2155, 16
      %v2226 = vpop.permute.xlu0 %2225
      %2227 = vrot.lane.b32.xlu0 %v2157, 16
      %v2228 = vpop.permute.xlu0 %2227
      %2229 = vrot.lane.b32.xlu0 %v2160, 16
      %v2230 = vpop.permute.xlu0 %2229
      %2231 = vrot.lane.b32.xlu0 %v2162, 16
      %v2232 = vpop.permute.xlu0 %2231
      %2233 = vrot.lane.b32.xlu0 %v2165, 16
      %v2234 = vpop.permute.xlu0 %2233
      %2235 = vrot.lane.b32.xlu0 %v2167, 16
      %v2236 = vpop.permute.xlu0 %2235
      %2237 = vrot.lane.b32.xlu0 %v2170, 16
      %v2238 = vpop.permute.xlu0 %2237
      %2239 = vrot.lane.b32.xlu0 %v2172, 16
      %v2240 = vpop.permute.xlu0 %2239
      %2241 = vrot.lane.b32.xlu0 %v2175, 16
      %v2242 = vpop.permute.xlu0 %2241
      %2243 = vrot.lane.b32.xlu0 %v2177, 16
      %v2244 = vpop.permute.xlu0 %2243
      %2245 = vrot.lane.b32.xlu0 %v2180, 16
      %v2246 = vpop.permute.xlu0 %2245
      %2247 = vrot.lane.b32.xlu0 %v2182, 16
      %v2248 = vpop.permute.xlu0 %2247
      %2249 = vrot.lane.b32.xlu0 %v2185, 16
      %v2250 = vpop.permute.xlu0 %2249
      %2251 = vrot.lane.b32.xlu0 %v2187, 16
      %v2252 = vpop.permute.xlu0 %2251
      %2253 = vrot.lane.b32.xlu0 %v2190, 16
      %v2254 = vpop.permute.xlu0 %2253
      %2255 = vrot.lane.b32.xlu0 %v2192, 16
      %v2256 = vpop.permute.xlu0 %2255
      %2257 = vrot.lane.b32.xlu0 %v2195, 16
      %v2258 = vpop.permute.xlu0 %2257
      %2259 = vrot.lane.b32.xlu0 %v2197, 16
      %v2260 = vpop.permute.xlu0 %2259
      %2261 = vrot.lane.b32.xlu0 %v2200, 16
      %v2262 = vpop.permute.xlu0 %2261
      %2263 = vrot.lane.b32.xlu0 %v2202, 16
      %v2264 = vpop.permute.xlu0 %2263
      %v2296 = vsel %vm768, 0.0, %v2034
      %v2297 = vsel %vm768, %v1893, %v2036
      %v2298 = vsel %vm768, %v1799, %v2038
      %v2299 = vsel %vm768, %v1894, %v2040
      %v2300 = vsel %vm768, %v1802, %v2042
      %v2301 = vsel %vm768, %v1895, %v2044
      %v2302 = vsel %vm768, %v1805, %v2046
      %v2303 = vsel %vm768, %v1896, %v2048
      %v2304 = vsel %vm768, %v1808, %v2050
      %v2305 = vsel %vm768, %v1897, %v2052
      %v2306 = vsel %vm768, %v1811, %v2054
      %v2307 = vsel %vm768, %v1898, %v2056
      %v2308 = vsel %vm768, %v1814, %v2058
      %v2309 = vsel %vm768, %v1899, %v2060
      %v2310 = vsel %vm768, %v1817, %v2062
      %v2311 = vsel %vm768, %v1900, %v2064
      %v2312 = vsel %vm768, %v1820, %v2066
      %v2313 = vsel %vm768, %v1901, %v2068
      %v2314 = vsel %vm768, %v1823, %v2070
      %v2315 = vsel %vm768, %v1902, %v2072
      %v2316 = vsel %vm768, %v1826, %v2074
      %v2317 = vsel %vm768, %v1903, %v2076
      %v2318 = vsel %vm768, %v1829, %v2078
      %v2319 = vsel %vm768, %v1904, %v2080
      %v2320 = vsel %vm768, %v1832, %v2082
      %v2321 = vsel %vm768, %v1905, %v2084
      %v2322 = vsel %vm768, %v1835, %v2086
      %v2323 = vsel %vm768, %v1906, %v2088
      %v2324 = vsel %vm768, %v1838, %v2090
      %v2325 = vsel %vm768, %v1907, %v2092
      %v2326 = vsel %vm768, %v1841, %v2094
      %vm2327 = vcmask 130048
      %v2328 = vsel %vm2327, %v2296, %v2204
      %v2329 = vsel %vm2327, %v2297, %v2206
      %v2330 = vsel %vm2327, %v2298, %v2208
      %v2331 = vsel %vm2327, %v2299, %v2210
      %v2332 = vsel %vm2327, %v2300, %v2212
      %v2333 = vsel %vm2327, %v2301, %v2214
      %v2334 = vsel %vm2327, %v2302, %v2216
      %v2335 = vsel %vm2327, %v2303, %v2218
      %v2336 = vsel %vm2327, %v2304, %v2220
      %v2337 = vsel %vm2327, %v2305, %v2222
      %v2338 = vsel %vm2327, %v2306, %v2224
      %v2339 = vsel %vm2327, %v2307, %v2226
      %v2340 = vsel %vm2327, %v2308, %v2228
      %v2341 = vsel %vm2327, %v2309, %v2230
      %v2342 = vsel %vm2327, %v2310, %v2232
      %v2343 = vsel %vm2327, %v2311, %v2234
      %v2344 = vsel %vm2327, %v2312, %v2236
      %v2345 = vsel %vm2327, %v2313, %v2238
      %v2346 = vsel %vm2327, %v2314, %v2240
      %v2347 = vsel %vm2327, %v2315, %v2242
      %v2348 = vsel %vm2327, %v2316, %v2244
      %v2349 = vsel %vm2327, %v2317, %v2246
      %v2350 = vsel %vm2327, %v2318, %v2248
      %v2351 = vsel %vm2327, %v2319, %v2250
      %v2352 = vsel %vm2327, %v2320, %v2252
      %v2353 = vsel %vm2327, %v2321, %v2254
      %v2354 = vsel %vm2327, %v2322, %v2256
      %v2355 = vsel %vm2327, %v2323, %v2258
      %v2356 = vsel %vm2327, %v2324, %v2260
      %v2357 = vsel %vm2327, %v2325, %v2262
      %v2358 = vsel %vm2327, %v2326, %v2264
      %v2359 = vld [vmem:[%s3] sm:$0xff]
      %v2360 = vld [vmem:[%s3 + $0x8] sm:$0xff]
      %v2361 = vld [vmem:[%s3 + $0x10] sm:$0xff]
      %v2364 = vrot.slane %v1908, 1
      %v2365 = vrot.slane %v1844, 1
      %v2366 = vsel %vm381, %v2364, %v2365
      %v2367 = vrot.slane %v1924, 1
      %v2368 = vsel %vm381, %v2365, %v2367
      %2369 = vrot.lane.b32.xlu0 %v2366, 8
      %v2370 = vpop.permute.xlu0 %2369
      %2371 = vrot.lane.b32.xlu0 %v2368, 8
      %v2372 = vpop.permute.xlu0 %2371
      %v2375 = vrot.slane %v1908, 2
      %v2376 = vrot.slane %v1844, 2
      %v2377 = vsel %vm558, %v2375, %v2376
      %v2378 = vrot.slane %v1924, 2
      %v2379 = vsel %vm558, %v2376, %v2378
      %2380 = vrot.lane.b32.xlu0 %v2377, 16
      %v2381 = vpop.permute.xlu0 %2380
      %2382 = vrot.lane.b32.xlu0 %v2379, 16
      %v2383 = vpop.permute.xlu0 %2382
      %v2386 = vsel %vm768, %v1908, %v2370
      %v2387 = vsel %vm768, %v1844, %v2372
      %v2388 = vsel %vm2327, %v2386, %v2381
      %v2389 = vsel %vm2327, %v2387, %v2383
      %s2390 = scalar_lea.vmem %s3, 24
      %v2391 = vld [vmem:[%s2390] sm:$0xff]
      %v2392 = vld [vmem:[%s2390 + $0x8] sm:$0xff]
      %v2393 = vld [vmem:[%s2390 + $0x10] sm:$0xff]
      %vm2394 = vcmask 195584
      %v2396 = vsel %vm2394, %v2329, 0
      %v2399 = vsel %vm2394, %v2330, 0
      %v2402 = vsel %vm2394, %v2331, 0
      %v2405 = vsel %vm2394, %v2332, 0
      %v2408 = vsel %vm2394, %v2333, 0
      %v2411 = vsel %vm2394, %v2334, 0
      %v2414 = vsel %vm2394, %v2335, 0
      %v2417 = vsel %vm2394, %v2336, 0
      %v2420 = vsel %vm2394, %v2337, 0
      %v2423 = vsel %vm2394, %v2338, 0
      %v2426 = vsel %vm2394, %v2339, 0
      %v2429 = vsel %vm2394, %v2340, 0
      %v2432 = vsel %vm2394, %v2341, 0
      %v2435 = vsel %vm2394, %v2342, 0
      %v2438 = vsel %vm2394, %v2343, 0
      %v2441 = vsel %vm2394, %v2344, 0
      %v2444 = vsel %vm2394, %v2345, 0
      %v2447 = vsel %vm2394, %v2346, 0
      %v2450 = vsel %vm2394, %v2347, 0
      %v2453 = vsel %vm2394, %v2348, 0
      %v2456 = vsel %vm2394, %v2349, 0
      %v2459 = vsel %vm2394, %v2350, 0
      %v2462 = vsel %vm2394, %v2351, 0
      %v2465 = vsel %vm2394, %v2352, 0
      %v2468 = vsel %vm2394, %v2353, 0
      %v2471 = vsel %vm2394, %v2354, 0
      %v2474 = vsel %vm2394, %v2355, 0
      %v2477 = vsel %vm2394, %v2356, 0
      %v2480 = vsel %vm2394, %v2357, 0
      %v2483 = vsel %vm2394, %v2358, 0
      %v2486 = vsel %vm2394, %v2388, 0
      %v2489 = vsel %vm2394, %v2389, 0
      %2491 = vmatprep.subr.mxu0 0.0
      %2492 = vmatpush1.msra.mxu0 %v2391
      %2493 = vmatprep.subr.mxu0 0.0
      %2494 = vmatpush1.msra.mxu0 %v2392
      %2495 = vmatprep.subr.mxu0 0.0
      %2496 = vmatpush1.msra.mxu0 %v2393
      %2497 = vmatprep.subr.mxu0 0.0
      %2498 = vmatpush1.msra.mxu0 0.0
      %2499 = vmatprep.subr.mxu0 0.0
      %2500 = vmatpush1.msra.mxu0 0.0
      %2501 = vmatprep.subr.mxu0 0.0
      %2502 = vmatpush1.msra.mxu0 0.0
      %2503 = vmatprep.subr.mxu0 0.0
      %2504 = vmatpush1.msra.mxu0 0.0
      %2505 = vmatprep.subr.mxu0 0.0
      %2506 = vmatpush1.msra.mxu0 0.0
      %2507 = vmatprep.subr.mxu0 0.0
      %2508 = vmatpush1.msra.mxu0 0.0
      %2509 = vmatprep.subr.mxu0 0.0
      %2510 = vmatpush1.msra.mxu0 0.0
      %2511 = vmatprep.subr.mxu0 0.0
      %2512 = vmatpush1.msra.mxu0 0.0
      %2513 = vmatprep.subr.mxu0 0.0
      %2514 = vmatpush1.msra.mxu0 0.0
      %2515 = vmatprep.subr.mxu0 0.0
      %2516 = vmatpush1.msra.mxu0 0.0
      %2517 = vmatprep.subr.mxu0 0.0
      %2518 = vmatpush1.msra.mxu0 0.0
      %2519 = vmatprep.subr.mxu0 0.0
      %2520 = vmatpush1.msra.mxu0 0.0
      %2521 = vmatprep.subr.mxu0 0.0
      %2522 = vmatpush1.msra.mxu0 0.0
      %2523 = vmatprep.subr.mxu0 0.0
      %2524 = vmatpush1.msra.mxu0 0.0
      %2525 = vmatprep.subr.mxu0 0.0
      %2526 = vmatpush1.msra.mxu0 0.0
      %2527 = vmatprep.subr.mxu0 0.0
      %2528 = vmatpush1.msra.mxu0 0.0
      %2529 = vmatprep.subr.mxu0 0.0
      %2530 = vmatpush1.msra.mxu0 0.0
      %2531 = vmatprep.subr.mxu0 0.0
      %2532 = vmatpush1.msra.mxu0 0.0
      %2533 = vmatprep.subr.mxu0 0.0
      %2534 = vmatpush1.msra.mxu0 0.0
      %2535 = vmatprep.subr.mxu0 0.0
      %2536 = vmatpush1.msra.mxu0 0.0
      %2537 = vmatprep.subr.mxu0 0.0
      %2538 = vmatpush1.msra.mxu0 0.0
      %2539 = vmatprep.subr.mxu0 0.0
      %2540 = vmatpush1.msra.mxu0 0.0
      %2541 = vmatprep.subr.mxu0 0.0
      %2542 = vmatpush1.msra.mxu0 0.0
      %2543 = vmatprep.subr.mxu0 0.0
      %2544 = vmatpush1.msra.mxu0 0.0
      %2545 = vmatprep.subr.mxu0 0.0
      %2546 = vmatpush1.msra.mxu0 0.0
      %2547 = vmatprep.subr.mxu0 0.0
      %2548 = vmatpush1.msra.mxu0 0.0
      %2549 = vmatprep.subr.mxu0 0.0
      %2550 = vmatpush1.msra.mxu0 0.0
      %2551 = vmatprep.subr.mxu0 0.0
      %2552 = vmatpush1.msra.mxu0 0.0
      %2553 = vmatprep.subr.mxu0 0.0
      %2554 = vmatpush1.msra.mxu0 0.0
      %2555 = vmatprep.mubr.f32.mxu0 0.0
      %2556 = vmatmul.mubr.f32.gmra.mrb[0].mxu0 %v2396
      %v2557 = vpop.f32.mrb[0].mxu0
      %v2558 = vadd.f32 0.0, %v2557
      %v2559 = vpop.f32.mrb[0].mxu0
      %2560 = vmatprep.mubr.f32.mxu0 0.0
      %2561 = vmatmul.mubr.f32.gmra.mrb[0].mxu0 %v2399
      %v2562 = vpop.f32.mrb[0].mxu0
      %v2563 = vadd.f32 0.0, %v2562
      %v2564 = vpop.f32.mrb[0].mxu0
      %2565 = vmatprep.mubr.f32.mxu0 0.0
      %2566 = vmatmul.mubr.f32.gmra.mrb[0].mxu0 %v2402
      %v2567 = vpop.f32.mrb[0].mxu0
      %v2568 = vadd.f32 0.0, %v2567
      %v2569 = vpop.f32.mrb[0].mxu0
      %2570 = vmatprep.mubr.f32.mxu0 0.0
      %2571 = vmatmul.mubr.f32.gmra.mrb[0].mxu0 %v2405
      %v2572 = vpop.f32.mrb[0].mxu0
      %v2573 = vadd.f32 0.0, %v2572
      %v2574 = vpop.f32.mrb[0].mxu0
      %2575 = vmatprep.mubr.f32.mxu0 0.0
      %2576 = vmatmul.mubr.f32.gmra.mrb[0].mxu0 %v2408
      %v2577 = vpop.f32.mrb[0].mxu0
      %v2578 = vadd.f32 0.0, %v2577
      %v2579 = vpop.f32.mrb[0].mxu0
      %2580 = vmatprep.mubr.f32.mxu0 0.0
      %2581 = vmatmul.mubr.f32.gmra.mrb[0].mxu0 %v2411
      %v2582 = vpop.f32.mrb[0].mxu0
      %v2583 = vadd.f32 0.0, %v2582
      %v2584 = vpop.f32.mrb[0].mxu0
      %2585 = vmatprep.mubr.f32.mxu0 0.0
      %2586 = vmatmul.mubr.f32.gmra.mrb[0].mxu0 %v2414
      %v2587 = vpop.f32.mrb[0].mxu0
      %v2588 = vadd.f32 0.0, %v2587
      %v2589 = vpop.f32.mrb[0].mxu0
      %2590 = vmatprep.mubr.f32.mxu0 0.0
      %2591 = vmatmul.mubr.f32.gmra.mrb[0].mxu0 %v2417
      %v2592 = vpop.f32.mrb[0].mxu0
      %v2593 = vadd.f32 0.0, %v2592
      %v2594 = vpop.f32.mrb[0].mxu0
      %2595 = vmatprep.mubr.f32.mxu0 0.0
      %2596 = vmatmul.mubr.f32.gmra.mrb[0].mxu0 %v2420
      %v2597 = vpop.f32.mrb[0].mxu0
      %v2598 = vadd.f32 0.0, %v2597
      %v2599 = vpop.f32.mrb[0].mxu0
      %2600 = vmatprep.mubr.f32.mxu0 0.0
      %2601 = vmatmul.mubr.f32.gmra.mrb[0].mxu0 %v2423
      %v2602 = vpop.f32.mrb[0].mxu0
      %v2603 = vadd.f32 0.0, %v2602
      %v2604 = vpop.f32.mrb[0].mxu0
      %2605 = vmatprep.mubr.f32.mxu0 0.0
      %2606 = vmatmul.mubr.f32.gmra.mrb[0].mxu0 %v2426
      %v2607 = vpop.f32.mrb[0].mxu0
      %v2608 = vadd.f32 0.0, %v2607
      %v2609 = vpop.f32.mrb[0].mxu0
      %2610 = vmatprep.mubr.f32.mxu0 0.0
      %2611 = vmatmul.mubr.f32.gmra.mrb[0].mxu0 %v2429
      %v2612 = vpop.f32.mrb[0].mxu0
      %v2613 = vadd.f32 0.0, %v2612
      %v2614 = vpop.f32.mrb[0].mxu0
      %2615 = vmatprep.mubr.f32.mxu0 0.0
      %2616 = vmatmul.mubr.f32.gmra.mrb[0].mxu0 %v2432
      %v2617 = vpop.f32.mrb[0].mxu0
      %v2618 = vadd.f32 0.0, %v2617
      %v2619 = vpop.f32.mrb[0].mxu0
      %2620 = vmatprep.mubr.f32.mxu0 0.0
      %2621 = vmatmul.mubr.f32.gmra.mrb[0].mxu0 %v2435
      %v2622 = vpop.f32.mrb[0].mxu0
      %v2623 = vadd.f32 0.0, %v2622
      %v2624 = vpop.f32.mrb[0].mxu0
      %2625 = vmatprep.mubr.f32.mxu0 0.0
      %2626 = vmatmul.mubr.f32.gmra.mrb[0].mxu0 %v2438
      %v2627 = vpop.f32.mrb[0].mxu0
      %v2628 = vadd.f32 0.0, %v2627
      %v2629 = vpop.f32.mrb[0].mxu0
      %2630 = vmatprep.mubr.f32.mxu0 0.0
      %2631 = vmatmul.mubr.f32.gmra.mrb[0].mxu0 %v2441
      %v2632 = vpop.f32.mrb[0].mxu0
      %v2633 = vadd.f32 0.0, %v2632
      %v2634 = vpop.f32.mrb[0].mxu0
      %2635 = vmatprep.mubr.f32.mxu0 0.0
      %2636 = vmatmul.mubr.f32.gmra.mrb[0].mxu0 %v2444
      %v2637 = vpop.f32.mrb[0].mxu0
      %v2638 = vadd.f32 0.0, %v2637
      %v2639 = vpop.f32.mrb[0].mxu0
      %2640 = vmatprep.mubr.f32.mxu0 0.0
      %2641 = vmatmul.mubr.f32.gmra.mrb[0].mxu0 %v2447
      %v2642 = vpop.f32.mrb[0].mxu0
      %v2643 = vadd.f32 0.0, %v2642
      %v2644 = vpop.f32.mrb[0].mxu0
      %2645 = vmatprep.mubr.f32.mxu0 0.0
      %2646 = vmatmul.mubr.f32.gmra.mrb[0].mxu0 %v2450
      %v2647 = vpop.f32.mrb[0].mxu0
      %v2648 = vadd.f32 0.0, %v2647
      %v2649 = vpop.f32.mrb[0].mxu0
      %2650 = vmatprep.mubr.f32.mxu0 0.0
      %2651 = vmatmul.mubr.f32.gmra.mrb[0].mxu0 %v2453
      %v2652 = vpop.f32.mrb[0].mxu0
      %v2653 = vadd.f32 0.0, %v2652
      %v2654 = vpop.f32.mrb[0].mxu0
      %2655 = vmatprep.mubr.f32.mxu0 0.0
      %2656 = vmatmul.mubr.f32.gmra.mrb[0].mxu0 %v2456
      %v2657 = vpop.f32.mrb[0].mxu0
      %v2658 = vadd.f32 0.0, %v2657
      %v2659 = vpop.f32.mrb[0].mxu0
      %2660 = vmatprep.mubr.f32.mxu0 0.0
      %2661 = vmatmul.mubr.f32.gmra.mrb[0].mxu0 %v2459
      %v2662 = vpop.f32.mrb[0].mxu0
      %v2663 = vadd.f32 0.0, %v2662
      %v2664 = vpop.f32.mrb[0].mxu0
      %2665 = vmatprep.mubr.f32.mxu0 0.0
      %2666 = vmatmul.mubr.f32.gmra.mrb[0].mxu0 %v2462
      %v2667 = vpop.f32.mrb[0].mxu0
      %v2668 = vadd.f32 0.0, %v2667
      %v2669 = vpop.f32.mrb[0].mxu0
      %2670 = vmatprep.mubr.f32.mxu0 0.0
      %2671 = vmatmul.mubr.f32.gmra.mrb[0].mxu0 %v2465
      %v2672 = vpop.f32.mrb[0].mxu0
      %v2673 = vadd.f32 0.0, %v2672
      %v2674 = vpop.f32.mrb[0].mxu0
      %2675 = vmatprep.mubr.f32.mxu0 0.0
      %2676 = vmatmul.mubr.f32.gmra.mrb[0].mxu0 %v2468
      %v2677 = vpop.f32.mrb[0].mxu0
      %v2678 = vadd.f32 0.0, %v2677
      %v2679 = vpop.f32.mrb[0].mxu0
      %2680 = vmatprep.mubr.f32.mxu0 0.0
      %2681 = vmatmul.mubr.f32.gmra.mrb[0].mxu0 %v2471
      %v2682 = vpop.f32.mrb[0].mxu0
      %v2683 = vadd.f32 0.0, %v2682
      %v2684 = vpop.f32.mrb[0].mxu0
      %2685 = vmatprep.mubr.f32.mxu0 0.0
      %2686 = vmatmul.mubr.f32.gmra.mrb[0].mxu0 %v2474
      %v2687 = vpop.f32.mrb[0].mxu0
      %v2688 = vadd.f32 0.0, %v2687
      %v2689 = vpop.f32.mrb[0].mxu0
      %2690 = vmatprep.mubr.f32.mxu0 0.0
      %2691 = vmatmul.mubr.f32.gmra.mrb[0].mxu0 %v2477
      %v2692 = vpop.f32.mrb[0].mxu0
      %v2693 = vadd.f32 0.0, %v2692
      %v2694 = vpop.f32.mrb[0].mxu0
      %2695 = vmatprep.mubr.f32.mxu0 0.0
      %2696 = vmatmul.mubr.f32.gmra.mrb[0].mxu0 %v2480
      %v2697 = vpop.f32.mrb[0].mxu0
      %v2698 = vadd.f32 0.0, %v2697
      %v2699 = vpop.f32.mrb[0].mxu0
      %2700 = vmatprep.mubr.f32.mxu0 0.0
      %2701 = vmatmul.mubr.f32.gmra.mrb[0].mxu0 %v2483
      %v2702 = vpop.f32.mrb[0].mxu0
      %v2703 = vadd.f32 0.0, %v2702
      %v2704 = vpop.f32.mrb[0].mxu0
      %2705 = vmatprep.mubr.f32.mxu0 0.0
      %2706 = vmatmul.mubr.f32.gmra.mrb[0].mxu0 %v2486
      %v2707 = vpop.f32.mrb[0].mxu0
      %v2708 = vadd.f32 0.0, %v2707
      %v2709 = vpop.f32.mrb[0].mxu0
      %2710 = vmatprep.mubr.f32.mxu0 0.0
      %2711 = vmatmul.mubr.f32.gmra.mrb[0].mxu0 %v2489
      %v2712 = vpop.f32.mrb[0].mxu0
      %v2713 = vadd.f32 0.0, %v2712
      %v2714 = vpop.f32.mrb[0].mxu0
      %2715 = vdwg.mxu0
      %v2717 = vsel %vm2394, %v2328, 0
      %2719 = vmatprep.subr.mxu0 0.0
      %2720 = vmatpush1.msra.mxu0 %v2359
      %2721 = vmatprep.subr.mxu0 0.0
      %2722 = vmatpush1.msra.mxu0 %v2360
      %2723 = vmatprep.subr.mxu0 0.0
      %2724 = vmatpush1.msra.mxu0 %v2361
      %2725 = vmatprep.subr.mxu0 0.0
      %2726 = vmatpush1.msra.mxu0 0.0
      %2727 = vmatprep.subr.mxu0 0.0
      %2728 = vmatpush1.msra.mxu0 0.0
      %2729 = vmatprep.subr.mxu0 0.0
      %2730 = vmatpush1.msra.mxu0 0.0
      %2731 = vmatprep.subr.mxu0 0.0
      %2732 = vmatpush1.msra.mxu0 0.0
      %2733 = vmatprep.subr.mxu0 0.0
      %2734 = vmatpush1.msra.mxu0 0.0
      %2735 = vmatprep.subr.mxu0 0.0
      %2736 = vmatpush1.msra.mxu0 0.0
      %2737 = vmatprep.subr.mxu0 0.0
      %2738 = vmatpush1.msra.mxu0 0.0
      %2739 = vmatprep.subr.mxu0 0.0
      %2740 = vmatpush1.msra.mxu0 0.0
      %2741 = vmatprep.subr.mxu0 0.0
      %2742 = vmatpush1.msra.mxu0 0.0
      %2743 = vmatprep.subr.mxu0 0.0
      %2744 = vmatpush1.msra.mxu0 0.0
      %2745 = vmatprep.subr.mxu0 0.0
      %2746 = vmatpush1.msra.mxu0 0.0
      %2747 = vmatprep.subr.mxu0 0.0
      %2748 = vmatpush1.msra.mxu0 0.0
      %2749 = vmatprep.subr.mxu0 0.0
      %2750 = vmatpush1.msra.mxu0 0.0
      %2751 = vmatprep.subr.mxu0 0.0
      %2752 = vmatpush1.msra.mxu0 0.0
      %2753 = vmatprep.subr.mxu0 0.0
      %2754 = vmatpush1.msra.mxu0 0.0
      %2755 = vmatprep.subr.mxu0 0.0
      %2756 = vmatpush1.msra.mxu0 0.0
      %2757 = vmatprep.subr.mxu0 0.0
      %2758 = vmatpush1.msra.mxu0 0.0
      %2759 = vmatprep.subr.mxu0 0.0
      %2760 = vmatpush1.msra.mxu0 0.0
      %2761 = vmatprep.subr.mxu0 0.0
      %2762 = vmatpush1.msra.mxu0 0.0
      %2763 = vmatprep.subr.mxu0 0.0
      %2764 = vmatpush1.msra.mxu0 0.0
      %2765 = vmatprep.subr.mxu0 0.0
      %2766 = vmatpush1.msra.mxu0 0.0
      %2767 = vmatprep.subr.mxu0 0.0
      %2768 = vmatpush1.msra.mxu0 0.0
      %2769 = vmatprep.subr.mxu0 0.0
      %2770 = vmatpush1.msra.mxu0 0.0
      %2771 = vmatprep.subr.mxu0 0.0
      %2772 = vmatpush1.msra.mxu0 0.0
      %2773 = vmatprep.subr.mxu0 0.0
      %2774 = vmatpush1.msra.mxu0 0.0
      %2775 = vmatprep.subr.mxu0 0.0
      %2776 = vmatpush1.msra.mxu0 0.0
      %2777 = vmatprep.subr.mxu0 0.0
      %2778 = vmatpush1.msra.mxu0 0.0
      %2779 = vmatprep.subr.mxu0 0.0
      %2780 = vmatpush1.msra.mxu0 0.0
      %2781 = vmatprep.subr.mxu0 0.0
      %2782 = vmatpush1.msra.mxu0 0.0
      %2783 = vmatprep.mubr.f32.mxu0 0.0
      %2784 = vmatmul.mubr.f32.gmra.mrb[0].mxu0 %v2717
      %v2785 = vpop.f32.mrb[0].mxu0
      %v2786 = vadd.f32 %v2558, %v2785
      %v2787 = vpop.f32.mrb[0].mxu0
      %2788 = vmatprep.mubr.f32.mxu0 0.0
      %2789 = vmatmul.mubr.f32.gmra.mrb[0].mxu0 %v2717
      %v2790 = vpop.f32.mrb[0].mxu0
      %v2791 = vadd.f32 %v2563, %v2790
      %v2792 = vpop.f32.mrb[0].mxu0
      %2793 = vmatprep.mubr.f32.mxu0 0.0
      %2794 = vmatmul.mubr.f32.gmra.mrb[0].mxu0 %v2396
      %v2795 = vpop.f32.mrb[0].mxu0
      %v2796 = vadd.f32 %v2568, %v2795
      %v2797 = vpop.f32.mrb[0].mxu0
      %2798 = vmatprep.mubr.f32.mxu0 0.0
      %2799 = vmatmul.mubr.f32.gmra.mrb[0].mxu0 %v2399
      %v2800 = vpop.f32.mrb[0].mxu0
      %v2801 = vadd.f32 %v2573, %v2800
      %v2802 = vpop.f32.mrb[0].mxu0
      %2803 = vmatprep.mubr.f32.mxu0 0.0
      %2804 = vmatmul.mubr.f32.gmra.mrb[0].mxu0 %v2402
      %v2805 = vpop.f32.mrb[0].mxu0
      %v2806 = vadd.f32 %v2578, %v2805
      %v2807 = vpop.f32.mrb[0].mxu0
      %2808 = vmatprep.mubr.f32.mxu0 0.0
      %2809 = vmatmul.mubr.f32.gmra.mrb[0].mxu0 %v2405
      %v2810 = vpop.f32.mrb[0].mxu0
      %v2811 = vadd.f32 %v2583, %v2810
      %v2812 = vpop.f32.mrb[0].mxu0
      %2813 = vmatprep.mubr.f32.mxu0 0.0
      %2814 = vmatmul.mubr.f32.gmra.mrb[0].mxu0 %v2408
      %v2815 = vpop.f32.mrb[0].mxu0
      %v2816 = vadd.f32 %v2588, %v2815
      %v2817 = vpop.f32.mrb[0].mxu0
      %2818 = vmatprep.mubr.f32.mxu0 0.0
      %2819 = vmatmul.mubr.f32.gmra.mrb[0].mxu0 %v2411
      %v2820 = vpop.f32.mrb[0].mxu0
      %v2821 = vadd.f32 %v2593, %v2820
      %v2822 = vpop.f32.mrb[0].mxu0
      %2823 = vmatprep.mubr.f32.mxu0 0.0
      %2824 = vmatmul.mubr.f32.gmra.mrb[0].mxu0 %v2414
      %v2825 = vpop.f32.mrb[0].mxu0
      %v2826 = vadd.f32 %v2598, %v2825
      %v2827 = vpop.f32.mrb[0].mxu0
      %2828 = vmatprep.mubr.f32.mxu0 0.0
      %2829 = vmatmul.mubr.f32.gmra.mrb[0].mxu0 %v2417
      %v2830 = vpop.f32.mrb[0].mxu0
      %v2831 = vadd.f32 %v2603, %v2830
      %v2832 = vpop.f32.mrb[0].mxu0
      %2833 = vmatprep.mubr.f32.mxu0 0.0
      %2834 = vmatmul.mubr.f32.gmra.mrb[0].mxu0 %v2420
      %v2835 = vpop.f32.mrb[0].mxu0
      %v2836 = vadd.f32 %v2608, %v2835
      %v2837 = vpop.f32.mrb[0].mxu0
      %2838 = vmatprep.mubr.f32.mxu0 0.0
      %2839 = vmatmul.mubr.f32.gmra.mrb[0].mxu0 %v2423
      %v2840 = vpop.f32.mrb[0].mxu0
      %v2841 = vadd.f32 %v2613, %v2840
      %v2842 = vpop.f32.mrb[0].mxu0
      %2843 = vmatprep.mubr.f32.mxu0 0.0
      %2844 = vmatmul.mubr.f32.gmra.mrb[0].mxu0 %v2426
      %v2845 = vpop.f32.mrb[0].mxu0
      %v2846 = vadd.f32 %v2618, %v2845
      %v2847 = vpop.f32.mrb[0].mxu0
      %2848 = vmatprep.mubr.f32.mxu0 0.0
      %2849 = vmatmul.mubr.f32.gmra.mrb[0].mxu0 %v2429
      %v2850 = vpop.f32.mrb[0].mxu0
      %v2851 = vadd.f32 %v2623, %v2850
      %v2852 = vpop.f32.mrb[0].mxu0
      %2853 = vmatprep.mubr.f32.mxu0 0.0
      %2854 = vmatmul.mubr.f32.gmra.mrb[0].mxu0 %v2432
      %v2855 = vpop.f32.mrb[0].mxu0
      %v2856 = vadd.f32 %v2628, %v2855
      %v2857 = vpop.f32.mrb[0].mxu0
      %2858 = vmatprep.mubr.f32.mxu0 0.0
      %2859 = vmatmul.mubr.f32.gmra.mrb[0].mxu0 %v2435
      %v2860 = vpop.f32.mrb[0].mxu0
      %v2861 = vadd.f32 %v2633, %v2860
      %v2862 = vpop.f32.mrb[0].mxu0
      %2863 = vmatprep.mubr.f32.mxu0 0.0
      %2864 = vmatmul.mubr.f32.gmra.mrb[0].mxu0 %v2438
      %v2865 = vpop.f32.mrb[0].mxu0
      %v2866 = vadd.f32 %v2638, %v2865
      %v2867 = vpop.f32.mrb[0].mxu0
      %2868 = vmatprep.mubr.f32.mxu0 0.0
      %2869 = vmatmul.mubr.f32.gmra.mrb[0].mxu0 %v2441
      %v2870 = vpop.f32.mrb[0].mxu0
      %v2871 = vadd.f32 %v2643, %v2870
      %v2872 = vpop.f32.mrb[0].mxu0
      %2873 = vmatprep.mubr.f32.mxu0 0.0
      %2874 = vmatmul.mubr.f32.gmra.mrb[0].mxu0 %v2444
      %v2875 = vpop.f32.mrb[0].mxu0
      %v2876 = vadd.f32 %v2648, %v2875
      %v2877 = vpop.f32.mrb[0].mxu0
      %2878 = vmatprep.mubr.f32.mxu0 0.0
      %2879 = vmatmul.mubr.f32.gmra.mrb[0].mxu0 %v2447
      %v2880 = vpop.f32.mrb[0].mxu0
      %v2881 = vadd.f32 %v2653, %v2880
      %v2882 = vpop.f32.mrb[0].mxu0
      %2883 = vmatprep.mubr.f32.mxu0 0.0
      %2884 = vmatmul.mubr.f32.gmra.mrb[0].mxu0 %v2450
      %v2885 = vpop.f32.mrb[0].mxu0
      %v2886 = vadd.f32 %v2658, %v2885
      %v2887 = vpop.f32.mrb[0].mxu0
      %2888 = vmatprep.mubr.f32.mxu0 0.0
      %2889 = vmatmul.mubr.f32.gmra.mrb[0].mxu0 %v2453
      %v2890 = vpop.f32.mrb[0].mxu0
      %v2891 = vadd.f32 %v2663, %v2890
      %v2892 = vpop.f32.mrb[0].mxu0
      %2893 = vmatprep.mubr.f32.mxu0 0.0
      %2894 = vmatmul.mubr.f32.gmra.mrb[0].mxu0 %v2456
      %v2895 = vpop.f32.mrb[0].mxu0
      %v2896 = vadd.f32 %v2668, %v2895
      %v2897 = vpop.f32.mrb[0].mxu0
      %2898 = vmatprep.mubr.f32.mxu0 0.0
      %2899 = vmatmul.mubr.f32.gmra.mrb[0].mxu0 %v2459
      %v2900 = vpop.f32.mrb[0].mxu0
      %v2901 = vadd.f32 %v2673, %v2900
      %v2902 = vpop.f32.mrb[0].mxu0
      %2903 = vmatprep.mubr.f32.mxu0 0.0
      %2904 = vmatmul.mubr.f32.gmra.mrb[0].mxu0 %v2462
      %v2905 = vpop.f32.mrb[0].mxu0
      %v2906 = vadd.f32 %v2678, %v2905
      %v2907 = vpop.f32.mrb[0].mxu0
      %2908 = vmatprep.mubr.f32.mxu0 0.0
      %2909 = vmatmul.mubr.f32.gmra.mrb[0].mxu0 %v2465
      %v2910 = vpop.f32.mrb[0].mxu0
      %v2911 = vadd.f32 %v2683, %v2910
      %v2912 = vpop.f32.mrb[0].mxu0
      %2913 = vmatprep.mubr.f32.mxu0 0.0
      %2914 = vmatmul.mubr.f32.gmra.mrb[0].mxu0 %v2468
      %v2915 = vpop.f32.mrb[0].mxu0
      %v2916 = vadd.f32 %v2688, %v2915
      %v2917 = vpop.f32.mrb[0].mxu0
      %2918 = vmatprep.mubr.f32.mxu0 0.0
      %2919 = vmatmul.mubr.f32.gmra.mrb[0].mxu0 %v2471
      %v2920 = vpop.f32.mrb[0].mxu0
      %v2921 = vadd.f32 %v2693, %v2920
      %v2922 = vpop.f32.mrb[0].mxu0
      %2923 = vmatprep.mubr.f32.mxu0 0.0
      %2924 = vmatmul.mubr.f32.gmra.mrb[0].mxu0 %v2474
      %v2925 = vpop.f32.mrb[0].mxu0
      %v2926 = vadd.f32 %v2698, %v2925
      %v2927 = vpop.f32.mrb[0].mxu0
      %2928 = vmatprep.mubr.f32.mxu0 0.0
      %2929 = vmatmul.mubr.f32.gmra.mrb[0].mxu0 %v2477
      %v2930 = vpop.f32.mrb[0].mxu0
      %v2931 = vadd.f32 %v2703, %v2930
      %v2932 = vpop.f32.mrb[0].mxu0
      %2933 = vmatprep.mubr.f32.mxu0 0.0
      %2934 = vmatmul.mubr.f32.gmra.mrb[0].mxu0 %v2480
      %v2935 = vpop.f32.mrb[0].mxu0
      %v2936 = vadd.f32 %v2708, %v2935
      %v2937 = vpop.f32.mrb[0].mxu0
      %2938 = vmatprep.mubr.f32.mxu0 0.0
      %2939 = vmatmul.mubr.f32.gmra.mrb[0].mxu0 %v2483
      %v2940 = vpop.f32.mrb[0].mxu0
      %v2941 = vadd.f32 %v2713, %v2940
      %v2942 = vpop.f32.mrb[0].mxu0
      %2943 = vdwg.mxu0
      %s2944 = scalar_lea.vmem %s3, 48
      %v2945 = vld [vmem:[%s2944] sm:$0xff]
      %v2946 = vld [vmem:[%s2944 + $0x8] sm:$0xff]
      %v2947 = vld [vmem:[%s2944 + $0x10] sm:$0xff]
      %2948 = vmatprep.subr.mxu0 0.0
      %2949 = vmatpush1.msra.mxu0 %v2945
      %2950 = vmatprep.subr.mxu0 0.0
      %2951 = vmatpush1.msra.mxu0 %v2946
      %2952 = vmatprep.subr.mxu0 0.0
      %2953 = vmatpush1.msra.mxu0 %v2947
      %2954 = vmatprep.subr.mxu0 0.0
      %2955 = vmatpush1.msra.mxu0 0.0
      %2956 = vmatprep.subr.mxu0 0.0
      %2957 = vmatpush1.msra.mxu0 0.0
      %2958 = vmatprep.subr.mxu0 0.0
      %2959 = vmatpush1.msra.mxu0 0.0
      %2960 = vmatprep.subr.mxu0 0.0
      %2961 = vmatpush1.msra.mxu0 0.0
      %2962 = vmatprep.subr.mxu0 0.0
      %2963 = vmatpush1.msra.mxu0 0.0
      %2964 = vmatprep.subr.mxu0 0.0
      %2965 = vmatpush1.msra.mxu0 0.0
      %2966 = vmatprep.subr.mxu0 0.0
      %2967 = vmatpush1.msra.mxu0 0.0
      %2968 = vmatprep.subr.mxu0 0.0
      %2969 = vmatpush1.msra.mxu0 0.0
      %2970 = vmatprep.subr.mxu0 0.0
      %2971 = vmatpush1.msra.mxu0 0.0
      %2972 = vmatprep.subr.mxu0 0.0
      %2973 = vmatpush1.msra.mxu0 0.0
      %2974 = vmatprep.subr.mxu0 0.0
      %2975 = vmatpush1.msra.mxu0 0.0
      %2976 = vmatprep.subr.mxu0 0.0
      %2977 = vmatpush1.msra.mxu0 0.0
      %2978 = vmatprep.subr.mxu0 0.0
      %2979 = vmatpush1.msra.mxu0 0.0
      %2980 = vmatprep.subr.mxu0 0.0
      %2981 = vmatpush1.msra.mxu0 0.0
      %2982 = vmatprep.subr.mxu0 0.0
      %2983 = vmatpush1.msra.mxu0 0.0
      %2984 = vmatprep.subr.mxu0 0.0
      %2985 = vmatpush1.msra.mxu0 0.0
      %2986 = vmatprep.subr.mxu0 0.0
      %2987 = vmatpush1.msra.mxu0 0.0
      %2988 = vmatprep.subr.mxu0 0.0
      %2989 = vmatpush1.msra.mxu0 0.0
      %2990 = vmatprep.subr.mxu0 0.0
      %2991 = vmatpush1.msra.mxu0 0.0
      %2992 = vmatprep.subr.mxu0 0.0
      %2993 = vmatpush1.msra.mxu0 0.0
      %2994 = vmatprep.subr.mxu0 0.0
      %2995 = vmatpush1.msra.mxu0 0.0
      %2996 = vmatprep.subr.mxu0 0.0
      %2997 = vmatpush1.msra.mxu0 0.0
      %2998 = vmatprep.subr.mxu0 0.0
      %2999 = vmatpush1.msra.mxu0 0.0
      %3000 = vmatprep.subr.mxu0 0.0
      %3001 = vmatpush1.msra.mxu0 0.0
      %3002 = vmatprep.subr.mxu0 0.0
      %3003 = vmatpush1.msra.mxu0 0.0
      %3004 = vmatprep.subr.mxu0 0.0
      %3005 = vmatpush1.msra.mxu0 0.0
      %3006 = vmatprep.subr.mxu0 0.0
      %3007 = vmatpush1.msra.mxu0 0.0
      %3008 = vmatprep.subr.mxu0 0.0
      %3009 = vmatpush1.msra.mxu0 0.0
      %3010 = vmatprep.subr.mxu0 0.0
      %3011 = vmatpush1.msra.mxu0 0.0
      %3012 = vmatprep.mubr.f32.mxu0 0.0
      %3013 = vmatmul.mubr.f32.gmra.mrb[0].mxu0 %v2402
      %v3014 = vpop.f32.mrb[0].mxu0
      %v3015 = vadd.f32 0.0, %v3014
      %v3016 = vpop.f32.mrb[0].mxu0
      %3017 = vmatprep.mubr.f32.mxu0 0.0
      %3018 = vmatmul.mubr.f32.gmra.mrb[0].mxu0 %v2405
      %v3019 = vpop.f32.mrb[0].mxu0
      %v3020 = vadd.f32 0.0, %v3019
      %v3021 = vpop.f32.mrb[0].mxu0
      %3022 = vmatprep.mubr.f32.mxu0 0.0
      %3023 = vmatmul.mubr.f32.gmra.mrb[0].mxu0 %v2408
      %v3024 = vpop.f32.mrb[0].mxu0
      %v3025 = vadd.f32 0.0, %v3024
      %v3026 = vpop.f32.mrb[0].mxu0
      %3027 = vmatprep.mubr.f32.mxu0 0.0
      %3028 = vmatmul.mubr.f32.gmra.mrb[0].mxu0 %v2411
      %v3029 = vpop.f32.mrb[0].mxu0
      %v3030 = vadd.f32 0.0, %v3029
      %v3031 = vpop.f32.mrb[0].mxu0
      %3032 = vmatprep.mubr.f32.mxu0 0.0
      %3033 = vmatmul.mubr.f32.gmra.mrb[0].mxu0 %v2414
      %v3034 = vpop.f32.mrb[0].mxu0
      %v3035 = vadd.f32 0.0, %v3034
      %v3036 = vpop.f32.mrb[0].mxu0
      %3037 = vmatprep.mubr.f32.mxu0 0.0
      %3038 = vmatmul.mubr.f32.gmra.mrb[0].mxu0 %v2417
      %v3039 = vpop.f32.mrb[0].mxu0
      %v3040 = vadd.f32 0.0, %v3039
      %v3041 = vpop.f32.mrb[0].mxu0
      %3042 = vmatprep.mubr.f32.mxu0 0.0
      %3043 = vmatmul.mubr.f32.gmra.mrb[0].mxu0 %v2420
      %v3044 = vpop.f32.mrb[0].mxu0
      %v3045 = vadd.f32 0.0, %v3044
      %v3046 = vpop.f32.mrb[0].mxu0
      %3047 = vmatprep.mubr.f32.mxu0 0.0
      %3048 = vmatmul.mubr.f32.gmra.mrb[0].mxu0 %v2423
      %v3049 = vpop.f32.mrb[0].mxu0
      %v3050 = vadd.f32 0.0, %v3049
      %v3051 = vpop.f32.mrb[0].mxu0
      %3052 = vmatprep.mubr.f32.mxu0 0.0
      %3053 = vmatmul.mubr.f32.gmra.mrb[0].mxu0 %v2426
      %v3054 = vpop.f32.mrb[0].mxu0
      %v3055 = vadd.f32 0.0, %v3054
      %v3056 = vpop.f32.mrb[0].mxu0
      %3057 = vmatprep.mubr.f32.mxu0 0.0
      %3058 = vmatmul.mubr.f32.gmra.mrb[0].mxu0 %v2429
      %v3059 = vpop.f32.mrb[0].mxu0
      %v3060 = vadd.f32 0.0, %v3059
      %v3061 = vpop.f32.mrb[0].mxu0
      %3062 = vmatprep.mubr.f32.mxu0 0.0
      %3063 = vmatmul.mubr.f32.gmra.mrb[0].mxu0 %v2432
      %v3064 = vpop.f32.mrb[0].mxu0
      %v3065 = vadd.f32 0.0, %v3064
      %v3066 = vpop.f32.mrb[0].mxu0
      %3067 = vmatprep.mubr.f32.mxu0 0.0
      %3068 = vmatmul.mubr.f32.gmra.mrb[0].mxu0 %v2435
      %v3069 = vpop.f32.mrb[0].mxu0
      %v3070 = vadd.f32 0.0, %v3069
      %v3071 = vpop.f32.mrb[0].mxu0
      %3072 = vmatprep.mubr.f32.mxu0 0.0
      %3073 = vmatmul.mubr.f32.gmra.mrb[0].mxu0 %v2438
      %v3074 = vpop.f32.mrb[0].mxu0
      %v3075 = vadd.f32 0.0, %v3074
      %v3076 = vpop.f32.mrb[0].mxu0
      %3077 = vmatprep.mubr.f32.mxu0 0.0
      %3078 = vmatmul.mubr.f32.gmra.mrb[0].mxu0 %v2441
      %v3079 = vpop.f32.mrb[0].mxu0
      %v3080 = vadd.f32 0.0, %v3079
      %v3081 = vpop.f32.mrb[0].mxu0
      %3082 = vmatprep.mubr.f32.mxu0 0.0
      %3083 = vmatmul.mubr.f32.gmra.mrb[0].mxu0 %v2444
      %v3084 = vpop.f32.mrb[0].mxu0
      %v3085 = vadd.f32 0.0, %v3084
      %v3086 = vpop.f32.mrb[0].mxu0
      %3087 = vmatprep.mubr.f32.mxu0 0.0
      %3088 = vmatmul.mubr.f32.gmra.mrb[0].mxu0 %v2447
      %v3089 = vpop.f32.mrb[0].mxu0
      %v3090 = vadd.f32 0.0, %v3089
      %v3091 = vpop.f32.mrb[0].mxu0
      %3092 = vmatprep.mubr.f32.mxu0 0.0
      %3093 = vmatmul.mubr.f32.gmra.mrb[0].mxu0 %v2450
      %v3094 = vpop.f32.mrb[0].mxu0
      %v3095 = vadd.f32 0.0, %v3094
      %v3096 = vpop.f32.mrb[0].mxu0
      %3097 = vmatprep.mubr.f32.mxu0 0.0
      %3098 = vmatmul.mubr.f32.gmra.mrb[0].mxu0 %v2453
      %v3099 = vpop.f32.mrb[0].mxu0
      %v3100 = vadd.f32 0.0, %v3099
      %v3101 = vpop.f32.mrb[0].mxu0
      %3102 = vmatprep.mubr.f32.mxu0 0.0
      %3103 = vmatmul.mubr.f32.gmra.mrb[0].mxu0 %v2456
      %v3104 = vpop.f32.mrb[0].mxu0
      %v3105 = vadd.f32 0.0, %v3104
      %v3106 = vpop.f32.mrb[0].mxu0
      %3107 = vmatprep.mubr.f32.mxu0 0.0
      %3108 = vmatmul.mubr.f32.gmra.mrb[0].mxu0 %v2459
      %v3109 = vpop.f32.mrb[0].mxu0
      %v3110 = vadd.f32 0.0, %v3109
      %v3111 = vpop.f32.mrb[0].mxu0
      %3112 = vmatprep.mubr.f32.mxu0 0.0
      %3113 = vmatmul.mubr.f32.gmra.mrb[0].mxu0 %v2462
      %v3114 = vpop.f32.mrb[0].mxu0
      %v3115 = vadd.f32 0.0, %v3114
      %v3116 = vpop.f32.mrb[0].mxu0
      %3117 = vmatprep.mubr.f32.mxu0 0.0
      %3118 = vmatmul.mubr.f32.gmra.mrb[0].mxu0 %v2465
      %v3119 = vpop.f32.mrb[0].mxu0
      %v3120 = vadd.f32 0.0, %v3119
      %v3121 = vpop.f32.mrb[0].mxu0
      %3122 = vmatprep.mubr.f32.mxu0 0.0
      %3123 = vmatmul.mubr.f32.gmra.mrb[0].mxu0 %v2468
      %v3124 = vpop.f32.mrb[0].mxu0
      %v3125 = vadd.f32 0.0, %v3124
      %v3126 = vpop.f32.mrb[0].mxu0
      %3127 = vmatprep.mubr.f32.mxu0 0.0
      %3128 = vmatmul.mubr.f32.gmra.mrb[0].mxu0 %v2471
      %v3129 = vpop.f32.mrb[0].mxu0
      %v3130 = vadd.f32 0.0, %v3129
      %v3131 = vpop.f32.mrb[0].mxu0
      %3132 = vmatprep.mubr.f32.mxu0 0.0
      %3133 = vmatmul.mubr.f32.gmra.mrb[0].mxu0 %v2474
      %v3134 = vpop.f32.mrb[0].mxu0
      %v3135 = vadd.f32 0.0, %v3134
      %v3136 = vpop.f32.mrb[0].mxu0
      %3137 = vmatprep.mubr.f32.mxu0 0.0
      %3138 = vmatmul.mubr.f32.gmra.mrb[0].mxu0 %v2477
      %v3139 = vpop.f32.mrb[0].mxu0
      %v3140 = vadd.f32 0.0, %v3139
      %v3141 = vpop.f32.mrb[0].mxu0
      %3142 = vmatprep.mubr.f32.mxu0 0.0
      %3143 = vmatmul.mubr.f32.gmra.mrb[0].mxu0 %v2480
      %v3144 = vpop.f32.mrb[0].mxu0
      %v3145 = vadd.f32 0.0, %v3144
      %v3146 = vpop.f32.mrb[0].mxu0
      %3147 = vmatprep.mubr.f32.mxu0 0.0
      %3148 = vmatmul.mubr.f32.gmra.mrb[0].mxu0 %v2483
      %v3149 = vpop.f32.mrb[0].mxu0
      %v3150 = vadd.f32 0.0, %v3149
      %v3151 = vpop.f32.mrb[0].mxu0
      %3152 = vmatprep.mubr.f32.mxu0 0.0
      %3153 = vmatmul.mubr.f32.gmra.mrb[0].mxu0 %v2486
      %v3154 = vpop.f32.mrb[0].mxu0
      %v3155 = vadd.f32 0.0, %v3154
      %v3156 = vpop.f32.mrb[0].mxu0
      %3157 = vmatprep.mubr.f32.mxu0 0.0
      %3158 = vmatmul.mubr.f32.gmra.mrb[0].mxu0 %v2489
      %v3159 = vpop.f32.mrb[0].mxu0
      %v3160 = vadd.f32 0.0, %v3159
      %v3161 = vpop.f32.mrb[0].mxu0
      %3162 = vmatprep.mubr.f32.mxu0 0.0
      %3163 = vmatmul.mubr.f32.gmra.mrb[0].mxu0 %v2717
      %v3164 = vpop.f32.mrb[0].mxu0
      %v3165 = vadd.f32 0.0, %v3164
      %v3166 = vpop.f32.mrb[0].mxu0
      %3167 = vmatprep.mubr.f32.mxu0 0.0
      %3168 = vmatmul.mubr.f32.gmra.mrb[0].mxu0 %v2717
      %v3169 = vpop.f32.mrb[0].mxu0
      %v3170 = vadd.f32 0.0, %v3169
      %v3171 = vpop.f32.mrb[0].mxu0
      %3172 = vdwg.mxu0
      %v3173 = vadd.f32 %v2786, %v3015
      %v3174 = vadd.f32 %v2791, %v3020
      %v3175 = vadd.f32 %v2796, %v3025
      %v3176 = vadd.f32 %v2801, %v3030
      %v3177 = vadd.f32 %v2806, %v3035
      %v3178 = vadd.f32 %v2811, %v3040
      %v3179 = vadd.f32 %v2816, %v3045
      %v3180 = vadd.f32 %v2821, %v3050
      %v3181 = vadd.f32 %v2826, %v3055
      %v3182 = vadd.f32 %v2831, %v3060
      %v3183 = vadd.f32 %v2836, %v3065
      %v3184 = vadd.f32 %v2841, %v3070
      %v3185 = vadd.f32 %v2846, %v3075
      %v3186 = vadd.f32 %v2851, %v3080
      %v3187 = vadd.f32 %v2856, %v3085
      %v3188 = vadd.f32 %v2861, %v3090
      %v3189 = vadd.f32 %v2866, %v3095
      %v3190 = vadd.f32 %v2871, %v3100
      %v3191 = vadd.f32 %v2876, %v3105
      %v3192 = vadd.f32 %v2881, %v3110
      %v3193 = vadd.f32 %v2886, %v3115
      %v3194 = vadd.f32 %v2891, %v3120
      %v3195 = vadd.f32 %v2896, %v3125
      %v3196 = vadd.f32 %v2901, %v3130
      %v3197 = vadd.f32 %v2906, %v3135
      %v3198 = vadd.f32 %v2911, %v3140
      %v3199 = vadd.f32 %v2916, %v3145
      %v3200 = vadd.f32 %v2921, %v3150
      %v3201 = vadd.f32 %v2926, %v3155
      %v3202 = vadd.f32 %v2931, %v3160
      %v3203 = vadd.f32 %v2936, %v3165
      %v3204 = vadd.f32 %v2941, %v3170
      %v3205 = vld [vmem:[%s4] sm:$0x1]
      %v3207 = vlaneseq
      %v3208 = vshrl.u32 %v3207, 7
      %v3209 = vsub.s32 0, %v3208
      %v3210 = vrot.slane %v3205, %v3209
      %v3212 = vadd.f32 %v3173, %v3210
      %v3213 = vadd.f32 %v3174, %v3210
      %v3214 = vadd.f32 %v3175, %v3210
      %v3215 = vadd.f32 %v3176, %v3210
      %v3216 = vadd.f32 %v3177, %v3210
      %v3217 = vadd.f32 %v3178, %v3210
      %v3218 = vadd.f32 %v3179, %v3210
      %v3219 = vadd.f32 %v3180, %v3210
      %v3220 = vadd.f32 %v3181, %v3210
      %v3221 = vadd.f32 %v3182, %v3210
      %v3222 = vadd.f32 %v3183, %v3210
      %v3223 = vadd.f32 %v3184, %v3210
      %v3224 = vadd.f32 %v3185, %v3210
      %v3225 = vadd.f32 %v3186, %v3210
      %v3226 = vadd.f32 %v3187, %v3210
      %v3227 = vadd.f32 %v3188, %v3210
      %v3228 = vadd.f32 %v3189, %v3210
      %v3229 = vadd.f32 %v3190, %v3210
      %v3230 = vadd.f32 %v3191, %v3210
      %v3231 = vadd.f32 %v3192, %v3210
      %v3232 = vadd.f32 %v3193, %v3210
      %v3233 = vadd.f32 %v3194, %v3210
      %v3234 = vadd.f32 %v3195, %v3210
      %v3235 = vadd.f32 %v3196, %v3210
      %v3236 = vadd.f32 %v3197, %v3210
      %v3237 = vadd.f32 %v3198, %v3210
      %v3238 = vadd.f32 %v3199, %v3210
      %v3239 = vadd.f32 %v3200, %v3210
      %v3240 = vadd.f32 %v3201, %v3210
      %v3241 = vadd.f32 %v3202, %v3210
      %v3242 = vadd.f32 %v3203, %v3210
      %v3243 = vadd.f32 %v3204, %v3210
      %v3244 = vld [vmem:[%s5] sm:$0xf]
      %v3245 = vld [vmem:[%s6] sm:$0x1]
      %v3247 = vlaneseq
      %v3248 = vshrl.u32 %v3247, 7
      %v3249 = vsub.s32 0, %v3248
      %v3250 = vrot.slane %v3245, %v3249
      %v3252 = vsel %vm735, %v389, 0
      %v3254 = vsel %vm735, %v391, 0
      %v3256 = vsel %vm735, %v394, 0
      %v3258 = vsel %vm735, %v396, 0
      %v3260 = vsel %vm735, %v399, 0
      %v3262 = vsel %vm735, %v401, 0
      %v3264 = vsel %vm735, %v404, 0
      %v3266 = vsel %vm735, %v406, 0
      %v3268 = vsel %vm735, %v409, 0
      %v3270 = vsel %vm735, %v411, 0
      %v3272 = vsel %vm735, %v414, 0
      %v3274 = vsel %vm735, %v416, 0
      %v3276 = vsel %vm735, %v419, 0
      %v3278 = vsel %vm735, %v421, 0
      %v3280 = vsel %vm735, %v424, 0
      %v3282 = vsel %vm735, %v426, 0
      %v3284 = vsel %vm735, %v429, 0
      %v3286 = vsel %vm735, %v431, 0
      %v3288 = vsel %vm735, %v434, 0
      %v3290 = vsel %vm735, %v436, 0
      %v3292 = vsel %vm735, %v439, 0
      %v3294 = vsel %vm735, %v441, 0
      %v3296 = vsel %vm735, %v444, 0
      %v3298 = vsel %vm735, %v446, 0
      %v3300 = vsel %vm735, %v449, 0
      %v3302 = vsel %vm735, %v451, 0
      %v3304 = vsel %vm735, %v454, 0
      %v3306 = vsel %vm735, %v456, 0
      %v3308 = vsel %vm735, %v459, 0
      %v3310 = vsel %vm735, %v461, 0
      %v3312 = vsel %vm735, %v808, 0
      %v3314 = vsel %vm735, %v810, 0
      %v3317 = vsel %vm932, %v3244, 0
      %3319 = vmatprep.subr.mxu0 0.0
      %3320 = vmatpush1.msra.mxu0 %v3317
      %3321 = vmatprep.subr.mxu0 0.0
      %3322 = vmatpush1.msra.mxu0 0.0
      %3323 = vmatprep.subr.mxu0 0.0
      %3324 = vmatpush1.msra.mxu0 0.0
      %3325 = vmatprep.subr.mxu0 0.0
      %3326 = vmatpush1.msra.mxu0 0.0
      %3327 = vmatprep.subr.mxu0 0.0
      %3328 = vmatpush1.msra.mxu0 0.0
      %3329 = vmatprep.subr.mxu0 0.0
      %3330 = vmatpush1.msra.mxu0 0.0
      %3331 = vmatprep.subr.mxu0 0.0
      %3332 = vmatpush1.msra.mxu0 0.0
      %3333 = vmatprep.subr.mxu0 0.0
      %3334 = vmatpush1.msra.mxu0 0.0
      %3335 = vmatprep.subr.mxu0 0.0
      %3336 = vmatpush1.msra.mxu0 0.0
      %3337 = vmatprep.subr.mxu0 0.0
      %3338 = vmatpush1.msra.mxu0 0.0
      %3339 = vmatprep.subr.mxu0 0.0
      %3340 = vmatpush1.msra.mxu0 0.0
      %3341 = vmatprep.subr.mxu0 0.0
      %3342 = vmatpush1.msra.mxu0 0.0
      %3343 = vmatprep.subr.mxu0 0.0
      %3344 = vmatpush1.msra.mxu0 0.0
      %3345 = vmatprep.subr.mxu0 0.0
      %3346 = vmatpush1.msra.mxu0 0.0
      %3347 = vmatprep.subr.mxu0 0.0
      %3348 = vmatpush1.msra.mxu0 0.0
      %3349 = vmatprep.subr.mxu0 0.0
      %3350 = vmatpush1.msra.mxu0 0.0
      %3351 = vmatprep.subr.mxu0 0.0
      %3352 = vmatpush1.msra.mxu0 0.0
      %3353 = vmatprep.subr.mxu0 0.0
      %3354 = vmatpush1.msra.mxu0 0.0
      %3355 = vmatprep.subr.mxu0 0.0
      %3356 = vmatpush1.msra.mxu0 0.0
      %3357 = vmatprep.subr.mxu0 0.0
      %3358 = vmatpush1.msra.mxu0 0.0
      %3359 = vmatprep.subr.mxu0 0.0
      %3360 = vmatpush1.msra.mxu0 0.0
      %3361 = vmatprep.subr.mxu0 0.0
      %3362 = vmatpush1.msra.mxu0 0.0
      %3363 = vmatprep.subr.mxu0 0.0
      %3364 = vmatpush1.msra.mxu0 0.0
      %3365 = vmatprep.subr.mxu0 0.0
      %3366 = vmatpush1.msra.mxu0 0.0
      %3367 = vmatprep.subr.mxu0 0.0
      %3368 = vmatpush1.msra.mxu0 0.0
      %3369 = vmatprep.subr.mxu0 0.0
      %3370 = vmatpush1.msra.mxu0 0.0
      %3371 = vmatprep.subr.mxu0 0.0
      %3372 = vmatpush1.msra.mxu0 0.0
      %3373 = vmatprep.subr.mxu0 0.0
      %3374 = vmatpush1.msra.mxu0 0.0
      %3375 = vmatprep.subr.mxu0 0.0
      %3376 = vmatpush1.msra.mxu0 0.0
      %3377 = vmatprep.subr.mxu0 0.0
      %3378 = vmatpush1.msra.mxu0 0.0
      %3379 = vmatprep.subr.mxu0 0.0
      %3380 = vmatpush1.msra.mxu0 0.0
      %3381 = vmatprep.subr.mxu0 0.0
      %3382 = vmatpush1.msra.mxu0 0.0
      %3383 = vmatprep.mubr.f32.mxu0 0.0
      %3384 = vmatmul.mubr.f32.gmra.mrb[0].mxu0 %v3252
      %v3385 = vpop.f32.mrb[0].mxu0
      %v3386 = vadd.f32 %v3250, %v3385
      %v3387 = vpop.f32.mrb[0].mxu0
      %3388 = vmatprep.mubr.f32.mxu0 0.0
      %3389 = vmatmul.mubr.f32.gmra.mrb[0].mxu0 %v3254
      %v3390 = vpop.f32.mrb[0].mxu0
      %v3391 = vadd.f32 %v3250, %v3390
      %v3392 = vpop.f32.mrb[0].mxu0
      %3393 = vmatprep.mubr.f32.mxu0 0.0
      %3394 = vmatmul.mubr.f32.gmra.mrb[0].mxu0 %v3256
      %v3395 = vpop.f32.mrb[0].mxu0
      %v3396 = vadd.f32 %v3250, %v3395
      %v3397 = vpop.f32.mrb[0].mxu0
      %3398 = vmatprep.mubr.f32.mxu0 0.0
      %3399 = vmatmul.mubr.f32.gmra.mrb[0].mxu0 %v3258
      %v3400 = vpop.f32.mrb[0].mxu0
      %v3401 = vadd.f32 %v3250, %v3400
      %v3402 = vpop.f32.mrb[0].mxu0
      %3403 = vmatprep.mubr.f32.mxu0 0.0
      %3404 = vmatmul.mubr.f32.gmra.mrb[0].mxu0 %v3260
      %v3405 = vpop.f32.mrb[0].mxu0
      %v3406 = vadd.f32 %v3250, %v3405
      %v3407 = vpop.f32.mrb[0].mxu0
      %3408 = vmatprep.mubr.f32.mxu0 0.0
      %3409 = vmatmul.mubr.f32.gmra.mrb[0].mxu0 %v3262
      %v3410 = vpop.f32.mrb[0].mxu0
      %v3411 = vadd.f32 %v3250, %v3410
      %v3412 = vpop.f32.mrb[0].mxu0
      %3413 = vmatprep.mubr.f32.mxu0 0.0
      %3414 = vmatmul.mubr.f32.gmra.mrb[0].mxu0 %v3264
      %v3415 = vpop.f32.mrb[0].mxu0
      %v3416 = vadd.f32 %v3250, %v3415
      %v3417 = vpop.f32.mrb[0].mxu0
      %3418 = vmatprep.mubr.f32.mxu0 0.0
      %3419 = vmatmul.mubr.f32.gmra.mrb[0].mxu0 %v3266
      %v3420 = vpop.f32.mrb[0].mxu0
      %v3421 = vadd.f32 %v3250, %v3420
      %v3422 = vpop.f32.mrb[0].mxu0
      %3423 = vmatprep.mubr.f32.mxu0 0.0
      %3424 = vmatmul.mubr.f32.gmra.mrb[0].mxu0 %v3268
      %v3425 = vpop.f32.mrb[0].mxu0
      %v3426 = vadd.f32 %v3250, %v3425
      %v3427 = vpop.f32.mrb[0].mxu0
      %3428 = vmatprep.mubr.f32.mxu0 0.0
      %3429 = vmatmul.mubr.f32.gmra.mrb[0].mxu0 %v3270
      %v3430 = vpop.f32.mrb[0].mxu0
      %v3431 = vadd.f32 %v3250, %v3430
      %v3432 = vpop.f32.mrb[0].mxu0
      %3433 = vmatprep.mubr.f32.mxu0 0.0
      %3434 = vmatmul.mubr.f32.gmra.mrb[0].mxu0 %v3272
      %v3435 = vpop.f32.mrb[0].mxu0
      %v3436 = vadd.f32 %v3250, %v3435
      %v3437 = vpop.f32.mrb[0].mxu0
      %3438 = vmatprep.mubr.f32.mxu0 0.0
      %3439 = vmatmul.mubr.f32.gmra.mrb[0].mxu0 %v3274
      %v3440 = vpop.f32.mrb[0].mxu0
      %v3441 = vadd.f32 %v3250, %v3440
      %v3442 = vpop.f32.mrb[0].mxu0
      %3443 = vmatprep.mubr.f32.mxu0 0.0
      %3444 = vmatmul.mubr.f32.gmra.mrb[0].mxu0 %v3276
      %v3445 = vpop.f32.mrb[0].mxu0
      %v3446 = vadd.f32 %v3250, %v3445
      %v3447 = vpop.f32.mrb[0].mxu0
      %3448 = vmatprep.mubr.f32.mxu0 0.0
      %3449 = vmatmul.mubr.f32.gmra.mrb[0].mxu0 %v3278
      %v3450 = vpop.f32.mrb[0].mxu0
      %v3451 = vadd.f32 %v3250, %v3450
      %v3452 = vpop.f32.mrb[0].mxu0
      %3453 = vmatprep.mubr.f32.mxu0 0.0
      %3454 = vmatmul.mubr.f32.gmra.mrb[0].mxu0 %v3280
      %v3455 = vpop.f32.mrb[0].mxu0
      %v3456 = vadd.f32 %v3250, %v3455
      %v3457 = vpop.f32.mrb[0].mxu0
      %3458 = vmatprep.mubr.f32.mxu0 0.0
      %3459 = vmatmul.mubr.f32.gmra.mrb[0].mxu0 %v3282
      %v3460 = vpop.f32.mrb[0].mxu0
      %v3461 = vadd.f32 %v3250, %v3460
      %v3462 = vpop.f32.mrb[0].mxu0
      %3463 = vmatprep.mubr.f32.mxu0 0.0
      %3464 = vmatmul.mubr.f32.gmra.mrb[0].mxu0 %v3284
      %v3465 = vpop.f32.mrb[0].mxu0
      %v3466 = vadd.f32 %v3250, %v3465
      %v3467 = vpop.f32.mrb[0].mxu0
      %3468 = vmatprep.mubr.f32.mxu0 0.0
      %3469 = vmatmul.mubr.f32.gmra.mrb[0].mxu0 %v3286
      %v3470 = vpop.f32.mrb[0].mxu0
      %v3471 = vadd.f32 %v3250, %v3470
      %v3472 = vpop.f32.mrb[0].mxu0
      %3473 = vmatprep.mubr.f32.mxu0 0.0
      %3474 = vmatmul.mubr.f32.gmra.mrb[0].mxu0 %v3288
      %v3475 = vpop.f32.mrb[0].mxu0
      %v3476 = vadd.f32 %v3250, %v3475
      %v3477 = vpop.f32.mrb[0].mxu0
      %3478 = vmatprep.mubr.f32.mxu0 0.0
      %3479 = vmatmul.mubr.f32.gmra.mrb[0].mxu0 %v3290
      %v3480 = vpop.f32.mrb[0].mxu0
      %v3481 = vadd.f32 %v3250, %v3480
      %v3482 = vpop.f32.mrb[0].mxu0
      %3483 = vmatprep.mubr.f32.mxu0 0.0
      %3484 = vmatmul.mubr.f32.gmra.mrb[0].mxu0 %v3292
      %v3485 = vpop.f32.mrb[0].mxu0
      %v3486 = vadd.f32 %v3250, %v3485
      %v3487 = vpop.f32.mrb[0].mxu0
      %3488 = vmatprep.mubr.f32.mxu0 0.0
      %3489 = vmatmul.mubr.f32.gmra.mrb[0].mxu0 %v3294
      %v3490 = vpop.f32.mrb[0].mxu0
      %v3491 = vadd.f32 %v3250, %v3490
      %v3492 = vpop.f32.mrb[0].mxu0
      %3493 = vmatprep.mubr.f32.mxu0 0.0
      %3494 = vmatmul.mubr.f32.gmra.mrb[0].mxu0 %v3296
      %v3495 = vpop.f32.mrb[0].mxu0
      %v3496 = vadd.f32 %v3250, %v3495
      %v3497 = vpop.f32.mrb[0].mxu0
      %3498 = vmatprep.mubr.f32.mxu0 0.0
      %3499 = vmatmul.mubr.f32.gmra.mrb[0].mxu0 %v3298
      %v3500 = vpop.f32.mrb[0].mxu0
      %v3501 = vadd.f32 %v3250, %v3500
      %v3502 = vpop.f32.mrb[0].mxu0
      %3503 = vmatprep.mubr.f32.mxu0 0.0
      %3504 = vmatmul.mubr.f32.gmra.mrb[0].mxu0 %v3300
      %v3505 = vpop.f32.mrb[0].mxu0
      %v3506 = vadd.f32 %v3250, %v3505
      %v3507 = vpop.f32.mrb[0].mxu0
      %3508 = vmatprep.mubr.f32.mxu0 0.0
      %3509 = vmatmul.mubr.f32.gmra.mrb[0].mxu0 %v3302
      %v3510 = vpop.f32.mrb[0].mxu0
      %v3511 = vadd.f32 %v3250, %v3510
      %v3512 = vpop.f32.mrb[0].mxu0
      %3513 = vmatprep.mubr.f32.mxu0 0.0
      %3514 = vmatmul.mubr.f32.gmra.mrb[0].mxu0 %v3304
      %v3515 = vpop.f32.mrb[0].mxu0
      %v3516 = vadd.f32 %v3250, %v3515
      %v3517 = vpop.f32.mrb[0].mxu0
      %3518 = vmatprep.mubr.f32.mxu0 0.0
      %3519 = vmatmul.mubr.f32.gmra.mrb[0].mxu0 %v3306
      %v3520 = vpop.f32.mrb[0].mxu0
      %v3521 = vadd.f32 %v3250, %v3520
      %v3522 = vpop.f32.mrb[0].mxu0
      %3523 = vmatprep.mubr.f32.mxu0 0.0
      %3524 = vmatmul.mubr.f32.gmra.mrb[0].mxu0 %v3308
      %v3525 = vpop.f32.mrb[0].mxu0
      %v3526 = vadd.f32 %v3250, %v3525
      %v3527 = vpop.f32.mrb[0].mxu0
      %3528 = vmatprep.mubr.f32.mxu0 0.0
      %3529 = vmatmul.mubr.f32.gmra.mrb[0].mxu0 %v3310
      %v3530 = vpop.f32.mrb[0].mxu0
      %v3531 = vadd.f32 %v3250, %v3530
      %v3532 = vpop.f32.mrb[0].mxu0
      %3533 = vmatprep.mubr.f32.mxu0 0.0
      %3534 = vmatmul.mubr.f32.gmra.mrb[0].mxu0 %v3312
      %v3535 = vpop.f32.mrb[0].mxu0
      %v3536 = vadd.f32 %v3250, %v3535
      %v3537 = vpop.f32.mrb[0].mxu0
      %3538 = vmatprep.mubr.f32.mxu0 0.0
      %3539 = vmatmul.mubr.f32.gmra.mrb[0].mxu0 %v3314
      %v3540 = vpop.f32.mrb[0].mxu0
      %v3541 = vadd.f32 %v3250, %v3540
      %v3542 = vpop.f32.mrb[0].mxu0
      %3543 = vdwg.mxu0
      %v3544 = vadd.f32 %v3212, %v3386
      %v3545 = vadd.f32 %v3213, %v3391
      %v3546 = vadd.f32 %v3214, %v3396
      %v3547 = vadd.f32 %v3215, %v3401
      %v3548 = vadd.f32 %v3216, %v3406
      %v3549 = vadd.f32 %v3217, %v3411
      %v3550 = vadd.f32 %v3218, %v3416
      %v3551 = vadd.f32 %v3219, %v3421
      %v3552 = vadd.f32 %v3220, %v3426
      %v3553 = vadd.f32 %v3221, %v3431
      %v3554 = vadd.f32 %v3222, %v3436
      %v3555 = vadd.f32 %v3223, %v3441
      %v3556 = vadd.f32 %v3224, %v3446
      %v3557 = vadd.f32 %v3225, %v3451
      %v3558 = vadd.f32 %v3226, %v3456
      %v3559 = vadd.f32 %v3227, %v3461
      %v3560 = vadd.f32 %v3228, %v3466
      %v3561 = vadd.f32 %v3229, %v3471
      %v3562 = vadd.f32 %v3230, %v3476
      %v3563 = vadd.f32 %v3231, %v3481
      %v3564 = vadd.f32 %v3232, %v3486
      %v3565 = vadd.f32 %v3233, %v3491
      %v3566 = vadd.f32 %v3234, %v3496
      %v3567 = vadd.f32 %v3235, %v3501
      %v3568 = vadd.f32 %v3236, %v3506
      %v3569 = vadd.f32 %v3237, %v3511
      %v3570 = vadd.f32 %v3238, %v3516
      %v3571 = vadd.f32 %v3239, %v3521
      %v3572 = vadd.f32 %v3240, %v3526
      %v3573 = vadd.f32 %v3241, %v3531
      %v3574 = vadd.f32 %v3242, %v3536
      %v3575 = vadd.f32 %v3243, %v3541
      %v3576 = vmax.f32 %v3544, 0.0
      %v3577 = vmax.f32 %v3545, 0.0
      %v3578 = vmax.f32 %v3546, 0.0
      %v3579 = vmax.f32 %v3547, 0.0
      %v3580 = vmax.f32 %v3548, 0.0
      %v3581 = vmax.f32 %v3549, 0.0
      %v3582 = vmax.f32 %v3550, 0.0
      %v3583 = vmax.f32 %v3551, 0.0
      %v3584 = vmax.f32 %v3552, 0.0
      %v3585 = vmax.f32 %v3553, 0.0
      %v3586 = vmax.f32 %v3554, 0.0
      %v3587 = vmax.f32 %v3555, 0.0
      %v3588 = vmax.f32 %v3556, 0.0
      %v3589 = vmax.f32 %v3557, 0.0
      %v3590 = vmax.f32 %v3558, 0.0
      %v3591 = vmax.f32 %v3559, 0.0
      %v3592 = vmax.f32 %v3560, 0.0
      %v3593 = vmax.f32 %v3561, 0.0
      %v3594 = vmax.f32 %v3562, 0.0
      %v3595 = vmax.f32 %v3563, 0.0
      %v3596 = vmax.f32 %v3564, 0.0
      %v3597 = vmax.f32 %v3565, 0.0
      %v3598 = vmax.f32 %v3566, 0.0
      %v3599 = vmax.f32 %v3567, 0.0
      %v3600 = vmax.f32 %v3568, 0.0
      %v3601 = vmax.f32 %v3569, 0.0
      %v3602 = vmax.f32 %v3570, 0.0
      %v3603 = vmax.f32 %v3571, 0.0
      %v3604 = vmax.f32 %v3572, 0.0
      %v3605 = vmax.f32 %v3573, 0.0
      %v3606 = vmax.f32 %v3574, 0.0
      %v3607 = vmax.f32 %v3575, 0.0
      %v3608 = vcombine.low %v3576, %v3580
      %v3609 = vcombine.high %v3576, %v3580
      %v3611 = vunpack.c.l.s4 1983009808
      %v3612 = vunpack.c.0.s8 %v3611
      %v3613 = vlaneseq
      %v3614 = vshrl.u32 %v3613, 7
      %v3615 = vsub.s32 %v3612, %v3614
      %v3616 = vrot.slane %v3608, %v3615
      %v3618 = vunpack.c.l.s4 1983009808
      %v3619 = vunpack.c.0.s8 %v3618
      %v3620 = vlaneseq
      %v3621 = vshrl.u32 %v3620, 7
      %v3622 = vsub.s32 %v3619, %v3621
      %v3623 = vrot.slane %v3609, %v3622
      %v3624 = vcombine.low %v3578, %v3582
      %v3625 = vcombine.high %v3578, %v3582
      %v3627 = vunpack.c.l.s4 1983009808
      %v3628 = vunpack.c.0.s8 %v3627
      %v3629 = vlaneseq
      %v3630 = vshrl.u32 %v3629, 7
      %v3631 = vsub.s32 %v3628, %v3630
      %v3632 = vrot.slane %v3624, %v3631
      %v3634 = vunpack.c.l.s4 1983009808
      %v3635 = vunpack.c.0.s8 %v3634
      %v3636 = vlaneseq
      %v3637 = vshrl.u32 %v3636, 7
      %v3638 = vsub.s32 %v3635, %v3637
      %v3639 = vrot.slane %v3625, %v3638
      %v3640 = vcombine.low %v3584, %v3588
      %v3641 = vcombine.high %v3584, %v3588
      %v3643 = vunpack.c.l.s4 1983009808
      %v3644 = vunpack.c.0.s8 %v3643
      %v3645 = vlaneseq
      %v3646 = vshrl.u32 %v3645, 7
      %v3647 = vsub.s32 %v3644, %v3646
      %v3648 = vrot.slane %v3640, %v3647
      %v3650 = vunpack.c.l.s4 1983009808
      %v3651 = vunpack.c.0.s8 %v3650
      %v3652 = vlaneseq
      %v3653 = vshrl.u32 %v3652, 7
      %v3654 = vsub.s32 %v3651, %v3653
      %v3655 = vrot.slane %v3641, %v3654
      %v3656 = vcombine.low %v3586, %v3590
      %v3657 = vcombine.high %v3586, %v3590
      %v3659 = vunpack.c.l.s4 1983009808
      %v3660 = vunpack.c.0.s8 %v3659
      %v3661 = vlaneseq
      %v3662 = vshrl.u32 %v3661, 7
      %v3663 = vsub.s32 %v3660, %v3662
      %v3664 = vrot.slane %v3656, %v3663
      %v3666 = vunpack.c.l.s4 1983009808
      %v3667 = vunpack.c.0.s8 %v3666
      %v3668 = vlaneseq
      %v3669 = vshrl.u32 %v3668, 7
      %v3670 = vsub.s32 %v3667, %v3669
      %v3671 = vrot.slane %v3657, %v3670
      %v3672 = vcombine.low %v3616, %v3632
      %v3673 = vcombine.high %v3616, %v3632
      %v3675 = vunpack.c.l.s4 1934713408
      %v3676 = vunpack.c.0.s8 %v3675
      %v3677 = vlaneseq
      %v3678 = vshrl.u32 %v3677, 7
      %v3679 = vsub.s32 %v3676, %v3678
      %v3680 = vrot.slane %v3672, %v3679
      %v3682 = vunpack.c.l.s4 1934713408
      %v3683 = vunpack.c.0.s8 %v3682
      %v3684 = vlaneseq
      %v3685 = vshrl.u32 %v3684, 7
      %v3686 = vsub.s32 %v3683, %v3685
      %v3687 = vrot.slane %v3673, %v3686
      %v3688 = vcombine.low %v3623, %v3639
      %v3689 = vcombine.high %v3623, %v3639
      %v3691 = vunpack.c.l.s4 1934713408
      %v3692 = vunpack.c.0.s8 %v3691
      %v3693 = vlaneseq
      %v3694 = vshrl.u32 %v3693, 7
      %v3695 = vsub.s32 %v3692, %v3694
      %v3696 = vrot.slane %v3688, %v3695
      %v3698 = vunpack.c.l.s4 1934713408
      %v3699 = vunpack.c.0.s8 %v3698
      %v3700 = vlaneseq
      %v3701 = vshrl.u32 %v3700, 7
      %v3702 = vsub.s32 %v3699, %v3701
      %v3703 = vrot.slane %v3689, %v3702
      %v3704 = vcombine.low %v3648, %v3664
      %v3705 = vcombine.high %v3648, %v3664
      %v3707 = vunpack.c.l.s4 1934713408
      %v3708 = vunpack.c.0.s8 %v3707
      %v3709 = vlaneseq
      %v3710 = vshrl.u32 %v3709, 7
      %v3711 = vsub.s32 %v3708, %v3710
      %v3712 = vrot.slane %v3704, %v3711
      %v3714 = vunpack.c.l.s4 1934713408
      %v3715 = vunpack.c.0.s8 %v3714
      %v3716 = vlaneseq
      %v3717 = vshrl.u32 %v3716, 7
      %v3718 = vsub.s32 %v3715, %v3717
      %v3719 = vrot.slane %v3705, %v3718
      %v3720 = vcombine.low %v3655, %v3671
      %v3721 = vcombine.high %v3655, %v3671
      %v3723 = vunpack.c.l.s4 1934713408
      %v3724 = vunpack.c.0.s8 %v3723
      %v3725 = vlaneseq
      %v3726 = vshrl.u32 %v3725, 7
      %v3727 = vsub.s32 %v3724, %v3726
      %v3728 = vrot.slane %v3720, %v3727
      %v3730 = vunpack.c.l.s4 1934713408
      %v3731 = vunpack.c.0.s8 %v3730
      %v3732 = vlaneseq
      %v3733 = vshrl.u32 %v3732, 7
      %v3734 = vsub.s32 %v3731, %v3733
      %v3735 = vrot.slane %v3721, %v3734
      %v3736 = vcombine.low %v3680, %v3712
      %v3737 = vcombine.high %v3680, %v3712
      %v3738 = vcombine.low %v3687, %v3719
      %v3739 = vcombine.high %v3687, %v3719
      %v3740 = vcombine.low %v3696, %v3728
      %v3741 = vcombine.high %v3696, %v3728
      %v3742 = vcombine.low %v3703, %v3735
      %v3743 = vcombine.high %v3703, %v3735
      %v3744 = vcombine.low %v3592, %v3596
      %v3745 = vcombine.high %v3592, %v3596
      %v3747 = vunpack.c.l.s4 1983009808
      %v3748 = vunpack.c.0.s8 %v3747
      %v3749 = vlaneseq
      %v3750 = vshrl.u32 %v3749, 7
      %v3751 = vsub.s32 %v3748, %v3750
      %v3752 = vrot.slane %v3744, %v3751
      %v3754 = vunpack.c.l.s4 1983009808
      %v3755 = vunpack.c.0.s8 %v3754
      %v3756 = vlaneseq
      %v3757 = vshrl.u32 %v3756, 7
      %v3758 = vsub.s32 %v3755, %v3757
      %v3759 = vrot.slane %v3745, %v3758
      %v3760 = vcombine.low %v3594, %v3598
      %v3761 = vcombine.high %v3594, %v3598
      %v3763 = vunpack.c.l.s4 1983009808
      %v3764 = vunpack.c.0.s8 %v3763
      %v3765 = vlaneseq
      %v3766 = vshrl.u32 %v3765, 7
      %v3767 = vsub.s32 %v3764, %v3766
      %v3768 = vrot.slane %v3760, %v3767
      %v3770 = vunpack.c.l.s4 1983009808
      %v3771 = vunpack.c.0.s8 %v3770
      %v3772 = vlaneseq
      %v3773 = vshrl.u32 %v3772, 7
      %v3774 = vsub.s32 %v3771, %v3773
      %v3775 = vrot.slane %v3761, %v3774
      %v3776 = vcombine.low %v3600, %v3604
      %v3777 = vcombine.high %v3600, %v3604
      %v3779 = vunpack.c.l.s4 1983009808
      %v3780 = vunpack.c.0.s8 %v3779
      %v3781 = vlaneseq
      %v3782 = vshrl.u32 %v3781, 7
      %v3783 = vsub.s32 %v3780, %v3782
      %v3784 = vrot.slane %v3776, %v3783
      %v3786 = vunpack.c.l.s4 1983009808
      %v3787 = vunpack.c.0.s8 %v3786
      %v3788 = vlaneseq
      %v3789 = vshrl.u32 %v3788, 7
      %v3790 = vsub.s32 %v3787, %v3789
      %v3791 = vrot.slane %v3777, %v3790
      %v3792 = vcombine.low %v3602, %v3606
      %v3793 = vcombine.high %v3602, %v3606
      %v3795 = vunpack.c.l.s4 1983009808
      %v3796 = vunpack.c.0.s8 %v3795
      %v3797 = vlaneseq
      %v3798 = vshrl.u32 %v3797, 7
      %v3799 = vsub.s32 %v3796, %v3798
      %v3800 = vrot.slane %v3792, %v3799
      %v3802 = vunpack.c.l.s4 1983009808
      %v3803 = vunpack.c.0.s8 %v3802
      %v3804 = vlaneseq
      %v3805 = vshrl.u32 %v3804, 7
      %v3806 = vsub.s32 %v3803, %v3805
      %v3807 = vrot.slane %v3793, %v3806
      %v3808 = vcombine.low %v3752, %v3768
      %v3809 = vcombine.high %v3752, %v3768
      %v3811 = vunpack.c.l.s4 1934713408
      %v3812 = vunpack.c.0.s8 %v3811
      %v3813 = vlaneseq
      %v3814 = vshrl.u32 %v3813, 7
      %v3815 = vsub.s32 %v3812, %v3814
      %v3816 = vrot.slane %v3808, %v3815
      %v3818 = vunpack.c.l.s4 1934713408
      %v3819 = vunpack.c.0.s8 %v3818
      %v3820 = vlaneseq
      %v3821 = vshrl.u32 %v3820, 7
      %v3822 = vsub.s32 %v3819, %v3821
      %v3823 = vrot.slane %v3809, %v3822
      %v3824 = vcombine.low %v3759, %v3775
      %v3825 = vcombine.high %v3759, %v3775
      %v3827 = vunpack.c.l.s4 1934713408
      %v3828 = vunpack.c.0.s8 %v3827
      %v3829 = vlaneseq
      %v3830 = vshrl.u32 %v3829, 7
      %v3831 = vsub.s32 %v3828, %v3830
      %v3832 = vrot.slane %v3824, %v3831
      %v3834 = vunpack.c.l.s4 1934713408
      %v3835 = vunpack.c.0.s8 %v3834
      %v3836 = vlaneseq
      %v3837 = vshrl.u32 %v3836, 7
      %v3838 = vsub.s32 %v3835, %v3837
      %v3839 = vrot.slane %v3825, %v3838
      %v3840 = vcombine.low %v3784, %v3800
      %v3841 = vcombine.high %v3784, %v3800
      %v3843 = vunpack.c.l.s4 1934713408
      %v3844 = vunpack.c.0.s8 %v3843
      %v3845 = vlaneseq
      %v3846 = vshrl.u32 %v3845, 7
      %v3847 = vsub.s32 %v3844, %v3846
      %v3848 = vrot.slane %v3840, %v3847
      %v3850 = vunpack.c.l.s4 1934713408
      %v3851 = vunpack.c.0.s8 %v3850
      %v3852 = vlaneseq
      %v3853 = vshrl.u32 %v3852, 7
      %v3854 = vsub.s32 %v3851, %v3853
      %v3855 = vrot.slane %v3841, %v3854
      %v3856 = vcombine.low %v3791, %v3807
      %v3857 = vcombine.high %v3791, %v3807
      %v3859 = vunpack.c.l.s4 1934713408
      %v3860 = vunpack.c.0.s8 %v3859
      %v3861 = vlaneseq
      %v3862 = vshrl.u32 %v3861, 7
      %v3863 = vsub.s32 %v3860, %v3862
      %v3864 = vrot.slane %v3856, %v3863
      %v3866 = vunpack.c.l.s4 1934713408
      %v3867 = vunpack.c.0.s8 %v3866
      %v3868 = vlaneseq
      %v3869 = vshrl.u32 %v3868, 7
      %v3870 = vsub.s32 %v3867, %v3869
      %v3871 = vrot.slane %v3857, %v3870
      %v3872 = vcombine.low %v3816, %v3848
      %v3873 = vcombine.high %v3816, %v3848
      %v3874 = vcombine.low %v3823, %v3855
      %v3875 = vcombine.high %v3823, %v3855
      %v3876 = vcombine.low %v3832, %v3864
      %v3877 = vcombine.high %v3832, %v3864
      %v3878 = vcombine.low %v3839, %v3871
      %v3879 = vcombine.high %v3839, %v3871
      %v3880 = vcombine.low %v3577, %v3581
      %v3881 = vcombine.high %v3577, %v3581
      %v3883 = vunpack.c.l.s4 1983009808
      %v3884 = vunpack.c.0.s8 %v3883
      %v3885 = vlaneseq
      %v3886 = vshrl.u32 %v3885, 7
      %v3887 = vsub.s32 %v3884, %v3886
      %v3888 = vrot.slane %v3880, %v3887
      %v3890 = vunpack.c.l.s4 1983009808
      %v3891 = vunpack.c.0.s8 %v3890
      %v3892 = vlaneseq
      %v3893 = vshrl.u32 %v3892, 7
      %v3894 = vsub.s32 %v3891, %v3893
      %v3895 = vrot.slane %v3881, %v3894
      %v3896 = vcombine.low %v3579, %v3583
      %v3897 = vcombine.high %v3579, %v3583
      %v3899 = vunpack.c.l.s4 1983009808
      %v3900 = vunpack.c.0.s8 %v3899
      %v3901 = vlaneseq
      %v3902 = vshrl.u32 %v3901, 7
      %v3903 = vsub.s32 %v3900, %v3902
      %v3904 = vrot.slane %v3896, %v3903
      %v3906 = vunpack.c.l.s4 1983009808
      %v3907 = vunpack.c.0.s8 %v3906
      %v3908 = vlaneseq
      %v3909 = vshrl.u32 %v3908, 7
      %v3910 = vsub.s32 %v3907, %v3909
      %v3911 = vrot.slane %v3897, %v3910
      %v3912 = vcombine.low %v3585, %v3589
      %v3913 = vcombine.high %v3585, %v3589
      %v3915 = vunpack.c.l.s4 1983009808
      %v3916 = vunpack.c.0.s8 %v3915
      %v3917 = vlaneseq
      %v3918 = vshrl.u32 %v3917, 7
      %v3919 = vsub.s32 %v3916, %v3918
      %v3920 = vrot.slane %v3912, %v3919
      %v3922 = vunpack.c.l.s4 1983009808
      %v3923 = vunpack.c.0.s8 %v3922
      %v3924 = vlaneseq
      %v3925 = vshrl.u32 %v3924, 7
      %v3926 = vsub.s32 %v3923, %v3925
      %v3927 = vrot.slane %v3913, %v3926
      %v3928 = vcombine.low %v3587, %v3591
      %v3929 = vcombine.high %v3587, %v3591
      %v3931 = vunpack.c.l.s4 1983009808
      %v3932 = vunpack.c.0.s8 %v3931
      %v3933 = vlaneseq
      %v3934 = vshrl.u32 %v3933, 7
      %v3935 = vsub.s32 %v3932, %v3934
      %v3936 = vrot.slane %v3928, %v3935
      %v3938 = vunpack.c.l.s4 1983009808
      %v3939 = vunpack.c.0.s8 %v3938
      %v3940 = vlaneseq
      %v3941 = vshrl.u32 %v3940, 7
      %v3942 = vsub.s32 %v3939, %v3941
      %v3943 = vrot.slane %v3929, %v3942
      %v3944 = vcombine.low %v3888, %v3904
      %v3945 = vcombine.high %v3888, %v3904
      %v3947 = vunpack.c.l.s4 1934713408
      %v3948 = vunpack.c.0.s8 %v3947
      %v3949 = vlaneseq
      %v3950 = vshrl.u32 %v3949, 7
      %v3951 = vsub.s32 %v3948, %v3950
      %v3952 = vrot.slane %v3944, %v3951
      %v3954 = vunpack.c.l.s4 1934713408
      %v3955 = vunpack.c.0.s8 %v3954
      %v3956 = vlaneseq
      %v3957 = vshrl.u32 %v3956, 7
      %v3958 = vsub.s32 %v3955, %v3957
      %v3959 = vrot.slane %v3945, %v3958
      %v3960 = vcombine.low %v3895, %v3911
      %v3961 = vcombine.high %v3895, %v3911
      %v3963 = vunpack.c.l.s4 1934713408
      %v3964 = vunpack.c.0.s8 %v3963
      %v3965 = vlaneseq
      %v3966 = vshrl.u32 %v3965, 7
      %v3967 = vsub.s32 %v3964, %v3966
      %v3968 = vrot.slane %v3960, %v3967
      %v3970 = vunpack.c.l.s4 1934713408
      %v3971 = vunpack.c.0.s8 %v3970
      %v3972 = vlaneseq
      %v3973 = vshrl.u32 %v3972, 7
      %v3974 = vsub.s32 %v3971, %v3973
      %v3975 = vrot.slane %v3961, %v3974
      %v3976 = vcombine.low %v3920, %v3936
      %v3977 = vcombine.high %v3920, %v3936
      %v3979 = vunpack.c.l.s4 1934713408
      %v3980 = vunpack.c.0.s8 %v3979
      %v3981 = vlaneseq
      %v3982 = vshrl.u32 %v3981, 7
      %v3983 = vsub.s32 %v3980, %v3982
      %v3984 = vrot.slane %v3976, %v3983
      %v3986 = vunpack.c.l.s4 1934713408
      %v3987 = vunpack.c.0.s8 %v3986
      %v3988 = vlaneseq
      %v3989 = vshrl.u32 %v3988, 7
      %v3990 = vsub.s32 %v3987, %v3989
      %v3991 = vrot.slane %v3977, %v3990
      %v3992 = vcombine.low %v3927, %v3943
      %v3993 = vcombine.high %v3927, %v3943
      %v3995 = vunpack.c.l.s4 1934713408
      %v3996 = vunpack.c.0.s8 %v3995
      %v3997 = vlaneseq
      %v3998 = vshrl.u32 %v3997, 7
      %v3999 = vsub.s32 %v3996, %v3998
      %v4000 = vrot.slane %v3992, %v3999
      %v4002 = vunpack.c.l.s4 1934713408
      %v4003 = vunpack.c.0.s8 %v4002
      %v4004 = vlaneseq
      %v4005 = vshrl.u32 %v4004, 7
      %v4006 = vsub.s32 %v4003, %v4005
      %v4007 = vrot.slane %v3993, %v4006
      %v4008 = vcombine.low %v3952, %v3984
      %v4009 = vcombine.high %v3952, %v3984
      %v4010 = vcombine.low %v3959, %v3991
      %v4011 = vcombine.high %v3959, %v3991
      %v4012 = vcombine.low %v3968, %v4000
      %v4013 = vcombine.high %v3968, %v4000
      %v4014 = vcombine.low %v3975, %v4007
      %v4015 = vcombine.high %v3975, %v4007
      %v4016 = vcombine.low %v3593, %v3597
      %v4017 = vcombine.high %v3593, %v3597
      %v4019 = vunpack.c.l.s4 1983009808
      %v4020 = vunpack.c.0.s8 %v4019
      %v4021 = vlaneseq
      %v4022 = vshrl.u32 %v4021, 7
      %v4023 = vsub.s32 %v4020, %v4022
      %v4024 = vrot.slane %v4016, %v4023
      %v4026 = vunpack.c.l.s4 1983009808
      %v4027 = vunpack.c.0.s8 %v4026
      %v4028 = vlaneseq
      %v4029 = vshrl.u32 %v4028, 7
      %v4030 = vsub.s32 %v4027, %v4029
      %v4031 = vrot.slane %v4017, %v4030
      %v4032 = vcombine.low %v3595, %v3599
      %v4033 = vcombine.high %v3595, %v3599
      %v4035 = vunpack.c.l.s4 1983009808
      %v4036 = vunpack.c.0.s8 %v4035
      %v4037 = vlaneseq
      %v4038 = vshrl.u32 %v4037, 7
      %v4039 = vsub.s32 %v4036, %v4038
      %v4040 = vrot.slane %v4032, %v4039
      %v4042 = vunpack.c.l.s4 1983009808
      %v4043 = vunpack.c.0.s8 %v4042
      %v4044 = vlaneseq
      %v4045 = vshrl.u32 %v4044, 7
      %v4046 = vsub.s32 %v4043, %v4045
      %v4047 = vrot.slane %v4033, %v4046
      %v4048 = vcombine.low %v3601, %v3605
      %v4049 = vcombine.high %v3601, %v3605
      %v4051 = vunpack.c.l.s4 1983009808
      %v4052 = vunpack.c.0.s8 %v4051
      %v4053 = vlaneseq
      %v4054 = vshrl.u32 %v4053, 7
      %v4055 = vsub.s32 %v4052, %v4054
      %v4056 = vrot.slane %v4048, %v4055
      %v4058 = vunpack.c.l.s4 1983009808
      %v4059 = vunpack.c.0.s8 %v4058
      %v4060 = vlaneseq
      %v4061 = vshrl.u32 %v4060, 7
      %v4062 = vsub.s32 %v4059, %v4061
      %v4063 = vrot.slane %v4049, %v4062
      %v4064 = vcombine.low %v3603, %v3607
      %v4065 = vcombine.high %v3603, %v3607
      %v4067 = vunpack.c.l.s4 1983009808
      %v4068 = vunpack.c.0.s8 %v4067
      %v4069 = vlaneseq
      %v4070 = vshrl.u32 %v4069, 7
      %v4071 = vsub.s32 %v4068, %v4070
      %v4072 = vrot.slane %v4064, %v4071
      %v4074 = vunpack.c.l.s4 1983009808
      %v4075 = vunpack.c.0.s8 %v4074
      %v4076 = vlaneseq
      %v4077 = vshrl.u32 %v4076, 7
      %v4078 = vsub.s32 %v4075, %v4077
      %v4079 = vrot.slane %v4065, %v4078
      %v4080 = vcombine.low %v4024, %v4040
      %v4081 = vcombine.high %v4024, %v4040
      %v4083 = vunpack.c.l.s4 1934713408
      %v4084 = vunpack.c.0.s8 %v4083
      %v4085 = vlaneseq
      %v4086 = vshrl.u32 %v4085, 7
      %v4087 = vsub.s32 %v4084, %v4086
      %v4088 = vrot.slane %v4080, %v4087
      %v4090 = vunpack.c.l.s4 1934713408
      %v4091 = vunpack.c.0.s8 %v4090
      %v4092 = vlaneseq
      %v4093 = vshrl.u32 %v4092, 7
      %v4094 = vsub.s32 %v4091, %v4093
      %v4095 = vrot.slane %v4081, %v4094
      %v4096 = vcombine.low %v4031, %v4047
      %v4097 = vcombine.high %v4031, %v4047
      %v4099 = vunpack.c.l.s4 1934713408
      %v4100 = vunpack.c.0.s8 %v4099
      %v4101 = vlaneseq
      %v4102 = vshrl.u32 %v4101, 7
      %v4103 = vsub.s32 %v4100, %v4102
      %v4104 = vrot.slane %v4096, %v4103
      %v4106 = vunpack.c.l.s4 1934713408
      %v4107 = vunpack.c.0.s8 %v4106
      %v4108 = vlaneseq
      %v4109 = vshrl.u32 %v4108, 7
      %v4110 = vsub.s32 %v4107, %v4109
      %v4111 = vrot.slane %v4097, %v4110
      %v4112 = vcombine.low %v4056, %v4072
      %v4113 = vcombine.high %v4056, %v4072
      %v4115 = vunpack.c.l.s4 1934713408
      %v4116 = vunpack.c.0.s8 %v4115
      %v4117 = vlaneseq
      %v4118 = vshrl.u32 %v4117, 7
      %v4119 = vsub.s32 %v4116, %v4118
      %v4120 = vrot.slane %v4112, %v4119
      %v4122 = vunpack.c.l.s4 1934713408
      %v4123 = vunpack.c.0.s8 %v4122
      %v4124 = vlaneseq
      %v4125 = vshrl.u32 %v4124, 7
      %v4126 = vsub.s32 %v4123, %v4125
      %v4127 = vrot.slane %v4113, %v4126
      %v4128 = vcombine.low %v4063, %v4079
      %v4129 = vcombine.high %v4063, %v4079
      %v4131 = vunpack.c.l.s4 1934713408
      %v4132 = vunpack.c.0.s8 %v4131
      %v4133 = vlaneseq
      %v4134 = vshrl.u32 %v4133, 7
      %v4135 = vsub.s32 %v4132, %v4134
      %v4136 = vrot.slane %v4128, %v4135
      %v4138 = vunpack.c.l.s4 1934713408
      %v4139 = vunpack.c.0.s8 %v4138
      %v4140 = vlaneseq
      %v4141 = vshrl.u32 %v4140, 7
      %v4142 = vsub.s32 %v4139, %v4141
      %v4143 = vrot.slane %v4129, %v4142
      %v4144 = vcombine.low %v4088, %v4120
      %v4145 = vcombine.high %v4088, %v4120
      %v4146 = vcombine.low %v4095, %v4127
      %v4147 = vcombine.high %v4095, %v4127
      %v4148 = vcombine.low %v4104, %v4136
      %v4149 = vcombine.high %v4104, %v4136
      %v4150 = vcombine.low %v4111, %v4143
      %v4151 = vcombine.high %v4111, %v4143
      %4154 = vrot.lane.b32.xlu0 %v3737, 8
      %v4155 = vpop.permute.xlu0 %4154
      %4156 = vrot.lane.b32.xlu0 %v3873, 8
      %v4157 = vpop.permute.xlu0 %4156
      %4162 = vrot.lane.b32.xlu0 %v3738, 16
      %v4163 = vpop.permute.xlu0 %4162
      %4164 = vrot.lane.b32.xlu0 %v3874, 16
      %v4165 = vpop.permute.xlu0 %4164
      %4170 = vrot.lane.b32.xlu0 %v3739, 24
      %v4171 = vpop.permute.xlu0 %4170
      %4172 = vrot.lane.b32.xlu0 %v3875, 24
      %v4173 = vpop.permute.xlu0 %4172
      %4178 = vrot.lane.b32.xlu0 %v3740, 32
      %v4179 = vpop.permute.xlu0 %4178
      %4180 = vrot.lane.b32.xlu0 %v3876, 32
      %v4181 = vpop.permute.xlu0 %4180
      %4186 = vrot.lane.b32.xlu0 %v3741, 40
      %v4187 = vpop.permute.xlu0 %4186
      %4188 = vrot.lane.b32.xlu0 %v3877, 40
      %v4189 = vpop.permute.xlu0 %4188
      %4194 = vrot.lane.b32.xlu0 %v3742, 48
      %v4195 = vpop.permute.xlu0 %4194
      %4196 = vrot.lane.b32.xlu0 %v3878, 48
      %v4197 = vpop.permute.xlu0 %4196
      %4202 = vrot.lane.b32.xlu0 %v3743, 56
      %v4203 = vpop.permute.xlu0 %4202
      %4204 = vrot.lane.b32.xlu0 %v3879, 56
      %v4205 = vpop.permute.xlu0 %4204
      %4210 = vrot.lane.b32.xlu0 %v4008, 64
      %v4211 = vpop.permute.xlu0 %4210
      %4212 = vrot.lane.b32.xlu0 %v4144, 64
      %v4213 = vpop.permute.xlu0 %4212
      %4218 = vrot.lane.b32.xlu0 %v4009, 72
      %v4219 = vpop.permute.xlu0 %4218
      %4220 = vrot.lane.b32.xlu0 %v4145, 72
      %v4221 = vpop.permute.xlu0 %4220
      %4226 = vrot.lane.b32.xlu0 %v4010, 80
      %v4227 = vpop.permute.xlu0 %4226
      %4228 = vrot.lane.b32.xlu0 %v4146, 80
      %v4229 = vpop.permute.xlu0 %4228
      %4234 = vrot.lane.b32.xlu0 %v4011, 88
      %v4235 = vpop.permute.xlu0 %4234
      %4236 = vrot.lane.b32.xlu0 %v4147, 88
      %v4237 = vpop.permute.xlu0 %4236
      %4242 = vrot.lane.b32.xlu0 %v4012, 96
      %v4243 = vpop.permute.xlu0 %4242
      %4244 = vrot.lane.b32.xlu0 %v4148, 96
      %v4245 = vpop.permute.xlu0 %4244
      %4250 = vrot.lane.b32.xlu0 %v4013, 104
      %v4251 = vpop.permute.xlu0 %4250
      %4252 = vrot.lane.b32.xlu0 %v4149, 104
      %v4253 = vpop.permute.xlu0 %4252
      %4258 = vrot.lane.b32.xlu0 %v4014, 112
      %v4259 = vpop.permute.xlu0 %4258
      %4260 = vrot.lane.b32.xlu0 %v4150, 112
      %v4261 = vpop.permute.xlu0 %4260
      %4266 = vrot.lane.b32.xlu0 %v4015, 120
      %v4267 = vpop.permute.xlu0 %4266
      %4268 = vrot.lane.b32.xlu0 %v4151, 120
      %v4269 = vpop.permute.xlu0 %4268
      %v4272 = vsel %vm768, %v3736, %v4155
      %v4273 = vsel %vm768, %v3872, %v4157
      %v4274 = vsel %vm2327, %v4272, %v4163
      %v4275 = vsel %vm2327, %v4273, %v4165
      %v4276 = vsel %vm2394, %v4274, %v4171
      %v4277 = vsel %vm2394, %v4275, %v4173
      %vm4278 = vcmask 261120
      %v4279 = vsel %vm4278, %v4276, %v4179
      %v4280 = vsel %vm4278, %v4277, %v4181
      %vm4281 = vcmask 326656
      %v4282 = vsel %vm4281, %v4279, %v4187
      %v4283 = vsel %vm4281, %v4280, %v4189
      %vm4284 = vcmask 392192
      %v4285 = vsel %vm4284, %v4282, %v4195
      %v4286 = vsel %vm4284, %v4283, %v4197
      %vm4287 = vcmask 457728
      %v4288 = vsel %vm4287, %v4285, %v4203
      %v4289 = vsel %vm4287, %v4286, %v4205
      %vm4290 = vcmask 523264
      %v4291 = vsel %vm4290, %v4288, %v4211
      %v4292 = vsel %vm4290, %v4289, %v4213
      %vm4293 = vcmask 588800
      %v4294 = vsel %vm4293, %v4291, %v4219
      %v4295 = vsel %vm4293, %v4292, %v4221
      %vm4296 = vcmask 654336
      %v4297 = vsel %vm4296, %v4294, %v4227
      %v4298 = vsel %vm4296, %v4295, %v4229
      %vm4299 = vcmask 719872
      %v4300 = vsel %vm4299, %v4297, %v4235
      %v4301 = vsel %vm4299, %v4298, %v4237
      %vm4302 = vcmask 785408
      %v4303 = vsel %vm4302, %v4300, %v4243
      %v4304 = vsel %vm4302, %v4301, %v4245
      %vm4305 = vcmask 850944
      %v4306 = vsel %vm4305, %v4303, %v4251
      %v4307 = vsel %vm4305, %v4304, %v4253
      %vm4308 = vcmask 916480
      %v4309 = vsel %vm4308, %v4306, %v4259
      %v4310 = vsel %vm4308, %v4307, %v4261
      %vm4311 = vcmask 982016
      %v4312 = vsel %vm4311, %v4309, %v4267
      %v4313 = vsel %vm4311, %v4310, %v4269
      %4314 = vst [vmem:[%s278] sm:$0xff] %v4312
      %4315 = vst [vmem:[%s278 + $0x8] sm:$0xff] %v4313
      %p4316 = scmp.lt.s32.totalorder %s18, 1
      %s4317 = scalar_select %p4316, %s18, 1
      %s4318 = smul.addr %s4317, 2
      %s4319 = smul.addr %s4318, 8
      %s4320 = scalar_lea.vmem %s7, %s4319
      // Predicated region
      $region49: #{_basic_block_impl.1} parent=47 // pred_check
        %p4321 = pneg %p188
      $region50: #{_basic_block_impl.1} parent=47 // pred_check_branch
        %4323 = sbr.rel (%p4321) target = $region52
      $region51: #{_basic_block_impl.1} parent=47 // pred_region
        _
      $region52: #{_basic_block_impl.1} parent=47 // pred_fallthru
        _
    $region48: #{_basic_block_impl.1} parent=5 // pred_fallthru
      _
    %p4324 = scmp.le.s32.totalorder 2, %s13
    // Predicated region
    $region53: #{_basic_block_impl.1} parent=5 // pred_check
      %p4325 = pneg %p4324
    $region54: #{_basic_block_impl.1} parent=5 // pred_check_branch
      %4327 = sbr.rel (%p4325) target = $region56
    $region55: #{_basic_block_impl.1} parent=5 // pred_region
      %s4328 = ssub.s32 %s13, 2
      // Predicated region
      $region57: #{_basic_block_impl.1} parent=55 // pred_check
        %p4329 = pneg %p194
      $region58: #{_basic_block_impl.1} parent=55 // pred_check_branch
        %4331 = sbr.rel (%p4329) target = $region60
      $region59: #{_basic_block_impl.1} parent=55 // pred_region
        %p4332 = scmp.lt.s32.totalorder %s19, 1
        %s4333 = scalar_select %p4332, %s19, 1
        %s4334 = smul.addr %s4333, 2
        %s4335 = smul.addr %s4334, 8
        %s4336 = scalar_lea.vmem %s7, %s4335
      $region60: #{_basic_block_impl.1} parent=55 // pred_fallthru
        _
    $region56: #{_basic_block_impl.1} parent=5 // pred_fallthru
      _
  $region6: #{_basic_block_impl.1} parent=0 // loop_footer
    %s17 = sadd.s32 1, %s13
  $region7: #{_basic_block_impl.1} parent=0 // loop_footer_branch
    %12 = sbr.rel target = $region3
  $region8: #{_basic_block_impl.1} parent=0 // loop_exit
    _

// kernel: _basic_block_impl.1
$region0: #{_basic_block_impl.1}
  #allocation0 [shape = 'u32[]', space=smem, size = 0x4, offset = 0x4, fixed_abs, tag = 'smem constant byte address 0x4 - core index']
  #allocation1 [shape = 'u32[144,128]{1,0:T(1,128)}', space=vmem, size = 0x12000, scoped, tag = 'internal scratch']
  %s0 = inlined_call_operand.vmem [shape: f32[2,18,18,4], index: 0, kind: input, shape index: {}]
  %s1 = inlined_call_operand.vmem [shape: f32[3,12,8], index: 1, kind: input, shape index: {}]
  %s2 = inlined_call_operand.vmem [shape: f32[1,8], index: 2, kind: input, shape index: {}]
  %s3 = inlined_call_operand.vmem [shape: f32[3,24,8], index: 3, kind: input, shape index: {}]
  %s4 = inlined_call_operand.vmem [shape: f32[1,8], index: 4, kind: input, shape index: {}]
  %s5 = inlined_call_operand.vmem [shape: f32[4,8], index: 5, kind: input, shape index: {}]
  %s6 = inlined_call_operand.vmem [shape: f32[1,8], index: 6, kind: input, shape index: {}]
  %s7 = inlined_call_operand.vmem [shape: f32[2,16,16,8], index: 7, kind: output, shape index: {}]
  %s8 = sld [smem:[#allocation0]]
  $region61: #{_basic_block_impl.1} parent=0
    _
  %s10 = ssub.s32 1, %s8
  %s11 = scalar_select 0, %s10, %s8
  loop: start=0, step=1, limit=4
  $region2: #{_basic_block_impl.1} parent=0 // loop_pre_header
    _
  $region3: #{_basic_block_impl.1} parent=0 // loop_header
    %s13 = sphi 0, %s17
    %p14 = scmp.ge.s32.totalorder %s13, 4
    %s23 = sphi 0, %s25
    %s26 = sphi 0, %s23
    %s27 = sphi 0, %s26
    %s43 = sphi 0, %s27
    %s47 = sphi 0, %s47
    %s49 = sphi 0, %s47
    %s50 = sphi 0, %s49
    %s64 = sphi 0, %s50
    %s68 = sphi 0, %s68
    %s70 = sphi 0, %s68
    %s71 = sphi 0, %s70
    %s85 = sphi 0, %s71
    %s89 = sphi 0, %s89
    %s91 = sphi 0, %s89
    %s92 = sphi 0, %s91
    %s106 = sphi 0, %s92
    %s110 = sphi 0, %s110
    %s112 = sphi 0, %s110
    %s113 = sphi 0, %s112
    %s127 = sphi 0, %s113
    %s131 = sphi 0, %s131
    %s133 = sphi 0, %s131
    %s134 = sphi 0, %s133
    %s148 = sphi 0, %s134
    %s152 = sphi 0, %s152
    %s154 = sphi 0, %s152
    %s155 = sphi 0, %s154
    %s169 = sphi 0, %s155
    %s175 = sphi 0, %s177
    %s178 = sphi 0, %s175
    %s179 = sphi 0, %s178
    %s195 = sphi 0, %s179
  $region4: #{_basic_block_impl.1} parent=0 // loop_header_branch
    %16 = sbr.rel (%p14) target = $region8
  $region5: #{_basic_block_impl.1} parent=0 // loop_body
    %s18 = ssub.s32 %s13, 1
    %s19 = ssub.s32 %s13, 2
    %s20 = sadd.s32 %s13, 1
    %s21 = ssub.s32 %s13, %s20
    %p22 = scmp.eq.s32.totalorder %s21, 0
    %s24 = sadd.s32 %s23, 1
    %s25 = scalar_select %p22, %s23, %s24
    %p28 = pneg %p22
    %p29 = scmp.eq.s32.totalorder %s13, 1
    %p30 = por %p28, %p29
    %p31 = scmp.ne.s32.totalorder %s23, %s26
    %p32 = scmp.eq.s32.totalorder %s13, 0
    %p33 = por %p31, %p32
    %p34 = scmp.ne.s32.totalorder %s23, %s26
    %p35 = scmp.eq.s32.totalorder %s18, 1
    %p36 = por %p34, %p35
    %p37 = scmp.ne.s32.totalorder %s26, %s27
    %p38 = scmp.eq.s32.totalorder %s18, 0
    %p39 = por %p37, %p38
    %p40 = scmp.ne.s32.totalorder %s26, %s27
    %p41 = scmp.eq.s32.totalorder %s19, 1
    %p42 = por %p40, %p41
    %p44 = scmp.ne.s32.totalorder %s27, %s43
    %p45 = scmp.eq.s32.totalorder %s19, 0
    %p46 = por %p44, %p45
    %s48 = sadd.s32 %s47, 1
    %p51 = scmp.eq.s32.totalorder %s13, 1
    %p52 = scmp.ne.s32.totalorder %s47, %s49
    %p53 = scmp.eq.s32.totalorder %s13, 0
    %p54 = por %p52, %p53
    %p55 = scmp.ne.s32.totalorder %s47, %s49
    %p56 = scmp.eq.s32.totalorder %s18, 1
    %p57 = por %p55, %p56
    %p58 = scmp.ne.s32.totalorder %s49, %s50
    %p59 = scmp.eq.s32.totalorder %s18, 0
    %p60 = por %p58, %p59
    %p61 = scmp.ne.s32.totalorder %s49, %s50
    %p62 = scmp.eq.s32.totalorder %s19, 1
    %p63 = por %p61, %p62
    %p65 = scmp.ne.s32.totalorder %s50, %s64
    %p66 = scmp.eq.s32.totalorder %s19, 0
    %p67 = por %p65, %p66
    %s69 = sadd.s32 %s68, 1
    %p72 = scmp.eq.s32.totalorder %s13, 1
    %p73 = scmp.ne.s32.totalorder %s68, %s70
    %p74 = scmp.eq.s32.totalorder %s13, 0
    %p75 = por %p73, %p74
    %p76 = scmp.ne.s32.totalorder %s68, %s70
    %p77 = scmp.eq.s32.totalorder %s18, 1
    %p78 = por %p76, %p77
    %p79 = scmp.ne.s32.totalorder %s70, %s71
    %p80 = scmp.eq.s32.totalorder %s18, 0
    %p81 = por %p79, %p80
    %p82 = scmp.ne.s32.totalorder %s70, %s71
    %p83 = scmp.eq.s32.totalorder %s19, 1
    %p84 = por %p82, %p83
    %p86 = scmp.ne.s32.totalorder %s71, %s85
    %p87 = scmp.eq.s32.totalorder %s19, 0
    %p88 = por %p86, %p87
    %s90 = sadd.s32 %s89, 1
    %p93 = scmp.eq.s32.totalorder %s13, 1
    %p94 = scmp.ne.s32.totalorder %s89, %s91
    %p95 = scmp.eq.s32.totalorder %s13, 0
    %p96 = por %p94, %p95
    %p97 = scmp.ne.s32.totalorder %s89, %s91
    %p98 = scmp.eq.s32.totalorder %s18, 1
    %p99 = por %p97, %p98
    %p100 = scmp.ne.s32.totalorder %s91, %s92
    %p101 = scmp.eq.s32.totalorder %s18, 0
    %p102 = por %p100, %p101
    %p103 = scmp.ne.s32.totalorder %s91, %s92
    %p104 = scmp.eq.s32.totalorder %s19, 1
    %p105 = por %p103, %p104
    %p107 = scmp.ne.s32.totalorder %s92, %s106
    %p108 = scmp.eq.s32.totalorder %s19, 0
    %p109 = por %p107, %p108
    %s111 = sadd.s32 %s110, 1
    %p114 = scmp.eq.s32.totalorder %s13, 1
    %p115 = scmp.ne.s32.totalorder %s110, %s112
    %p116 = scmp.eq.s32.totalorder %s13, 0
    %p117 = por %p115, %p116
    %p118 = scmp.ne.s32.totalorder %s110, %s112
    %p119 = scmp.eq.s32.totalorder %s18, 1
    %p120 = por %p118, %p119
    %p121 = scmp.ne.s32.totalorder %s112, %s113
    %p122 = scmp.eq.s32.totalorder %s18, 0
    %p123 = por %p121, %p122
    %p124 = scmp.ne.s32.totalorder %s112, %s113
    %p125 = scmp.eq.s32.totalorder %s19, 1
    %p126 = por %p124, %p125
    %p128 = scmp.ne.s32.totalorder %s113, %s127
    %p129 = scmp.eq.s32.totalorder %s19, 0
    %p130 = por %p128, %p129
    %s132 = sadd.s32 %s131, 1
    %p135 = scmp.eq.s32.totalorder %s13, 1
    %p136 = scmp.ne.s32.totalorder %s131, %s133
    %p137 = scmp.eq.s32.totalorder %s13, 0
    %p138 = por %p136, %p137
    %p139 = scmp.ne.s32.totalorder %s131, %s133
    %p140 = scmp.eq.s32.totalorder %s18, 1
    %p141 = por %p139, %p140
    %p142 = scmp.ne.s32.totalorder %s133, %s134
    %p143 = scmp.eq.s32.totalorder %s18, 0
    %p144 = por %p142, %p143
    %p145 = scmp.ne.s32.totalorder %s133, %s134
    %p146 = scmp.eq.s32.totalorder %s19, 1
    %p147 = por %p145, %p146
    %p149 = scmp.ne.s32.totalorder %s134, %s148
    %p150 = scmp.eq.s32.totalorder %s19, 0
    %p151 = por %p149, %p150
    %s153 = sadd.s32 %s152, 1
    %p156 = scmp.eq.s32.totalorder %s13, 1
    %p157 = scmp.ne.s32.totalorder %s152, %s154
    %p158 = scmp.eq.s32.totalorder %s13, 0
    %p159 = por %p157, %p158
    %p160 = scmp.ne.s32.totalorder %s152, %s154
    %p161 = scmp.eq.s32.totalorder %s18, 1
    %p162 = por %p160, %p161
    %p163 = scmp.ne.s32.totalorder %s154, %s155
    %p164 = scmp.eq.s32.totalorder %s18, 0
    %p165 = por %p163, %p164
    %p166 = scmp.ne.s32.totalorder %s154, %s155
    %p167 = scmp.eq.s32.totalorder %s19, 1
    %p168 = por %p166, %p167
    %p170 = scmp.ne.s32.totalorder %s155, %s169
    %p171 = scmp.eq.s32.totalorder %s19, 0
    %p172 = por %p170, %p171
    %s173 = ssub.s32 %s13, %s20
    %p174 = scmp.eq.s32.totalorder %s173, 0
    %s176 = sadd.s32 %s175, 1
    %s177 = scalar_select %p174, %s175, %s176
    %p180 = pneg %p174
    %p181 = scmp.eq.s32.totalorder %s13, 1
    %p182 = por %p180, %p181
    %p183 = scmp.ne.s32.totalorder %s175, %s178
    %p184 = scmp.eq.s32.totalorder %s13, 0
    %p185 = por %p183, %p184
    %p186 = scmp.ne.s32.totalorder %s175, %s178
    %p187 = scmp.eq.s32.totalorder %s18, 1
    %p188 = por %p186, %p187
    %p189 = scmp.ne.s32.totalorder %s178, %s179
    %p190 = scmp.eq.s32.totalorder %s18, 0
    %p191 = por %p189, %p190
    %p192 = scmp.ne.s32.totalorder %s178, %s179
    %p193 = scmp.eq.s32.totalorder %s19, 1
    %p194 = por %p192, %p193
    %p196 = scmp.ne.s32.totalorder %s179, %s195
    %p197 = scmp.eq.s32.totalorder %s19, 0
    %p198 = por %p196, %p197
    %p199 = scmp.le.s32.totalorder 1, %s13
    %p200 = scmp.lt.s32.totalorder %s13, 3
    %p201 = pnand %p199, %p200
    %p202 = pneg %p201
    // Predicated region
    $region9: #{_basic_block_impl.1} parent=5 // pred_check
      _
    $region10: #{_basic_block_impl.1} parent=5 // pred_check_branch
      %204 = sbr.rel (%p201) target = $region12
    $region11: #{_basic_block_impl.1} parent=5 // pred_region
      %s205 = ssub.s32 %s13, 1
      // Predicated region
      $region13: #{_basic_block_impl.1} parent=11 // pred_check
        %p206 = pneg %p60
      $region14: #{_basic_block_impl.1} parent=11 // pred_check_branch
        %208 = sbr.rel (%p206) target = $region16
      $region15: #{_basic_block_impl.1} parent=11 // pred_region
        _
      $region16: #{_basic_block_impl.1} parent=11 // pred_fallthru
        _
      // Predicated region
      $region17: #{_basic_block_impl.1} parent=11 // pred_check
        %p209 = pneg %p81
      $region18: #{_basic_block_impl.1} parent=11 // pred_check_branch
        %211 = sbr.rel (%p209) target = $region20
      $region19: #{_basic_block_impl.1} parent=11 // pred_region
        _
      $region20: #{_basic_block_impl.1} parent=11 // pred_fallthru
        _
      // Predicated region
      $region21: #{_basic_block_impl.1} parent=11 // pred_check
        %p212 = pneg %p102
      $region22: #{_basic_block_impl.1} parent=11 // pred_check_branch
        %214 = sbr.rel (%p212) target = $region24
      $region23: #{_basic_block_impl.1} parent=11 // pred_region
        _
      $region24: #{_basic_block_impl.1} parent=11 // pred_fallthru
        _
      // Predicated region
      $region25: #{_basic_block_impl.1} parent=11 // pred_check
        %p215 = pneg %p123
      $region26: #{_basic_block_impl.1} parent=11 // pred_check_branch
        %217 = sbr.rel (%p215) target = $region28
      $region27: #{_basic_block_impl.1} parent=11 // pred_region
        _
      $region28: #{_basic_block_impl.1} parent=11 // pred_fallthru
        _
      // Predicated region
      $region29: #{_basic_block_impl.1} parent=11 // pred_check
        %p218 = pneg %p144
      $region30: #{_basic_block_impl.1} parent=11 // pred_check_branch
        %220 = sbr.rel (%p218) target = $region32
      $region31: #{_basic_block_impl.1} parent=11 // pred_region
        _
      $region32: #{_basic_block_impl.1} parent=11 // pred_fallthru
        _
      // Predicated region
      $region33: #{_basic_block_impl.1} parent=11 // pred_check
        %p221 = pneg %p165
      $region34: #{_basic_block_impl.1} parent=11 // pred_check_branch
        %223 = sbr.rel (%p221) target = $region36
      $region35: #{_basic_block_impl.1} parent=11 // pred_region
        _
      $region36: #{_basic_block_impl.1} parent=11 // pred_fallthru
        _
    $region12: #{_basic_block_impl.1} parent=5 // pred_fallthru
      _
    %p224 = scmp.lt.s32.totalorder %s13, 2
    // Predicated region
    $region37: #{_basic_block_impl.1} parent=5 // pred_check
      %p225 = pneg %p224
    $region38: #{_basic_block_impl.1} parent=5 // pred_check_branch
      %227 = sbr.rel (%p225) target = $region40
    $region39: #{_basic_block_impl.1} parent=5 // pred_region
      // Predicated region
      $region41: #{_basic_block_impl.1} parent=39 // pred_check
        %p228 = pneg %p33
      $region42: #{_basic_block_impl.1} parent=39 // pred_check_branch
        %230 = sbr.rel (%p228) target = $region44
      $region43: #{_basic_block_impl.1} parent=39 // pred_region
        %p231 = scmp.lt.s32.totalorder %s13, 1
        %s232 = scalar_select %p231, %s13, 1
        %s233 = smul.addr %s232, 54
        %s234 = smul.addr %s233, 8
        %s235 = scalar_lea.vmem %s0, %s234
      $region44: #{_basic_block_impl.1} parent=39 // pred_fallthru
        _
    $region40: #{_basic_block_impl.1} parent=5 // pred_fallthru
      _
    %p236 = scmp.le.s32.totalorder 1, %s13
    %p237 = scmp.lt.s32.totalorder %s13, 3
    %p238 = pnand %p236, %p237
    %p239 = pneg %p238
    // Predicated region
    $region45: #{_basic_block_impl.1} parent=5 // pred_check
      _
    $region46: #{_basic_block_impl.1} parent=5 // pred_check_branch
      %241 = sbr.rel (%p238) target = $region48
    $region47: #{_basic_block_impl.1} parent=5 // pred_region
      %s242 = ssub.s32 %s13, 1
      %p243 = scmp.lt.s32.totalorder %s18, 1
      %s244 = scalar_select %p243, %s18, 1
      %s245 = smul.addr %s244, 54
      %s246 = smul.addr %s245, 8
      %s247 = scalar_lea.vmem %s0, %s246
      %p248 = pneg %p39
      %p249 = pneg %p36
      %p250 = pneg %p60
      %p251 = pneg %p57
      %p252 = pneg %p81
      %p253 = pneg %p78
      %p254 = pneg %p102
      %p255 = pneg %p99
      %p256 = pneg %p123
      %p257 = pneg %p120
      %p258 = pneg %p144
      %p259 = pneg %p141
      %p260 = pneg %p165
      %p261 = pneg %p162
      %p262 = pneg %p191
      %p263 = pneg %p188
      %p264 = scmp.lt.s32.totalorder %s18, 1
      %s265 = scalar_select %p264, %s18, 1
      %s266 = smul.addr %s265, 32
      %s267 = smul.addr %s266, 8
      %s268 = scalar_lea.vmem %s7, %s267
      %p269 = scmp.lt.s32.totalorder %s18, 1
      %s270 = scalar_select %p269, %s18, 1
      %s271 = smul.addr %s270, 54
      %s272 = smul.addr %s271, 8
      %s273 = scalar_lea.vmem %s0, %s272
      %p274 = scmp.lt.s32.totalorder %s18, 1
      %s275 = scalar_select %p274, %s18, 1
      %s276 = smul.addr %s275, 32
      %s277 = smul.addr %s276, 8
      %s278 = scalar_lea.vmem %s7, %s277
      %v279 = vld [vmem:[%s273] sm:$0xff]
      %v280 = vld [vmem:[%s273 + $0x8] sm:$0xff]
      %v281 = vld [vmem:[%s273 + $0x10] sm:$0x3]
      %v282 = vld [vmem:[%s273 + $0x18] sm:$0xff]
      %v283 = vld [vmem:[%s273 + $0x20] sm:$0xff]
      %v284 = vld [vmem:[%s273 + $0x28] sm:$0x3]
      %v285 = vld [vmem:[%s273 + $0x30] sm:$0xff]
      %v286 = vld [vmem:[%s273 + $0x38] sm:$0xff]
      %v287 = vld [vmem:[%s273 + $0x40] sm:$0x3]
      %v288 = vld [vmem:[%s273 + $0x48] sm:$0xff]
      %v289 = vld [vmem:[%s273 + $0x50] sm:$0xff]
      %v290 = vld [vmem:[%s273 + $0x58] sm:$0x3]
      %v291 = vld [vmem:[%s273 + $0x60] sm:$0xff]
      %v292 = vld [vmem:[%s273 + $0x68] sm:$0xff]
      %v293 = vld [vmem:[%s273 + $0x70] sm:$0x3]
      %v294 = vld [vmem:[%s273 + $0x78] sm:$0xff]
      %v295 = vld [vmem:[%s273 + $0x80] sm:$0xff]
      %v296 = vld [vmem:[%s273 + $0x88] sm:$0x3]
      %v297 = vld [vmem:[%s273 + $0x90] sm:$0xff]
      %v298 = vld [vmem:[%s273 + $0x98] sm:$0xff]
      %v299 = vld [vmem:[%s273 + $0xa0] sm:$0x3]
      %v300 = vld [vmem:[%s273 + $0xa8] sm:$0xff]
      %v301 = vld [vmem:[%s273 + $0xb0] sm:$0xff]
      %v302 = vld [vmem:[%s273 + $0xb8] sm:$0x3]
      %v303 = vld [vmem:[%s273 + $0xc0] sm:$0xff]
      %v304 = vld [vmem:[%s273 + $0xc8] sm:$0xff]
      %v305 = vld [vmem:[%s273 + $0xd0] sm:$0x3]
      %v306 = vld [vmem:[%s273 + $0xd8] sm:$0xff]
      %v307 = vld [vmem:[%s273 + $0xe0] sm:$0xff]
      %v308 = vld [vmem:[%s273 + $0xe8] sm:$0x3]
      %v309 = vld [vmem:[%s273 + $0xf0] sm:$0xff]
      %v310 = vld [vmem:[%s273 + $0xf8] sm:$0xff]
      %v311 = vld [vmem:[%s273 + $0x100] sm:$0x3]
      %v312 = vld [vmem:[%s273 + $0x108] sm:$0xff]
      %v313 = vld [vmem:[%s273 + $0x110] sm:$0xff]
      %v314 = vld [vmem:[%s273 + $0x118] sm:$0x3]
      %v315 = vld [vmem:[%s273 + $0x120] sm:$0xff]
      %v316 = vld [vmem:[%s273 + $0x128] sm:$0xff]
      %v317 = vld [vmem:[%s273 + $0x130] sm:$0x3]
      %v318 = vld [vmem:[%s273 + $0x138] sm:$0xff]
      %v319 = vld [vmem:[%s273 + $0x140] sm:$0xff]
      %v320 = vld [vmem:[%s273 + $0x148] sm:$0x3]
      %v321 = vld [vmem:[%s273 + $0x150] sm:$0xff]
      %v322 = vld [vmem:[%s273 + $0x158] sm:$0xff]
      %v323 = vld [vmem:[%s273 + $0x160] sm:$0x3]
      %v324 = vld [vmem:[%s273 + $0x168] sm:$0xff]
      %v325 = vld [vmem:[%s273 + $0x170] sm:$0xff]
      %v326 = vld [vmem:[%s273 + $0x178] sm:$0x3]
      %v327 = vld [vmem:[%s273 + $0x180] sm:$0xff]
      %v328 = vld [vmem:[%s273 + $0x188] sm:$0xff]
      %v329 = vld [vmem:[%s273 + $0x190] sm:$0x3]
      %v330 = vld [vmem:[%s273 + $0x198] sm:$0xff]
      %v331 = vld [vmem:[%s273 + $0x1a0] sm:$0xff]
      %v332 = vld [vmem:[%s273 + $0x1a8] sm:$0x3]
      %vm381 = vcmask 1046528
      %v382 = vrot.slane %v279, 1
      %v383 = vrot.slane %v280, 1
      %v384 = vsel %vm381, %v382, %v383
      %v385 = vrot.slane %v281, 1
      %v386 = vsel %vm381, %v383, %v385
      %v387 = vrot.slane %v282, 1
      %v388 = vrot.slane %v283, 1
      %v389 = vsel %vm381, %v387, %v388
      %v390 = vrot.slane %v284, 1
      %v391 = vsel %vm381, %v388, %v390
      %v392 = vrot.slane %v285, 1
      %v393 = vrot.slane %v286, 1
      %v394 = vsel %vm381, %v392, %v393
      %v395 = vrot.slane %v287, 1
      %v396 = vsel %vm381, %v393, %v395
      %v397 = vrot.slane %v288, 1
      %v398 = vrot.slane %v289, 1
      %v399 = vsel %vm381, %v397, %v398
      %v400 = vrot.slane %v290, 1
      %v401 = vsel %vm381, %v398, %v400
      %v402 = vrot.slane %v291, 1
      %v403 = vrot.slane %v292, 1
      %v404 = vsel %vm381, %v402, %v403
      %v405 = vrot.slane %v293, 1
      %v406 = vsel %vm381, %v403, %v405
      %v407 = vrot.slane %v294, 1
      %v408 = vrot.slane %v295, 1
      %v409 = vsel %vm381, %v407, %v408
      %v410 = vrot.slane %v296, 1
      %v411 = vsel %vm381, %v408, %v410
      %v412 = vrot.slane %v297, 1
      %v413 = vrot.slane %v298, 1
      %v414 = vsel %vm381, %v412, %v413
      %v415 = vrot.slane %v299, 1
      %v416 = vsel %vm381, %v413, %v415
      %v417 = vrot.slane %v300, 1
      %v418 = vrot.slane %v301, 1
      %v419 = vsel %vm381, %v417, %v418
      %v420 = vrot.slane %v302, 1
      %v421 = vsel %vm381, %v418, %v420
      %v422 = vrot.slane %v303, 1
      %v423 = vrot.slane %v304, 1
      %v424 = vsel %vm381, %v422, %v423
      %v425 = vrot.slane %v305, 1
      %v426 = vsel %vm381, %v423, %v425
      %v427 = vrot.slane %v306, 1
      %v428 = vrot.slane %v307, 1
      %v429 = vsel %vm381, %v427, %v428
      %v430 = vrot.slane %v308, 1
      %v431 = vsel %vm381, %v428, %v430
      %v432 = vrot.slane %v309, 1
      %v433 = vrot.slane %v310, 1
      %v434 = vsel %vm381, %v432, %v433
      %v435 = vrot.slane %v311, 1
      %v436 = vsel %vm381, %v433, %v435
      %v437 = vrot.slane %v312, 1
      %v438 = vrot.slane %v313, 1
      %v439 = vsel %vm381, %v437, %v438
      %v440 = vrot.slane %v314, 1
      %v441 = vsel %vm381, %v438, %v440
      %v442 = vrot.slane %v315, 1
      %v443 = vrot.slane %v316, 1
      %v444 = vsel %vm381, %v442, %v443
      %v445 = vrot.slane %v317, 1
      %v446 = vsel %vm381, %v443, %v445
      %v447 = vrot.slane %v318, 1
      %v448 = vrot.slane %v319, 1
      %v449 = vsel %vm381, %v447, %v448
      %v450 = vrot.slane %v320, 1
      %v451 = vsel %vm381, %v448, %v450
      %v452 = vrot.slane %v321, 1
      %v453 = vrot.slane %v322, 1
      %v454 = vsel %vm381, %v452, %v453
      %v455 = vrot.slane %v323, 1
      %v456 = vsel %vm381, %v453, %v455
      %v457 = vrot.slane %v324, 1
      %v458 = vrot.slane %v325, 1
      %v459 = vsel %vm381, %v457, %v458
      %v460 = vrot.slane %v326, 1
      %v461 = vsel %vm381, %v458, %v460
      %462 = vrot.lane.b32.xlu0 %v384, 4
      %v463 = vpop.permute.xlu0 %462
      %464 = vrot.lane.b32.xlu0 %v386, 4
      %v465 = vpop.permute.xlu0 %464
      %466 = vrot.lane.b32.xlu0 %v389, 4
      %v467 = vpop.permute.xlu0 %466
      %468 = vrot.lane.b32.xlu0 %v391, 4
      %v469 = vpop.permute.xlu0 %468
      %470 = vrot.lane.b32.xlu0 %v394, 4
      %v471 = vpop.permute.xlu0 %470
      %472 = vrot.lane.b32.xlu0 %v396, 4
      %v473 = vpop.permute.xlu0 %472
      %474 = vrot.lane.b32.xlu0 %v399, 4
      %v475 = vpop.permute.xlu0 %474
      %476 = vrot.lane.b32.xlu0 %v401, 4
      %v477 = vpop.permute.xlu0 %476
      %478 = vrot.lane.b32.xlu0 %v404, 4
      %v479 = vpop.permute.xlu0 %478
      %480 = vrot.lane.b32.xlu0 %v406, 4
      %v481 = vpop.permute.xlu0 %480
      %482 = vrot.lane.b32.xlu0 %v409, 4
      %v483 = vpop.permute.xlu0 %482
      %484 = vrot.lane.b32.xlu0 %v411, 4
      %v485 = vpop.permute.xlu0 %484
      %486 = vrot.lane.b32.xlu0 %v414, 4
      %v487 = vpop.permute.xlu0 %486
      %488 = vrot.lane.b32.xlu0 %v416, 4
      %v489 = vpop.permute.xlu0 %488
      %490 = vrot.lane.b32.xlu0 %v419, 4
      %v491 = vpop.permute.xlu0 %490
      %492 = vrot.lane.b32.xlu0 %v421, 4
      %v493 = vpop.permute.xlu0 %492
      %494 = vrot.lane.b32.xlu0 %v424, 4
      %v495 = vpop.permute.xlu0 %494
      %496 = vrot.lane.b32.xlu0 %v426, 4
      %v497 = vpop.permute.xlu0 %496
      %498 = vrot.lane.b32.xlu0 %v429, 4
      %v499 = vpop.permute.xlu0 %498
      %500 = vrot.lane.b32.xlu0 %v431, 4
      %v501 = vpop.permute.xlu0 %500
      %502 = vrot.lane.b32.xlu0 %v434, 4
      %v503 = vpop.permute.xlu0 %502
      %504 = vrot.lane.b32.xlu0 %v436, 4
      %v505 = vpop.permute.xlu0 %504
      %506 = vrot.lane.b32.xlu0 %v439, 4
      %v507 = vpop.permute.xlu0 %506
      %508 = vrot.lane.b32.xlu0 %v441, 4
      %v509 = vpop.permute.xlu0 %508
      %510 = vrot.lane.b32.xlu0 %v444, 4
      %v511 = vpop.permute.xlu0 %510
      %512 = vrot.lane.b32.xlu0 %v446, 4
      %v513 = vpop.permute.xlu0 %512
      %514 = vrot.lane.b32.xlu0 %v449, 4
      %v515 = vpop.permute.xlu0 %514
      %516 = vrot.lane.b32.xlu0 %v451, 4
      %v517 = vpop.permute.xlu0 %516
      %518 = vrot.lane.b32.xlu0 %v454, 4
      %v519 = vpop.permute.xlu0 %518
      %520 = vrot.lane.b32.xlu0 %v456, 4
      %v521 = vpop.permute.xlu0 %520
      %522 = vrot.lane.b32.xlu0 %v459, 4
      %v523 = vpop.permute.xlu0 %522
      %524 = vrot.lane.b32.xlu0 %v461, 4
      %v525 = vpop.permute.xlu0 %524
      %vm558 = vcmask 1045504
      %v559 = vrot.slane %v279, 2
      %v560 = vrot.slane %v280, 2
      %v561 = vsel %vm558, %v559, %v560
      %v562 = vrot.slane %v281, 2
      %v563 = vsel %vm558, %v560, %v562
      %v564 = vrot.slane %v282, 2
      %v565 = vrot.slane %v283, 2
      %v566 = vsel %vm558, %v564, %v565
      %v567 = vrot.slane %v284, 2
      %v568 = vsel %vm558, %v565, %v567
      %v569 = vrot.slane %v285, 2
      %v570 = vrot.slane %v286, 2
      %v571 = vsel %vm558, %v569, %v570
      %v572 = vrot.slane %v287, 2
      %v573 = vsel %vm558, %v570, %v572
      %v574 = vrot.slane %v288, 2
      %v575 = vrot.slane %v289, 2
      %v576 = vsel %vm558, %v574, %v575
      %v577 = vrot.slane %v290, 2
      %v578 = vsel %vm558, %v575, %v577
      %v579 = vrot.slane %v291, 2
      %v580 = vrot.slane %v292, 2
      %v581 = vsel %vm558, %v579, %v580
      %v582 = vrot.slane %v293, 2
      %v583 = vsel %vm558, %v580, %v582
      %v584 = vrot.slane %v294, 2
      %v585 = vrot.slane %v295, 2
      %v586 = vsel %vm558, %v584, %v585
      %v587 = vrot.slane %v296, 2
      %v588 = vsel %vm558, %v585, %v587
      %v589 = vrot.slane %v297, 2
      %v590 = vrot.slane %v298, 2
      %v591 = vsel %vm558, %v589, %v590
      %v592 = vrot.slane %v299, 2
      %v593 = vsel %vm558, %v590, %v592
      %v594 = vrot.slane %v300, 2
      %v595 = vrot.slane %v301, 2
      %v596 = vsel %vm558, %v594, %v595
      %v597 = vrot.slane %v302, 2
      %v598 = vsel %vm558, %v595, %v597
      %v599 = vrot.slane %v303, 2
      %v600 = vrot.slane %v304, 2
      %v601 = vsel %vm558, %v599, %v600
      %v602 = vrot.slane %v305, 2
      %v603 = vsel %vm558, %v600, %v602
      %v604 = vrot.slane %v306, 2
      %v605 = vrot.slane %v307, 2
      %v606 = vsel %vm558, %v604, %v605
      %v607 = vrot.slane %v308, 2
      %v608 = vsel %vm558, %v605, %v607
      %v609 = vrot.slane %v309, 2
      %v610 = vrot.slane %v310, 2
      %v611 = vsel %vm558, %v609, %v610
      %v612 = vrot.slane %v311, 2
      %v613 = vsel %vm558, %v610, %v612
      %v614 = vrot.slane %v312, 2
      %v615 = vrot.slane %v313, 2
      %v616 = vsel %vm558, %v614, %v615
      %v617 = vrot.slane %v314, 2
      %v618 = vsel %vm558, %v615, %v617
      %v619 = vrot.slane %v315, 2
      %v620 = vrot.slane %v316, 2
      %v621 = vsel %vm558, %v619, %v620
      %v622 = vrot.slane %v317, 2
      %v623 = vsel %vm558, %v620, %v622
      %v624 = vrot.slane %v318, 2
      %v625 = vrot.slane %v319, 2
      %v626 = vsel %vm558, %v624, %v625
      %v627 = vrot.slane %v320, 2
      %v628 = vsel %vm558, %v625, %v627
      %v629 = vrot.slane %v321, 2
      %v630 = vrot.slane %v322, 2
      %v631 = vsel %vm558, %v629, %v630
      %v632 = vrot.slane %v323, 2
      %v633 = vsel %vm558, %v630, %v632
      %v634 = vrot.slane %v324, 2
      %v635 = vrot.slane %v325, 2
      %v636 = vsel %vm558, %v634, %v635
      %v637 = vrot.slane %v326, 2
      %v638 = vsel %vm558, %v635, %v637
      %639 = vrot.lane.b32.xlu0 %v561, 8
      %v640 = vpop.permute.xlu0 %639
      %641 = vrot.lane.b32.xlu0 %v563, 8
      %v642 = vpop.permute.xlu0 %641
      %643 = vrot.lane.b32.xlu0 %v566, 8
      %v644 = vpop.permute.xlu0 %643
      %645 = vrot.lane.b32.xlu0 %v568, 8
      %v646 = vpop.permute.xlu0 %645
      %647 = vrot.lane.b32.xlu0 %v571, 8
      %v648 = vpop.permute.xlu0 %647
      %649 = vrot.lane.b32.xlu0 %v573, 8
      %v650 = vpop.permute.xlu0 %649
      %651 = vrot.lane.b32.xlu0 %v576, 8
      %v652 = vpop.permute.xlu0 %651
      %653 = vrot.lane.b32.xlu0 %v578, 8
      %v654 = vpop.permute.xlu0 %653
      %655 = vrot.lane.b32.xlu0 %v581, 8
      %v656 = vpop.permute.xlu0 %655
      %657 = vrot.lane.b32.xlu0 %v583, 8
      %v658 = vpop.permute.xlu0 %657
      %659 = vrot.lane.b32.xlu0 %v586, 8
      %v660 = vpop.permute.xlu0 %659
      %661 = vrot.lane.b32.xlu0 %v588, 8
      %v662 = vpop.permute.xlu0 %661
      %663 = vrot.lane.b32.xlu0 %v591, 8
      %v664 = vpop.permute.xlu0 %663
      %665 = vrot.lane.b32.xlu0 %v593, 8
      %v666 = vpop.permute.xlu0 %665
      %667 = vrot.lane.b32.xlu0 %v596, 8
      %v668 = vpop.permute.xlu0 %667
      %669 = vrot.lane.b32.xlu0 %v598, 8
      %v670 = vpop.permute.xlu0 %669
      %671 = vrot.lane.b32.xlu0 %v601, 8
      %v672 = vpop.permute.xlu0 %671
      %673 = vrot.lane.b32.xlu0 %v603, 8
      %v674 = vpop.permute.xlu0 %673
      %675 = vrot.lane.b32.xlu0 %v606, 8
      %v676 = vpop.permute.xlu0 %675
      %677 = vrot.lane.b32.xlu0 %v608, 8
      %v678 = vpop.permute.xlu0 %677
      %679 = vrot.lane.b32.xlu0 %v611, 8
      %v680 = vpop.permute.xlu0 %679
      %681 = vrot.lane.b32.xlu0 %v613, 8
      %v682 = vpop.permute.xlu0 %681
      %683 = vrot.lane.b32.xlu0 %v616, 8
      %v684 = vpop.permute.xlu0 %683
      %685 = vrot.lane.b32.xlu0 %v618, 8
      %v686 = vpop.permute.xlu0 %685
      %687 = vrot.lane.b32.xlu0 %v621, 8
      %v688 = vpop.permute.xlu0 %687
      %689 = vrot.lane.b32.xlu0 %v623, 8
      %v690 = vpop.permute.xlu0 %689
      %691 = vrot.lane.b32.xlu0 %v626, 8
      %v692 = vpop.permute.xlu0 %691
      %693 = vrot.lane.b32.xlu0 %v628, 8
      %v694 = vpop.permute.xlu0 %693
      %695 = vrot.lane.b32.xlu0 %v631, 8
      %v696 = vpop.permute.xlu0 %695
      %697 = vrot.lane.b32.xlu0 %v633, 8
      %v698 = vpop.permute.xlu0 %697
      %699 = vrot.lane.b32.xlu0 %v636, 8
      %v700 = vpop.permute.xlu0 %699
      %701 = vrot.lane.b32.xlu0 %v638, 8
      %v702 = vpop.permute.xlu0 %701
      %vm735 = vcmask 31744
      %v736 = vsel %vm735, %v279, %v463
      %v737 = vsel %vm735, %v280, %v465
      %v738 = vsel %vm735, %v282, %v467
      %v739 = vsel %vm735, %v283, %v469
      %v740 = vsel %vm735, %v285, %v471
      %v741 = vsel %vm735, %v286, %v473
      %v742 = vsel %vm735, %v288, %v475
      %v743 = vsel %vm735, %v289, %v477
      %v744 = vsel %vm735, %v291, %v479
      %v745 = vsel %vm735, %v292, %v481
      %v746 = vsel %vm735, %v294, %v483
      %v747 = vsel %vm735, %v295, %v485
      %v748 = vsel %vm735, %v297, %v487
      %v749 = vsel %vm735, %v298, %v489
      %v750 = vsel %vm735, %v300, %v491
      %v751 = vsel %vm735, %v301, %v493
      %v752 = vsel %vm735, %v303, %v495
      %v753 = vsel %vm735, %v304, %v497
      %v754 = vsel %vm735, %v306, %v499
      %v755 = vsel %vm735, %v307, %v501
      %v756 = vsel %vm735, %v309, %v503
      %v757 = vsel %vm735, %v310, %v505
      %v758 = vsel %vm735, %v312, %v507
      %v759 = vsel %vm735, %v313, %v509
      %v760 = vsel %vm735, %v315, %v511
      %v761 = vsel %vm735, %v316, %v513
      %v762 = vsel %vm735, %v318, %v515
      %v763 = vsel %vm735, %v319, %v517
      %v764 = vsel %vm735, %v321, %v519
      %v765 = vsel %vm735, %v322, %v521
      %v766 = vsel %vm735, %v324, %v523
      %v767 = vsel %vm735, %v325, %v525
      %vm768 = vcmask 64512
      %v769 = vsel %vm768, %v736, %v640
      %v770 = vsel %vm768, %v737, %v642
      %v771 = vsel %vm768, %v738, %v644
      %v772 = vsel %vm768, %v739, %v646
      %v773 = vsel %vm768, %v740, %v648
      %v774 = vsel %vm768, %v741, %v650
      %v775 = vsel %vm768, %v742, %v652
      %v776 = vsel %vm768, %v743, %v654
      %v777 = vsel %vm768, %v744, %v656
      %v778 = vsel %vm768, %v745, %v658
      %v779 = vsel %vm768, %v746, %v660
      %v780 = vsel %vm768, %v747, %v662
      %v781 = vsel %vm768, %v748, %v664
      %v782 = vsel %vm768, %v749, %v666
      %v783 = vsel %vm768, %v750, %v668
      %v784 = vsel %vm768, %v751, %v670
      %v785 = vsel %vm768, %v752, %v672
      %v786 = vsel %vm768, %v753, %v674
      %v787 = vsel %vm768, %v754, %v676
      %v788 = vsel %vm768, %v755, %v678
      %v789 = vsel %vm768, %v756, %v680
      %v790 = vsel %vm768, %v757, %v682
      %v791 = vsel %vm768, %v758, %v684
      %v792 = vsel %vm768, %v759, %v686
      %v793 = vsel %vm768, %v760, %v688
      %v794 = vsel %vm768, %v761, %v690
      %v795 = vsel %vm768, %v762, %v692
      %v796 = vsel %vm768, %v763, %v694
      %v797 = vsel %vm768, %v764, %v696
      %v798 = vsel %vm768, %v765, %v698
      %v799 = vsel %vm768, %v766, %v700
      %v800 = vsel %vm768, %v767, %v702
      %v801 = vld [vmem:[%s1] sm:$0xff]
      %v802 = vld [vmem:[%s1 + $0x8] sm:$0xf]
      %v806 = vrot.slane %v327, 1
      %v807 = vrot.slane %v328, 1
      %v808 = vsel %vm381, %v806, %v807
      %v809 = vrot.slane %v329, 1
      %v810 = vsel %vm381, %v807, %v809
      %811 = vrot.lane.b32.xlu0 %v808, 4
      %v812 = vpop.permute.xlu0 %811
      %813 = vrot.lane.b32.xlu0 %v810, 4
      %v814 = vpop.permute.xlu0 %813
      %v817 = vrot.slane %v327, 2
      %v818 = vrot.slane %v328, 2
      %v819 = vsel %vm558, %v817, %v818
      %v820 = vrot.slane %v329, 2
      %v821 = vsel %vm558, %v818, %v820
      %822 = vrot.lane.b32.xlu0 %v819, 8
      %v823 = vpop.permute.xlu0 %822
      %824 = vrot.lane.b32.xlu0 %v821, 8
      %v825 = vpop.permute.xlu0 %824
      %v828 = vsel %vm735, %v327, %v812
      %v829 = vsel %vm735, %v328, %v814
      %v830 = vsel %vm768, %v828, %v823
      %v831 = vsel %vm768, %v829, %v825
      %s832 = scalar_lea.vmem %s1, 16
      %v833 = vld [vmem:[%s832] sm:$0xff]
      %v834 = vld [vmem:[%s832 + $0x8] sm:$0xf]
      %vm835 = vcmask 97280
      %v837 = vsel %vm835, %v771, 0
      %v840 = vsel %vm835, %v772, 0
      %v843 = vsel %vm835, %v773, 0
      %v846 = vsel %vm835, %v774, 0
      %v849 = vsel %vm835, %v775, 0
      %v852 = vsel %vm835, %v776, 0
      %v855 = vsel %vm835, %v777, 0
      %v858 = vsel %vm835, %v778, 0
      %v861 = vsel %vm835, %v779, 0
      %v864 = vsel %vm835, %v780, 0
      %v867 = vsel %vm835, %v781, 0
      %v870 = vsel %vm835, %v782, 0
      %v873 = vsel %vm835, %v783, 0
      %v876 = vsel %vm835, %v784, 0
      %v879 = vsel %vm835, %v785, 0
      %v882 = vsel %vm835, %v786, 0
      %v885 = vsel %vm835, %v787, 0
      %v888 = vsel %vm835, %v788, 0
      %v891 = vsel %vm835, %v789, 0
      %v894 = vsel %vm835, %v790, 0
      %v897 = vsel %vm835, %v791, 0
      %v900 = vsel %vm835, %v792, 0
      %v903 = vsel %vm835, %v793, 0
      %v906 = vsel %vm835, %v794, 0
      %v909 = vsel %vm835, %v795, 0
      %v912 = vsel %vm835, %v796, 0
      %v915 = vsel %vm835, %v797, 0
      %v918 = vsel %vm835, %v798, 0
      %v921 = vsel %vm835, %v799, 0
      %v924 = vsel %vm835, %v800, 0
      %v927 = vsel %vm835, %v830, 0
      %v930 = vsel %vm835, %v831, 0
      %vm932 = vcmask 1043456
      %v934 = vsel %vm932, %v834, 0
      %936 = vmatprep.subr.mxu0 0.0
      %937 = vmatpush1.msra.mxu0 %v833
      %938 = vmatprep.subr.mxu0 0.0
      %939 = vmatpush1.msra.mxu0 %v934
      %940 = vmatprep.subr.mxu0 0.0
      %941 = vmatpush1.msra.mxu0 0.0
      %942 = vmatprep.subr.mxu0 0.0
      %943 = vmatpush1.msra.mxu0 0.0
      %944 = vmatprep.subr.mxu0 0.0
      %945 = vmatpush1.msra.mxu0 0.0
      %946 = vmatprep.subr.mxu0 0.0
      %947 = vmatpush1.msra.mxu0 0.0
      %948 = vmatprep.subr.mxu0 0.0
      %949 = vmatpush1.msra.mxu0 0.0
      %950 = vmatprep.subr.mxu0 0.0
      %951 = vmatpush1.msra.mxu0 0.0
      %952 = vmatprep.subr.mxu0 0.0
      %953 = vmatpush1.msra.mxu0 0.0
      %954 = vmatprep.subr.mxu0 0.0
      %955 = vmatpush1.msra.mxu0 0.0
      %956 = vmatprep.subr.mxu0 0.0
      %957 = vmatpush1.msra.mxu0 0.0
      %958 = vmatprep.subr.mxu0 0.0
      %959 = vmatpush1.msra.mxu0 0.0
      %960 = vmatprep.subr.mxu0 0.0
      %961 = vmatpush1.msra.mxu0 0.0
      %962 = vmatprep.subr.mxu0 0.0
      %963 = vmatpush1.msra.mxu0 0.0
      %964 = vmatprep.subr.mxu0 0.0
      %965 = vmatpush1.msra.mxu0 0.0
      %966 = vmatprep.subr.mxu0 0.0
      %967 = vmatpush1.msra.mxu0 0.0
      %968 = vmatprep.subr.mxu0 0.0
      %969 = vmatpush1.msra.mxu0 0.0
      %970 = vmatprep.subr.mxu0 0.0
      %971 = vmatpush1.msra.mxu0 0.0
      %972 = vmatprep.subr.mxu0 0.0
      %973 = vmatpush1.msra.mxu0 0.0
      %974 = vmatprep.subr.mxu0 0.0
      %975 = vmatpush1.msra.mxu0 0.0
      %976 = vmatprep.subr.mxu0 0.0
      %977 = vmatpush1.msra.mxu0 0.0
      %978 = vmatprep.subr.mxu0 0.0
      %979 = vmatpush1.msra.mxu0 0.0
      %980 = vmatprep.subr.mxu0 0.0
      %981 = vmatpush1.msra.mxu0 0.0
      %982 = vmatprep.subr.mxu0 0.0
      %983 = vmatpush1.msra.mxu0 0.0
      %984 = vmatprep.subr.mxu0 0.0
      %985 = vmatpush1.msra.mxu0 0.0
      %986 = vmatprep.subr.mxu0 0.0
      %987 = vmatpush1.msra.mxu0 0.0
      %988 = vmatprep.subr.mxu0 0.0
      %989 = vmatpush1.msra.mxu0 0.0
      %990 = vmatprep.subr.mxu0 0.0
      %991 = vmatpush1.msra.mxu0 0.0
      %992 = vmatprep.subr.mxu0 0.0
      %993 = vmatpush1.msra.mxu0 0.0
      %994 = vmatprep.subr.mxu0 0.0
      %995 = vmatpush1.msra.mxu0 0.0
      %996 = vmatprep.subr.mxu0 0.0
      %997 = vmatpush1.msra.mxu0 0.0
      %998 = vmatprep.subr.mxu0 0.0
      %999 = vmatpush1.msra.mxu0 0.0
      %1000 = vmatprep.mubr.f32.mxu0 0.0
      %1001 = vmatmul.mubr.f32.gmra.mrb[0].mxu0 %v837
      %v1002 = vpop.f32.mrb[0].mxu0
      %v1003 = vadd.f32 0.0, %v1002
      %v1004 = vpop.f32.mrb[0].mxu0
      %1005 = vmatprep.mubr.f32.mxu0 0.0
      %1006 = vmatmul.mubr.f32.gmra.mrb[0].mxu0 %v840
      %v1007 = vpop.f32.mrb[0].mxu0
      %v1008 = vadd.f32 0.0, %v1007
      %v1009 = vpop.f32.mrb[0].mxu0
      %1010 = vmatprep.mubr.f32.mxu0 0.0
      %1011 = vmatmul.mubr.f32.gmra.mrb[0].mxu0 %v843
      %v1012 = vpop.f32.mrb[0].mxu0
      %v1013 = vadd.f32 0.0, %v1012
      %v1014 = vpop.f32.mrb[0].mxu0
      %1015 = vmatprep.mubr.f32.mxu0 0.0
      %1016 = vmatmul.mubr.f32.gmra.mrb[0].mxu0 %v846
      %v1017 = vpop.f32.mrb[0].mxu0
      %v1018 = vadd.f32 0.0, %v1017
      %v1019 = vpop.f32.mrb[0].mxu0
      %1020 = vmatprep.mubr.f32.mxu0 0.0
      %1021 = vmatmul.mubr.f32.gmra.mrb[0].mxu0 %v849
      %v1022 = vpop.f32.mrb[0].mxu0
      %v1023 = vadd.f32 0.0, %v1022
      %v1024 = vpop.f32.mrb[0].mxu0
      %1025 = vmatprep.mubr.f32.mxu0 0.0
      %1026 = vmatmul.mubr.f32.gmra.mrb[0].mxu0 %v852
      %v1027 = vpop.f32.mrb[0].mxu0
      %v1028 = vadd.f32 0.0, %v1027
      %v1029 = vpop.f32.mrb[0].mxu0
      %1030 = vmatprep.mubr.f32.mxu0 0.0
      %1031 = vmatmul.mubr.f32.gmra.mrb[0].mxu0 %v855
      %v1032 = vpop.f32.mrb[0].mxu0
      %v1033 = vadd.f32 0.0, %v1032
      %v1034 = vpop.f32.mrb[0].mxu0
      %1035 = vmatprep.mubr.f32.mxu0 0.0
      %1036 = vmatmul.mubr.f32.gmra.mrb[0].mxu0 %v858
      %v1037 = vpop.f32.mrb[0].mxu0
      %v1038 = vadd.f32 0.0, %v1037
      %v1039 = vpop.f32.mrb[0].mxu0
      %1040 = vmatprep.mubr.f32.mxu0 0.0
      %1041 = vmatmul.mubr.f32.gmra.mrb[0].mxu0 %v861
      %v1042 = vpop.f32.mrb[0].mxu0
      %v1043 = vadd.f32 0.0, %v1042
      %v1044 = vpop.f32.mrb[0].mxu0
      %1045 = vmatprep.mubr.f32.mxu0 0.0
      %1046 = vmatmul.mubr.f32.gmra.mrb[0].mxu0 %v864
      %v1047 = vpop.f32.mrb[0].mxu0
      %v1048 = vadd.f32 0.0, %v1047
      %v1049 = vpop.f32.mrb[0].mxu0
      %1050 = vmatprep.mubr.f32.mxu0 0.0
      %1051 = vmatmul.mubr.f32.gmra.mrb[0].mxu0 %v867
      %v1052 = vpop.f32.mrb[0].mxu0
      %v1053 = vadd.f32 0.0, %v1052
      %v1054 = vpop.f32.mrb[0].mxu0
      %1055 = vmatprep.mubr.f32.mxu0 0.0
      %1056 = vmatmul.mubr.f32.gmra.mrb[0].mxu0 %v870
      %v1057 = vpop.f32.mrb[0].mxu0
      %v1058 = vadd.f32 0.0, %v1057
      %v1059 = vpop.f32.mrb[0].mxu0
      %1060 = vmatprep.mubr.f32.mxu0 0.0
      %1061 = vmatmul.mubr.f32.gmra.mrb[0].mxu0 %v873
      %v1062 = vpop.f32.mrb[0].mxu0
      %v1063 = vadd.f32 0.0, %v1062
      %v1064 = vpop.f32.mrb[0].mxu0
      %1065 = vmatprep.mubr.f32.mxu0 0.0
      %1066 = vmatmul.mubr.f32.gmra.mrb[0].mxu0 %v876
      %v1067 = vpop.f32.mrb[0].mxu0
      %v1068 = vadd.f32 0.0, %v1067
      %v1069 = vpop.f32.mrb[0].mxu0
      %1070 = vmatprep.mubr.f32.mxu0 0.0
      %1071 = vmatmul.mubr.f32.gmra.mrb[0].mxu0 %v879
      %v1072 = vpop.f32.mrb[0].mxu0
      %v1073 = vadd.f32 0.0, %v1072
      %v1074 = vpop.f32.mrb[0].mxu0
      %1075 = vmatprep.mubr.f32.mxu0 0.0
      %1076 = vmatmul.mubr.f32.gmra.mrb[0].mxu0 %v882
      %v1077 = vpop.f32.mrb[0].mxu0
      %v1078 = vadd.f32 0.0, %v1077
      %v1079 = vpop.f32.mrb[0].mxu0
      %1080 = vmatprep.mubr.f32.mxu0 0.0
      %1081 = vmatmul.mubr.f32.gmra.mrb[0].mxu0 %v885
      %v1082 = vpop.f32.mrb[0].mxu0
      %v1083 = vadd.f32 0.0, %v1082
      %v1084 = vpop.f32.mrb[0].mxu0
      %1085 = vmatprep.mubr.f32.mxu0 0.0
      %1086 = vmatmul.mubr.f32.gmra.mrb[0].mxu0 %v888
      %v1087 = vpop.f32.mrb[0].mxu0
      %v1088 = vadd.f32 0.0, %v1087
      %v1089 = vpop.f32.mrb[0].mxu0
      %1090 = vmatprep.mubr.f32.mxu0 0.0
      %1091 = vmatmul.mubr.f32.gmra.mrb[0].mxu0 %v891
      %v1092 = vpop.f32.mrb[0].mxu0
      %v1093 = vadd.f32 0.0, %v1092
      %v1094 = vpop.f32.mrb[0].mxu0
      %1095 = vmatprep.mubr.f32.mxu0 0.0
      %1096 = vmatmul.mubr.f32.gmra.mrb[0].mxu0 %v894
      %v1097 = vpop.f32.mrb[0].mxu0
      %v1098 = vadd.f32 0.0, %v1097
      %v1099 = vpop.f32.mrb[0].mxu0
      %1100 = vmatprep.mubr.f32.mxu0 0.0
      %1101 = vmatmul.mubr.f32.gmra.mrb[0].mxu0 %v897
      %v1102 = vpop.f32.mrb[0].mxu0
      %v1103 = vadd.f32 0.0, %v1102
      %v1104 = vpop.f32.mrb[0].mxu0
      %1105 = vmatprep.mubr.f32.mxu0 0.0
      %1106 = vmatmul.mubr.f32.gmra.mrb[0].mxu0 %v900
      %v1107 = vpop.f32.mrb[0].mxu0
      %v1108 = vadd.f32 0.0, %v1107
      %v1109 = vpop.f32.mrb[0].mxu0
      %1110 = vmatprep.mubr.f32.mxu0 0.0
      %1111 = vmatmul.mubr.f32.gmra.mrb[0].mxu0 %v903
      %v1112 = vpop.f32.mrb[0].mxu0
      %v1113 = vadd.f32 0.0, %v1112
      %v1114 = vpop.f32.mrb[0].mxu0
      %1115 = vmatprep.mubr.f32.mxu0 0.0
      %1116 = vmatmul.mubr.f32.gmra.mrb[0].mxu0 %v906
      %v1117 = vpop.f32.mrb[0].mxu0
      %v1118 = vadd.f32 0.0, %v1117
      %v1119 = vpop.f32.mrb[0].mxu0
      %1120 = vmatprep.mubr.f32.mxu0 0.0
      %1121 = vmatmul.mubr.f32.gmra.mrb[0].mxu0 %v909
      %v1122 = vpop.f32.mrb[0].mxu0
      %v1123 = vadd.f32 0.0, %v1122
      %v1124 = vpop.f32.mrb[0].mxu0
      %1125 = vmatprep.mubr.f32.mxu0 0.0
      %1126 = vmatmul.mubr.f32.gmra.mrb[0].mxu0 %v912
      %v1127 = vpop.f32.mrb[0].mxu0
      %v1128 = vadd.f32 0.0, %v1127
      %v1129 = vpop.f32.mrb[0].mxu0
      %1130 = vmatprep.mubr.f32.mxu0 0.0
      %1131 = vmatmul.mubr.f32.gmra.mrb[0].mxu0 %v915
      %v1132 = vpop.f32.mrb[0].mxu0
      %v1133 = vadd.f32 0.0, %v1132
      %v1134 = vpop.f32.mrb[0].mxu0
      %1135 = vmatprep.mubr.f32.mxu0 0.0
      %1136 = vmatmul.mubr.f32.gmra.mrb[0].mxu0 %v918
      %v1137 = vpop.f32.mrb[0].mxu0
      %v1138 = vadd.f32 0.0, %v1137
      %v1139 = vpop.f32.mrb[0].mxu0
      %1140 = vmatprep.mubr.f32.mxu0 0.0
      %1141 = vmatmul.mubr.f32.gmra.mrb[0].mxu0 %v921
      %v1142 = vpop.f32.mrb[0].mxu0
      %v1143 = vadd.f32 0.0, %v1142
      %v1144 = vpop.f32.mrb[0].mxu0
      %1145 = vmatprep.mubr.f32.mxu0 0.0
      %1146 = vmatmul.mubr.f32.gmra.mrb[0].mxu0 %v924
      %v1147 = vpop.f32.mrb[0].mxu0
      %v1148 = vadd.f32 0.0, %v1147
      %v1149 = vpop.f32.mrb[0].mxu0
      %1150 = vmatprep.mubr.f32.mxu0 0.0
      %1151 = vmatmul.mubr.f32.gmra.mrb[0].mxu0 %v927
      %v1152 = vpop.f32.mrb[0].mxu0
      %v1153 = vadd.f32 0.0, %v1152
      %v1154 = vpop.f32.mrb[0].mxu0
      %1155 = vmatprep.mubr.f32.mxu0 0.0
      %1156 = vmatmul.mubr.f32.gmra.mrb[0].mxu0 %v930
      %v1157 = vpop.f32.mrb[0].mxu0
      %v1158 = vadd.f32 0.0, %v1157
      %v1159 = vpop.f32.mrb[0].mxu0
      %1160 = vdwg.mxu0
      %v1162 = vsel %vm835, %v769, 0
      %v1165 = vsel %vm835, %v770, 0
      %v1168 = vsel %vm932, %v802, 0
      %1170 = vmatprep.subr.mxu0 0.0
      %1171 = vmatpush1.msra.mxu0 %v801
      %1172 = vmatprep.subr.mxu0 0.0
      %1173 = vmatpush1.msra.mxu0 %v1168
      %1174 = vmatprep.subr.mxu0 0.0
      %1175 = vmatpush1.msra.mxu0 0.0
      %1176 = vmatprep.subr.mxu0 0.0
      %1177 = vmatpush1.msra.mxu0 0.0
      %1178 = vmatprep.subr.mxu0 0.0
      %1179 = vmatpush1.msra.mxu0 0.0
      %1180 = vmatprep.subr.mxu0 0.0
      %1181 = vmatpush1.msra.mxu0 0.0
      %1182 = vmatprep.subr.mxu0 0.0
      %1183 = vmatpush1.msra.mxu0 0.0
      %1184 = vmatprep.subr.mxu0 0.0
      %1185 = vmatpush1.msra.mxu0 0.0
      %1186 = vmatprep.subr.mxu0 0.0
      %1187 = vmatpush1.msra.mxu0 0.0
      %1188 = vmatprep.subr.mxu0 0.0
      %1189 = vmatpush1.msra.mxu0 0.0
      %1190 = vmatprep.subr.mxu0 0.0
      %1191 = vmatpush1.msra.mxu0 0.0
      %1192 = vmatprep.subr.mxu0 0.0
      %1193 = vmatpush1.msra.mxu0 0.0
      %1194 = vmatprep.subr.mxu0 0.0
      %1195 = vmatpush1.msra.mxu0 0.0
      %1196 = vmatprep.subr.mxu0 0.0
      %1197 = vmatpush1.msra.mxu0 0.0
      %1198 = vmatprep.subr.mxu0 0.0
      %1199 = vmatpush1.msra.mxu0 0.0
      %1200 = vmatprep.subr.mxu0 0.0
      %1201 = vmatpush1.msra.mxu0 0.0
      %1202 = vmatprep.subr.mxu0 0.0
      %1203 = vmatpush1.msra.mxu0 0.0
      %1204 = vmatprep.subr.mxu0 0.0
      %1205 = vmatpush1.msra.mxu0 0.0
      %1206 = vmatprep.subr.mxu0 0.0
      %1207 = vmatpush1.msra.mxu0 0.0
      %1208 = vmatprep.subr.mxu0 0.0
      %1209 = vmatpush1.msra.mxu0 0.0
      %1210 = vmatprep.subr.mxu0 0.0
      %1211 = vmatpush1.msra.mxu0 0.0
      %1212 = vmatprep.subr.mxu0 0.0
      %1213 = vmatpush1.msra.mxu0 0.0
      %1214 = vmatprep.subr.mxu0 0.0
      %1215 = vmatpush1.msra.mxu0 0.0
      %1216 = vmatprep.subr.mxu0 0.0
      %1217 = vmatpush1.msra.mxu0 0.0
      %1218 = vmatprep.subr.mxu0 0.0
      %1219 = vmatpush1.msra.mxu0 0.0
      %1220 = vmatprep.subr.mxu0 0.0
      %1221 = vmatpush1.msra.mxu0 0.0
      %1222 = vmatprep.subr.mxu0 0.0
      %1223 = vmatpush1.msra.mxu0 0.0
      %1224 = vmatprep.subr.mxu0 0.0
      %1225 = vmatpush1.msra.mxu0 0.0
      %1226 = vmatprep.subr.mxu0 0.0
      %1227 = vmatpush1.msra.mxu0 0.0
      %1228 = vmatprep.subr.mxu0 0.0
      %1229 = vmatpush1.msra.mxu0 0.0
      %1230 = vmatprep.subr.mxu0 0.0
      %1231 = vmatpush1.msra.mxu0 0.0
      %1232 = vmatprep.subr.mxu0 0.0
      %1233 = vmatpush1.msra.mxu0 0.0
      %1234 = vmatprep.mubr.f32.mxu0 0.0
      %1235 = vmatmul.mubr.f32.gmra.mrb[0].mxu0 %v1162
      %v1236 = vpop.f32.mrb[0].mxu0
      %v1237 = vadd.f32 %v1003, %v1236
      %v1238 = vpop.f32.mrb[0].mxu0
      %1239 = vmatprep.mubr.f32.mxu0 0.0
      %1240 = vmatmul.mubr.f32.gmra.mrb[0].mxu0 %v1165
      %v1241 = vpop.f32.mrb[0].mxu0
      %v1242 = vadd.f32 %v1008, %v1241
      %v1243 = vpop.f32.mrb[0].mxu0
      %1244 = vmatprep.mubr.f32.mxu0 0.0
      %1245 = vmatmul.mubr.f32.gmra.mrb[0].mxu0 %v837
      %v1246 = vpop.f32.mrb[0].mxu0
      %v1247 = vadd.f32 %v1013, %v1246
      %v1248 = vpop.f32.mrb[0].mxu0
      %1249 = vmatprep.mubr.f32.mxu0 0.0
      %1250 = vmatmul.mubr.f32.gmra.mrb[0].mxu0 %v840
      %v1251 = vpop.f32.mrb[0].mxu0
      %v1252 = vadd.f32 %v1018, %v1251
      %v1253 = vpop.f32.mrb[0].mxu0
      %1254 = vmatprep.mubr.f32.mxu0 0.0
      %1255 = vmatmul.mubr.f32.gmra.mrb[0].mxu0 %v843
      %v1256 = vpop.f32.mrb[0].mxu0
      %v1257 = vadd.f32 %v1023, %v1256
      %v1258 = vpop.f32.mrb[0].mxu0
      %1259 = vmatprep.mubr.f32.mxu0 0.0
      %1260 = vmatmul.mubr.f32.gmra.mrb[0].mxu0 %v846
      %v1261 = vpop.f32.mrb[0].mxu0
      %v1262 = vadd.f32 %v1028, %v1261
      %v1263 = vpop.f32.mrb[0].mxu0
      %1264 = vmatprep.mubr.f32.mxu0 0.0
      %1265 = vmatmul.mubr.f32.gmra.mrb[0].mxu0 %v849
      %v1266 = vpop.f32.mrb[0].mxu0
      %v1267 = vadd.f32 %v1033, %v1266
      %v1268 = vpop.f32.mrb[0].mxu0
      %1269 = vmatprep.mubr.f32.mxu0 0.0
      %1270 = vmatmul.mubr.f32.gmra.mrb[0].mxu0 %v852
      %v1271 = vpop.f32.mrb[0].mxu0
      %v1272 = vadd.f32 %v1038, %v1271
      %v1273 = vpop.f32.mrb[0].mxu0
      %1274 = vmatprep.mubr.f32.mxu0 0.0
      %1275 = vmatmul.mubr.f32.gmra.mrb[0].mxu0 %v855
      %v1276 = vpop.f32.mrb[0].mxu0
      %v1277 = vadd.f32 %v1043, %v1276
      %v1278 = vpop.f32.mrb[0].mxu0
      %1279 = vmatprep.mubr.f32.mxu0 0.0
      %1280 = vmatmul.mubr.f32.gmra.mrb[0].mxu0 %v858
      %v1281 = vpop.f32.mrb[0].mxu0
      %v1282 = vadd.f32 %v1048, %v1281
      %v1283 = vpop.f32.mrb[0].mxu0
      %1284 = vmatprep.mubr.f32.mxu0 0.0
      %1285 = vmatmul.mubr.f32.gmra.mrb[0].mxu0 %v861
      %v1286 = vpop.f32.mrb[0].mxu0
      %v1287 = vadd.f32 %v1053, %v1286
      %v1288 = vpop.f32.mrb[0].mxu0
      %1289 = vmatprep.mubr.f32.mxu0 0.0
      %1290 = vmatmul.mubr.f32.gmra.mrb[0].mxu0 %v864
      %v1291 = vpop.f32.mrb[0].mxu0
      %v1292 = vadd.f32 %v1058, %v1291
      %v1293 = vpop.f32.mrb[0].mxu0
      %1294 = vmatprep.mubr.f32.mxu0 0.0
      %1295 = vmatmul.mubr.f32.gmra.mrb[0].mxu0 %v867
      %v1296 = vpop.f32.mrb[0].mxu0
      %v1297 = vadd.f32 %v1063, %v1296
      %v1298 = vpop.f32.mrb[0].mxu0
      %1299 = vmatprep.mubr.f32.mxu0 0.0
      %1300 = vmatmul.mubr.f32.gmra.mrb[0].mxu0 %v870
      %v1301 = vpop.f32.mrb[0].mxu0
      %v1302 = vadd.f32 %v1068, %v1301
      %v1303 = vpop.f32.mrb[0].mxu0
      %1304 = vmatprep.mubr.f32.mxu0 0.0
      %1305 = vmatmul.mubr.f32.gmra.mrb[0].mxu0 %v873
      %v1306 = vpop.f32.mrb[0].mxu0
      %v1307 = vadd.f32 %v1073, %v1306
      %v1308 = vpop.f32.mrb[0].mxu0
      %1309 = vmatprep.mubr.f32.mxu0 0.0
      %1310 = vmatmul.mubr.f32.gmra.mrb[0].mxu0 %v876
      %v1311 = vpop.f32.mrb[0].mxu0
      %v1312 = vadd.f32 %v1078, %v1311
      %v1313 = vpop.f32.mrb[0].mxu0
      %1314 = vmatprep.mubr.f32.mxu0 0.0
      %1315 = vmatmul.mubr.f32.gmra.mrb[0].mxu0 %v879
      %v1316 = vpop.f32.mrb[0].mxu0
      %v1317 = vadd.f32 %v1083, %v1316
      %v1318 = vpop.f32.mrb[0].mxu0
      %1319 = vmatprep.mubr.f32.mxu0 0.0
      %1320 = vmatmul.mubr.f32.gmra.mrb[0].mxu0 %v882
      %v1321 = vpop.f32.mrb[0].mxu0
      %v1322 = vadd.f32 %v1088, %v1321
      %v1323 = vpop.f32.mrb[0].mxu0
      %1324 = vmatprep.mubr.f32.mxu0 0.0
      %1325 = vmatmul.mubr.f32.gmra.mrb[0].mxu0 %v885
      %v1326 = vpop.f32.mrb[0].mxu0
      %v1327 = vadd.f32 %v1093, %v1326
      %v1328 = vpop.f32.mrb[0].mxu0
      %1329 = vmatprep.mubr.f32.mxu0 0.0
      %1330 = vmatmul.mubr.f32.gmra.mrb[0].mxu0 %v888
      %v1331 = vpop.f32.mrb[0].mxu0
      %v1332 = vadd.f32 %v1098, %v1331
      %v1333 = vpop.f32.mrb[0].mxu0
      %1334 = vmatprep.mubr.f32.mxu0 0.0
      %1335 = vmatmul.mubr.f32.gmra.mrb[0].mxu0 %v891
      %v1336 = vpop.f32.mrb[0].mxu0
      %v1337 = vadd.f32 %v1103, %v1336
      %v1338 = vpop.f32.mrb[0].mxu0
      %1339 = vmatprep.mubr.f32.mxu0 0.0
      %1340 = vmatmul.mubr.f32.gmra.mrb[0].mxu0 %v894
      %v1341 = vpop.f32.mrb[0].mxu0
      %v1342 = vadd.f32 %v1108, %v1341
      %v1343 = vpop.f32.mrb[0].mxu0
      %1344 = vmatprep.mubr.f32.mxu0 0.0
      %1345 = vmatmul.mubr.f32.gmra.mrb[0].mxu0 %v897
      %v1346 = vpop.f32.mrb[0].mxu0
      %v1347 = vadd.f32 %v1113, %v1346
      %v1348 = vpop.f32.mrb[0].mxu0
      %1349 = vmatprep.mubr.f32.mxu0 0.0
      %1350 = vmatmul.mubr.f32.gmra.mrb[0].mxu0 %v900
      %v1351 = vpop.f32.mrb[0].mxu0
      %v1352 = vadd.f32 %v1118, %v1351
      %v1353 = vpop.f32.mrb[0].mxu0
      %1354 = vmatprep.mubr.f32.mxu0 0.0
      %1355 = vmatmul.mubr.f32.gmra.mrb[0].mxu0 %v903
      %v1356 = vpop.f32.mrb[0].mxu0
      %v1357 = vadd.f32 %v1123, %v1356
      %v1358 = vpop.f32.mrb[0].mxu0
      %1359 = vmatprep.mubr.f32.mxu0 0.0
      %1360 = vmatmul.mubr.f32.gmra.mrb[0].mxu0 %v906
      %v1361 = vpop.f32.mrb[0].mxu0
      %v1362 = vadd.f32 %v1128, %v1361
      %v1363 = vpop.f32.mrb[0].mxu0
      %1364 = vmatprep.mubr.f32.mxu0 0.0
      %1365 = vmatmul.mubr.f32.gmra.mrb[0].mxu0 %v909
      %v1366 = vpop.f32.mrb[0].mxu0
      %v1367 = vadd.f32 %v1133, %v1366
      %v1368 = vpop.f32.mrb[0].mxu0
      %1369 = vmatprep.mubr.f32.mxu0 0.0
      %1370 = vmatmul.mubr.f32.gmra.mrb[0].mxu0 %v912
      %v1371 = vpop.f32.mrb[0].mxu0
      %v1372 = vadd.f32 %v1138, %v1371
      %v1373 = vpop.f32.mrb[0].mxu0
      %1374 = vmatprep.mubr.f32.mxu0 0.0
      %1375 = vmatmul.mubr.f32.gmra.mrb[0].mxu0 %v915
      %v1376 = vpop.f32.mrb[0].mxu0
      %v1377 = vadd.f32 %v1143, %v1376
      %v1378 = vpop.f32.mrb[0].mxu0
      %1379 = vmatprep.mubr.f32.mxu0 0.0
      %1380 = vmatmul.mubr.f32.gmra.mrb[0].mxu0 %v918
      %v1381 = vpop.f32.mrb[0].mxu0
      %v1382 = vadd.f32 %v1148, %v1381
      %v1383 = vpop.f32.mrb[0].mxu0
      %1384 = vmatprep.mubr.f32.mxu0 0.0
      %1385 = vmatmul.mubr.f32.gmra.mrb[0].mxu0 %v921
      %v1386 = vpop.f32.mrb[0].mxu0
      %v1387 = vadd.f32 %v1153, %v1386
      %v1388 = vpop.f32.mrb[0].mxu0
      %1389 = vmatprep.mubr.f32.mxu0 0.0
      %1390 = vmatmul.mubr.f32.gmra.mrb[0].mxu0 %v924
      %v1391 = vpop.f32.mrb[0].mxu0
      %v1392 = vadd.f32 %v1158, %v1391
      %v1393 = vpop.f32.mrb[0].mxu0
      %1394 = vdwg.mxu0
      %v1398 = vrot.slane %v330, 1
      %v1399 = vrot.slane %v331, 1
      %v1400 = vsel %vm381, %v1398, %v1399
      %v1401 = vrot.slane %v332, 1
      %v1402 = vsel %vm381, %v1399, %v1401
      %1403 = vrot.lane.b32.xlu0 %v1400, 4
      %v1404 = vpop.permute.xlu0 %1403
      %1405 = vrot.lane.b32.xlu0 %v1402, 4
      %v1406 = vpop.permute.xlu0 %1405
      %v1409 = vrot.slane %v330, 2
      %v1410 = vrot.slane %v331, 2
      %v1411 = vsel %vm558, %v1409, %v1410
      %v1412 = vrot.slane %v332, 2
      %v1413 = vsel %vm558, %v1410, %v1412
      %1414 = vrot.lane.b32.xlu0 %v1411, 8
      %v1415 = vpop.permute.xlu0 %1414
      %1416 = vrot.lane.b32.xlu0 %v1413, 8
      %v1417 = vpop.permute.xlu0 %1416
      %v1420 = vsel %vm735, %v330, %v1404
      %v1421 = vsel %vm735, %v331, %v1406
      %v1422 = vsel %vm768, %v1420, %v1415
      %v1423 = vsel %vm768, %v1421, %v1417
      %s1424 = scalar_lea.vmem %s1, 32
      %v1425 = vld [vmem:[%s1424] sm:$0xff]
      %v1426 = vld [vmem:[%s1424 + $0x8] sm:$0xf]
      %v1428 = vsel %vm835, %v1422, 0
      %v1431 = vsel %vm835, %v1423, 0
      %v1434 = vsel %vm932, %v1426, 0
      %1436 = vmatprep.subr.mxu0 0.0
      %1437 = vmatpush1.msra.mxu0 %v1425
      %1438 = vmatprep.subr.mxu0 0.0
      %1439 = vmatpush1.msra.mxu0 %v1434
      %1440 = vmatprep.subr.mxu0 0.0
      %1441 = vmatpush1.msra.mxu0 0.0
      %1442 = vmatprep.subr.mxu0 0.0
      %1443 = vmatpush1.msra.mxu0 0.0
      %1444 = vmatprep.subr.mxu0 0.0
      %1445 = vmatpush1.msra.mxu0 0.0
      %1446 = vmatprep.subr.mxu0 0.0
      %1447 = vmatpush1.msra.mxu0 0.0
      %1448 = vmatprep.subr.mxu0 0.0
      %1449 = vmatpush1.msra.mxu0 0.0
      %1450 = vmatprep.subr.mxu0 0.0
      %1451 = vmatpush1.msra.mxu0 0.0
      %1452 = vmatprep.subr.mxu0 0.0
      %1453 = vmatpush1.msra.mxu0 0.0
      %1454 = vmatprep.subr.mxu0 0.0
      %1455 = vmatpush1.msra.mxu0 0.0
      %1456 = vmatprep.subr.mxu0 0.0
      %1457 = vmatpush1.msra.mxu0 0.0
      %1458 = vmatprep.subr.mxu0 0.0
      %1459 = vmatpush1.msra.mxu0 0.0
      %1460 = vmatprep.subr.mxu0 0.0
      %1461 = vmatpush1.msra.mxu0 0.0
      %1462 = vmatprep.subr.mxu0 0.0
      %1463 = vmatpush1.msra.mxu0 0.0
      %1464 = vmatprep.subr.mxu0 0.0
      %1465 = vmatpush1.msra.mxu0 0.0
      %1466 = vmatprep.subr.mxu0 0.0
      %1467 = vmatpush1.msra.mxu0 0.0
      %1468 = vmatprep.subr.mxu0 0.0
      %1469 = vmatpush1.msra.mxu0 0.0
      %1470 = vmatprep.subr.mxu0 0.0
      %1471 = vmatpush1.msra.mxu0 0.0
      %1472 = vmatprep.subr.mxu0 0.0
      %1473 = vmatpush1.msra.mxu0 0.0
      %1474 = vmatprep.subr.mxu0 0.0
      %1475 = vmatpush1.msra.mxu0 0.0
      %1476 = vmatprep.subr.mxu0 0.0
      %1477 = vmatpush1.msra.mxu0 0.0
      %1478 = vmatprep.subr.mxu0 0.0
      %1479 = vmatpush1.msra.mxu0 0.0
      %1480 = vmatprep.subr.mxu0 0.0
      %1481 = vmatpush1.msra.mxu0 0.0
      %1482 = vmatprep.subr.mxu0 0.0
      %1483 = vmatpush1.msra.mxu0 0.0
      %1484 = vmatprep.subr.mxu0 0.0
      %1485 = vmatpush1.msra.mxu0 0.0
      %1486 = vmatprep.subr.mxu0 0.0
      %1487 = vmatpush1.msra.mxu0 0.0
      %1488 = vmatprep.subr.mxu0 0.0
      %1489 = vmatpush1.msra.mxu0 0.0
      %1490 = vmatprep.subr.mxu0 0.0
      %1491 = vmatpush1.msra.mxu0 0.0
      %1492 = vmatprep.subr.mxu0 0.0
      %1493 = vmatpush1.msra.mxu0 0.0
      %1494 = vmatprep.subr.mxu0 0.0
      %1495 = vmatpush1.msra.mxu0 0.0
      %1496 = vmatprep.subr.mxu0 0.0
      %1497 = vmatpush1.msra.mxu0 0.0
      %1498 = vmatprep.subr.mxu0 0.0
      %1499 = vmatpush1.msra.mxu0 0.0
      %1500 = vmatprep.mubr.f32.mxu0 0.0
      %1501 = vmatmul.mubr.f32.gmra.mrb[0].mxu0 %v843
      %v1502 = vpop.f32.mrb[0].mxu0
      %v1503 = vadd.f32 0.0, %v1502
      %v1504 = vpop.f32.mrb[0].mxu0
      %1505 = vmatprep.mubr.f32.mxu0 0.0
      %1506 = vmatmul.mubr.f32.gmra.mrb[0].mxu0 %v846
      %v1507 = vpop.f32.mrb[0].mxu0
      %v1508 = vadd.f32 0.0, %v1507
      %v1509 = vpop.f32.mrb[0].mxu0
      %1510 = vmatprep.mubr.f32.mxu0 0.0
      %1511 = vmatmul.mubr.f32.gmra.mrb[0].mxu0 %v849
      %v1512 = vpop.f32.mrb[0].mxu0
      %v1513 = vadd.f32 0.0, %v1512
      %v1514 = vpop.f32.mrb[0].mxu0
      %1515 = vmatprep.mubr.f32.mxu0 0.0
      %1516 = vmatmul.mubr.f32.gmra.mrb[0].mxu0 %v852
      %v1517 = vpop.f32.mrb[0].mxu0
      %v1518 = vadd.f32 0.0, %v1517
      %v1519 = vpop.f32.mrb[0].mxu0
      %1520 = vmatprep.mubr.f32.mxu0 0.0
      %1521 = vmatmul.mubr.f32.gmra.mrb[0].mxu0 %v855
      %v1522 = vpop.f32.mrb[0].mxu0
      %v1523 = vadd.f32 0.0, %v1522
      %v1524 = vpop.f32.mrb[0].mxu0
      %1525 = vmatprep.mubr.f32.mxu0 0.0
      %1526 = vmatmul.mubr.f32.gmra.mrb[0].mxu0 %v858
      %v1527 = vpop.f32.mrb[0].mxu0
      %v1528 = vadd.f32 0.0, %v1527
      %v1529 = vpop.f32.mrb[0].mxu0
      %1530 = vmatprep.mubr.f32.mxu0 0.0
      %1531 = vmatmul.mubr.f32.gmra.mrb[0].mxu0 %v861
      %v1532 = vpop.f32.mrb[0].mxu0
      %v1533 = vadd.f32 0.0, %v1532
      %v1534 = vpop.f32.mrb[0].mxu0
      %1535 = vmatprep.mubr.f32.mxu0 0.0
      %1536 = vmatmul.mubr.f32.gmra.mrb[0].mxu0 %v864
      %v1537 = vpop.f32.mrb[0].mxu0
      %v1538 = vadd.f32 0.0, %v1537
      %v1539 = vpop.f32.mrb[0].mxu0
      %1540 = vmatprep.mubr.f32.mxu0 0.0
      %1541 = vmatmul.mubr.f32.gmra.mrb[0].mxu0 %v867
      %v1542 = vpop.f32.mrb[0].mxu0
      %v1543 = vadd.f32 0.0, %v1542
      %v1544 = vpop.f32.mrb[0].mxu0
      %1545 = vmatprep.mubr.f32.mxu0 0.0
      %1546 = vmatmul.mubr.f32.gmra.mrb[0].mxu0 %v870
      %v1547 = vpop.f32.mrb[0].mxu0
      %v1548 = vadd.f32 0.0, %v1547
      %v1549 = vpop.f32.mrb[0].mxu0
      %1550 = vmatprep.mubr.f32.mxu0 0.0
      %1551 = vmatmul.mubr.f32.gmra.mrb[0].mxu0 %v873
      %v1552 = vpop.f32.mrb[0].mxu0
      %v1553 = vadd.f32 0.0, %v1552
      %v1554 = vpop.f32.mrb[0].mxu0
      %1555 = vmatprep.mubr.f32.mxu0 0.0
      %1556 = vmatmul.mubr.f32.gmra.mrb[0].mxu0 %v876
      %v1557 = vpop.f32.mrb[0].mxu0
      %v1558 = vadd.f32 0.0, %v1557
      %v1559 = vpop.f32.mrb[0].mxu0
      %1560 = vmatprep.mubr.f32.mxu0 0.0
      %1561 = vmatmul.mubr.f32.gmra.mrb[0].mxu0 %v879
      %v1562 = vpop.f32.mrb[0].mxu0
      %v1563 = vadd.f32 0.0, %v1562
      %v1564 = vpop.f32.mrb[0].mxu0
      %1565 = vmatprep.mubr.f32.mxu0 0.0
      %1566 = vmatmul.mubr.f32.gmra.mrb[0].mxu0 %v882
      %v1567 = vpop.f32.mrb[0].mxu0
      %v1568 = vadd.f32 0.0, %v1567
      %v1569 = vpop.f32.mrb[0].mxu0
      %1570 = vmatprep.mubr.f32.mxu0 0.0
      %1571 = vmatmul.mubr.f32.gmra.mrb[0].mxu0 %v885
      %v1572 = vpop.f32.mrb[0].mxu0
      %v1573 = vadd.f32 0.0, %v1572
      %v1574 = vpop.f32.mrb[0].mxu0
      %1575 = vmatprep.mubr.f32.mxu0 0.0
      %1576 = vmatmul.mubr.f32.gmra.mrb[0].mxu0 %v888
      %v1577 = vpop.f32.mrb[0].mxu0
      %v1578 = vadd.f32 0.0, %v1577
      %v1579 = vpop.f32.mrb[0].mxu0
      %1580 = vmatprep.mubr.f32.mxu0 0.0
      %1581 = vmatmul.mubr.f32.gmra.mrb[0].mxu0 %v891
      %v1582 = vpop.f32.mrb[0].mxu0
      %v1583 = vadd.f32 0.0, %v1582
      %v1584 = vpop.f32.mrb[0].mxu0
      %1585 = vmatprep.mubr.f32.mxu0 0.0
      %1586 = vmatmul.mubr.f32.gmra.mrb[0].mxu0 %v894
      %v1587 = vpop.f32.mrb[0].mxu0
      %v1588 = vadd.f32 0.0, %v1587
      %v1589 = vpop.f32.mrb[0].mxu0
      %1590 = vmatprep.mubr.f32.mxu0 0.0
      %1591 = vmatmul.mubr.f32.gmra.mrb[0].mxu0 %v897
      %v1592 = vpop.f32.mrb[0].mxu0
      %v1593 = vadd.f32 0.0, %v1592
      %v1594 = vpop.f32.mrb[0].mxu0
      %1595 = vmatprep.mubr.f32.mxu0 0.0
      %1596 = vmatmul.mubr.f32.gmra.mrb[0].mxu0 %v900
      %v1597 = vpop.f32.mrb[0].mxu0
      %v1598 = vadd.f32 0.0, %v1597
      %v1599 = vpop.f32.mrb[0].mxu0
      %1600 = vmatprep.mubr.f32.mxu0 0.0
      %1601 = vmatmul.mubr.f32.gmra.mrb[0].mxu0 %v903
      %v1602 = vpop.f32.mrb[0].mxu0
      %v1603 = vadd.f32 0.0, %v1602
      %v1604 = vpop.f32.mrb[0].mxu0
      %1605 = vmatprep.mubr.f32.mxu0 0.0
      %1606 = vmatmul.mubr.f32.gmra.mrb[0].mxu0 %v906
      %v1607 = vpop.f32.mrb[0].mxu0
      %v1608 = vadd.f32 0.0, %v1607
      %v1609 = vpop.f32.mrb[0].mxu0
      %1610 = vmatprep.mubr.f32.mxu0 0.0
      %1611 = vmatmul.mubr.f32.gmra.mrb[0].mxu0 %v909
      %v1612 = vpop.f32.mrb[0].mxu0
      %v1613 = vadd.f32 0.0, %v1612
      %v1614 = vpop.f32.mrb[0].mxu0
      %1615 = vmatprep.mubr.f32.mxu0 0.0
      %1616 = vmatmul.mubr.f32.gmra.mrb[0].mxu0 %v912
      %v1617 = vpop.f32.mrb[0].mxu0
      %v1618 = vadd.f32 0.0, %v1617
      %v1619 = vpop.f32.mrb[0].mxu0
      %1620 = vmatprep.mubr.f32.mxu0 0.0
      %1621 = vmatmul.mubr.f32.gmra.mrb[0].mxu0 %v915
      %v1622 = vpop.f32.mrb[0].mxu0
      %v1623 = vadd.f32 0.0, %v1622
      %v1624 = vpop.f32.mrb[0].mxu0
      %1625 = vmatprep.mubr.f32.mxu0 0.0
      %1626 = vmatmul.mubr.f32.gmra.mrb[0].mxu0 %v918
      %v1627 = vpop.f32.mrb[0].mxu0
      %v1628 = vadd.f32 0.0, %v1627
      %v1629 = vpop.f32.mrb[0].mxu0
      %1630 = vmatprep.mubr.f32.mxu0 0.0
      %1631 = vmatmul.mubr.f32.gmra.mrb[0].mxu0 %v921
      %v1632 = vpop.f32.mrb[0].mxu0
      %v1633 = vadd.f32 0.0, %v1632
      %v1634 = vpop.f32.mrb[0].mxu0
      %1635 = vmatprep.mubr.f32.mxu0 0.0
      %1636 = vmatmul.mubr.f32.gmra.mrb[0].mxu0 %v924
      %v1637 = vpop.f32.mrb[0].mxu0
      %v1638 = vadd.f32 0.0, %v1637
      %v1639 = vpop.f32.mrb[0].mxu0
      %1640 = vmatprep.mubr.f32.mxu0 0.0
      %1641 = vmatmul.mubr.f32.gmra.mrb[0].mxu0 %v927
      %v1642 = vpop.f32.mrb[0].mxu0
      %v1643 = vadd.f32 0.0, %v1642
      %v1644 = vpop.f32.mrb[0].mxu0
      %1645 = vmatprep.mubr.f32.mxu0 0.0
      %1646 = vmatmul.mubr.f32.gmra.mrb[0].mxu0 %v930
      %v1647 = vpop.f32.mrb[0].mxu0
      %v1648 = vadd.f32 0.0, %v1647
      %v1649 = vpop.f32.mrb[0].mxu0
      %1650 = vmatprep.mubr.f32.mxu0 0.0
      %1651 = vmatmul.mubr.f32.gmra.mrb[0].mxu0 %v1428
      %v1652 = vpop.f32.mrb[0].mxu0
      %v1653 = vadd.f32 0.0, %v1652
      %v1654 = vpop.f32.mrb[0].mxu0
      %1655 = vmatprep.mubr.f32.mxu0 0.0
      %1656 = vmatmul.mubr.f32.gmra.mrb[0].mxu0 %v1431
      %v1657 = vpop.f32.mrb[0].mxu0
      %v1658 = vadd.f32 0.0, %v1657
      %v1659 = vpop.f32.mrb[0].mxu0
      %1660 = vdwg.mxu0
      %v1661 = vadd.f32 %v1237, %v1503
      %v1662 = vadd.f32 %v1242, %v1508
      %v1663 = vadd.f32 %v1247, %v1513
      %v1664 = vadd.f32 %v1252, %v1518
      %v1665 = vadd.f32 %v1257, %v1523
      %v1666 = vadd.f32 %v1262, %v1528
      %v1667 = vadd.f32 %v1267, %v1533
      %v1668 = vadd.f32 %v1272, %v1538
      %v1669 = vadd.f32 %v1277, %v1543
      %v1670 = vadd.f32 %v1282, %v1548
      %v1671 = vadd.f32 %v1287, %v1553
      %v1672 = vadd.f32 %v1292, %v1558
      %v1673 = vadd.f32 %v1297, %v1563
      %v1674 = vadd.f32 %v1302, %v1568
      %v1675 = vadd.f32 %v1307, %v1573
      %v1676 = vadd.f32 %v1312, %v1578
      %v1677 = vadd.f32 %v1317, %v1583
      %v1678 = vadd.f32 %v1322, %v1588
      %v1679 = vadd.f32 %v1327, %v1593
      %v1680 = vadd.f32 %v1332, %v1598
      %v1681 = vadd.f32 %v1337, %v1603
      %v1682 = vadd.f32 %v1342, %v1608
      %v1683 = vadd.f32 %v1347, %v1613
      %v1684 = vadd.f32 %v1352, %v1618
      %v1685 = vadd.f32 %v1357, %v1623
      %v1686 = vadd.f32 %v1362, %v1628
      %v1687 = vadd.f32 %v1367, %v1633
      %v1688 = vadd.f32 %v1372, %v1638
      %v1689 = vadd.f32 %v1377, %v1643
      %v1690 = vadd.f32 %v1382, %v1648
      %v1691 = vadd.f32 %v1387, %v1653
      %v1692 = vadd.f32 %v1392, %v1658
      %v1693 = vld [vmem:[%s2] sm:$0x1]
      %v1695 = vlaneseq
      %v1696 = vshrl.u32 %v1695, 7
      %v1697 = vsub.s32 0, %v1696
      %v1698 = vrot.slane %v1693, %v1697
      %v1700 = vadd.f32 %v1661, %v1698
      %v1701 = vadd.f32 %v1662, %v1698
      %v1702 = vadd.f32 %v1663, %v1698
      %v1703 = vadd.f32 %v1664, %v1698
      %v1704 = vadd.f32 %v1665, %v1698
      %v1705 = vadd.f32 %v1666, %v1698
      %v1706 = vadd.f32 %v1667, %v1698
      %v1707 = vadd.f32 %v1668, %v1698
      %v1708 = vadd.f32 %v1669, %v1698
      %v1709 = vadd.f32 %v1670, %v1698
      %v1710 = vadd.f32 %v1671, %v1698
      %v1711 = vadd.f32 %v1672, %v1698
      %v1712 = vadd.f32 %v1673, %v1698
      %v1713 = vadd.f32 %v1674, %v1698
      %v1714 = vadd.f32 %v1675, %v1698
      %v1715 = vadd.f32 %v1676, %v1698
      %v1716 = vadd.f32 %v1677, %v1698
      %v1717 = vadd.f32 %v1678, %v1698
      %v1718 = vadd.f32 %v1679, %v1698
      %v1719 = vadd.f32 %v1680, %v1698
      %v1720 = vadd.f32 %v1681, %v1698
      %v1721 = vadd.f32 %v1682, %v1698
      %v1722 = vadd.f32 %v1683, %v1698
      %v1723 = vadd.f32 %v1684, %v1698
      %v1724 = vadd.f32 %v1685, %v1698
      %v1725 = vadd.f32 %v1686, %v1698
      %v1726 = vadd.f32 %v1687, %v1698
      %v1727 = vadd.f32 %v1688, %v1698
      %v1728 = vadd.f32 %v1689, %v1698
      %v1729 = vadd.f32 %v1690, %v1698
      %v1730 = vadd.f32 %v1691, %v1698
      %v1731 = vadd.f32 %v1692, %v1698
      %v1732 = vmax.f32 %v1700, 0.0
      %v1733 = vmax.f32 %v1701, 0.0
      %v1734 = vmax.f32 %v1702, 0.0
      %v1735 = vmax.f32 %v1703, 0.0
      %v1736 = vmax.f32 %v1704, 0.0
      %v1737 = vmax.f32 %v1705, 0.0
      %v1738 = vmax.f32 %v1706, 0.0
      %v1739 = vmax.f32 %v1707, 0.0
      %v1740 = vmax.f32 %v1708, 0.0
      %v1741 = vmax.f32 %v1709, 0.0
      %v1742 = vmax.f32 %v1710, 0.0
      %v1743 = vmax.f32 %v1711, 0.0
      %v1744 = vmax.f32 %v1712, 0.0
      %v1745 = vmax.f32 %v1713, 0.0
      %v1746 = vmax.f32 %v1714, 0.0
      %v1747 = vmax.f32 %v1715, 0.0
      %v1748 = vmax.f32 %v1716, 0.0
      %v1749 = vmax.f32 %v1717, 0.0
      %v1750 = vmax.f32 %v1718, 0.0
      %v1751 = vmax.f32 %v1719, 0.0
      %v1752 = vmax.f32 %v1720, 0.0
      %v1753 = vmax.f32 %v1721, 0.0
      %v1754 = vmax.f32 %v1722, 0.0
      %v1755 = vmax.f32 %v1723, 0.0
      %v1756 = vmax.f32 %v1724, 0.0
      %v1757 = vmax.f32 %v1725, 0.0
      %v1758 = vmax.f32 %v1726, 0.0
      %v1759 = vmax.f32 %v1727, 0.0
      %v1760 = vmax.f32 %v1728, 0.0
      %v1761 = vmax.f32 %v1729, 0.0
      %v1762 = vmax.f32 %v1730, 0.0
      %v1763 = vmax.f32 %v1731, 0.0
      %vm1796 = vcmask 1040384
      %v1797 = vrot.slane %v1732, 7
      %v1798 = vrot.slane %v1733, 7
      %v1799 = vsel %vm1796, %v1797, %v1798
      %v1800 = vrot.slane %v1734, 7
      %v1801 = vrot.slane %v1735, 7
      %v1802 = vsel %vm1796, %v1800, %v1801
      %v1803 = vrot.slane %v1736, 7
      %v1804 = vrot.slane %v1737, 7
      %v1805 = vsel %vm1796, %v1803, %v1804
      %v1806 = vrot.slane %v1738, 7
      %v1807 = vrot.slane %v1739, 7
      %v1808 = vsel %vm1796, %v1806, %v1807
      %v1809 = vrot.slane %v1740, 7
      %v1810 = vrot.slane %v1741, 7
      %v1811 = vsel %vm1796, %v1809, %v1810
      %v1812 = vrot.slane %v1742, 7
      %v1813 = vrot.slane %v1743, 7
      %v1814 = vsel %vm1796, %v1812, %v1813
      %v1815 = vrot.slane %v1744, 7
      %v1816 = vrot.slane %v1745, 7
      %v1817 = vsel %vm1796, %v1815, %v1816
      %v1818 = vrot.slane %v1746, 7
      %v1819 = vrot.slane %v1747, 7
      %v1820 = vsel %vm1796, %v1818, %v1819
      %v1821 = vrot.slane %v1748, 7
      %v1822 = vrot.slane %v1749, 7
      %v1823 = vsel %vm1796, %v1821, %v1822
      %v1824 = vrot.slane %v1750, 7
      %v1825 = vrot.slane %v1751, 7
      %v1826 = vsel %vm1796, %v1824, %v1825
      %v1827 = vrot.slane %v1752, 7
      %v1828 = vrot.slane %v1753, 7
      %v1829 = vsel %vm1796, %v1827, %v1828
      %v1830 = vrot.slane %v1754, 7
      %v1831 = vrot.slane %v1755, 7
      %v1832 = vsel %vm1796, %v1830, %v1831
      %v1833 = vrot.slane %v1756, 7
      %v1834 = vrot.slane %v1757, 7
      %v1835 = vsel %vm1796, %v1833, %v1834
      %v1836 = vrot.slane %v1758, 7
      %v1837 = vrot.slane %v1759, 7
      %v1838 = vsel %vm1796, %v1836, %v1837
      %v1839 = vrot.slane %v1760, 7
      %v1840 = vrot.slane %v1761, 7
      %v1841 = vsel %vm1796, %v1839, %v1840
      %v1842 = vrot.slane %v1762, 7
      %v1843 = vrot.slane %v1763, 7
      %v1844 = vsel %vm1796, %v1842, %v1843
      %v1893 = vsel %vm1796, 0.0, %v1797
      %v1894 = vsel %vm1796, 0.0, %v1800
      %v1895 = vsel %vm1796, 0.0, %v1803
      %v1896 = vsel %vm1796, 0.0, %v1806
      %v1897 = vsel %vm1796, 0.0, %v1809
      %v1898 = vsel %vm1796, 0.0, %v1812
      %v1899 = vsel %vm1796, 0.0, %v1815
      %v1900 = vsel %vm1796, 0.0, %v1818
      %v1901 = vsel %vm1796, 0.0, %v1821
      %v1902 = vsel %vm1796, 0.0, %v1824
      %v1903 = vsel %vm1796, 0.0, %v1827
      %v1904 = vsel %vm1796, 0.0, %v1830
      %v1905 = vsel %vm1796, 0.0, %v1833
      %v1906 = vsel %vm1796, 0.0, %v1836
      %v1907 = vsel %vm1796, 0.0, %v1839
      %v1908 = vsel %vm1796, 0.0, %v1842
      %v1909 = vsel %vm1796, %v1798, 0.0
      %v1910 = vsel %vm1796, %v1801, 0.0
      %v1911 = vsel %vm1796, %v1804, 0.0
      %v1912 = vsel %vm1796, %v1807, 0.0
      %v1913 = vsel %vm1796, %v1810, 0.0
      %v1914 = vsel %vm1796, %v1813, 0.0
      %v1915 = vsel %vm1796, %v1816, 0.0
      %v1916 = vsel %vm1796, %v1819, 0.0
      %v1917 = vsel %vm1796, %v1822, 0.0
      %v1918 = vsel %vm1796, %v1825, 0.0
      %v1919 = vsel %vm1796, %v1828, 0.0
      %v1920 = vsel %vm1796, %v1831, 0.0
      %v1921 = vsel %vm1796, %v1834, 0.0
      %v1922 = vsel %vm1796, %v1837, 0.0
      %v1923 = vsel %vm1796, %v1840, 0.0
      %v1924 = vsel %vm1796, %v1843, 0.0
      %v1956 = vrot.slane 0.0, 1
      %v1957 = vsel %vm381, %v1956, %v1956
      %v1958 = vrot.slane %v1893, 1
      %v1959 = vrot.slane %v1799, 1
      %v1960 = vsel %vm381, %v1958, %v1959
      %v1961 = vrot.slane %v1909, 1
      %v1962 = vsel %vm381, %v1959, %v1961
      %v1963 = vrot.slane %v1894, 1
      %v1964 = vrot.slane %v1802, 1
      %v1965 = vsel %vm381, %v1963, %v1964
      %v1966 = vrot.slane %v1910, 1
      %v1967 = vsel %vm381, %v1964, %v1966
      %v1968 = vrot.slane %v1895, 1
      %v1969 = vrot.slane %v1805, 1
      %v1970 = vsel %vm381, %v1968, %v1969
      %v1971 = vrot.slane %v1911, 1
      %v1972 = vsel %vm381, %v1969, %v1971
      %v1973 = vrot.slane %v1896, 1
      %v1974 = vrot.slane %v1808, 1
      %v1975 = vsel %vm381, %v1973, %v1974
      %v1976 = vrot.slane %v1912, 1
      %v1977 = vsel %vm381, %v1974, %v1976
      %v1978 = vrot.slane %v1897, 1
      %v1979 = vrot.slane %v1811, 1
      %v1980 = vsel %vm381, %v1978, %v1979
      %v1981 = vrot.slane %v1913, 1
      %v1982 = vsel %vm381, %v1979, %v1981
      %v1983 = vrot.slane %v1898, 1
      %v1984 = vrot.slane %v1814, 1
      %v1985 = vsel %vm381, %v1983, %v1984
      %v1986 = vrot.slane %v1914, 1
      %v1987 = vsel %vm381, %v1984, %v1986
      %v1988 = vrot.slane %v1899, 1
      %v1989 = vrot.slane %v1817, 1
      %v1990 = vsel %vm381, %v1988, %v1989
      %v1991 = vrot.slane %v1915, 1
      %v1992 = vsel %vm381, %v1989, %v1991
      %v1993 = vrot.slane %v1900, 1
      %v1994 = vrot.slane %v1820, 1
      %v1995 = vsel %vm381, %v1993, %v1994
      %v1996 = vrot.slane %v1916, 1
      %v1997 = vsel %vm381, %v1994, %v1996
      %v1998 = vrot.slane %v1901, 1
      %v1999 = vrot.slane %v1823, 1
      %v2000 = vsel %vm381, %v1998, %v1999
      %v2001 = vrot.slane %v1917, 1
      %v2002 = vsel %vm381, %v1999, %v2001
      %v2003 = vrot.slane %v1902, 1
      %v2004 = vrot.slane %v1826, 1
      %v2005 = vsel %vm381, %v2003, %v2004
      %v2006 = vrot.slane %v1918, 1
      %v2007 = vsel %vm381, %v2004, %v2006
      %v2008 = vrot.slane %v1903, 1
      %v2009 = vrot.slane %v1829, 1
      %v2010 = vsel %vm381, %v2008, %v2009
      %v2011 = vrot.slane %v1919, 1
      %v2012 = vsel %vm381, %v2009, %v2011
      %v2013 = vrot.slane %v1904, 1
      %v2014 = vrot.slane %v1832, 1
      %v2015 = vsel %vm381, %v2013, %v2014
      %v2016 = vrot.slane %v1920, 1
      %v2017 = vsel %vm381, %v2014, %v2016
      %v2018 = vrot.slane %v1905, 1
      %v2019 = vrot.slane %v1835, 1
      %v2020 = vsel %vm381, %v2018, %v2019
      %v2021 = vrot.slane %v1921, 1
      %v2022 = vsel %vm381, %v2019, %v2021
      %v2023 = vrot.slane %v1906, 1
      %v2024 = vrot.slane %v1838, 1
      %v2025 = vsel %vm381, %v2023, %v2024
      %v2026 = vrot.slane %v1922, 1
      %v2027 = vsel %vm381, %v2024, %v2026
      %v2028 = vrot.slane %v1907, 1
      %v2029 = vrot.slane %v1841, 1
      %v2030 = vsel %vm381, %v2028, %v2029
      %v2031 = vrot.slane %v1923, 1
      %v2032 = vsel %vm381, %v2029, %v2031
      %2033 = vrot.lane.b32.xlu0 %v1957, 8
      %v2034 = vpop.permute.xlu0 %2033
      %2035 = vrot.lane.b32.xlu0 %v1960, 8
      %v2036 = vpop.permute.xlu0 %2035
      %2037 = vrot.lane.b32.xlu0 %v1962, 8
      %v2038 = vpop.permute.xlu0 %2037
      %2039 = vrot.lane.b32.xlu0 %v1965, 8
      %v2040 = vpop.permute.xlu0 %2039
      %2041 = vrot.lane.b32.xlu0 %v1967, 8
      %v2042 = vpop.permute.xlu0 %2041
      %2043 = vrot.lane.b32.xlu0 %v1970, 8
      %v2044 = vpop.permute.xlu0 %2043
      %2045 = vrot.lane.b32.xlu0 %v1972, 8
      %v2046 = vpop.permute.xlu0 %2045
      %2047 = vrot.lane.b32.xlu0 %v1975, 8
      %v2048 = vpop.permute.xlu0 %2047
      %2049 = vrot.lane.b32.xlu0 %v1977, 8
      %v2050 = vpop.permute.xlu0 %2049
      %2051 = vrot.lane.b32.xlu0 %v1980, 8
      %v2052 = vpop.permute.xlu0 %2051
      %2053 = vrot.lane.b32.xlu0 %v1982, 8
      %v2054 = vpop.permute.xlu0 %2053
      %2055 = vrot.lane.b32.xlu0 %v1985, 8
      %v2056 = vpop.permute.xlu0 %2055
      %2057 = vrot.lane.b32.xlu0 %v1987, 8
      %v2058 = vpop.permute.xlu0 %2057
      %2059 = vrot.lane.b32.xlu0 %v1990, 8
      %v2060 = vpop.permute.xlu0 %2059
      %2061 = vrot.lane.b32.xlu0 %v1992, 8
      %v2062 = vpop.permute.xlu0 %2061
      %2063 = vrot.lane.b32.xlu0 %v1995, 8
      %v2064 = vpop.permute.xlu0 %2063
      %2065 = vrot.lane.b32.xlu0 %v1997, 8
      %v2066 = vpop.permute.xlu0 %2065
      %2067 = vrot.lane.b32.xlu0 %v2000, 8
      %v2068 = vpop.permute.xlu0 %2067
      %2069 = vrot.lane.b32.xlu0 %v2002, 8
      %v2070 = vpop.permute.xlu0 %2069
      %2071 = vrot.lane.b32.xlu0 %v2005, 8
      %v2072 = vpop.permute.xlu0 %2071
      %2073 = vrot.lane.b32.xlu0 %v2007, 8
      %v2074 = vpop.permute.xlu0 %2073
      %2075 = vrot.lane.b32.xlu0 %v2010, 8
      %v2076 = vpop.permute.xlu0 %2075
      %2077 = vrot.lane.b32.xlu0 %v2012, 8
      %v2078 = vpop.permute.xlu0 %2077
      %2079 = vrot.lane.b32.xlu0 %v2015, 8
      %v2080 = vpop.permute.xlu0 %2079
      %2081 = vrot.lane.b32.xlu0 %v2017, 8
      %v2082 = vpop.permute.xlu0 %2081
      %2083 = vrot.lane.b32.xlu0 %v2020, 8
      %v2084 = vpop.permute.xlu0 %2083
      %2085 = vrot.lane.b32.xlu0 %v2022, 8
      %v2086 = vpop.permute.xlu0 %2085
      %2087 = vrot.lane.b32.xlu0 %v2025, 8
      %v2088 = vpop.permute.xlu0 %2087
      %2089 = vrot.lane.b32.xlu0 %v2027, 8
      %v2090 = vpop.permute.xlu0 %2089
      %2091 = vrot.lane.b32.xlu0 %v2030, 8
      %v2092 = vpop.permute.xlu0 %2091
      %2093 = vrot.lane.b32.xlu0 %v2032, 8
      %v2094 = vpop.permute.xlu0 %2093
      %v2126 = vrot.slane 0.0, 2
      %v2127 = vsel %vm558, %v2126, %v2126
      %v2128 = vrot.slane %v1893, 2
      %v2129 = vrot.slane %v1799, 2
      %v2130 = vsel %vm558, %v2128, %v2129
      %v2131 = vrot.slane %v1909, 2
      %v2132 = vsel %vm558, %v2129, %v2131
      %v2133 = vrot.slane %v1894, 2
      %v2134 = vrot.slane %v1802, 2
      %v2135 = vsel %vm558, %v2133, %v2134
      %v2136 = vrot.slane %v1910, 2
      %v2137 = vsel %vm558, %v2134, %v2136
      %v2138 = vrot.slane %v1895, 2
      %v2139 = vrot.slane %v1805, 2
      %v2140 = vsel %vm558, %v2138, %v2139
      %v2141 = vrot.slane %v1911, 2
      %v2142 = vsel %vm558, %v2139, %v2141
      %v2143 = vrot.slane %v1896, 2
      %v2144 = vrot.slane %v1808, 2
      %v2145 = vsel %vm558, %v2143, %v2144
      %v2146 = vrot.slane %v1912, 2
      %v2147 = vsel %vm558, %v2144, %v2146
      %v2148 = vrot.slane %v1897, 2
      %v2149 = vrot.slane %v1811, 2
      %v2150 = vsel %vm558, %v2148, %v2149
      %v2151 = vrot.slane %v1913, 2
      %v2152 = vsel %vm558, %v2149, %v2151
      %v2153 = vrot.slane %v1898, 2
      %v2154 = vrot.slane %v1814, 2
      %v2155 = vsel %vm558, %v2153, %v2154
      %v2156 = vrot.slane %v1914, 2
      %v2157 = vsel %vm558, %v2154, %v2156
      %v2158 = vrot.slane %v1899, 2
      %v2159 = vrot.slane %v1817, 2
      %v2160 = vsel %vm558, %v2158, %v2159
      %v2161 = vrot.slane %v1915, 2
      %v2162 = vsel %vm558, %v2159, %v2161
      %v2163 = vrot.slane %v1900, 2
      %v2164 = vrot.slane %v1820, 2
      %v2165 = vsel %vm558, %v2163, %v2164
      %v2166 = vrot.slane %v1916, 2
      %v2167 = vsel %vm558, %v2164, %v2166
      %v2168 = vrot.slane %v1901, 2
      %v2169 = vrot.slane %v1823, 2
      %v2170 = vsel %vm558, %v2168, %v2169
      %v2171 = vrot.slane %v1917, 2
      %v2172 = vsel %vm558, %v2169, %v2171
      %v2173 = vrot.slane %v1902, 2
      %v2174 = vrot.slane %v1826, 2
      %v2175 = vsel %vm558, %v2173, %v2174
      %v2176 = vrot.slane %v1918, 2
      %v2177 = vsel %vm558, %v2174, %v2176
      %v2178 = vrot.slane %v1903, 2
      %v2179 = vrot.slane %v1829, 2
      %v2180 = vsel %vm558, %v2178, %v2179
      %v2181 = vrot.slane %v1919, 2
      %v2182 = vsel %vm558, %v2179, %v2181
      %v2183 = vrot.slane %v1904, 2
      %v2184 = vrot.slane %v1832, 2
      %v2185 = vsel %vm558, %v2183, %v2184
      %v2186 = vrot.slane %v1920, 2
      %v2187 = vsel %vm558, %v2184, %v2186
      %v2188 = vrot.slane %v1905, 2
      %v2189 = vrot.slane %v1835, 2
      %v2190 = vsel %vm558, %v2188, %v2189
      %v2191 = vrot.slane %v1921, 2
      %v2192 = vsel %vm558, %v2189, %v2191
      %v2193 = vrot.slane %v1906, 2
      %v2194 = vrot.slane %v1838, 2
      %v2195 = vsel %vm558, %v2193, %v2194
      %v2196 = vrot.slane %v1922, 2
      %v2197 = vsel %vm558, %v2194, %v2196
      %v2198 = vrot.slane %v1907, 2
      %v2199 = vrot.slane %v1841, 2
      %v2200 = vsel %vm558, %v2198, %v2199
      %v2201 = vrot.slane %v1923, 2
      %v2202 = vsel %vm558, %v2199, %v2201
      %2203 = vrot.lane.b32.xlu0 %v2127, 16
      %v2204 = vpop.permute.xlu0 %2203
      %2205 = vrot.lane.b32.xlu0 %v2130, 16
      %v2206 = vpop.permute.xlu0 %2205
      %2207 = vrot.lane.b32.xlu0 %v2132, 16
      %v2208 = vpop.permute.xlu0 %2207
      %2209 = vrot.lane.b32.xlu0 %v2135, 16
      %v2210 = vpop.permute.xlu0 %2209
      %2211 = vrot.lane.b32.xlu0 %v2137, 16
      %v2212 = vpop.permute.xlu0 %2211
      %2213 = vrot.lane.b32.xlu0 %v2140, 16
      %v2214 = vpop.permute.xlu0 %2213
      %2215 = vrot.lane.b32.xlu0 %v2142, 16
      %v2216 = vpop.permute.xlu0 %2215
      %2217 = vrot.lane.b32.xlu0 %v2145, 16
      %v2218 = vpop.permute.xlu0 %2217
      %2219 = vrot.lane.b32.xlu0 %v2147, 16
      %v2220 = vpop.permute.xlu0 %2219
      %2221 = vrot.lane.b32.xlu0 %v2150, 16
      %v2222 = vpop.permute.xlu0 %2221
      %2223 = vrot.lane.b32.xlu0 %v2152, 16
      %v2224 = vpop.permute.xlu0 %2223
      %2225 = vrot.lane.b32.xlu0 %v2155, 16
      %v2226 = vpop.permute.xlu0 %2225
      %2227 = vrot.lane.b32.xlu0 %v2157, 16
      %v2228 = vpop.permute.xlu0 %2227
      %2229 = vrot.lane.b32.xlu0 %v2160, 16
      %v2230 = vpop.permute.xlu0 %2229
      %2231 = vrot.lane.b32.xlu0 %v2162, 16
      %v2232 = vpop.permute.xlu0 %2231
      %2233 = vrot.lane.b32.xlu0 %v2165, 16
      %v2234 = vpop.permute.xlu0 %2233
      %2235 = vrot.lane.b32.xlu0 %v2167, 16
      %v2236 = vpop.permute.xlu0 %2235
      %2237 = vrot.lane.b32.xlu0 %v2170, 16
      %v2238 = vpop.permute.xlu0 %2237
      %2239 = vrot.lane.b32.xlu0 %v2172, 16
      %v2240 = vpop.permute.xlu0 %2239
      %2241 = vrot.lane.b32.xlu0 %v2175, 16
      %v2242 = vpop.permute.xlu0 %2241
      %2243 = vrot.lane.b32.xlu0 %v2177, 16
      %v2244 = vpop.permute.xlu0 %2243
      %2245 = vrot.lane.b32.xlu0 %v2180, 16
      %v2246 = vpop.permute.xlu0 %2245
      %2247 = vrot.lane.b32.xlu0 %v2182, 16
      %v2248 = vpop.permute.xlu0 %2247
      %2249 = vrot.lane.b32.xlu0 %v2185, 16
      %v2250 = vpop.permute.xlu0 %2249
      %2251 = vrot.lane.b32.xlu0 %v2187, 16
      %v2252 = vpop.permute.xlu0 %2251
      %2253 = vrot.lane.b32.xlu0 %v2190, 16
      %v2254 = vpop.permute.xlu0 %2253
      %2255 = vrot.lane.b32.xlu0 %v2192, 16
      %v2256 = vpop.permute.xlu0 %2255
      %2257 = vrot.lane.b32.xlu0 %v2195, 16
      %v2258 = vpop.permute.xlu0 %2257
      %2259 = vrot.lane.b32.xlu0 %v2197, 16
      %v2260 = vpop.permute.xlu0 %2259
      %2261 = vrot.lane.b32.xlu0 %v2200, 16
      %v2262 = vpop.permute.xlu0 %2261
      %2263 = vrot.lane.b32.xlu0 %v2202, 16
      %v2264 = vpop.permute.xlu0 %2263
      %v2296 = vsel %vm768, 0.0, %v2034
      %v2297 = vsel %vm768, %v1893, %v2036
      %v2298 = vsel %vm768, %v1799, %v2038
      %v2299 = vsel %vm768, %v1894, %v2040
      %v2300 = vsel %vm768, %v1802, %v2042
      %v2301 = vsel %vm768, %v1895, %v2044
      %v2302 = vsel %vm768, %v1805, %v2046
      %v2303 = vsel %vm768, %v1896, %v2048
      %v2304 = vsel %vm768, %v1808, %v2050
      %v2305 = vsel %vm768, %v1897, %v2052
      %v2306 = vsel %vm768, %v1811, %v2054
      %v2307 = vsel %vm768, %v1898, %v2056
      %v2308 = vsel %vm768, %v1814, %v2058
      %v2309 = vsel %vm768, %v1899, %v2060
      %v2310 = vsel %vm768, %v1817, %v2062
      %v2311 = vsel %vm768, %v1900, %v2064
      %v2312 = vsel %vm768, %v1820, %v2066
      %v2313 = vsel %vm768, %v1901, %v2068
      %v2314 = vsel %vm768, %v1823, %v2070
      %v2315 = vsel %vm768, %v1902, %v2072
      %v2316 = vsel %vm768, %v1826, %v2074
      %v2317 = vsel %vm768, %v1903, %v2076
      %v2318 = vsel %vm768, %v1829, %v2078
      %v2319 = vsel %vm768, %v1904, %v2080
      %v2320 = vsel %vm768, %v1832, %v2082
      %v2321 = vsel %vm768, %v1905, %v2084
      %v2322 = vsel %vm768, %v1835, %v2086
      %v2323 = vsel %vm768, %v1906, %v2088
      %v2324 = vsel %vm768, %v1838, %v2090
      %v2325 = vsel %vm768, %v1907, %v2092
      %v2326 = vsel %vm768, %v1841, %v2094
      %vm2327 = vcmask 130048
      %v2328 = vsel %vm2327, %v2296, %v2204
      %v2329 = vsel %vm2327, %v2297, %v2206
      %v2330 = vsel %vm2327, %v2298, %v2208
      %v2331 = vsel %vm2327, %v2299, %v2210
      %v2332 = vsel %vm2327, %v2300, %v2212
      %v2333 = vsel %vm2327, %v2301, %v2214
      %v2334 = vsel %vm2327, %v2302, %v2216
      %v2335 = vsel %vm2327, %v2303, %v2218
      %v2336 = vsel %vm2327, %v2304, %v2220
      %v2337 = vsel %vm2327, %v2305, %v2222
      %v2338 = vsel %vm2327, %v2306, %v2224
      %v2339 = vsel %vm2327, %v2307, %v2226
      %v2340 = vsel %vm2327, %v2308, %v2228
      %v2341 = vsel %vm2327, %v2309, %v2230
      %v2342 = vsel %vm2327, %v2310, %v2232
      %v2343 = vsel %vm2327, %v2311, %v2234
      %v2344 = vsel %vm2327, %v2312, %v2236
      %v2345 = vsel %vm2327, %v2313, %v2238
      %v2346 = vsel %vm2327, %v2314, %v2240
      %v2347 = vsel %vm2327, %v2315, %v2242
      %v2348 = vsel %vm2327, %v2316, %v2244
      %v2349 = vsel %vm2327, %v2317, %v2246
      %v2350 = vsel %vm2327, %v2318, %v2248
      %v2351 = vsel %vm2327, %v2319, %v2250
      %v2352 = vsel %vm2327, %v2320, %v2252
      %v2353 = vsel %vm2327, %v2321, %v2254
      %v2354 = vsel %vm2327, %v2322, %v2256
      %v2355 = vsel %vm2327, %v2323, %v2258
      %v2356 = vsel %vm2327, %v2324, %v2260
      %v2357 = vsel %vm2327, %v2325, %v2262
      %v2358 = vsel %vm2327, %v2326, %v2264
      %v2359 = vld [vmem:[%s3] sm:$0xff]
      %v2360 = vld [vmem:[%s3 + $0x8] sm:$0xff]
      %v2361 = vld [vmem:[%s3 + $0x10] sm:$0xff]
      %v2364 = vrot.slane %v1908, 1
      %v2365 = vrot.slane %v1844, 1
      %v2366 = vsel %vm381, %v2364, %v2365
      %v2367 = vrot.slane %v1924, 1
      %v2368 = vsel %vm381, %v2365, %v2367
      %2369 = vrot.lane.b32.xlu0 %v2366, 8
      %v2370 = vpop.permute.xlu0 %2369
      %2371 = vrot.lane.b32.xlu0 %v2368, 8
      %v2372 = vpop.permute.xlu0 %2371
      %v2375 = vrot.slane %v1908, 2
      %v2376 = vrot.slane %v1844, 2
      %v2377 = vsel %vm558, %v2375, %v2376
      %v2378 = vrot.slane %v1924, 2
      %v2379 = vsel %vm558, %v2376, %v2378
      %2380 = vrot.lane.b32.xlu0 %v2377, 16
      %v2381 = vpop.permute.xlu0 %2380
      %2382 = vrot.lane.b32.xlu0 %v2379, 16
      %v2383 = vpop.permute.xlu0 %2382
      %v2386 = vsel %vm768, %v1908, %v2370
      %v2387 = vsel %vm768, %v1844, %v2372
      %v2388 = vsel %vm2327, %v2386, %v2381
      %v2389 = vsel %vm2327, %v2387, %v2383
      %s2390 = scalar_lea.vmem %s3, 24
      %v2391 = vld [vmem:[%s2390] sm:$0xff]
      %v2392 = vld [vmem:[%s2390 + $0x8] sm:$0xff]
      %v2393 = vld [vmem:[%s2390 + $0x10] sm:$0xff]
      %vm2394 = vcmask 195584
      %v2396 = vsel %vm2394, %v2329, 0
      %v2399 = vsel %vm2394, %v2330, 0
      %v2402 = vsel %vm2394, %v2331, 0
      %v2405 = vsel %vm2394, %v2332, 0
      %v2408 = vsel %vm2394, %v2333, 0
      %v2411 = vsel %vm2394, %v2334, 0
      %v2414 = vsel %vm2394, %v2335, 0
      %v2417 = vsel %vm2394, %v2336, 0
      %v2420 = vsel %vm2394, %v2337, 0
      %v2423 = vsel %vm2394, %v2338, 0
      %v2426 = vsel %vm2394, %v2339, 0
      %v2429 = vsel %vm2394, %v2340, 0
      %v2432 = vsel %vm2394, %v2341, 0
      %v2435 = vsel %vm2394, %v2342, 0
      %v2438 = vsel %vm2394, %v2343, 0
      %v2441 = vsel %vm2394, %v2344, 0
      %v2444 = vsel %vm2394, %v2345, 0
      %v2447 = vsel %vm2394, %v2346, 0
      %v2450 = vsel %vm2394, %v2347, 0
      %v2453 = vsel %vm2394, %v2348, 0
      %v2456 = vsel %vm2394, %v2349, 0
      %v2459 = vsel %vm2394, %v2350, 0
      %v2462 = vsel %vm2394, %v2351, 0
      %v2465 = vsel %vm2394, %v2352, 0
      %v2468 = vsel %vm2394, %v2353, 0
      %v2471 = vsel %vm2394, %v2354, 0
      %v2474 = vsel %vm2394, %v2355, 0
      %v2477 = vsel %vm2394, %v2356, 0
      %v2480 = vsel %vm2394, %v2357, 0
      %v2483 = vsel %vm2394, %v2358, 0
      %v2486 = vsel %vm2394, %v2388, 0
      %v2489 = vsel %vm2394, %v2389, 0
      %2491 = vmatprep.subr.mxu0 0.0
      %2492 = vmatpush1.msra.mxu0 %v2391
      %2493 = vmatprep.subr.mxu0 0.0
      %2494 = vmatpush1.msra.mxu0 %v2392
      %2495 = vmatprep.subr.mxu0 0.0
      %2496 = vmatpush1.msra.mxu0 %v2393
      %2497 = vmatprep.subr.mxu0 0.0
      %2498 = vmatpush1.msra.mxu0 0.0
      %2499 = vmatprep.subr.mxu0 0.0
      %2500 = vmatpush1.msra.mxu0 0.0
      %2501 = vmatprep.subr.mxu0 0.0
      %2502 = vmatpush1.msra.mxu0 0.0
      %2503 = vmatprep.subr.mxu0 0.0
      %2504 = vmatpush1.msra.mxu0 0.0
      %2505 = vmatprep.subr.mxu0 0.0
      %2506 = vmatpush1.msra.mxu0 0.0
      %2507 = vmatprep.subr.mxu0 0.0
      %2508 = vmatpush1.msra.mxu0 0.0
      %2509 = vmatprep.subr.mxu0 0.0
      %2510 = vmatpush1.msra.mxu0 0.0
      %2511 = vmatprep.subr.mxu0 0.0
      %2512 = vmatpush1.msra.mxu0 0.0
      %2513 = vmatprep.subr.mxu0 0.0
      %2514 = vmatpush1.msra.mxu0 0.0
      %2515 = vmatprep.subr.mxu0 0.0
      %2516 = vmatpush1.msra.mxu0 0.0
      %2517 = vmatprep.subr.mxu0 0.0
      %2518 = vmatpush1.msra.mxu0 0.0
      %2519 = vmatprep.subr.mxu0 0.0
      %2520 = vmatpush1.msra.mxu0 0.0
      %2521 = vmatprep.subr.mxu0 0.0
      %2522 = vmatpush1.msra.mxu0 0.0
      %2523 = vmatprep.subr.mxu0 0.0
      %2524 = vmatpush1.msra.mxu0 0.0
      %2525 = vmatprep.subr.mxu0 0.0
      %2526 = vmatpush1.msra.mxu0 0.0
      %2527 = vmatprep.subr.mxu0 0.0
      %2528 = vmatpush1.msra.mxu0 0.0
      %2529 = vmatprep.subr.mxu0 0.0
      %2530 = vmatpush1.msra.mxu0 0.0
      %2531 = vmatprep.subr.mxu0 0.0
      %2532 = vmatpush1.msra.mxu0 0.0
      %2533 = vmatprep.subr.mxu0 0.0
      %2534 = vmatpush1.msra.mxu0 0.0
      %2535 = vmatprep.subr.mxu0 0.0
      %2536 = vmatpush1.msra.mxu0 0.0
      %2537 = vmatprep.subr.mxu0 0.0
      %2538 = vmatpush1.msra.mxu0 0.0
      %2539 = vmatprep.subr.mxu0 0.0
      %2540 = vmatpush1.msra.mxu0 0.0
      %2541 = vmatprep.subr.mxu0 0.0
      %2542 = vmatpush1.msra.mxu0 0.0
      %2543 = vmatprep.subr.mxu0 0.0
      %2544 = vmatpush1.msra.mxu0 0.0
      %2545 = vmatprep.subr.mxu0 0.0
      %2546 = vmatpush1.msra.mxu0 0.0
      %2547 = vmatprep.subr.mxu0 0.0
      %2548 = vmatpush1.msra.mxu0 0.0
      %2549 = vmatprep.subr.mxu0 0.0
      %2550 = vmatpush1.msra.mxu0 0.0
      %2551 = vmatprep.subr.mxu0 0.0
      %2552 = vmatpush1.msra.mxu0 0.0
      %2553 = vmatprep.subr.mxu0 0.0
      %2554 = vmatpush1.msra.mxu0 0.0
      %2555 = vmatprep.mubr.f32.mxu0 0.0
      %2556 = vmatmul.mubr.f32.gmra.mrb[0].mxu0 %v2396
      %v2557 = vpop.f32.mrb[0].mxu0
      %v2558 = vadd.f32 0.0, %v2557
      %v2559 = vpop.f32.mrb[0].mxu0
      %2560 = vmatprep.mubr.f32.mxu0 0.0
      %2561 = vmatmul.mubr.f32.gmra.mrb[0].mxu0 %v2399
      %v2562 = vpop.f32.mrb[0].mxu0
      %v2563 = vadd.f32 0.0, %v2562
      %v2564 = vpop.f32.mrb[0].mxu0
      %2565 = vmatprep.mubr.f32.mxu0 0.0
      %2566 = vmatmul.mubr.f32.gmra.mrb[0].mxu0 %v2402
      %v2567 = vpop.f32.mrb[0].mxu0
      %v2568 = vadd.f32 0.0, %v2567
      %v2569 = vpop.f32.mrb[0].mxu0
      %2570 = vmatprep.mubr.f32.mxu0 0.0
      %2571 = vmatmul.mubr.f32.gmra.mrb[0].mxu0 %v2405
      %v2572 = vpop.f32.mrb[0].mxu0
      %v2573 = vadd.f32 0.0, %v2572
      %v2574 = vpop.f32.mrb[0].mxu0
      %2575 = vmatprep.mubr.f32.mxu0 0.0
      %2576 = vmatmul.mubr.f32.gmra.mrb[0].mxu0 %v2408
      %v2577 = vpop.f32.mrb[0].mxu0
      %v2578 = vadd.f32 0.0, %v2577
      %v2579 = vpop.f32.mrb[0].mxu0
      %2580 = vmatprep.mubr.f32.mxu0 0.0
      %2581 = vmatmul.mubr.f32.gmra.mrb[0].mxu0 %v2411
      %v2582 = vpop.f32.mrb[0].mxu0
      %v2583 = vadd.f32 0.0, %v2582
      %v2584 = vpop.f32.mrb[0].mxu0
      %2585 = vmatprep.mubr.f32.mxu0 0.0
      %2586 = vmatmul.mubr.f32.gmra.mrb[0].mxu0 %v2414
      %v2587 = vpop.f32.mrb[0].mxu0
      %v2588 = vadd.f32 0.0, %v2587
      %v2589 = vpop.f32.mrb[0].mxu0
      %2590 = vmatprep.mubr.f32.mxu0 0.0
      %2591 = vmatmul.mubr.f32.gmra.mrb[0].mxu0 %v2417
      %v2592 = vpop.f32.mrb[0].mxu0
      %v2593 = vadd.f32 0.0, %v2592
      %v2594 = vpop.f32.mrb[0].mxu0
      %2595 = vmatprep.mubr.f32.mxu0 0.0
      %2596 = vmatmul.mubr.f32.gmra.mrb[0].mxu0 %v2420
      %v2597 = vpop.f32.mrb[0].mxu0
      %v2598 = vadd.f32 0.0, %v2597
      %v2599 = vpop.f32.mrb[0].mxu0
      %2600 = vmatprep.mubr.f32.mxu0 0.0
      %2601 = vmatmul.mubr.f32.gmra.mrb[0].mxu0 %v2423
      %v2602 = vpop.f32.mrb[0].mxu0
      %v2603 = vadd.f32 0.0, %v2602
      %v2604 = vpop.f32.mrb[0].mxu0
      %2605 = vmatprep.mubr.f32.mxu0 0.0
      %2606 = vmatmul.mubr.f32.gmra.mrb[0].mxu0 %v2426
      %v2607 = vpop.f32.mrb[0].mxu0
      %v2608 = vadd.f32 0.0, %v2607
      %v2609 = vpop.f32.mrb[0].mxu0
      %2610 = vmatprep.mubr.f32.mxu0 0.0
      %2611 = vmatmul.mubr.f32.gmra.mrb[0].mxu0 %v2429
      %v2612 = vpop.f32.mrb[0].mxu0
      %v2613 = vadd.f32 0.0, %v2612
      %v2614 = vpop.f32.mrb[0].mxu0
      %2615 = vmatprep.mubr.f32.mxu0 0.0
      %2616 = vmatmul.mubr.f32.gmra.mrb[0].mxu0 %v2432
      %v2617 = vpop.f32.mrb[0].mxu0
      %v2618 = vadd.f32 0.0, %v2617
      %v2619 = vpop.f32.mrb[0].mxu0
      %2620 = vmatprep.mubr.f32.mxu0 0.0
      %2621 = vmatmul.mubr.f32.gmra.mrb[0].mxu0 %v2435
      %v2622 = vpop.f32.mrb[0].mxu0
      %v2623 = vadd.f32 0.0, %v2622
      %v2624 = vpop.f32.mrb[0].mxu0
      %2625 = vmatprep.mubr.f32.mxu0 0.0
      %2626 = vmatmul.mubr.f32.gmra.mrb[0].mxu0 %v2438
      %v2627 = vpop.f32.mrb[0].mxu0
      %v2628 = vadd.f32 0.0, %v2627
      %v2629 = vpop.f32.mrb[0].mxu0
      %2630 = vmatprep.mubr.f32.mxu0 0.0
      %2631 = vmatmul.mubr.f32.gmra.mrb[0].mxu0 %v2441
      %v2632 = vpop.f32.mrb[0].mxu0
      %v2633 = vadd.f32 0.0, %v2632
      %v2634 = vpop.f32.mrb[0].mxu0
      %2635 = vmatprep.mubr.f32.mxu0 0.0
      %2636 = vmatmul.mubr.f32.gmra.mrb[0].mxu0 %v2444
      %v2637 = vpop.f32.mrb[0].mxu0
      %v2638 = vadd.f32 0.0, %v2637
      %v2639 = vpop.f32.mrb[0].mxu0
      %2640 = vmatprep.mubr.f32.mxu0 0.0
      %2641 = vmatmul.mubr.f32.gmra.mrb[0].mxu0 %v2447
      %v2642 = vpop.f32.mrb[0].mxu0
      %v2643 = vadd.f32 0.0, %v2642
      %v2644 = vpop.f32.mrb[0].mxu0
      %2645 = vmatprep.mubr.f32.mxu0 0.0
      %2646 = vmatmul.mubr.f32.gmra.mrb[0].mxu0 %v2450
      %v2647 = vpop.f32.mrb[0].mxu0
      %v2648 = vadd.f32 0.0, %v2647
      %v2649 = vpop.f32.mrb[0].mxu0
      %2650 = vmatprep.mubr.f32.mxu0 0.0
      %2651 = vmatmul.mubr.f32.gmra.mrb[0].mxu0 %v2453
      %v2652 = vpop.f32.mrb[0].mxu0
      %v2653 = vadd.f32 0.0, %v2652
      %v2654 = vpop.f32.mrb[0].mxu0
      %2655 = vmatprep.mubr.f32.mxu0 0.0
      %2656 = vmatmul.mubr.f32.gmra.mrb[0].mxu0 %v2456
      %v2657 = vpop.f32.mrb[0].mxu0
      %v2658 = vadd.f32 0.0, %v2657
      %v2659 = vpop.f32.mrb[0].mxu0
      %2660 = vmatprep.mubr.f32.mxu0 0.0
      %2661 = vmatmul.mubr.f32.gmra.mrb[0].mxu0 %v2459
      %v2662 = vpop.f32.mrb[0].mxu0
      %v2663 = vadd.f32 0.0, %v2662
      %v2664 = vpop.f32.mrb[0].mxu0
      %2665 = vmatprep.mubr.f32.mxu0 0.0
      %2666 = vmatmul.mubr.f32.gmra.mrb[0].mxu0 %v2462
      %v2667 = vpop.f32.mrb[0].mxu0
      %v2668 = vadd.f32 0.0, %v2667
      %v2669 = vpop.f32.mrb[0].mxu0
      %2670 = vmatprep.mubr.f32.mxu0 0.0
      %2671 = vmatmul.mubr.f32.gmra.mrb[0].mxu0 %v2465
      %v2672 = vpop.f32.mrb[0].mxu0
      %v2673 = vadd.f32 0.0, %v2672
      %v2674 = vpop.f32.mrb[0].mxu0
      %2675 = vmatprep.mubr.f32.mxu0 0.0
      %2676 = vmatmul.mubr.f32.gmra.mrb[0].mxu0 %v2468
      %v2677 = vpop.f32.mrb[0].mxu0
      %v2678 = vadd.f32 0.0, %v2677
      %v2679 = vpop.f32.mrb[0].mxu0
      %2680 = vmatprep.mubr.f32.mxu0 0.0
      %2681 = vmatmul.mubr.f32.gmra.mrb[0].mxu0 %v2471
      %v2682 = vpop.f32.mrb[0].mxu0
      %v2683 = vadd.f32 0.0, %v2682
      %v2684 = vpop.f32.mrb[0].mxu0
      %2685 = vmatprep.mubr.f32.mxu0 0.0
      %2686 = vmatmul.mubr.f32.gmra.mrb[0].mxu0 %v2474
      %v2687 = vpop.f32.mrb[0].mxu0
      %v2688 = vadd.f32 0.0, %v2687
      %v2689 = vpop.f32.mrb[0].mxu0
      %2690 = vmatprep.mubr.f32.mxu0 0.0
      %2691 = vmatmul.mubr.f32.gmra.mrb[0].mxu0 %v2477
      %v2692 = vpop.f32.mrb[0].mxu0
      %v2693 = vadd.f32 0.0, %v2692
      %v2694 = vpop.f32.mrb[0].mxu0
      %2695 = vmatprep.mubr.f32.mxu0 0.0
      %2696 = vmatmul.mubr.f32.gmra.mrb[0].mxu0 %v2480
      %v2697 = vpop.f32.mrb[0].mxu0
      %v2698 = vadd.f32 0.0, %v2697
      %v2699 = vpop.f32.mrb[0].mxu0
      %2700 = vmatprep.mubr.f32.mxu0 0.0
      %2701 = vmatmul.mubr.f32.gmra.mrb[0].mxu0 %v2483
      %v2702 = vpop.f32.mrb[0].mxu0
      %v2703 = vadd.f32 0.0, %v2702
      %v2704 = vpop.f32.mrb[0].mxu0
      %2705 = vmatprep.mubr.f32.mxu0 0.0
      %2706 = vmatmul.mubr.f32.gmra.mrb[0].mxu0 %v2486
      %v2707 = vpop.f32.mrb[0].mxu0
      %v2708 = vadd.f32 0.0, %v2707
      %v2709 = vpop.f32.mrb[0].mxu0
      %2710 = vmatprep.mubr.f32.mxu0 0.0
      %2711 = vmatmul.mubr.f32.gmra.mrb[0].mxu0 %v2489
      %v2712 = vpop.f32.mrb[0].mxu0
      %v2713 = vadd.f32 0.0, %v2712
      %v2714 = vpop.f32.mrb[0].mxu0
      %2715 = vdwg.mxu0
      %v2717 = vsel %vm2394, %v2328, 0
      %2719 = vmatprep.subr.mxu0 0.0
      %2720 = vmatpush1.msra.mxu0 %v2359
      %2721 = vmatprep.subr.mxu0 0.0
      %2722 = vmatpush1.msra.mxu0 %v2360
      %2723 = vmatprep.subr.mxu0 0.0
      %2724 = vmatpush1.msra.mxu0 %v2361
      %2725 = vmatprep.subr.mxu0 0.0
      %2726 = vmatpush1.msra.mxu0 0.0
      %2727 = vmatprep.subr.mxu0 0.0
      %2728 = vmatpush1.msra.mxu0 0.0
      %2729 = vmatprep.subr.mxu0 0.0
      %2730 = vmatpush1.msra.mxu0 0.0
      %2731 = vmatprep.subr.mxu0 0.0
      %2732 = vmatpush1.msra.mxu0 0.0
      %2733 = vmatprep.subr.mxu0 0.0
      %2734 = vmatpush1.msra.mxu0 0.0
      %2735 = vmatprep.subr.mxu0 0.0
      %2736 = vmatpush1.msra.mxu0 0.0
      %2737 = vmatprep.subr.mxu0 0.0
      %2738 = vmatpush1.msra.mxu0 0.0
      %2739 = vmatprep.subr.mxu0 0.0
      %2740 = vmatpush1.msra.mxu0 0.0
      %2741 = vmatprep.subr.mxu0 0.0
      %2742 = vmatpush1.msra.mxu0 0.0
      %2743 = vmatprep.subr.mxu0 0.0
      %2744 = vmatpush1.msra.mxu0 0.0
      %2745 = vmatprep.subr.mxu0 0.0
      %2746 = vmatpush1.msra.mxu0 0.0
      %2747 = vmatprep.subr.mxu0 0.0
      %2748 = vmatpush1.msra.mxu0 0.0
      %2749 = vmatprep.subr.mxu0 0.0
      %2750 = vmatpush1.msra.mxu0 0.0
      %2751 = vmatprep.subr.mxu0 0.0
      %2752 = vmatpush1.msra.mxu0 0.0
      %2753 = vmatprep.subr.mxu0 0.0
      %2754 = vmatpush1.msra.mxu0 0.0
      %2755 = vmatprep.subr.mxu0 0.0
      %2756 = vmatpush1.msra.mxu0 0.0
      %2757 = vmatprep.subr.mxu0 0.0
      %2758 = vmatpush1.msra.mxu0 0.0
      %2759 = vmatprep.subr.mxu0 0.0
      %2760 = vmatpush1.msra.mxu0 0.0
      %2761 = vmatprep.subr.mxu0 0.0
      %2762 = vmatpush1.msra.mxu0 0.0
      %2763 = vmatprep.subr.mxu0 0.0
      %2764 = vmatpush1.msra.mxu0 0.0
      %2765 = vmatprep.subr.mxu0 0.0
      %2766 = vmatpush1.msra.mxu0 0.0
      %2767 = vmatprep.subr.mxu0 0.0
      %2768 = vmatpush1.msra.mxu0 0.0
      %2769 = vmatprep.subr.mxu0 0.0
      %2770 = vmatpush1.msra.mxu0 0.0
      %2771 = vmatprep.subr.mxu0 0.0
      %2772 = vmatpush1.msra.mxu0 0.0
      %2773 = vmatprep.subr.mxu0 0.0
      %2774 = vmatpush1.msra.mxu0 0.0
      %2775 = vmatprep.subr.mxu0 0.0
      %2776 = vmatpush1.msra.mxu0 0.0
      %2777 = vmatprep.subr.mxu0 0.0
      %2778 = vmatpush1.msra.mxu0 0.0
      %2779 = vmatprep.subr.mxu0 0.0
      %2780 = vmatpush1.msra.mxu0 0.0
      %2781 = vmatprep.subr.mxu0 0.0
      %2782 = vmatpush1.msra.mxu0 0.0
      %2783 = vmatprep.mubr.f32.mxu0 0.0
      %2784 = vmatmul.mubr.f32.gmra.mrb[0].mxu0 %v2717
      %v2785 = vpop.f32.mrb[0].mxu0
      %v2786 = vadd.f32 %v2558, %v2785
      %v2787 = vpop.f32.mrb[0].mxu0
      %2788 = vmatprep.mubr.f32.mxu0 0.0
      %2789 = vmatmul.mubr.f32.gmra.mrb[0].mxu0 %v2717
      %v2790 = vpop.f32.mrb[0].mxu0
      %v2791 = vadd.f32 %v2563, %v2790
      %v2792 = vpop.f32.mrb[0].mxu0
      %2793 = vmatprep.mubr.f32.mxu0 0.0
      %2794 = vmatmul.mubr.f32.gmra.mrb[0].mxu0 %v2396
      %v2795 = vpop.f32.mrb[0].mxu0
      %v2796 = vadd.f32 %v2568, %v2795
      %v2797 = vpop.f32.mrb[0].mxu0
      %2798 = vmatprep.mubr.f32.mxu0 0.0
      %2799 = vmatmul.mubr.f32.gmra.mrb[0].mxu0 %v2399
      %v2800 = vpop.f32.mrb[0].mxu0
      %v2801 = vadd.f32 %v2573, %v2800
      %v2802 = vpop.f32.mrb[0].mxu0
      %2803 = vmatprep.mubr.f32.mxu0 0.0
      %2804 = vmatmul.mubr.f32.gmra.mrb[0].mxu0 %v2402
      %v2805 = vpop.f32.mrb[0].mxu0
      %v2806 = vadd.f32 %v2578, %v2805
      %v2807 = vpop.f32.mrb[0].mxu0
      %2808 = vmatprep.mubr.f32.mxu0 0.0
      %2809 = vmatmul.mubr.f32.gmra.mrb[0].mxu0 %v2405
      %v2810 = vpop.f32.mrb[0].mxu0
      %v2811 = vadd.f32 %v2583, %v2810
      %v2812 = vpop.f32.mrb[0].mxu0
      %2813 = vmatprep.mubr.f32.mxu0 0.0
      %2814 = vmatmul.mubr.f32.gmra.mrb[0].mxu0 %v2408
      %v2815 = vpop.f32.mrb[0].mxu0
      %v2816 = vadd.f32 %v2588, %v2815
      %v2817 = vpop.f32.mrb[0].mxu0
      %2818 = vmatprep.mubr.f32.mxu0 0.0
      %2819 = vmatmul.mubr.f32.gmra.mrb[0].mxu0 %v2411
      %v2820 = vpop.f32.mrb[0].mxu0
      %v2821 = vadd.f32 %v2593, %v2820
      %v2822 = vpop.f32.mrb[0].mxu0
      %2823 = vmatprep.mubr.f32.mxu0 0.0
      %2824 = vmatmul.mubr.f32.gmra.mrb[0].mxu0 %v2414
      %v2825 = vpop.f32.mrb[0].mxu0
      %v2826 = vadd.f32 %v2598, %v2825
      %v2827 = vpop.f32.mrb[0].mxu0
      %2828 = vmatprep.mubr.f32.mxu0 0.0
      %2829 = vmatmul.mubr.f32.gmra.mrb[0].mxu0 %v2417
      %v2830 = vpop.f32.mrb[0].mxu0
      %v2831 = vadd.f32 %v2603, %v2830
      %v2832 = vpop.f32.mrb[0].mxu0
      %2833 = vmatprep.mubr.f32.mxu0 0.0
      %2834 = vmatmul.mubr.f32.gmra.mrb[0].mxu0 %v2420
      %v2835 = vpop.f32.mrb[0].mxu0
      %v2836 = vadd.f32 %v2608, %v2835
      %v2837 = vpop.f32.mrb[0].mxu0
      %2838 = vmatprep.mubr.f32.mxu0 0.0
      %2839 = vmatmul.mubr.f32.gmra.mrb[0].mxu0 %v2423
      %v2840 = vpop.f32.mrb[0].mxu0
      %v2841 = vadd.f32 %v2613, %v2840
      %v2842 = vpop.f32.mrb[0].mxu0
      %2843 = vmatprep.mubr.f32.mxu0 0.0
      %2844 = vmatmul.mubr.f32.gmra.mrb[0].mxu0 %v2426
      %v2845 = vpop.f32.mrb[0].mxu0
      %v2846 = vadd.f32 %v2618, %v2845
      %v2847 = vpop.f32.mrb[0].mxu0
      %2848 = vmatprep.mubr.f32.mxu0 0.0
      %2849 = vmatmul.mubr.f32.gmra.mrb[0].mxu0 %v2429
      %v2850 = vpop.f32.mrb[0].mxu0
      %v2851 = vadd.f32 %v2623, %v2850
      %v2852 = vpop.f32.mrb[0].mxu0
      %2853 = vmatprep.mubr.f32.mxu0 0.0
      %2854 = vmatmul.mubr.f32.gmra.mrb[0].mxu0 %v2432
      %v2855 = vpop.f32.mrb[0].mxu0
      %v2856 = vadd.f32 %v2628, %v2855
      %v2857 = vpop.f32.mrb[0].mxu0
      %2858 = vmatprep.mubr.f32.mxu0 0.0
      %2859 = vmatmul.mubr.f32.gmra.mrb[0].mxu0 %v2435
      %v2860 = vpop.f32.mrb[0].mxu0
      %v2861 = vadd.f32 %v2633, %v2860
      %v2862 = vpop.f32.mrb[0].mxu0
      %2863 = vmatprep.mubr.f32.mxu0 0.0
      %2864 = vmatmul.mubr.f32.gmra.mrb[0].mxu0 %v2438
      %v2865 = vpop.f32.mrb[0].mxu0
      %v2866 = vadd.f32 %v2638, %v2865
      %v2867 = vpop.f32.mrb[0].mxu0
      %2868 = vmatprep.mubr.f32.mxu0 0.0
      %2869 = vmatmul.mubr.f32.gmra.mrb[0].mxu0 %v2441
      %v2870 = vpop.f32.mrb[0].mxu0
      %v2871 = vadd.f32 %v2643, %v2870
      %v2872 = vpop.f32.mrb[0].mxu0
      %2873 = vmatprep.mubr.f32.mxu0 0.0
      %2874 = vmatmul.mubr.f32.gmra.mrb[0].mxu0 %v2444
      %v2875 = vpop.f32.mrb[0].mxu0
      %v2876 = vadd.f32 %v2648, %v2875
      %v2877 = vpop.f32.mrb[0].mxu0
      %2878 = vmatprep.mubr.f32.mxu0 0.0
      %2879 = vmatmul.mubr.f32.gmra.mrb[0].mxu0 %v2447
      %v2880 = vpop.f32.mrb[0].mxu0
      %v2881 = vadd.f32 %v2653, %v2880
      %v2882 = vpop.f32.mrb[0].mxu0
      %2883 = vmatprep.mubr.f32.mxu0 0.0
      %2884 = vmatmul.mubr.f32.gmra.mrb[0].mxu0 %v2450
      %v2885 = vpop.f32.mrb[0].mxu0
      %v2886 = vadd.f32 %v2658, %v2885
      %v2887 = vpop.f32.mrb[0].mxu0
      %2888 = vmatprep.mubr.f32.mxu0 0.0
      %2889 = vmatmul.mubr.f32.gmra.mrb[0].mxu0 %v2453
      %v2890 = vpop.f32.mrb[0].mxu0
      %v2891 = vadd.f32 %v2663, %v2890
      %v2892 = vpop.f32.mrb[0].mxu0
      %2893 = vmatprep.mubr.f32.mxu0 0.0
      %2894 = vmatmul.mubr.f32.gmra.mrb[0].mxu0 %v2456
      %v2895 = vpop.f32.mrb[0].mxu0
      %v2896 = vadd.f32 %v2668, %v2895
      %v2897 = vpop.f32.mrb[0].mxu0
      %2898 = vmatprep.mubr.f32.mxu0 0.0
      %2899 = vmatmul.mubr.f32.gmra.mrb[0].mxu0 %v2459
      %v2900 = vpop.f32.mrb[0].mxu0
      %v2901 = vadd.f32 %v2673, %v2900
      %v2902 = vpop.f32.mrb[0].mxu0
      %2903 = vmatprep.mubr.f32.mxu0 0.0
      %2904 = vmatmul.mubr.f32.gmra.mrb[0].mxu0 %v2462
      %v2905 = vpop.f32.mrb[0].mxu0
      %v2906 = vadd.f32 %v2678, %v2905
      %v2907 = vpop.f32.mrb[0].mxu0
      %2908 = vmatprep.mubr.f32.mxu0 0.0
      %2909 = vmatmul.mubr.f32.gmra.mrb[0].mxu0 %v2465
      %v2910 = vpop.f32.mrb[0].mxu0
      %v2911 = vadd.f32 %v2683, %v2910
      %v2912 = vpop.f32.mrb[0].mxu0
      %2913 = vmatprep.mubr.f32.mxu0 0.0
      %2914 = vmatmul.mubr.f32.gmra.mrb[0].mxu0 %v2468
      %v2915 = vpop.f32.mrb[0].mxu0
      %v2916 = vadd.f32 %v2688, %v2915
      %v2917 = vpop.f32.mrb[0].mxu0
      %2918 = vmatprep.mubr.f32.mxu0 0.0
      %2919 = vmatmul.mubr.f32.gmra.mrb[0].mxu0 %v2471
      %v2920 = vpop.f32.mrb[0].mxu0
      %v2921 = vadd.f32 %v2693, %v2920
      %v2922 = vpop.f32.mrb[0].mxu0
      %2923 = vmatprep.mubr.f32.mxu0 0.0
      %2924 = vmatmul.mubr.f32.gmra.mrb[0].mxu0 %v2474
      %v2925 = vpop.f32.mrb[0].mxu0
      %v2926 = vadd.f32 %v2698, %v2925
      %v2927 = vpop.f32.mrb[0].mxu0
      %2928 = vmatprep.mubr.f32.mxu0 0.0
      %2929 = vmatmul.mubr.f32.gmra.mrb[0].mxu0 %v2477
      %v2930 = vpop.f32.mrb[0].mxu0
      %v2931 = vadd.f32 %v2703, %v2930
      %v2932 = vpop.f32.mrb[0].mxu0
      %2933 = vmatprep.mubr.f32.mxu0 0.0
      %2934 = vmatmul.mubr.f32.gmra.mrb[0].mxu0 %v2480
      %v2935 = vpop.f32.mrb[0].mxu0
      %v2936 = vadd.f32 %v2708, %v2935
      %v2937 = vpop.f32.mrb[0].mxu0
      %2938 = vmatprep.mubr.f32.mxu0 0.0
      %2939 = vmatmul.mubr.f32.gmra.mrb[0].mxu0 %v2483
      %v2940 = vpop.f32.mrb[0].mxu0
      %v2941 = vadd.f32 %v2713, %v2940
      %v2942 = vpop.f32.mrb[0].mxu0
      %2943 = vdwg.mxu0
      %s2944 = scalar_lea.vmem %s3, 48
      %v2945 = vld [vmem:[%s2944] sm:$0xff]
      %v2946 = vld [vmem:[%s2944 + $0x8] sm:$0xff]
      %v2947 = vld [vmem:[%s2944 + $0x10] sm:$0xff]
      %2948 = vmatprep.subr.mxu0 0.0
      %2949 = vmatpush1.msra.mxu0 %v2945
      %2950 = vmatprep.subr.mxu0 0.0
      %2951 = vmatpush1.msra.mxu0 %v2946
      %2952 = vmatprep.subr.mxu0 0.0
      %2953 = vmatpush1.msra.mxu0 %v2947
      %2954 = vmatprep.subr.mxu0 0.0
      %2955 = vmatpush1.msra.mxu0 0.0
      %2956 = vmatprep.subr.mxu0 0.0
      %2957 = vmatpush1.msra.mxu0 0.0
      %2958 = vmatprep.subr.mxu0 0.0
      %2959 = vmatpush1.msra.mxu0 0.0
      %2960 = vmatprep.subr.mxu0 0.0
      %2961 = vmatpush1.msra.mxu0 0.0
      %2962 = vmatprep.subr.mxu0 0.0
      %2963 = vmatpush1.msra.mxu0 0.0
      %2964 = vmatprep.subr.mxu0 0.0
      %2965 = vmatpush1.msra.mxu0 0.0
      %2966 = vmatprep.subr.mxu0 0.0
      %2967 = vmatpush1.msra.mxu0 0.0
      %2968 = vmatprep.subr.mxu0 0.0
      %2969 = vmatpush1.msra.mxu0 0.0
      %2970 = vmatprep.subr.mxu0 0.0
      %2971 = vmatpush1.msra.mxu0 0.0
      %2972 = vmatprep.subr.mxu0 0.0
      %2973 = vmatpush1.msra.mxu0 0.0
      %2974 = vmatprep.subr.mxu0 0.0
      %2975 = vmatpush1.msra.mxu0 0.0
      %2976 = vmatprep.subr.mxu0 0.0
      %2977 = vmatpush1.msra.mxu0 0.0
      %2978 = vmatprep.subr.mxu0 0.0
      %2979 = vmatpush1.msra.mxu0 0.0
      %2980 = vmatprep.subr.mxu0 0.0
      %2981 = vmatpush1.msra.mxu0 0.0
      %2982 = vmatprep.subr.mxu0 0.0
      %2983 = vmatpush1.msra.mxu0 0.0
      %2984 = vmatprep.subr.mxu0 0.0
      %2985 = vmatpush1.msra.mxu0 0.0
      %2986 = vmatprep.subr.mxu0 0.0
      %2987 = vmatpush1.msra.mxu0 0.0
      %2988 = vmatprep.subr.mxu0 0.0
      %2989 = vmatpush1.msra.mxu0 0.0
      %2990 = vmatprep.subr.mxu0 0.0
      %2991 = vmatpush1.msra.mxu0 0.0
      %2992 = vmatprep.subr.mxu0 0.0
      %2993 = vmatpush1.msra.mxu0 0.0
      %2994 = vmatprep.subr.mxu0 0.0
      %2995 = vmatpush1.msra.mxu0 0.0
      %2996 = vmatprep.subr.mxu0 0.0
      %2997 = vmatpush1.msra.mxu0 0.0
      %2998 = vmatprep.subr.mxu0 0.0
      %2999 = vmatpush1.msra.mxu0 0.0
      %3000 = vmatprep.subr.mxu0 0.0
      %3001 = vmatpush1.msra.mxu0 0.0
      %3002 = vmatprep.subr.mxu0 0.0
      %3003 = vmatpush1.msra.mxu0 0.0
      %3004 = vmatprep.subr.mxu0 0.0
      %3005 = vmatpush1.msra.mxu0 0.0
      %3006 = vmatprep.subr.mxu0 0.0
      %3007 = vmatpush1.msra.mxu0 0.0
      %3008 = vmatprep.subr.mxu0 0.0
      %3009 = vmatpush1.msra.mxu0 0.0
      %3010 = vmatprep.subr.mxu0 0.0
      %3011 = vmatpush1.msra.mxu0 0.0
      %3012 = vmatprep.mubr.f32.mxu0 0.0
      %3013 = vmatmul.mubr.f32.gmra.mrb[0].mxu0 %v2402
      %v3014 = vpop.f32.mrb[0].mxu0
      %v3015 = vadd.f32 0.0, %v3014
      %v3016 = vpop.f32.mrb[0].mxu0
      %3017 = vmatprep.mubr.f32.mxu0 0.0
      %3018 = vmatmul.mubr.f32.gmra.mrb[0].mxu0 %v2405
      %v3019 = vpop.f32.mrb[0].mxu0
      %v3020 = vadd.f32 0.0, %v3019
      %v3021 = vpop.f32.mrb[0].mxu0
      %3022 = vmatprep.mubr.f32.mxu0 0.0
      %3023 = vmatmul.mubr.f32.gmra.mrb[0].mxu0 %v2408
      %v3024 = vpop.f32.mrb[0].mxu0
      %v3025 = vadd.f32 0.0, %v3024
      %v3026 = vpop.f32.mrb[0].mxu0
      %3027 = vmatprep.mubr.f32.mxu0 0.0
      %3028 = vmatmul.mubr.f32.gmra.mrb[0].mxu0 %v2411
      %v3029 = vpop.f32.mrb[0].mxu0
      %v3030 = vadd.f32 0.0, %v3029
      %v3031 = vpop.f32.mrb[0].mxu0
      %3032 = vmatprep.mubr.f32.mxu0 0.0
      %3033 = vmatmul.mubr.f32.gmra.mrb[0].mxu0 %v2414
      %v3034 = vpop.f32.mrb[0].mxu0
      %v3035 = vadd.f32 0.0, %v3034
      %v3036 = vpop.f32.mrb[0].mxu0
      %3037 = vmatprep.mubr.f32.mxu0 0.0
      %3038 = vmatmul.mubr.f32.gmra.mrb[0].mxu0 %v2417
      %v3039 = vpop.f32.mrb[0].mxu0
      %v3040 = vadd.f32 0.0, %v3039
      %v3041 = vpop.f32.mrb[0].mxu0
      %3042 = vmatprep.mubr.f32.mxu0 0.0
      %3043 = vmatmul.mubr.f32.gmra.mrb[0].mxu0 %v2420
      %v3044 = vpop.f32.mrb[0].mxu0
      %v3045 = vadd.f32 0.0, %v3044
      %v3046 = vpop.f32.mrb[0].mxu0
      %3047 = vmatprep.mubr.f32.mxu0 0.0
      %3048 = vmatmul.mubr.f32.gmra.mrb[0].mxu0 %v2423
      %v3049 = vpop.f32.mrb[0].mxu0
      %v3050 = vadd.f32 0.0, %v3049
      %v3051 = vpop.f32.mrb[0].mxu0
      %3052 = vmatprep.mubr.f32.mxu0 0.0
      %3053 = vmatmul.mubr.f32.gmra.mrb[0].mxu0 %v2426
      %v3054 = vpop.f32.mrb[0].mxu0
      %v3055 = vadd.f32 0.0, %v3054
      %v3056 = vpop.f32.mrb[0].mxu0
      %3057 = vmatprep.mubr.f32.mxu0 0.0
      %3058 = vmatmul.mubr.f32.gmra.mrb[0].mxu0 %v2429
      %v3059 = vpop.f32.mrb[0].mxu0
      %v3060 = vadd.f32 0.0, %v3059
      %v3061 = vpop.f32.mrb[0].mxu0
      %3062 = vmatprep.mubr.f32.mxu0 0.0
      %3063 = vmatmul.mubr.f32.gmra.mrb[0].mxu0 %v2432
      %v3064 = vpop.f32.mrb[0].mxu0
      %v3065 = vadd.f32 0.0, %v3064
      %v3066 = vpop.f32.mrb[0].mxu0
      %3067 = vmatprep.mubr.f32.mxu0 0.0
      %3068 = vmatmul.mubr.f32.gmra.mrb[0].mxu0 %v2435
      %v3069 = vpop.f32.mrb[0].mxu0
      %v3070 = vadd.f32 0.0, %v3069
      %v3071 = vpop.f32.mrb[0].mxu0
      %3072 = vmatprep.mubr.f32.mxu0 0.0
      %3073 = vmatmul.mubr.f32.gmra.mrb[0].mxu0 %v2438
      %v3074 = vpop.f32.mrb[0].mxu0
      %v3075 = vadd.f32 0.0, %v3074
      %v3076 = vpop.f32.mrb[0].mxu0
      %3077 = vmatprep.mubr.f32.mxu0 0.0
      %3078 = vmatmul.mubr.f32.gmra.mrb[0].mxu0 %v2441
      %v3079 = vpop.f32.mrb[0].mxu0
      %v3080 = vadd.f32 0.0, %v3079
      %v3081 = vpop.f32.mrb[0].mxu0
      %3082 = vmatprep.mubr.f32.mxu0 0.0
      %3083 = vmatmul.mubr.f32.gmra.mrb[0].mxu0 %v2444
      %v3084 = vpop.f32.mrb[0].mxu0
      %v3085 = vadd.f32 0.0, %v3084
      %v3086 = vpop.f32.mrb[0].mxu0
      %3087 = vmatprep.mubr.f32.mxu0 0.0
      %3088 = vmatmul.mubr.f32.gmra.mrb[0].mxu0 %v2447
      %v3089 = vpop.f32.mrb[0].mxu0
      %v3090 = vadd.f32 0.0, %v3089
      %v3091 = vpop.f32.mrb[0].mxu0
      %3092 = vmatprep.mubr.f32.mxu0 0.0
      %3093 = vmatmul.mubr.f32.gmra.mrb[0].mxu0 %v2450
      %v3094 = vpop.f32.mrb[0].mxu0
      %v3095 = vadd.f32 0.0, %v3094
      %v3096 = vpop.f32.mrb[0].mxu0
      %3097 = vmatprep.mubr.f32.mxu0 0.0
      %3098 = vmatmul.mubr.f32.gmra.mrb[0].mxu0 %v2453
      %v3099 = vpop.f32.mrb[0].mxu0
      %v3100 = vadd.f32 0.0, %v3099
      %v3101 = vpop.f32.mrb[0].mxu0
      %3102 = vmatprep.mubr.f32.mxu0 0.0
      %3103 = vmatmul.mubr.f32.gmra.mrb[0].mxu0 %v2456
      %v3104 = vpop.f32.mrb[0].mxu0
      %v3105 = vadd.f32 0.0, %v3104
      %v3106 = vpop.f32.mrb[0].mxu0
      %3107 = vmatprep.mubr.f32.mxu0 0.0
      %3108 = vmatmul.mubr.f32.gmra.mrb[0].mxu0 %v2459
      %v3109 = vpop.f32.mrb[0].mxu0
      %v3110 = vadd.f32 0.0, %v3109
      %v3111 = vpop.f32.mrb[0].mxu0
      %3112 = vmatprep.mubr.f32.mxu0 0.0
      %3113 = vmatmul.mubr.f32.gmra.mrb[0].mxu0 %v2462
      %v3114 = vpop.f32.mrb[0].mxu0
      %v3115 = vadd.f32 0.0, %v3114
      %v3116 = vpop.f32.mrb[0].mxu0
      %3117 = vmatprep.mubr.f32.mxu0 0.0
      %3118 = vmatmul.mubr.f32.gmra.mrb[0].mxu0 %v2465
      %v3119 = vpop.f32.mrb[0].mxu0
      %v3120 = vadd.f32 0.0, %v3119
      %v3121 = vpop.f32.mrb[0].mxu0
      %3122 = vmatprep.mubr.f32.mxu0 0.0
      %3123 = vmatmul.mubr.f32.gmra.mrb[0].mxu0 %v2468
      %v3124 = vpop.f32.mrb[0].mxu0
      %v3125 = vadd.f32 0.0, %v3124
      %v3126 = vpop.f32.mrb[0].mxu0
      %3127 = vmatprep.mubr.f32.mxu0 0.0
      %3128 = vmatmul.mubr.f32.gmra.mrb[0].mxu0 %v2471
      %v3129 = vpop.f32.mrb[0].mxu0
      %v3130 = vadd.f32 0.0, %v3129
      %v3131 = vpop.f32.mrb[0].mxu0
      %3132 = vmatprep.mubr.f32.mxu0 0.0
      %3133 = vmatmul.mubr.f32.gmra.mrb[0].mxu0 %v2474
      %v3134 = vpop.f32.mrb[0].mxu0
      %v3135 = vadd.f32 0.0, %v3134
      %v3136 = vpop.f32.mrb[0].mxu0
      %3137 = vmatprep.mubr.f32.mxu0 0.0
      %3138 = vmatmul.mubr.f32.gmra.mrb[0].mxu0 %v2477
      %v3139 = vpop.f32.mrb[0].mxu0
      %v3140 = vadd.f32 0.0, %v3139
      %v3141 = vpop.f32.mrb[0].mxu0
      %3142 = vmatprep.mubr.f32.mxu0 0.0
      %3143 = vmatmul.mubr.f32.gmra.mrb[0].mxu0 %v2480
      %v3144 = vpop.f32.mrb[0].mxu0
      %v3145 = vadd.f32 0.0, %v3144
      %v3146 = vpop.f32.mrb[0].mxu0
      %3147 = vmatprep.mubr.f32.mxu0 0.0
      %3148 = vmatmul.mubr.f32.gmra.mrb[0].mxu0 %v2483
      %v3149 = vpop.f32.mrb[0].mxu0
      %v3150 = vadd.f32 0.0, %v3149
      %v3151 = vpop.f32.mrb[0].mxu0
      %3152 = vmatprep.mubr.f32.mxu0 0.0
      %3153 = vmatmul.mubr.f32.gmra.mrb[0].mxu0 %v2486
      %v3154 = vpop.f32.mrb[0].mxu0
      %v3155 = vadd.f32 0.0, %v3154
      %v3156 = vpop.f32.mrb[0].mxu0
      %3157 = vmatprep.mubr.f32.mxu0 0.0
      %3158 = vmatmul.mubr.f32.gmra.mrb[0].mxu0 %v2489
      %v3159 = vpop.f32.mrb[0].mxu0
      %v3160 = vadd.f32 0.0, %v3159
      %v3161 = vpop.f32.mrb[0].mxu0
      %3162 = vmatprep.mubr.f32.mxu0 0.0
      %3163 = vmatmul.mubr.f32.gmra.mrb[0].mxu0 %v2717
      %v3164 = vpop.f32.mrb[0].mxu0
      %v3165 = vadd.f32 0.0, %v3164
      %v3166 = vpop.f32.mrb[0].mxu0
      %3167 = vmatprep.mubr.f32.mxu0 0.0
      %3168 = vmatmul.mubr.f32.gmra.mrb[0].mxu0 %v2717
      %v3169 = vpop.f32.mrb[0].mxu0
      %v3170 = vadd.f32 0.0, %v3169
      %v3171 = vpop.f32.mrb[0].mxu0
      %3172 = vdwg.mxu0
      %v3173 = vadd.f32 %v2786, %v3015
      %v3174 = vadd.f32 %v2791, %v3020
      %v3175 = vadd.f32 %v2796, %v3025
      %v3176 = vadd.f32 %v2801, %v3030
      %v3177 = vadd.f32 %v2806, %v3035
      %v3178 = vadd.f32 %v2811, %v3040
      %v3179 = vadd.f32 %v2816, %v3045
      %v3180 = vadd.f32 %v2821, %v3050
      %v3181 = vadd.f32 %v2826, %v3055
      %v3182 = vadd.f32 %v2831, %v3060
      %v3183 = vadd.f32 %v2836, %v3065
      %v3184 = vadd.f32 %v2841, %v3070
      %v3185 = vadd.f32 %v2846, %v3075
      %v3186 = vadd.f32 %v2851, %v3080
      %v3187 = vadd.f32 %v2856, %v3085
      %v3188 = vadd.f32 %v2861, %v3090
      %v3189 = vadd.f32 %v2866, %v3095
      %v3190 = vadd.f32 %v2871, %v3100
      %v3191 = vadd.f32 %v2876, %v3105
      %v3192 = vadd.f32 %v2881, %v3110
      %v3193 = vadd.f32 %v2886, %v3115
      %v3194 = vadd.f32 %v2891, %v3120
      %v3195 = vadd.f32 %v2896, %v3125
      %v3196 = vadd.f32 %v2901, %v3130
      %v3197 = vadd.f32 %v2906, %v3135
      %v3198 = vadd.f32 %v2911, %v3140
      %v3199 = vadd.f32 %v2916, %v3145
      %v3200 = vadd.f32 %v2921, %v3150
      %v3201 = vadd.f32 %v2926, %v3155
      %v3202 = vadd.f32 %v2931, %v3160
      %v3203 = vadd.f32 %v2936, %v3165
      %v3204 = vadd.f32 %v2941, %v3170
      %v3205 = vld [vmem:[%s4] sm:$0x1]
      %v3207 = vlaneseq
      %v3208 = vshrl.u32 %v3207, 7
      %v3209 = vsub.s32 0, %v3208
      %v3210 = vrot.slane %v3205, %v3209
      %v3212 = vadd.f32 %v3173, %v3210
      %v3213 = vadd.f32 %v3174, %v3210
      %v3214 = vadd.f32 %v3175, %v3210
      %v3215 = vadd.f32 %v3176, %v3210
      %v3216 = vadd.f32 %v3177, %v3210
      %v3217 = vadd.f32 %v3178, %v3210
      %v3218 = vadd.f32 %v3179, %v3210
      %v3219 = vadd.f32 %v3180, %v3210
      %v3220 = vadd.f32 %v3181, %v3210
      %v3221 = vadd.f32 %v3182, %v3210
      %v3222 = vadd.f32 %v3183, %v3210
      %v3223 = vadd.f32 %v3184, %v3210
      %v3224 = vadd.f32 %v3185, %v3210
      %v3225 = vadd.f32 %v3186, %v3210
      %v3226 = vadd.f32 %v3187, %v3210
      %v3227 = vadd.f32 %v3188, %v3210
      %v3228 = vadd.f32 %v3189, %v3210
      %v3229 = vadd.f32 %v3190, %v3210
      %v3230 = vadd.f32 %v3191, %v3210
      %v3231 = vadd.f32 %v3192, %v3210
      %v3232 = vadd.f32 %v3193, %v3210
      %v3233 = vadd.f32 %v3194, %v3210
      %v3234 = vadd.f32 %v3195, %v3210
      %v3235 = vadd.f32 %v3196, %v3210
      %v3236 = vadd.f32 %v3197, %v3210
      %v3237 = vadd.f32 %v3198, %v3210
      %v3238 = vadd.f32 %v3199, %v3210
      %v3239 = vadd.f32 %v3200, %v3210
      %v3240 = vadd.f32 %v3201, %v3210
      %v3241 = vadd.f32 %v3202, %v3210
      %v3242 = vadd.f32 %v3203, %v3210
      %v3243 = vadd.f32 %v3204, %v3210
      %v3244 = vld [vmem:[%s5] sm:$0xf]
      %v3245 = vld [vmem:[%s6] sm:$0x1]
      %v3247 = vlaneseq
      %v3248 = vshrl.u32 %v3247, 7
      %v3249 = vsub.s32 0, %v3248
      %v3250 = vrot.slane %v3245, %v3249
      %v3252 = vsel %vm735, %v389, 0
      %v3254 = vsel %vm735, %v391, 0
      %v3256 = vsel %vm735, %v394, 0
      %v3258 = vsel %vm735, %v396, 0
      %v3260 = vsel %vm735, %v399, 0
      %v3262 = vsel %vm735, %v401, 0
      %v3264 = vsel %vm735, %v404, 0
      %v3266 = vsel %vm735, %v406, 0
      %v3268 = vsel %vm735, %v409, 0
      %v3270 = vsel %vm735, %v411, 0
      %v3272 = vsel %vm735, %v414, 0
      %v3274 = vsel %vm735, %v416, 0
      %v3276 = vsel %vm735, %v419, 0
      %v3278 = vsel %vm735, %v421, 0
      %v3280 = vsel %vm735, %v424, 0
      %v3282 = vsel %vm735, %v426, 0
      %v3284 = vsel %vm735, %v429, 0
      %v3286 = vsel %vm735, %v431, 0
      %v3288 = vsel %vm735, %v434, 0
      %v3290 = vsel %vm735, %v436, 0
      %v3292 = vsel %vm735, %v439, 0
      %v3294 = vsel %vm735, %v441, 0
      %v3296 = vsel %vm735, %v444, 0
      %v3298 = vsel %vm735, %v446, 0
      %v3300 = vsel %vm735, %v449, 0
      %v3302 = vsel %vm735, %v451, 0
      %v3304 = vsel %vm735, %v454, 0
      %v3306 = vsel %vm735, %v456, 0
      %v3308 = vsel %vm735, %v459, 0
      %v3310 = vsel %vm735, %v461, 0
      %v3312 = vsel %vm735, %v808, 0
      %v3314 = vsel %vm735, %v810, 0
      %v3317 = vsel %vm932, %v3244, 0
      %3319 = vmatprep.subr.mxu0 0.0
      %3320 = vmatpush1.msra.mxu0 %v3317
      %3321 = vmatprep.subr.mxu0 0.0
      %3322 = vmatpush1.msra.mxu0 0.0
      %3323 = vmatprep.subr.mxu0 0.0
      %3324 = vmatpush1.msra.mxu0 0.0
      %3325 = vmatprep.subr.mxu0 0.0
      %3326 = vmatpush1.msra.mxu0 0.0
      %3327 = vmatprep.subr.mxu0 0.0
      %3328 = vmatpush1.msra.mxu0 0.0
      %3329 = vmatprep.subr.mxu0 0.0
      %3330 = vmatpush1.msra.mxu0 0.0
      %3331 = vmatprep.subr.mxu0 0.0
      %3332 = vmatpush1.msra.mxu0 0.0
      %3333 = vmatprep.subr.mxu0 0.0
      %3334 = vmatpush1.msra.mxu0 0.0
      %3335 = vmatprep.subr.mxu0 0.0
      %3336 = vmatpush1.msra.mxu0 0.0
      %3337 = vmatprep.subr.mxu0 0.0
      %3338 = vmatpush1.msra.mxu0 0.0
      %3339 = vmatprep.subr.mxu0 0.0
      %3340 = vmatpush1.msra.mxu0 0.0
      %3341 = vmatprep.subr.mxu0 0.0
      %3342 = vmatpush1.msra.mxu0 0.0
      %3343 = vmatprep.subr.mxu0 0.0
      %3344 = vmatpush1.msra.mxu0 0.0
      %3345 = vmatprep.subr.mxu0 0.0
      %3346 = vmatpush1.msra.mxu0 0.0
      %3347 = vmatprep.subr.mxu0 0.0
      %3348 = vmatpush1.msra.mxu0 0.0
      %3349 = vmatprep.subr.mxu0 0.0
      %3350 = vmatpush1.msra.mxu0 0.0
      %3351 = vmatprep.subr.mxu0 0.0
      %3352 = vmatpush1.msra.mxu0 0.0
      %3353 = vmatprep.subr.mxu0 0.0
      %3354 = vmatpush1.msra.mxu0 0.0
      %3355 = vmatprep.subr.mxu0 0.0
      %3356 = vmatpush1.msra.mxu0 0.0
      %3357 = vmatprep.subr.mxu0 0.0
      %3358 = vmatpush1.msra.mxu0 0.0
      %3359 = vmatprep.subr.mxu0 0.0
      %3360 = vmatpush1.msra.mxu0 0.0
      %3361 = vmatprep.subr.mxu0 0.0
      %3362 = vmatpush1.msra.mxu0 0.0
      %3363 = vmatprep.subr.mxu0 0.0
      %3364 = vmatpush1.msra.mxu0 0.0
      %3365 = vmatprep.subr.mxu0 0.0
      %3366 = vmatpush1.msra.mxu0 0.0
      %3367 = vmatprep.subr.mxu0 0.0
      %3368 = vmatpush1.msra.mxu0 0.0
      %3369 = vmatprep.subr.mxu0 0.0
      %3370 = vmatpush1.msra.mxu0 0.0
      %3371 = vmatprep.subr.mxu0 0.0
      %3372 = vmatpush1.msra.mxu0 0.0
      %3373 = vmatprep.subr.mxu0 0.0
      %3374 = vmatpush1.msra.mxu0 0.0
      %3375 = vmatprep.subr.mxu0 0.0
      %3376 = vmatpush1.msra.mxu0 0.0
      %3377 = vmatprep.subr.mxu0 0.0
      %3378 = vmatpush1.msra.mxu0 0.0
      %3379 = vmatprep.subr.mxu0 0.0
      %3380 = vmatpush1.msra.mxu0 0.0
      %3381 = vmatprep.subr.mxu0 0.0
      %3382 = vmatpush1.msra.mxu0 0.0
      %3383 = vmatprep.mubr.f32.mxu0 0.0
      %3384 = vmatmul.mubr.f32.gmra.mrb[0].mxu0 %v3252
      %v3385 = vpop.f32.mrb[0].mxu0
      %v3386 = vadd.f32 %v3250, %v3385
      %v3387 = vpop.f32.mrb[0].mxu0
      %3388 = vmatprep.mubr.f32.mxu0 0.0
      %3389 = vmatmul.mubr.f32.gmra.mrb[0].mxu0 %v3254
      %v3390 = vpop.f32.mrb[0].mxu0
      %v3391 = vadd.f32 %v3250, %v3390
      %v3392 = vpop.f32.mrb[0].mxu0
      %3393 = vmatprep.mubr.f32.mxu0 0.0
      %3394 = vmatmul.mubr.f32.gmra.mrb[0].mxu0 %v3256
      %v3395 = vpop.f32.mrb[0].mxu0
      %v3396 = vadd.f32 %v3250, %v3395
      %v3397 = vpop.f32.mrb[0].mxu0
      %3398 = vmatprep.mubr.f32.mxu0 0.0
      %3399 = vmatmul.mubr.f32.gmra.mrb[0].mxu0 %v3258
      %v3400 = vpop.f32.mrb[0].mxu0
      %v3401 = vadd.f32 %v3250, %v3400
      %v3402 = vpop.f32.mrb[0].mxu0
      %3403 = vmatprep.mubr.f32.mxu0 0.0
      %3404 = vmatmul.mubr.f32.gmra.mrb[0].mxu0 %v3260
      %v3405 = vpop.f32.mrb[0].mxu0
      %v3406 = vadd.f32 %v3250, %v3405
      %v3407 = vpop.f32.mrb[0].mxu0
      %3408 = vmatprep.mubr.f32.mxu0 0.0
      %3409 = vmatmul.mubr.f32.gmra.mrb[0].mxu0 %v3262
      %v3410 = vpop.f32.mrb[0].mxu0
      %v3411 = vadd.f32 %v3250, %v3410
      %v3412 = vpop.f32.mrb[0].mxu0
      %3413 = vmatprep.mubr.f32.mxu0 0.0
      %3414 = vmatmul.mubr.f32.gmra.mrb[0].mxu0 %v3264
      %v3415 = vpop.f32.mrb[0].mxu0
      %v3416 = vadd.f32 %v3250, %v3415
      %v3417 = vpop.f32.mrb[0].mxu0
      %3418 = vmatprep.mubr.f32.mxu0 0.0
      %3419 = vmatmul.mubr.f32.gmra.mrb[0].mxu0 %v3266
      %v3420 = vpop.f32.mrb[0].mxu0
      %v3421 = vadd.f32 %v3250, %v3420
      %v3422 = vpop.f32.mrb[0].mxu0
      %3423 = vmatprep.mubr.f32.mxu0 0.0
      %3424 = vmatmul.mubr.f32.gmra.mrb[0].mxu0 %v3268
      %v3425 = vpop.f32.mrb[0].mxu0
      %v3426 = vadd.f32 %v3250, %v3425
      %v3427 = vpop.f32.mrb[0].mxu0
      %3428 = vmatprep.mubr.f32.mxu0 0.0
      %3429 = vmatmul.mubr.f32.gmra.mrb[0].mxu0 %v3270
      %v3430 = vpop.f32.mrb[0].mxu0
      %v3431 = vadd.f32 %v3250, %v3430
      %v3432 = vpop.f32.mrb[0].mxu0
      %3433 = vmatprep.mubr.f32.mxu0 0.0
      %3434 = vmatmul.mubr.f32.gmra.mrb[0].mxu0 %v3272
      %v3435 = vpop.f32.mrb[0].mxu0
      %v3436 = vadd.f32 %v3250, %v3435
      %v3437 = vpop.f32.mrb[0].mxu0
      %3438 = vmatprep.mubr.f32.mxu0 0.0
      %3439 = vmatmul.mubr.f32.gmra.mrb[0].mxu0 %v3274
      %v3440 = vpop.f32.mrb[0].mxu0
      %v3441 = vadd.f32 %v3250, %v3440
      %v3442 = vpop.f32.mrb[0].mxu0
      %3443 = vmatprep.mubr.f32.mxu0 0.0
      %3444 = vmatmul.mubr.f32.gmra.mrb[0].mxu0 %v3276
      %v3445 = vpop.f32.mrb[0].mxu0
      %v3446 = vadd.f32 %v3250, %v3445
      %v3447 = vpop.f32.mrb[0].mxu0
      %3448 = vmatprep.mubr.f32.mxu0 0.0
      %3449 = vmatmul.mubr.f32.gmra.mrb[0].mxu0 %v3278
      %v3450 = vpop.f32.mrb[0].mxu0
      %v3451 = vadd.f32 %v3250, %v3450
      %v3452 = vpop.f32.mrb[0].mxu0
      %3453 = vmatprep.mubr.f32.mxu0 0.0
      %3454 = vmatmul.mubr.f32.gmra.mrb[0].mxu0 %v3280
      %v3455 = vpop.f32.mrb[0].mxu0
      %v3456 = vadd.f32 %v3250, %v3455
      %v3457 = vpop.f32.mrb[0].mxu0
      %3458 = vmatprep.mubr.f32.mxu0 0.0
      %3459 = vmatmul.mubr.f32.gmra.mrb[0].mxu0 %v3282
      %v3460 = vpop.f32.mrb[0].mxu0
      %v3461 = vadd.f32 %v3250, %v3460
      %v3462 = vpop.f32.mrb[0].mxu0
      %3463 = vmatprep.mubr.f32.mxu0 0.0
      %3464 = vmatmul.mubr.f32.gmra.mrb[0].mxu0 %v3284
      %v3465 = vpop.f32.mrb[0].mxu0
      %v3466 = vadd.f32 %v3250, %v3465
      %v3467 = vpop.f32.mrb[0].mxu0
      %3468 = vmatprep.mubr.f32.mxu0 0.0
      %3469 = vmatmul.mubr.f32.gmra.mrb[0].mxu0 %v3286
      %v3470 = vpop.f32.mrb[0].mxu0
      %v3471 = vadd.f32 %v3250, %v3470
      %v3472 = vpop.f32.mrb[0].mxu0
      %3473 = vmatprep.mubr.f32.mxu0 0.0
      %3474 = vmatmul.mubr.f32.gmra.mrb[0].mxu0 %v3288
      %v3475 = vpop.f32.mrb[0].mxu0
      %v3476 = vadd.f32 %v3250, %v3475
      %v3477 = vpop.f32.mrb[0].mxu0
      %3478 = vmatprep.mubr.f32.mxu0 0.0
      %3479 = vmatmul.mubr.f32.gmra.mrb[0].mxu0 %v3290
      %v3480 = vpop.f32.mrb[0].mxu0
      %v3481 = vadd.f32 %v3250, %v3480
      %v3482 = vpop.f32.mrb[0].mxu0
      %3483 = vmatprep.mubr.f32.mxu0 0.0
      %3484 = vmatmul.mubr.f32.gmra.mrb[0].mxu0 %v3292
      %v3485 = vpop.f32.mrb[0].mxu0
      %v3486 = vadd.f32 %v3250, %v3485
      %v3487 = vpop.f32.mrb[0].mxu0
      %3488 = vmatprep.mubr.f32.mxu0 0.0
      %3489 = vmatmul.mubr.f32.gmra.mrb[0].mxu0 %v3294
      %v3490 = vpop.f32.mrb[0].mxu0
      %v3491 = vadd.f32 %v3250, %v3490
      %v3492 = vpop.f32.mrb[0].mxu0
      %3493 = vmatprep.mubr.f32.mxu0 0.0
      %3494 = vmatmul.mubr.f32.gmra.mrb[0].mxu0 %v3296
      %v3495 = vpop.f32.mrb[0].mxu0
      %v3496 = vadd.f32 %v3250, %v3495
      %v3497 = vpop.f32.mrb[0].mxu0
      %3498 = vmatprep.mubr.f32.mxu0 0.0
      %3499 = vmatmul.mubr.f32.gmra.mrb[0].mxu0 %v3298
      %v3500 = vpop.f32.mrb[0].mxu0
      %v3501 = vadd.f32 %v3250, %v3500
      %v3502 = vpop.f32.mrb[0].mxu0
      %3503 = vmatprep.mubr.f32.mxu0 0.0
      %3504 = vmatmul.mubr.f32.gmra.mrb[0].mxu0 %v3300
      %v3505 = vpop.f32.mrb[0].mxu0
      %v3506 = vadd.f32 %v3250, %v3505
      %v3507 = vpop.f32.mrb[0].mxu0
      %3508 = vmatprep.mubr.f32.mxu0 0.0
      %3509 = vmatmul.mubr.f32.gmra.mrb[0].mxu0 %v3302
      %v3510 = vpop.f32.mrb[0].mxu0
      %v3511 = vadd.f32 %v3250, %v3510
      %v3512 = vpop.f32.mrb[0].mxu0
      %3513 = vmatprep.mubr.f32.mxu0 0.0
      %3514 = vmatmul.mubr.f32.gmra.mrb[0].mxu0 %v3304
      %v3515 = vpop.f32.mrb[0].mxu0
      %v3516 = vadd.f32 %v3250, %v3515
      %v3517 = vpop.f32.mrb[0].mxu0
      %3518 = vmatprep.mubr.f32.mxu0 0.0
      %3519 = vmatmul.mubr.f32.gmra.mrb[0].mxu0 %v3306
      %v3520 = vpop.f32.mrb[0].mxu0
      %v3521 = vadd.f32 %v3250, %v3520
      %v3522 = vpop.f32.mrb[0].mxu0
      %3523 = vmatprep.mubr.f32.mxu0 0.0
      %3524 = vmatmul.mubr.f32.gmra.mrb[0].mxu0 %v3308
      %v3525 = vpop.f32.mrb[0].mxu0
      %v3526 = vadd.f32 %v3250, %v3525
      %v3527 = vpop.f32.mrb[0].mxu0
      %3528 = vmatprep.mubr.f32.mxu0 0.0
      %3529 = vmatmul.mubr.f32.gmra.mrb[0].mxu0 %v3310
      %v3530 = vpop.f32.mrb[0].mxu0
      %v3531 = vadd.f32 %v3250, %v3530
      %v3532 = vpop.f32.mrb[0].mxu0
      %3533 = vmatprep.mubr.f32.mxu0 0.0
      %3534 = vmatmul.mubr.f32.gmra.mrb[0].mxu0 %v3312
      %v3535 = vpop.f32.mrb[0].mxu0
      %v3536 = vadd.f32 %v3250, %v3535
      %v3537 = vpop.f32.mrb[0].mxu0
      %3538 = vmatprep.mubr.f32.mxu0 0.0
      %3539 = vmatmul.mubr.f32.gmra.mrb[0].mxu0 %v3314
      %v3540 = vpop.f32.mrb[0].mxu0
      %v3541 = vadd.f32 %v3250, %v3540
      %v3542 = vpop.f32.mrb[0].mxu0
      %3543 = vdwg.mxu0
      %v3544 = vadd.f32 %v3212, %v3386
      %v3545 = vadd.f32 %v3213, %v3391
      %v3546 = vadd.f32 %v3214, %v3396
      %v3547 = vadd.f32 %v3215, %v3401
      %v3548 = vadd.f32 %v3216, %v3406
      %v3549 = vadd.f32 %v3217, %v3411
      %v3550 = vadd.f32 %v3218, %v3416
      %v3551 = vadd.f32 %v3219, %v3421
      %v3552 = vadd.f32 %v3220, %v3426
      %v3553 = vadd.f32 %v3221, %v3431
      %v3554 = vadd.f32 %v3222, %v3436
      %v3555 = vadd.f32 %v3223, %v3441
      %v3556 = vadd.f32 %v3224, %v3446
      %v3557 = vadd.f32 %v3225, %v3451
      %v3558 = vadd.f32 %v3226, %v3456
      %v3559 = vadd.f32 %v3227, %v3461
      %v3560 = vadd.f32 %v3228, %v3466
      %v3561 = vadd.f32 %v3229, %v3471
      %v3562 = vadd.f32 %v3230, %v3476
      %v3563 = vadd.f32 %v3231, %v3481
      %v3564 = vadd.f32 %v3232, %v3486
      %v3565 = vadd.f32 %v3233, %v3491
      %v3566 = vadd.f32 %v3234, %v3496
      %v3567 = vadd.f32 %v3235, %v3501
      %v3568 = vadd.f32 %v3236, %v3506
      %v3569 = vadd.f32 %v3237, %v3511
      %v3570 = vadd.f32 %v3238, %v3516
      %v3571 = vadd.f32 %v3239, %v3521
      %v3572 = vadd.f32 %v3240, %v3526
      %v3573 = vadd.f32 %v3241, %v3531
      %v3574 = vadd.f32 %v3242, %v3536
      %v3575 = vadd.f32 %v3243, %v3541
      %v3576 = vmax.f32 %v3544, 0.0
      %v3577 = vmax.f32 %v3545, 0.0
      %v3578 = vmax.f32 %v3546, 0.0
      %v3579 = vmax.f32 %v3547, 0.0
      %v3580 = vmax.f32 %v3548, 0.0
      %v3581 = vmax.f32 %v3549, 0.0
      %v3582 = vmax.f32 %v3550, 0.0
      %v3583 = vmax.f32 %v3551, 0.0
      %v3584 = vmax.f32 %v3552, 0.0
      %v3585 = vmax.f32 %v3553, 0.0
      %v3586 = vmax.f32 %v3554, 0.0
      %v3587 = vmax.f32 %v3555, 0.0
      %v3588 = vmax.f32 %v3556, 0.0
      %v3589 = vmax.f32 %v3557, 0.0
      %v3590 = vmax.f32 %v3558, 0.0
      %v3591 = vmax.f32 %v3559, 0.0
      %v3592 = vmax.f32 %v3560, 0.0
      %v3593 = vmax.f32 %v3561, 0.0
      %v3594 = vmax.f32 %v3562, 0.0
      %v3595 = vmax.f32 %v3563, 0.0
      %v3596 = vmax.f32 %v3564, 0.0
      %v3597 = vmax.f32 %v3565, 0.0
      %v3598 = vmax.f32 %v3566, 0.0
      %v3599 = vmax.f32 %v3567, 0.0
      %v3600 = vmax.f32 %v3568, 0.0
      %v3601 = vmax.f32 %v3569, 0.0
      %v3602 = vmax.f32 %v3570, 0.0
      %v3603 = vmax.f32 %v3571, 0.0
      %v3604 = vmax.f32 %v3572, 0.0
      %v3605 = vmax.f32 %v3573, 0.0
      %v3606 = vmax.f32 %v3574, 0.0
      %v3607 = vmax.f32 %v3575, 0.0
      %3608 = vst.msk [vmem:[%s278] sm:$0xff] %vm768, %v3576
      %3609 = vst.msk [vmem:[%s278 + $0x8] sm:$0xff] %vm768, %v3577
      %3610 = vst.msk [vmem:[%s278 + $0x10] sm:$0xff] %vm768, %v3578
      %3611 = vst.msk [vmem:[%s278 + $0x18] sm:$0xff] %vm768, %v3579
      %3612 = vst.msk [vmem:[%s278 + $0x20] sm:$0xff] %vm768, %v3580
      %3613 = vst.msk [vmem:[%s278 + $0x28] sm:$0xff] %vm768, %v3581
      %3614 = vst.msk [vmem:[%s278 + $0x30] sm:$0xff] %vm768, %v3582
      %3615 = vst.msk [vmem:[%s278 + $0x38] sm:$0xff] %vm768, %v3583
      %3616 = vst.msk [vmem:[%s278 + $0x40] sm:$0xff] %vm768, %v3584
      %3617 = vst.msk [vmem:[%s278 + $0x48] sm:$0xff] %vm768, %v3585
      %3618 = vst.msk [vmem:[%s278 + $0x50] sm:$0xff] %vm768, %v3586
      %3619 = vst.msk [vmem:[%s278 + $0x58] sm:$0xff] %vm768, %v3587
      %3620 = vst.msk [vmem:[%s278 + $0x60] sm:$0xff] %vm768, %v3588
      %3621 = vst.msk [vmem:[%s278 + $0x68] sm:$0xff] %vm768, %v3589
      %3622 = vst.msk [vmem:[%s278 + $0x70] sm:$0xff] %vm768, %v3590
      %3623 = vst.msk [vmem:[%s278 + $0x78] sm:$0xff] %vm768, %v3591
      %3624 = vst.msk [vmem:[%s278 + $0x80] sm:$0xff] %vm768, %v3592
      %3625 = vst.msk [vmem:[%s278 + $0x88] sm:$0xff] %vm768, %v3593
      %3626 = vst.msk [vmem:[%s278 + $0x90] sm:$0xff] %vm768, %v3594
      %3627 = vst.msk [vmem:[%s278 + $0x98] sm:$0xff] %vm768, %v3595
      %3628 = vst.msk [vmem:[%s278 + $0xa0] sm:$0xff] %vm768, %v3596
      %3629 = vst.msk [vmem:[%s278 + $0xa8] sm:$0xff] %vm768, %v3597
      %3630 = vst.msk [vmem:[%s278 + $0xb0] sm:$0xff] %vm768, %v3598
      %3631 = vst.msk [vmem:[%s278 + $0xb8] sm:$0xff] %vm768, %v3599
      %3632 = vst.msk [vmem:[%s278 + $0xc0] sm:$0xff] %vm768, %v3600
      %3633 = vst.msk [vmem:[%s278 + $0xc8] sm:$0xff] %vm768, %v3601
      %3634 = vst.msk [vmem:[%s278 + $0xd0] sm:$0xff] %vm768, %v3602
      %3635 = vst.msk [vmem:[%s278 + $0xd8] sm:$0xff] %vm768, %v3603
      %3636 = vst.msk [vmem:[%s278 + $0xe0] sm:$0xff] %vm768, %v3604
      %3637 = vst.msk [vmem:[%s278 + $0xe8] sm:$0xff] %vm768, %v3605
      %3638 = vst.msk [vmem:[%s278 + $0xf0] sm:$0xff] %vm768, %v3606
      %3639 = vst.msk [vmem:[%s278 + $0xf8] sm:$0xff] %vm768, %v3607
      %p3640 = scmp.lt.s32.totalorder %s18, 1
      %s3641 = scalar_select %p3640, %s18, 1
      %s3642 = smul.addr %s3641, 32
      %s3643 = smul.addr %s3642, 8
      %s3644 = scalar_lea.vmem %s7, %s3643
      // Predicated region
      $region49: #{_basic_block_impl.1} parent=47 // pred_check
        %p3645 = pneg %p188
      $region50: #{_basic_block_impl.1} parent=47 // pred_check_branch
        %3647 = sbr.rel (%p3645) target = $region52
      $region51: #{_basic_block_impl.1} parent=47 // pred_region
        _
      $region52: #{_basic_block_impl.1} parent=47 // pred_fallthru
        _
    $region48: #{_basic_block_impl.1} parent=5 // pred_fallthru
      _
    %p3648 = scmp.le.s32.totalorder 2, %s13
    // Predicated region
    $region53: #{_basic_block_impl.1} parent=5 // pred_check
      %p3649 = pneg %p3648
    $region54: #{_basic_block_impl.1} parent=5 // pred_check_branch
      %3651 = sbr.rel (%p3649) target = $region56
    $region55: #{_basic_block_impl.1} parent=5 // pred_region
      %s3652 = ssub.s32 %s13, 2
      // Predicated region
      $region57: #{_basic_block_impl.1} parent=55 // pred_check
        %p3653 = pneg %p194
      $region58: #{_basic_block_impl.1} parent=55 // pred_check_branch
        %3655 = sbr.rel (%p3653) target = $region60
      $region59: #{_basic_block_impl.1} parent=55 // pred_region
        %p3656 = scmp.lt.s32.totalorder %s19, 1
        %s3657 = scalar_select %p3656, %s19, 1
        %s3658 = smul.addr %s3657, 32
        %s3659 = smul.addr %s3658, 8
        %s3660 = scalar_lea.vmem %s7, %s3659
      $region60: #{_basic_block_impl.1} parent=55 // pred_fallthru
        _
    $region56: #{_basic_block_impl.1} parent=5 // pred_fallthru
      _
  $region6: #{_basic_block_impl.1} parent=0 // loop_footer
    %s17 = sadd.s32 1, %s13
  $region7: #{_basic_block_impl.1} parent=0 // loop_footer_branch
    %12 = sbr.rel target = $region3
  $region8: #{_basic_block_impl.1} parent=0 // loop_exit
    _

</llo_original>
